<compile_context>
chip_gen: v7x
topology: tpu7x:2x2x1
jax: 0.10.0
libtpu: 0.0.40
codegen_flags: <defaults>
</compile_context>

<pallas_src>
import jax
import jax.numpy as jnp
from jax.experimental import pallas as pl
from jax.experimental.pallas import tpu as pltpu

VMEM = pl.BlockSpec(memory_space=pltpu.MemorySpace.VMEM)


def _mish(x):
    # mish(x) = x * tanh(softplus(x)) = x * (1 - 2 / ((1 + e^x)^2 + 1))
    ex = jnp.exp(x)
    s = 1.0 + ex
    return x * (1.0 - 2.0 * pl.reciprocal(s * s + 1.0, approx=True))


def _make_rcnn_kernel(B, L, E, filter_sizes, n_filters, n_windows=10):
    """Builds the fused kernel for static (B, L, E, filter_sizes, n_filters)."""
    H = E
    F = n_filters
    n_convs = len(filter_sizes)
    kp = L // n_windows                      # max_pool1d kernel == stride (torch: L // 10)
    # timestep chunk for batched hidden-state writeback (CH*B rows per aligned store)
    CH = 4 if L % 4 == 0 else (2 if L % 2 == 0 else 1)
    pmax_l = max((fs - 1) // 2 for fs in filter_sizes)
    pmax_r = max(fs - 1 - (fs - 1) // 2 for fs in filter_sizes)

    def kernel(x_ref,
               wih1, bl1, whh1,
               wih2, bl2, whh2,
               wd_ref, bd_ref,
               *rest):
        # rest = [wc_0, bc_0, ..., wc_{n-1}, bc_{n-1}, w1p, b1, w2, b2, w3, b3,
        #         out_ref, xg, hs1, hs2]
        conv_refs = rest[:2 * n_convs]
        w1_ref, b1_ref, w2_ref, b2_ref, w3_ref, b3_ref = rest[2 * n_convs:2 * n_convs + 6]
        out_ref = rest[2 * n_convs + 6]
        xg, hs1, hs2 = rest[2 * n_convs + 7:]

        def bilstm(x_bf, wih_ref, b_ref, whh_ref, hs_ref):
            """One bidirectional LSTM layer.  x_bf rows are ordered t*B + b (time-major), bf16."""
            # ONE hoisted input-projection matmul for both directions (bias folded in).
            # Columns 0:8H hold the fwd gate pre-activations at lanes [2g*H, 2g*H+H) (zeros
            # elsewhere); columns 8H:16H hold the bwd ones at lanes [2g*H+H, 2(g+1)*H).
            xg[...] = (jnp.dot(x_bf, wih_ref[...], preferred_element_type=jnp.float32)
                       + b_ref[...])
            Whh = whh_ref[...]                             # (2H, 8H) bf16, block-diagonal
            h = jnp.zeros((B, 2 * H), jnp.float32)         # lanes [h_fwd | h_bwd]
            c = jnp.zeros((B, 2 * H), jnp.float32)
            for t0 in range(0, L, CH):
                hf_blocks, hb_blocks = [], []
                for j in range(CH):
                    t = t0 + j
                    rf = t * B                              # forward reads real time t
                    rb = (L - 1 - t) * B                    # backward reads real time L-1-t
                    g = (jnp.dot(h.astype(jnp.bfloat16), Whh,
                                 preferred_element_type=jnp.float32)
                         + xg[rf:rf + B, 0:8 * H]
                         + xg[rb:rb + B, 8 * H:16 * H])     # (B, 8H) grouped gates
                    i = jax.nn.sigmoid(g[:, 0:2 * H])
                    f = jax.nn.sigmoid(g[:, 2 * H:4 * H])
                    gg = jnp.tanh(g[:, 4 * H:6 * H])
                    o = jax.nn.sigmoid(g[:, 6 * H:8 * H])
                    c = f * c + i * gg
                    h = o * jnp.tanh(c)
                    hf_blocks.append(h[:, 0:H])
                    hb_blocks.append(h[:, H:2 * H])
                # One aligned (CH*B, H) store per direction per chunk (time-aligned rows).
                hs_ref[t0 * B:(t0 + CH) * B, 0:H] = jnp.concatenate(hf_blocks, axis=0)
                hs_ref[(L - CH - t0) * B:(L - t0) * B, H:2 * H] = \
                    jnp.concatenate(hb_blocks[::-1], axis=0)
            return hs_ref[...]                              # (L*B, 2H) = [h_fwd | h_bwd] per t

        # ------------- 2-layer bidirectional LSTM -------------
        x1 = bilstm(x_ref[...], wih1, bl1, whh1, hs1)                       # (L*B, 2H) f32
        x2 = bilstm(x1.astype(jnp.bfloat16), wih2, bl2, whh2, hs2)          # (L*B, 2H) f32

        # ------------- down: Linear(2E -> E) + Mish (dropout = identity) -------------
        down = _mish(jnp.dot(x2.astype(jnp.bfloat16), wd_ref[...],
                             preferred_element_type=jnp.float32) + bd_ref[...])   # (L*B, E)
        down_bf = down.astype(jnp.bfloat16)

        # Shared zero-padded (time) copy of `down` for all convs (rows = (pmax_l+L+pmax_r)*B).
        pad_parts = []
        if pmax_l > 0:
            pad_parts.append(jnp.zeros((pmax_l * B, E), jnp.bfloat16))
        pad_parts.append(down_bf)
        if pmax_r > 0:
            pad_parts.append(jnp.zeros((pmax_r * B, E), jnp.bfloat16))
        padded = jnp.concatenate(pad_parts, axis=0) if len(pad_parts) > 1 else down_bf

        # ------------- convs + Mish + 10-window max pool, streamed into fc1 -------------
        d_mid = b1_ref.shape[1]
        h1_acc = jnp.zeros((B, d_mid), jnp.float32) + b1_ref[...]
        for ci in range(n_convs):
            fs = filter_sizes[ci]
            pad_l = (fs - 1) // 2                  # PyTorch padding='same' (odd & even fs)
            wc = conv_refs[2 * ci][...]            # (fs*E, F) bf16, row index k*E + e
            bc = conv_refs[2 * ci + 1][...]        # (1, F) f32
            # Conv1d as a sum of fs row-shifted matmuls (no im2col lane concat).
            conv = bc
            for k in range(fs):
                start = (pmax_l - pad_l + k) * B
                conv = conv + jnp.dot(padded[start:start + L * B, :],
                                      wc[k * E:(k + 1) * E, :],
                                      preferred_element_type=jnp.float32)
            conv_bf = _mish(conv).astype(jnp.bfloat16)                       # (L*B, F)
            # max_pool1d(kernel=stride=kp); each pooled (B, F) window goes straight into the
            # fc1 accumulation (fc1 weight rows pre-permuted to [conv, window, filter] order).
            for p in range(n_windows):
                base = p * kp * B
                wmax = conv_bf[base:base + B, :]
                for j in range(1, kp):
                    wmax = jnp.maximum(wmax, conv_bf[base + j * B:base + (j + 1) * B, :])
                w1_slice = w1_ref[(ci * n_windows + p) * F:(ci * n_windows + p + 1) * F, :]
                h1_acc = h1_acc + jnp.dot(wmax, w1_slice,
                                          preferred_element_type=jnp.float32)

        # ------------- fc: (Linear+Mish done above) -> Mish, Linear+Mish, Linear -------------
        h1 = _mish(h1_acc)
        h2 = _mish(jnp.dot(h1.astype(jnp.bfloat16), w2_ref[...],
                           preferred_element_type=jnp.float32) + b2_ref[...])
        out_ref[...] = (jnp.dot(h2.astype(jnp.bfloat16), w3_ref[...],
                                preferred_element_type=jnp.float32) + b3_ref[...])

    return kernel


# ---------------- Parameters (deterministic synthetic init, kernel-friendly layouts) ----------------
def init_params(key, vocab_size, E, n_filters, filter_sizes, output_dim):
    keys = iter(jax.random.split(key, 64))

    def nrm(shape, scale=0.1):
        return jax.random.normal(next(keys), shape, jnp.float32) * scale

    H = E
    params = {"emb": nrm((vocab_size, E), 1.0)}

    def fuse_bilstm_layer(in_dim):
        # Per-direction torch-style weights (pre-transposed to (In,4H)/(H,4H), gate order
        # i,f,g,o; bias = b_ih + b_hh combined), fused once on the host into the kernel layout.
        wih_f, whh_f, b_f = nrm((in_dim, 4 * H)), nrm((H, 4 * H)), nrm((1, 4 * H), 0.05)
        wih_b, whh_b, b_b = nrm((in_dim, 4 * H)), nrm((H, 4 * H)), nrm((1, 4 * H), 0.05)
        wih_cat = jnp.zeros((in_dim, 16 * H), jnp.float32)
        b_cat = jnp.zeros((1, 16 * H), jnp.float32)
        whh_cat = jnp.zeros((2 * H, 8 * H), jnp.float32)   # block-diag [[Wf,0],[0,Wb]], grouped
        for gi in range(4):
            s0, s1 = gi * H, (gi + 1) * H                  # source gate columns
            fd0, fd1 = 2 * gi * H, 2 * gi * H + H          # fwd lanes of gate gi
            bd0, bd1 = 2 * gi * H + H, 2 * (gi + 1) * H    # bwd lanes of gate gi
            wih_cat = wih_cat.at[:, fd0:fd1].set(wih_f[:, s0:s1])
            wih_cat = wih_cat.at[:, 8 * H + bd0:8 * H + bd1].set(wih_b[:, s0:s1])
            b_cat = b_cat.at[:, fd0:fd1].set(b_f[:, s0:s1])
            b_cat = b_cat.at[:, 8 * H + bd0:8 * H + bd1].set(b_b[:, s0:s1])
            whh_cat = whh_cat.at[0:H, fd0:fd1].set(whh_f[:, s0:s1])
            whh_cat = whh_cat.at[H:2 * H, bd0:bd1].set(whh_b[:, s0:s1])
        return wih_cat.astype(jnp.bfloat16), b_cat, whh_cat.astype(jnp.bfloat16)

    params["wih1"], params["bl1"], params["whh1"] = fuse_bilstm_layer(E)
    params["wih2"], params["bl2"], params["whh2"] = fuse_bilstm_layer(2 * E)

    params["wd"] = nrm((2 * E, E)).astype(jnp.bfloat16)
    params["bd"] = nrm((1, E), 0.05)

    # Conv1d weights in matmul layout: (fs*E, F) with row index k*E + e (from torch (F, E, fs)).
    convs = []
    for fs in filter_sizes:
        w_torch = nrm((n_filters, E, fs))
        wc_col = jnp.transpose(w_torch, (2, 1, 0)).reshape(fs * E, n_filters)
        convs.append((wc_col.astype(jnp.bfloat16), nrm((1, n_filters), 0.05)))
    params["convs"] = convs

    n_convs = len(filter_sizes)
    d_in, d_mid = n_convs * n_filters * 10, n_convs * n_filters
    # fc1 weight generated in torch-transposed layout (rows = torch flatten order ci*F*10+f*10+p),
    # then row-permuted once on the host to the kernel's order ci*10*F + p*F + f.
    w1_t = nrm((d_in, d_mid))
    w1p = jnp.transpose(
        w1_t.reshape(n_convs, n_filters, 10, d_mid), (0, 2, 1, 3)).reshape(d_in, d_mid)
    params["w1p"] = w1p.astype(jnp.bfloat16)
    params["b1"] = nrm((1, d_mid), 0.05)
    params["w2"] = nrm((d_mid, d_mid // 2)).astype(jnp.bfloat16)
    params["b2"] = nrm((1, d_mid // 2), 0.05)
    params["w3"] = nrm((d_mid // 2, output_dim)).astype(jnp.bfloat16)
    params["b3"] = nrm((1, output_dim), 0.05)
    return params


@jax.jit
def rcnn_forward(params, data):
    B, L = data.shape
    E = params["emb"].shape[1]
    n_filters = params["convs"][0][0].shape[1]
    filter_sizes = tuple(int(wc.shape[0]) // E for wc, _ in params["convs"])
    out_dim = params["b3"].shape[1]
    # torch fc1 input size assumes exactly 10 pool windows; as in the torch model this
    # effectively requires floor(L / (L // 10)) == 10.  We require L % 10 == 0.
    assert L % 10 == 0, "sequence length must be a multiple of 10 (10 pool windows)"

    # TODO(synk): embedding gather + time-major transpose kept as XLA glue (could move in-kernel
    # via an SMEM index input + dynamic row loads); v7x dual-TensorCore direction split not done.
    x = params["emb"][data]                                            # (B, L, E)
    x2d = jnp.transpose(x, (1, 0, 2)).reshape(L * B, E).astype(jnp.bfloat16)  # rows t*B + b

    conv_flat = [a for pair in params["convs"] for a in pair]
    args = ([x2d,
             params["wih1"], params["bl1"], params["whh1"],
             params["wih2"], params["bl2"], params["whh2"],
             params["wd"], params["bd"]] + conv_flat +
            [params["w1p"], params["b1"], params["w2"], params["b2"],
             params["w3"], params["b3"]])

    kernel = _make_rcnn_kernel(B, L, E, filter_sizes, n_filters)
    return pl.pallas_call(
        kernel,
        out_shape=jax.ShapeDtypeStruct((B, out_dim), jnp.float32),
        in_specs=[VMEM] * len(args),
        out_specs=VMEM,
        scratch_shapes=[
            pltpu.VMEM((L * B, 16 * E), jnp.float32),  # fused x@W_ih gates (both dirs), reused
            pltpu.VMEM((L * B, 2 * E), jnp.float32),   # layer-1 per-timestep [h_fwd | h_bwd]
            pltpu.VMEM((L * B, 2 * E), jnp.float32),   # layer-2 per-timestep [h_fwd | h_bwd]
        ],
    )(*args)


if __name__ == "__main__":
    vocab_size, E, n_filters, output_dim = 50, 16, 8, 4
    filter_sizes = (3, 5)
    B, L = 2, 20   # L multiple of 10 so max_pool1d yields exactly 10 windows (as fc expects)

    key = jax.random.PRNGKey(0)
    pkey, dkey = jax.random.split(key)
    params = init_params(pkey, vocab_size, E, n_filters, filter_sizes, output_dim)
    data = jax.random.randint(dkey, (B, L), 0, vocab_size, dtype=jnp.int32)

    out = rcnn_forward(params, data)
    jax.block_until_ready(out)
    assert out.shape == (B, output_dim) and out.dtype == jnp.float32
    print("KERNEL_OK")
</pallas_src>

<mosaic_0001>
module attributes {stable_mosaic.version = 11 : i64} {
  func.func @kernel(%arg0: memref<40x16xbf16, #tpu.memory_space<vmem>>, %arg1: memref<16x256xbf16, #tpu.memory_space<vmem>>, %arg2: memref<1x256xf32, #tpu.memory_space<vmem>>, %arg3: memref<32x128xbf16, #tpu.memory_space<vmem>>, %arg4: memref<32x256xbf16, #tpu.memory_space<vmem>>, %arg5: memref<1x256xf32, #tpu.memory_space<vmem>>, %arg6: memref<32x128xbf16, #tpu.memory_space<vmem>>, %arg7: memref<32x16xbf16, #tpu.memory_space<vmem>>, %arg8: memref<1x16xf32, #tpu.memory_space<vmem>>, %arg9: memref<48x8xbf16, #tpu.memory_space<vmem>>, %arg10: memref<1x8xf32, #tpu.memory_space<vmem>>, %arg11: memref<80x8xbf16, #tpu.memory_space<vmem>>, %arg12: memref<1x8xf32, #tpu.memory_space<vmem>>, %arg13: memref<160x16xbf16, #tpu.memory_space<vmem>>, %arg14: memref<1x16xf32, #tpu.memory_space<vmem>>, %arg15: memref<16x8xbf16, #tpu.memory_space<vmem>>, %arg16: memref<1x8xf32, #tpu.memory_space<vmem>>, %arg17: memref<8x4xbf16, #tpu.memory_space<vmem>>, %arg18: memref<1x4xf32, #tpu.memory_space<vmem>>, %arg19: memref<2x4xf32, #tpu.memory_space<vmem>>, %arg20: memref<40x256xf32, #tpu.memory_space<vmem>>, %arg21: memref<40x32xf32, #tpu.memory_space<vmem>>, %arg22: memref<40x32xf32, #tpu.memory_space<vmem>>) attributes {dimension_semantics = [], scalar_prefetch = 0 : i64, scratch_operands = 3 : i64, tpu.core_type = #tpu.core_type<tc>} {
    %c0 = arith.constant 0 : index
    %c0_0 = arith.constant 0 : index
    %0 = vector.load %arg0[%c0, %c0_0] : memref<40x16xbf16, #tpu.memory_space<vmem>>, vector<40x16xbf16>
    %c0_1 = arith.constant 0 : index
    %c0_2 = arith.constant 0 : index
    %1 = vector.load %arg1[%c0_1, %c0_2] : memref<16x256xbf16, #tpu.memory_space<vmem>>, vector<16x256xbf16>
    %cst = arith.constant dense<0.000000e+00> : vector<40x256xf32>
    %2 = tpu.matmul %0, %1, %cst {dimension_numbers = #tpu.dot_dimension_numbers<[1], [0], [0], [1], [0, 0, 1, 1], [], []>} : vector<40x16xbf16>, vector<16x256xbf16>, vector<40x256xf32> -> vector<40x256xf32>
    %c0_3 = arith.constant 0 : index
    %c0_4 = arith.constant 0 : index
    %3 = vector.load %arg2[%c0_3, %c0_4] : memref<1x256xf32, #tpu.memory_space<vmem>>, vector<1x256xf32>
    %4 = vector.broadcast %3 : vector<1x256xf32> to vector<40x256xf32>
    %5 = arith.addf %2, %4 : vector<40x256xf32>
    %c0_5 = arith.constant 0 : index
    %c0_6 = arith.constant 0 : index
    %6 = vector.load %arg20[%c0_5, %c0_6] : memref<40x256xf32, #tpu.memory_space<vmem>>, vector<40x256xf32>
    tpu.vector_store %arg20[%c0_5, %c0_6], %5 {strides = array<i32>} : memref<40x256xf32, #tpu.memory_space<vmem>>, vector<40x256xf32>,
    %c0_7 = arith.constant 0 : index
    %c0_8 = arith.constant 0 : index
    %7 = vector.load %arg3[%c0_7, %c0_8] : memref<32x128xbf16, #tpu.memory_space<vmem>>, vector<32x128xbf16>
    %cst_9 = arith.constant 0.000000e+00 : f32
    %8 = vector.broadcast %cst_9 : f32 to vector<2x32xf32>
    %cst_10 = arith.constant 0.000000e+00 : f32
    %9 = vector.broadcast %cst_10 : f32 to vector<2x32xf32>
    %10 = arith.truncf %8 : vector<2x32xf32> to vector<2x32xbf16>
    %cst_11 = arith.constant dense<0.000000e+00> : vector<2x128xf32>
    %11 = tpu.matmul %10, %7, %cst_11 {dimension_numbers = #tpu.dot_dimension_numbers<[1], [0], [0], [1], [0, 0, 1, 1], [], []>} : vector<2x32xbf16>, vector<32x128xbf16>, vector<2x128xf32> -> vector<2x128xf32>
    %c0_12 = arith.constant 0 : index
    %c0_13 = arith.constant 0 : index
    %12 = vector.load %arg20[%c0_12, %c0_13] : memref<40x256xf32, #tpu.memory_space<vmem>>, vector<2x128xf32>
    %13 = arith.addf %11, %12 : vector<2x128xf32>
    %c38 = arith.constant 38 : index
    %c128 = arith.constant 128 : index
    %14 = vector.load %arg20[%c38, %c128] : memref<40x256xf32, #tpu.memory_space<vmem>>, vector<2x128xf32>
    %15 = arith.addf %13, %14 : vector<2x128xf32>
    %16 = vector.extract_strided_slice %15 {offsets = [0, 0], sizes = [2, 32], strides = [1, 1]} : vector<2x128xf32> to vector<2x32xf32>
    %17 = arith.negf %16 : vector<2x32xf32>
    %18 = math.exp %17 : vector<2x32xf32>
    %cst_14 = arith.constant 1.000000e+00 : f32
    %19 = vector.broadcast %cst_14 : f32 to vector<2x32xf32>
    %20 = arith.addf %19, %18 : vector<2x32xf32>
    %21 = arith.divf %19, %20 : vector<2x32xf32>
    %22 = vector.extract_strided_slice %15 {offsets = [0, 32], sizes = [2, 32], strides = [1, 1]} : vector<2x128xf32> to vector<2x32xf32>
    %23 = arith.negf %22 : vector<2x32xf32>
    %24 = math.exp %23 : vector<2x32xf32>
    %cst_15 = arith.constant 1.000000e+00 : f32
    %25 = vector.broadcast %cst_15 : f32 to vector<2x32xf32>
    %26 = arith.addf %25, %24 : vector<2x32xf32>
    %27 = arith.divf %25, %26 : vector<2x32xf32>
    %28 = vector.extract_strided_slice %15 {offsets = [0, 64], sizes = [2, 32], strides = [1, 1]} : vector<2x128xf32> to vector<2x32xf32>
    %29 = math.tanh %28 : vector<2x32xf32>
    %30 = vector.extract_strided_slice %15 {offsets = [0, 96], sizes = [2, 32], strides = [1, 1]} : vector<2x128xf32> to vector<2x32xf32>
    %31 = arith.negf %30 : vector<2x32xf32>
    %32 = math.exp %31 : vector<2x32xf32>
    %cst_16 = arith.constant 1.000000e+00 : f32
    %33 = vector.broadcast %cst_16 : f32 to vector<2x32xf32>
    %34 = arith.addf %33, %32 : vector<2x32xf32>
    %35 = arith.divf %33, %34 : vector<2x32xf32>
    %36 = arith.mulf %27, %9 : vector<2x32xf32>
    %37 = arith.mulf %21, %29 : vector<2x32xf32>
    %38 = arith.addf %36, %37 : vector<2x32xf32>
    %39 = math.tanh %38 : vector<2x32xf32>
    %40 = arith.mulf %35, %39 : vector<2x32xf32>
    %41 = vector.extract_strided_slice %40 {offsets = [0, 0], sizes = [2, 16], strides = [1, 1]} : vector<2x32xf32> to vector<2x16xf32>
    %42 = vector.extract_strided_slice %40 {offsets = [0, 16], sizes = [2, 16], strides = [1, 1]} : vector<2x32xf32> to vector<2x16xf32>
    %43 = arith.truncf %40 : vector<2x32xf32> to vector<2x32xbf16>
    %cst_17 = arith.constant dense<0.000000e+00> : vector<2x128xf32>
    %44 = tpu.matmul %43, %7, %cst_17 {dimension_numbers = #tpu.dot_dimension_numbers<[1], [0], [0], [1], [0, 0, 1, 1], [], []>} : vector<2x32xbf16>, vector<32x128xbf16>, vector<2x128xf32> -> vector<2x128xf32>
    %c2 = arith.constant 2 : index
    %c0_18 = arith.constant 0 : index
    %45 = vector.load %arg20[%c2, %c0_18] : memref<40x256xf32, #tpu.memory_space<vmem>>, vector<2x128xf32>
    %46 = arith.addf %44, %45 : vector<2x128xf32>
    %c36 = arith.constant 36 : index
    %c128_19 = arith.constant 128 : index
    %47 = vector.load %arg20[%c36, %c128_19] : memref<40x256xf32, #tpu.memory_space<vmem>>, vector<2x128xf32>
    %48 = arith.addf %46, %47 : vector<2x128xf32>
    %49 = vector.extract_strided_slice %48 {offsets = [0, 0], sizes = [2, 32], strides = [1, 1]} : vector<2x128xf32> to vector<2x32xf32>
    %50 = arith.negf %49 : vector<2x32xf32>
    %51 = math.exp %50 : vector<2x32xf32>
    %cst_20 = arith.constant 1.000000e+00 : f32
    %52 = vector.broadcast %cst_20 : f32 to vector<2x32xf32>
    %53 = arith.addf %52, %51 : vector<2x32xf32>
    %54 = arith.divf %52, %53 : vector<2x32xf32>
    %55 = vector.extract_strided_slice %48 {offsets = [0, 32], sizes = [2, 32], strides = [1, 1]} : vector<2x128xf32> to vector<2x32xf32>
    %56 = arith.negf %55 : vector<2x32xf32>
    %57 = math.exp %56 : vector<2x32xf32>
    %cst_21 = arith.constant 1.000000e+00 : f32
    %58 = vector.broadcast %cst_21 : f32 to vector<2x32xf32>
    %59 = arith.addf %58, %57 : vector<2x32xf32>
    %60 = arith.divf %58, %59 : vector<2x32xf32>
    %61 = vector.extract_strided_slice %48 {offsets = [0, 64], sizes = [2, 32], strides = [1, 1]} : vector<2x128xf32> to vector<2x32xf32>
    %62 = math.tanh %61 : vector<2x32xf32>
    %63 = vector.extract_strided_slice %48 {offsets = [0, 96], sizes = [2, 32], strides = [1, 1]} : vector<2x128xf32> to vector<2x32xf32>
    %64 = arith.negf %63 : vector<2x32xf32>
    %65 = math.exp %64 : vector<2x32xf32>
    %cst_22 = arith.constant 1.000000e+00 : f32
    %66 = vector.broadcast %cst_22 : f32 to vector<2x32xf32>
    %67 = arith.addf %66, %65 : vector<2x32xf32>
    %68 = arith.divf %66, %67 : vector<2x32xf32>
    %69 = arith.mulf %60, %38 : vector<2x32xf32>
    %70 = arith.mulf %54, %62 : vector<2x32xf32>
    %71 = arith.addf %69, %70 : vector<2x32xf32>
    %72 = math.tanh %71 : vector<2x32xf32>
    %73 = arith.mulf %68, %72 : vector<2x32xf32>
    %74 = vector.extract_strided_slice %73 {offsets = [0, 0], sizes = [2, 16], strides = [1, 1]} : vector<2x32xf32> to vector<2x16xf32>
    %75 = vector.extract_strided_slice %73 {offsets = [0, 16], sizes = [2, 16], strides = [1, 1]} : vector<2x32xf32> to vector<2x16xf32>
    %76 = arith.truncf %73 : vector<2x32xf32> to vector<2x32xbf16>
    %cst_23 = arith.constant dense<0.000000e+00> : vector<2x128xf32>
    %77 = tpu.matmul %76, %7, %cst_23 {dimension_numbers = #tpu.dot_dimension_numbers<[1], [0], [0], [1], [0, 0, 1, 1], [], []>} : vector<2x32xbf16>, vector<32x128xbf16>, vector<2x128xf32> -> vector<2x128xf32>
    %c4 = arith.constant 4 : index
    %c0_24 = arith.constant 0 : index
    %78 = vector.load %arg20[%c4, %c0_24] : memref<40x256xf32, #tpu.memory_space<vmem>>, vector<2x128xf32>
    %79 = arith.addf %77, %78 : vector<2x128xf32>
    %c34 = arith.constant 34 : index
    %c128_25 = arith.constant 128 : index
    %80 = vector.load %arg20[%c34, %c128_25] : memref<40x256xf32, #tpu.memory_space<vmem>>, vector<2x128xf32>
    %81 = arith.addf %79, %80 : vector<2x128xf32>
    %82 = vector.extract_strided_slice %81 {offsets = [0, 0], sizes = [2, 32], strides = [1, 1]} : vector<2x128xf32> to vector<2x32xf32>
    %83 = arith.negf %82 : vector<2x32xf32>
    %84 = math.exp %83 : vector<2x32xf32>
    %cst_26 = arith.constant 1.000000e+00 : f32
    %85 = vector.broadcast %cst_26 : f32 to vector<2x32xf32>
    %86 = arith.addf %85, %84 : vector<2x32xf32>
    %87 = arith.divf %85, %86 : vector<2x32xf32>
    %88 = vector.extract_strided_slice %81 {offsets = [0, 32], sizes = [2, 32], strides = [1, 1]} : vector<2x128xf32> to vector<2x32xf32>
    %89 = arith.negf %88 : vector<2x32xf32>
    %90 = math.exp %89 : vector<2x32xf32>
    %cst_27 = arith.constant 1.000000e+00 : f32
    %91 = vector.broadcast %cst_27 : f32 to vector<2x32xf32>
    %92 = arith.addf %91, %90 : vector<2x32xf32>
    %93 = arith.divf %91, %92 : vector<2x32xf32>
    %94 = vector.extract_strided_slice %81 {offsets = [0, 64], sizes = [2, 32], strides = [1, 1]} : vector<2x128xf32> to vector<2x32xf32>
    %95 = math.tanh %94 : vector<2x32xf32>
    %96 = vector.extract_strided_slice %81 {offsets = [0, 96], sizes = [2, 32], strides = [1, 1]} : vector<2x128xf32> to vector<2x32xf32>
    %97 = arith.negf %96 : vector<2x32xf32>
    %98 = math.exp %97 : vector<2x32xf32>
    %cst_28 = arith.constant 1.000000e+00 : f32
    %99 = vector.broadcast %cst_28 : f32 to vector<2x32xf32>
    %100 = arith.addf %99, %98 : vector<2x32xf32>
    %101 = arith.divf %99, %100 : vector<2x32xf32>
    %102 = arith.mulf %93, %71 : vector<2x32xf32>
    %103 = arith.mulf %87, %95 : vector<2x32xf32>
    %104 = arith.addf %102, %103 : vector<2x32xf32>
    %105 = math.tanh %104 : vector<2x32xf32>
    %106 = arith.mulf %101, %105 : vector<2x32xf32>
    %107 = vector.extract_strided_slice %106 {offsets = [0, 0], sizes = [2, 16], strides = [1, 1]} : vector<2x32xf32> to vector<2x16xf32>
    %108 = vector.extract_strided_slice %106 {offsets = [0, 16], sizes = [2, 16], strides = [1, 1]} : vector<2x32xf32> to vector<2x16xf32>
    %109 = arith.truncf %106 : vector<2x32xf32> to vector<2x32xbf16>
    %cst_29 = arith.constant dense<0.000000e+00> : vector<2x128xf32>
    %110 = tpu.matmul %109, %7, %cst_29 {dimension_numbers = #tpu.dot_dimension_numbers<[1], [0], [0], [1], [0, 0, 1, 1], [], []>} : vector<2x32xbf16>, vector<32x128xbf16>, vector<2x128xf32> -> vector<2x128xf32>
    %c6 = arith.constant 6 : index
    %c0_30 = arith.constant 0 : index
    %111 = vector.load %arg20[%c6, %c0_30] : memref<40x256xf32, #tpu.memory_space<vmem>>, vector<2x128xf32>
    %112 = arith.addf %110, %111 : vector<2x128xf32>
    %c32 = arith.constant 32 : index
    %c128_31 = arith.constant 128 : index
    %113 = vector.load %arg20[%c32, %c128_31] : memref<40x256xf32, #tpu.memory_space<vmem>>, vector<2x128xf32>
    %114 = arith.addf %112, %113 : vector<2x128xf32>
    %115 = vector.extract_strided_slice %114 {offsets = [0, 0], sizes = [2, 32], strides = [1, 1]} : vector<2x128xf32> to vector<2x32xf32>
    %116 = arith.negf %115 : vector<2x32xf32>
    %117 = math.exp %116 : vector<2x32xf32>
    %cst_32 = arith.constant 1.000000e+00 : f32
    %118 = vector.broadcast %cst_32 : f32 to vector<2x32xf32>
    %119 = arith.addf %118, %117 : vector<2x32xf32>
    %120 = arith.divf %118, %119 : vector<2x32xf32>
    %121 = vector.extract_strided_slice %114 {offsets = [0, 32], sizes = [2, 32], strides = [1, 1]} : vector<2x128xf32> to vector<2x32xf32>
    %122 = arith.negf %121 : vector<2x32xf32>
    %123 = math.exp %122 : vector<2x32xf32>
    %cst_33 = arith.constant 1.000000e+00 : f32
    %124 = vector.broadcast %cst_33 : f32 to vector<2x32xf32>
    %125 = arith.addf %124, %123 : vector<2x32xf32>
    %126 = arith.divf %124, %125 : vector<2x32xf32>
    %127 = vector.extract_strided_slice %114 {offsets = [0, 64], sizes = [2, 32], strides = [1, 1]} : vector<2x128xf32> to vector<2x32xf32>
    %128 = math.tanh %127 : vector<2x32xf32>
    %129 = vector.extract_strided_slice %114 {offsets = [0, 96], sizes = [2, 32], strides = [1, 1]} : vector<2x128xf32> to vector<2x32xf32>
    %130 = arith.negf %129 : vector<2x32xf32>
    %131 = math.exp %130 : vector<2x32xf32>
    %cst_34 = arith.constant 1.000000e+00 : f32
    %132 = vector.broadcast %cst_34 : f32 to vector<2x32xf32>
    %133 = arith.addf %132, %131 : vector<2x32xf32>
    %134 = arith.divf %132, %133 : vector<2x32xf32>
    %135 = arith.mulf %126, %104 : vector<2x32xf32>
    %136 = arith.mulf %120, %128 : vector<2x32xf32>
    %137 = arith.addf %135, %136 : vector<2x32xf32>
    %138 = math.tanh %137 : vector<2x32xf32>
    %139 = arith.mulf %134, %138 : vector<2x32xf32>
    %140 = vector.extract_strided_slice %139 {offsets = [0, 0], sizes = [2, 16], strides = [1, 1]} : vector<2x32xf32> to vector<2x16xf32>
    %141 = vector.extract_strided_slice %139 {offsets = [0, 16], sizes = [2, 16], strides = [1, 1]} : vector<2x32xf32> to vector<2x16xf32>
    %142 = tpu.concatenate %41, %74, %107, %140 in 0 : vector<2x16xf32>, vector<2x16xf32>, vector<2x16xf32>, vector<2x16xf32> -> vector<8x16xf32>
    %c0_35 = arith.constant 0 : index
    %c0_36 = arith.constant 0 : index
    %143 = vector.load %arg21[%c0_35, %c0_36] : memref<40x32xf32, #tpu.memory_space<vmem>>, vector<8x16xf32>
    tpu.vector_store %arg21[%c0_35, %c0_36], %142 {strides = array<i32>} : memref<40x32xf32, #tpu.memory_space<vmem>>, vector<8x16xf32>,
    %144 = tpu.concatenate %141, %108, %75, %42 in 0 : vector<2x16xf32>, vector<2x16xf32>, vector<2x16xf32>, vector<2x16xf32> -> vector<8x16xf32>
    %c32_37 = arith.constant 32 : index
    %c16 = arith.constant 16 : index
    %145 = vector.load %arg21[%c32_37, %c16] : memref<40x32xf32, #tpu.memory_space<vmem>>, vector<8x16xf32>
    tpu.vector_store %arg21[%c32_37, %c16], %144 {strides = array<i32>} : memref<40x32xf32, #tpu.memory_space<vmem>>, vector<8x16xf32>,
    %146 = arith.truncf %139 : vector<2x32xf32> to vector<2x32xbf16>
    %cst_38 = arith.constant dense<0.000000e+00> : vector<2x128xf32>
    %147 = tpu.matmul %146, %7, %cst_38 {dimension_numbers = #tpu.dot_dimension_numbers<[1], [0], [0], [1], [0, 0, 1, 1], [], []>} : vector<2x32xbf16>, vector<32x128xbf16>, vector<2x128xf32> -> vector<2x128xf32>
    %c8 = arith.constant 8 : index
    %c0_39 = arith.constant 0 : index
    %148 = vector.load %arg20[%c8, %c0_39] : memref<40x256xf32, #tpu.memory_space<vmem>>, vector<2x128xf32>
    %149 = arith.addf %147, %148 : vector<2x128xf32>
    %c30 = arith.constant 30 : index
    %c128_40 = arith.constant 128 : index
    %150 = vector.load %arg20[%c30, %c128_40] : memref<40x256xf32, #tpu.memory_space<vmem>>, vector<2x128xf32>
    %151 = arith.addf %149, %150 : vector<2x128xf32>
    %152 = vector.extract_strided_slice %151 {offsets = [0, 0], sizes = [2, 32], strides = [1, 1]} : vector<2x128xf32> to vector<2x32xf32>
    %153 = arith.negf %152 : vector<2x32xf32>
    %154 = math.exp %153 : vector<2x32xf32>
    %cst_41 = arith.constant 1.000000e+00 : f32
    %155 = vector.broadcast %cst_41 : f32 to vector<2x32xf32>
    %156 = arith.addf %155, %154 : vector<2x32xf32>
    %157 = arith.divf %155, %156 : vector<2x32xf32>
    %158 = vector.extract_strided_slice %151 {offsets = [0, 32], sizes = [2, 32], strides = [1, 1]} : vector<2x128xf32> to vector<2x32xf32>
    %159 = arith.negf %158 : vector<2x32xf32>
    %160 = math.exp %159 : vector<2x32xf32>
    %cst_42 = arith.constant 1.000000e+00 : f32
    %161 = vector.broadcast %cst_42 : f32 to vector<2x32xf32>
    %162 = arith.addf %161, %160 : vector<2x32xf32>
    %163 = arith.divf %161, %162 : vector<2x32xf32>
    %164 = vector.extract_strided_slice %151 {offsets = [0, 64], sizes = [2, 32], strides = [1, 1]} : vector<2x128xf32> to vector<2x32xf32>
    %165 = math.tanh %164 : vector<2x32xf32>
    %166 = vector.extract_strided_slice %151 {offsets = [0, 96], sizes = [2, 32], strides = [1, 1]} : vector<2x128xf32> to vector<2x32xf32>
    %167 = arith.negf %166 : vector<2x32xf32>
    %168 = math.exp %167 : vector<2x32xf32>
    %cst_43 = arith.constant 1.000000e+00 : f32
    %169 = vector.broadcast %cst_43 : f32 to vector<2x32xf32>
    %170 = arith.addf %169, %168 : vector<2x32xf32>
    %171 = arith.divf %169, %170 : vector<2x32xf32>
    %172 = arith.mulf %163, %137 : vector<2x32xf32>
    %173 = arith.mulf %157, %165 : vector<2x32xf32>
    %174 = arith.addf %172, %173 : vector<2x32xf32>
    %175 = math.tanh %174 : vector<2x32xf32>
    %176 = arith.mulf %171, %175 : vector<2x32xf32>
    %177 = vector.extract_strided_slice %176 {offsets = [0, 0], sizes = [2, 16], strides = [1, 1]} : vector<2x32xf32> to vector<2x16xf32>
    %178 = vector.extract_strided_slice %176 {offsets = [0, 16], sizes = [2, 16], strides = [1, 1]} : vector<2x32xf32> to vector<2x16xf32>
    %179 = arith.truncf %176 : vector<2x32xf32> to vector<2x32xbf16>
    %cst_44 = arith.constant dense<0.000000e+00> : vector<2x128xf32>
    %180 = tpu.matmul %179, %7, %cst_44 {dimension_numbers = #tpu.dot_dimension_numbers<[1], [0], [0], [1], [0, 0, 1, 1], [], []>} : vector<2x32xbf16>, vector<32x128xbf16>, vector<2x128xf32> -> vector<2x128xf32>
    %c10 = arith.constant 10 : index
    %c0_45 = arith.constant 0 : index
    %181 = vector.load %arg20[%c10, %c0_45] : memref<40x256xf32, #tpu.memory_space<vmem>>, vector<2x128xf32>
    %182 = arith.addf %180, %181 : vector<2x128xf32>
    %c28 = arith.constant 28 : index
    %c128_46 = arith.constant 128 : index
    %183 = vector.load %arg20[%c28, %c128_46] : memref<40x256xf32, #tpu.memory_space<vmem>>, vector<2x128xf32>
    %184 = arith.addf %182, %183 : vector<2x128xf32>
    %185 = vector.extract_strided_slice %184 {offsets = [0, 0], sizes = [2, 32], strides = [1, 1]} : vector<2x128xf32> to vector<2x32xf32>
    %186 = arith.negf %185 : vector<2x32xf32>
    %187 = math.exp %186 : vector<2x32xf32>
    %cst_47 = arith.constant 1.000000e+00 : f32
    %188 = vector.broadcast %cst_47 : f32 to vector<2x32xf32>
    %189 = arith.addf %188, %187 : vector<2x32xf32>
    %190 = arith.divf %188, %189 : vector<2x32xf32>
    %191 = vector.extract_strided_slice %184 {offsets = [0, 32], sizes = [2, 32], strides = [1, 1]} : vector<2x128xf32> to vector<2x32xf32>
    %192 = arith.negf %191 : vector<2x32xf32>
    %193 = math.exp %192 : vector<2x32xf32>
    %cst_48 = arith.constant 1.000000e+00 : f32
    %194 = vector.broadcast %cst_48 : f32 to vector<2x32xf32>
    %195 = arith.addf %194, %193 : vector<2x32xf32>
    %196 = arith.divf %194, %195 : vector<2x32xf32>
    %197 = vector.extract_strided_slice %184 {offsets = [0, 64], sizes = [2, 32], strides = [1, 1]} : vector<2x128xf32> to vector<2x32xf32>
    %198 = math.tanh %197 : vector<2x32xf32>
    %199 = vector.extract_strided_slice %184 {offsets = [0, 96], sizes = [2, 32], strides = [1, 1]} : vector<2x128xf32> to vector<2x32xf32>
    %200 = arith.negf %199 : vector<2x32xf32>
    %201 = math.exp %200 : vector<2x32xf32>
    %cst_49 = arith.constant 1.000000e+00 : f32
    %202 = vector.broadcast %cst_49 : f32 to vector<2x32xf32>
    %203 = arith.addf %202, %201 : vector<2x32xf32>
    %204 = arith.divf %202, %203 : vector<2x32xf32>
    %205 = arith.mulf %196, %174 : vector<2x32xf32>
    %206 = arith.mulf %190, %198 : vector<2x32xf32>
    %207 = arith.addf %205, %206 : vector<2x32xf32>
    %208 = math.tanh %207 : vector<2x32xf32>
    %209 = arith.mulf %204, %208 : vector<2x32xf32>
    %210 = vector.extract_strided_slice %209 {offsets = [0, 0], sizes = [2, 16], strides = [1, 1]} : vector<2x32xf32> to vector<2x16xf32>
    %211 = vector.extract_strided_slice %209 {offsets = [0, 16], sizes = [2, 16], strides = [1, 1]} : vector<2x32xf32> to vector<2x16xf32>
    %212 = arith.truncf %209 : vector<2x32xf32> to vector<2x32xbf16>
    %cst_50 = arith.constant dense<0.000000e+00> : vector<2x128xf32>
    %213 = tpu.matmul %212, %7, %cst_50 {dimension_numbers = #tpu.dot_dimension_numbers<[1], [0], [0], [1], [0, 0, 1, 1], [], []>} : vector<2x32xbf16>, vector<32x128xbf16>, vector<2x128xf32> -> vector<2x128xf32>
    %c12 = arith.constant 12 : index
    %c0_51 = arith.constant 0 : index
    %214 = vector.load %arg20[%c12, %c0_51] : memref<40x256xf32, #tpu.memory_space<vmem>>, vector<2x128xf32>
    %215 = arith.addf %213, %214 : vector<2x128xf32>
    %c26 = arith.constant 26 : index
    %c128_52 = arith.constant 128 : index
    %216 = vector.load %arg20[%c26, %c128_52] : memref<40x256xf32, #tpu.memory_space<vmem>>, vector<2x128xf32>
    %217 = arith.addf %215, %216 : vector<2x128xf32>
    %218 = vector.extract_strided_slice %217 {offsets = [0, 0], sizes = [2, 32], strides = [1, 1]} : vector<2x128xf32> to vector<2x32xf32>
    %219 = arith.negf %218 : vector<2x32xf32>
    %220 = math.exp %219 : vector<2x32xf32>
    %cst_53 = arith.constant 1.000000e+00 : f32
    %221 = vector.broadcast %cst_53 : f32 to vector<2x32xf32>
    %222 = arith.addf %221, %220 : vector<2x32xf32>
    %223 = arith.divf %221, %222 : vector<2x32xf32>
    %224 = vector.extract_strided_slice %217 {offsets = [0, 32], sizes = [2, 32], strides = [1, 1]} : vector<2x128xf32> to vector<2x32xf32>
    %225 = arith.negf %224 : vector<2x32xf32>
    %226 = math.exp %225 : vector<2x32xf32>
    %cst_54 = arith.constant 1.000000e+00 : f32
    %227 = vector.broadcast %cst_54 : f32 to vector<2x32xf32>
    %228 = arith.addf %227, %226 : vector<2x32xf32>
    %229 = arith.divf %227, %228 : vector<2x32xf32>
    %230 = vector.extract_strided_slice %217 {offsets = [0, 64], sizes = [2, 32], strides = [1, 1]} : vector<2x128xf32> to vector<2x32xf32>
    %231 = math.tanh %230 : vector<2x32xf32>
    %232 = vector.extract_strided_slice %217 {offsets = [0, 96], sizes = [2, 32], strides = [1, 1]} : vector<2x128xf32> to vector<2x32xf32>
    %233 = arith.negf %232 : vector<2x32xf32>
    %234 = math.exp %233 : vector<2x32xf32>
    %cst_55 = arith.constant 1.000000e+00 : f32
    %235 = vector.broadcast %cst_55 : f32 to vector<2x32xf32>
    %236 = arith.addf %235, %234 : vector<2x32xf32>
    %237 = arith.divf %235, %236 : vector<2x32xf32>
    %238 = arith.mulf %229, %207 : vector<2x32xf32>
    %239 = arith.mulf %223, %231 : vector<2x32xf32>
    %240 = arith.addf %238, %239 : vector<2x32xf32>
    %241 = math.tanh %240 : vector<2x32xf32>
    %242 = arith.mulf %237, %241 : vector<2x32xf32>
    %243 = vector.extract_strided_slice %242 {offsets = [0, 0], sizes = [2, 16], strides = [1, 1]} : vector<2x32xf32> to vector<2x16xf32>
    %244 = vector.extract_strided_slice %242 {offsets = [0, 16], sizes = [2, 16], strides = [1, 1]} : vector<2x32xf32> to vector<2x16xf32>
    %245 = arith.truncf %242 : vector<2x32xf32> to vector<2x32xbf16>
    %cst_56 = arith.constant dense<0.000000e+00> : vector<2x128xf32>
    %246 = tpu.matmul %245, %7, %cst_56 {dimension_numbers = #tpu.dot_dimension_numbers<[1], [0], [0], [1], [0, 0, 1, 1], [], []>} : vector<2x32xbf16>, vector<32x128xbf16>, vector<2x128xf32> -> vector<2x128xf32>
    %c14 = arith.constant 14 : index
    %c0_57 = arith.constant 0 : index
    %247 = vector.load %arg20[%c14, %c0_57] : memref<40x256xf32, #tpu.memory_space<vmem>>, vector<2x128xf32>
    %248 = arith.addf %246, %247 : vector<2x128xf32>
    %c24 = arith.constant 24 : index
    %c128_58 = arith.constant 128 : index
    %249 = vector.load %arg20[%c24, %c128_58] : memref<40x256xf32, #tpu.memory_space<vmem>>, vector<2x128xf32>
    %250 = arith.addf %248, %249 : vector<2x128xf32>
    %251 = vector.extract_strided_slice %250 {offsets = [0, 0], sizes = [2, 32], strides = [1, 1]} : vector<2x128xf32> to vector<2x32xf32>
    %252 = arith.negf %251 : vector<2x32xf32>
    %253 = math.exp %252 : vector<2x32xf32>
    %cst_59 = arith.constant 1.000000e+00 : f32
    %254 = vector.broadcast %cst_59 : f32 to vector<2x32xf32>
    %255 = arith.addf %254, %253 : vector<2x32xf32>
    %256 = arith.divf %254, %255 : vector<2x32xf32>
    %257 = vector.extract_strided_slice %250 {offsets = [0, 32], sizes = [2, 32], strides = [1, 1]} : vector<2x128xf32> to vector<2x32xf32>
    %258 = arith.negf %257 : vector<2x32xf32>
    %259 = math.exp %258 : vector<2x32xf32>
    %cst_60 = arith.constant 1.000000e+00 : f32
    %260 = vector.broadcast %cst_60 : f32 to vector<2x32xf32>
    %261 = arith.addf %260, %259 : vector<2x32xf32>
    %262 = arith.divf %260, %261 : vector<2x32xf32>
    %263 = vector.extract_strided_slice %250 {offsets = [0, 64], sizes = [2, 32], strides = [1, 1]} : vector<2x128xf32> to vector<2x32xf32>
    %264 = math.tanh %263 : vector<2x32xf32>
    %265 = vector.extract_strided_slice %250 {offsets = [0, 96], sizes = [2, 32], strides = [1, 1]} : vector<2x128xf32> to vector<2x32xf32>
    %266 = arith.negf %265 : vector<2x32xf32>
    %267 = math.exp %266 : vector<2x32xf32>
    %cst_61 = arith.constant 1.000000e+00 : f32
    %268 = vector.broadcast %cst_61 : f32 to vector<2x32xf32>
    %269 = arith.addf %268, %267 : vector<2x32xf32>
    %270 = arith.divf %268, %269 : vector<2x32xf32>
    %271 = arith.mulf %262, %240 : vector<2x32xf32>
    %272 = arith.mulf %256, %264 : vector<2x32xf32>
    %273 = arith.addf %271, %272 : vector<2x32xf32>
    %274 = math.tanh %273 : vector<2x32xf32>
    %275 = arith.mulf %270, %274 : vector<2x32xf32>
    %276 = vector.extract_strided_slice %275 {offsets = [0, 0], sizes = [2, 16], strides = [1, 1]} : vector<2x32xf32> to vector<2x16xf32>
    %277 = vector.extract_strided_slice %275 {offsets = [0, 16], sizes = [2, 16], strides = [1, 1]} : vector<2x32xf32> to vector<2x16xf32>
    %278 = tpu.concatenate %177, %210, %243, %276 in 0 : vector<2x16xf32>, vector<2x16xf32>, vector<2x16xf32>, vector<2x16xf32> -> vector<8x16xf32>
    %c8_62 = arith.constant 8 : index
    %c0_63 = arith.constant 0 : index
    %279 = vector.load %arg21[%c8_62, %c0_63] : memref<40x32xf32, #tpu.memory_space<vmem>>, vector<8x16xf32>
    tpu.vector_store %arg21[%c8_62, %c0_63], %278 {strides = array<i32>} : memref<40x32xf32, #tpu.memory_space<vmem>>, vector<8x16xf32>,
    %280 = tpu.concatenate %277, %244, %211, %178 in 0 : vector<2x16xf32>, vector<2x16xf32>, vector<2x16xf32>, vector<2x16xf32> -> vector<8x16xf32>
    %c24_64 = arith.constant 24 : index
    %c16_65 = arith.constant 16 : index
    %281 = vector.load %arg21[%c24_64, %c16_65] : memref<40x32xf32, #tpu.memory_space<vmem>>, vector<8x16xf32>
    tpu.vector_store %arg21[%c24_64, %c16_65], %280 {strides = array<i32>} : memref<40x32xf32, #tpu.memory_space<vmem>>, vector<8x16xf32>,
    %282 = arith.truncf %275 : vector<2x32xf32> to vector<2x32xbf16>
    %cst_66 = arith.constant dense<0.000000e+00> : vector<2x128xf32>
    %283 = tpu.matmul %282, %7, %cst_66 {dimension_numbers = #tpu.dot_dimension_numbers<[1], [0], [0], [1], [0, 0, 1, 1], [], []>} : vector<2x32xbf16>, vector<32x128xbf16>, vector<2x128xf32> -> vector<2x128xf32>
    %c16_67 = arith.constant 16 : index
    %c0_68 = arith.constant 0 : index
    %284 = vector.load %arg20[%c16_67, %c0_68] : memref<40x256xf32, #tpu.memory_space<vmem>>, vector<2x128xf32>
    %285 = arith.addf %283, %284 : vector<2x128xf32>
    %c22 = arith.constant 22 : index
    %c128_69 = arith.constant 128 : index
    %286 = vector.load %arg20[%c22, %c128_69] : memref<40x256xf32, #tpu.memory_space<vmem>>, vector<2x128xf32>
    %287 = arith.addf %285, %286 : vector<2x128xf32>
    %288 = vector.extract_strided_slice %287 {offsets = [0, 0], sizes = [2, 32], strides = [1, 1]} : vector<2x128xf32> to vector<2x32xf32>
    %289 = arith.negf %288 : vector<2x32xf32>
    %290 = math.exp %289 : vector<2x32xf32>
    %cst_70 = arith.constant 1.000000e+00 : f32
    %291 = vector.broadcast %cst_70 : f32 to vector<2x32xf32>
    %292 = arith.addf %291, %290 : vector<2x32xf32>
    %293 = arith.divf %291, %292 : vector<2x32xf32>
    %294 = vector.extract_strided_slice %287 {offsets = [0, 32], sizes = [2, 32], strides = [1, 1]} : vector<2x128xf32> to vector<2x32xf32>
    %295 = arith.negf %294 : vector<2x32xf32>
    %296 = math.exp %295 : vector<2x32xf32>
    %cst_71 = arith.constant 1.000000e+00 : f32
    %297 = vector.broadcast %cst_71 : f32 to vector<2x32xf32>
    %298 = arith.addf %297, %296 : vector<2x32xf32>
    %299 = arith.divf %297, %298 : vector<2x32xf32>
    %300 = vector.extract_strided_slice %287 {offsets = [0, 64], sizes = [2, 32], strides = [1, 1]} : vector<2x128xf32> to vector<2x32xf32>
    %301 = math.tanh %300 : vector<2x32xf32>
    %302 = vector.extract_strided_slice %287 {offsets = [0, 96], sizes = [2, 32], strides = [1, 1]} : vector<2x128xf32> to vector<2x32xf32>
    %303 = arith.negf %302 : vector<2x32xf32>
    %304 = math.exp %303 : vector<2x32xf32>
    %cst_72 = arith.constant 1.000000e+00 : f32
    %305 = vector.broadcast %cst_72 : f32 to vector<2x32xf32>
    %306 = arith.addf %305, %304 : vector<2x32xf32>
    %307 = arith.divf %305, %306 : vector<2x32xf32>
    %308 = arith.mulf %299, %273 : vector<2x32xf32>
    %309 = arith.mulf %293, %301 : vector<2x32xf32>
    %310 = arith.addf %308, %309 : vector<2x32xf32>
    %311 = math.tanh %310 : vector<2x32xf32>
    %312 = arith.mulf %307, %311 : vector<2x32xf32>
    %313 = vector.extract_strided_slice %312 {offsets = [0, 0], sizes = [2, 16], strides = [1, 1]} : vector<2x32xf32> to vector<2x16xf32>
    %314 = vector.extract_strided_slice %312 {offsets = [0, 16], sizes = [2, 16], strides = [1, 1]} : vector<2x32xf32> to vector<2x16xf32>
    %315 = arith.truncf %312 : vector<2x32xf32> to vector<2x32xbf16>
    %cst_73 = arith.constant dense<0.000000e+00> : vector<2x128xf32>
    %316 = tpu.matmul %315, %7, %cst_73 {dimension_numbers = #tpu.dot_dimension_numbers<[1], [0], [0], [1], [0, 0, 1, 1], [], []>} : vector<2x32xbf16>, vector<32x128xbf16>, vector<2x128xf32> -> vector<2x128xf32>
    %c18 = arith.constant 18 : index
    %c0_74 = arith.constant 0 : index
    %317 = vector.load %arg20[%c18, %c0_74] : memref<40x256xf32, #tpu.memory_space<vmem>>, vector<2x128xf32>
    %318 = arith.addf %316, %317 : vector<2x128xf32>
    %c20 = arith.constant 20 : index
    %c128_75 = arith.constant 128 : index
    %319 = vector.load %arg20[%c20, %c128_75] : memref<40x256xf32, #tpu.memory_space<vmem>>, vector<2x128xf32>
    %320 = arith.addf %318, %319 : vector<2x128xf32>
    %321 = vector.extract_strided_slice %320 {offsets = [0, 0], sizes = [2, 32], strides = [1, 1]} : vector<2x128xf32> to vector<2x32xf32>
    %322 = arith.negf %321 : vector<2x32xf32>
    %323 = math.exp %322 : vector<2x32xf32>
    %cst_76 = arith.constant 1.000000e+00 : f32
    %324 = vector.broadcast %cst_76 : f32 to vector<2x32xf32>
    %325 = arith.addf %324, %323 : vector<2x32xf32>
    %326 = arith.divf %324, %325 : vector<2x32xf32>
    %327 = vector.extract_strided_slice %320 {offsets = [0, 32], sizes = [2, 32], strides = [1, 1]} : vector<2x128xf32> to vector<2x32xf32>
    %328 = arith.negf %327 : vector<2x32xf32>
    %329 = math.exp %328 : vector<2x32xf32>
    %cst_77 = arith.constant 1.000000e+00 : f32
    %330 = vector.broadcast %cst_77 : f32 to vector<2x32xf32>
    %331 = arith.addf %330, %329 : vector<2x32xf32>
    %332 = arith.divf %330, %331 : vector<2x32xf32>
    %333 = vector.extract_strided_slice %320 {offsets = [0, 64], sizes = [2, 32], strides = [1, 1]} : vector<2x128xf32> to vector<2x32xf32>
    %334 = math.tanh %333 : vector<2x32xf32>
    %335 = vector.extract_strided_slice %320 {offsets = [0, 96], sizes = [2, 32], strides = [1, 1]} : vector<2x128xf32> to vector<2x32xf32>
    %336 = arith.negf %335 : vector<2x32xf32>
    %337 = math.exp %336 : vector<2x32xf32>
    %cst_78 = arith.constant 1.000000e+00 : f32
    %338 = vector.broadcast %cst_78 : f32 to vector<2x32xf32>
    %339 = arith.addf %338, %337 : vector<2x32xf32>
    %340 = arith.divf %338, %339 : vector<2x32xf32>
    %341 = arith.mulf %332, %310 : vector<2x32xf32>
    %342 = arith.mulf %326, %334 : vector<2x32xf32>
    %343 = arith.addf %341, %342 : vector<2x32xf32>
    %344 = math.tanh %343 : vector<2x32xf32>
    %345 = arith.mulf %340, %344 : vector<2x32xf32>
    %346 = vector.extract_strided_slice %345 {offsets = [0, 0], sizes = [2, 16], strides = [1, 1]} : vector<2x32xf32> to vector<2x16xf32>
    %347 = vector.extract_strided_slice %345 {offsets = [0, 16], sizes = [2, 16], strides = [1, 1]} : vector<2x32xf32> to vector<2x16xf32>
    %348 = arith.truncf %345 : vector<2x32xf32> to vector<2x32xbf16>
    %cst_79 = arith.constant dense<0.000000e+00> : vector<2x128xf32>
    %349 = tpu.matmul %348, %7, %cst_79 {dimension_numbers = #tpu.dot_dimension_numbers<[1], [0], [0], [1], [0, 0, 1, 1], [], []>} : vector<2x32xbf16>, vector<32x128xbf16>, vector<2x128xf32> -> vector<2x128xf32>
    %c20_80 = arith.constant 20 : index
    %c0_81 = arith.constant 0 : index
    %350 = vector.load %arg20[%c20_80, %c0_81] : memref<40x256xf32, #tpu.memory_space<vmem>>, vector<2x128xf32>
    %351 = arith.addf %349, %350 : vector<2x128xf32>
    %c18_82 = arith.constant 18 : index
    %c128_83 = arith.constant 128 : index
    %352 = vector.load %arg20[%c18_82, %c128_83] : memref<40x256xf32, #tpu.memory_space<vmem>>, vector<2x128xf32>
    %353 = arith.addf %351, %352 : vector<2x128xf32>
    %354 = vector.extract_strided_slice %353 {offsets = [0, 0], sizes = [2, 32], strides = [1, 1]} : vector<2x128xf32> to vector<2x32xf32>
    %355 = arith.negf %354 : vector<2x32xf32>
    %356 = math.exp %355 : vector<2x32xf32>
    %cst_84 = arith.constant 1.000000e+00 : f32
    %357 = vector.broadcast %cst_84 : f32 to vector<2x32xf32>
    %358 = arith.addf %357, %356 : vector<2x32xf32>
    %359 = arith.divf %357, %358 : vector<2x32xf32>
    %360 = vector.extract_strided_slice %353 {offsets = [0, 32], sizes = [2, 32], strides = [1, 1]} : vector<2x128xf32> to vector<2x32xf32>
    %361 = arith.negf %360 : vector<2x32xf32>
    %362 = math.exp %361 : vector<2x32xf32>
    %cst_85 = arith.constant 1.000000e+00 : f32
    %363 = vector.broadcast %cst_85 : f32 to vector<2x32xf32>
    %364 = arith.addf %363, %362 : vector<2x32xf32>
    %365 = arith.divf %363, %364 : vector<2x32xf32>
    %366 = vector.extract_strided_slice %353 {offsets = [0, 64], sizes = [2, 32], strides = [1, 1]} : vector<2x128xf32> to vector<2x32xf32>
    %367 = math.tanh %366 : vector<2x32xf32>
    %368 = vector.extract_strided_slice %353 {offsets = [0, 96], sizes = [2, 32], strides = [1, 1]} : vector<2x128xf32> to vector<2x32xf32>
    %369 = arith.negf %368 : vector<2x32xf32>
    %370 = math.exp %369 : vector<2x32xf32>
    %cst_86 = arith.constant 1.000000e+00 : f32
    %371 = vector.broadcast %cst_86 : f32 to vector<2x32xf32>
    %372 = arith.addf %371, %370 : vector<2x32xf32>
    %373 = arith.divf %371, %372 : vector<2x32xf32>
    %374 = arith.mulf %365, %343 : vector<2x32xf32>
    %375 = arith.mulf %359, %367 : vector<2x32xf32>
    %376 = arith.addf %374, %375 : vector<2x32xf32>
    %377 = math.tanh %376 : vector<2x32xf32>
    %378 = arith.mulf %373, %377 : vector<2x32xf32>
    %379 = vector.extract_strided_slice %378 {offsets = [0, 0], sizes = [2, 16], strides = [1, 1]} : vector<2x32xf32> to vector<2x16xf32>
    %380 = vector.extract_strided_slice %378 {offsets = [0, 16], sizes = [2, 16], strides = [1, 1]} : vector<2x32xf32> to vector<2x16xf32>
    %381 = arith.truncf %378 : vector<2x32xf32> to vector<2x32xbf16>
    %cst_87 = arith.constant dense<0.000000e+00> : vector<2x128xf32>
    %382 = tpu.matmul %381, %7, %cst_87 {dimension_numbers = #tpu.dot_dimension_numbers<[1], [0], [0], [1], [0, 0, 1, 1], [], []>} : vector<2x32xbf16>, vector<32x128xbf16>, vector<2x128xf32> -> vector<2x128xf32>
    %c22_88 = arith.constant 22 : index
    %c0_89 = arith.constant 0 : index
    %383 = vector.load %arg20[%c22_88, %c0_89] : memref<40x256xf32, #tpu.memory_space<vmem>>, vector<2x128xf32>
    %384 = arith.addf %382, %383 : vector<2x128xf32>
    %c16_90 = arith.constant 16 : index
    %c128_91 = arith.constant 128 : index
    %385 = vector.load %arg20[%c16_90, %c128_91] : memref<40x256xf32, #tpu.memory_space<vmem>>, vector<2x128xf32>
    %386 = arith.addf %384, %385 : vector<2x128xf32>
    %387 = vector.extract_strided_slice %386 {offsets = [0, 0], sizes = [2, 32], strides = [1, 1]} : vector<2x128xf32> to vector<2x32xf32>
    %388 = arith.negf %387 : vector<2x32xf32>
    %389 = math.exp %388 : vector<2x32xf32>
    %cst_92 = arith.constant 1.000000e+00 : f32
    %390 = vector.broadcast %cst_92 : f32 to vector<2x32xf32>
    %391 = arith.addf %390, %389 : vector<2x32xf32>
    %392 = arith.divf %390, %391 : vector<2x32xf32>
    %393 = vector.extract_strided_slice %386 {offsets = [0, 32], sizes = [2, 32], strides = [1, 1]} : vector<2x128xf32> to vector<2x32xf32>
    %394 = arith.negf %393 : vector<2x32xf32>
    %395 = math.exp %394 : vector<2x32xf32>
    %cst_93 = arith.constant 1.000000e+00 : f32
    %396 = vector.broadcast %cst_93 : f32 to vector<2x32xf32>
    %397 = arith.addf %396, %395 : vector<2x32xf32>
    %398 = arith.divf %396, %397 : vector<2x32xf32>
    %399 = vector.extract_strided_slice %386 {offsets = [0, 64], sizes = [2, 32], strides = [1, 1]} : vector<2x128xf32> to vector<2x32xf32>
    %400 = math.tanh %399 : vector<2x32xf32>
    %401 = vector.extract_strided_slice %386 {offsets = [0, 96], sizes = [2, 32], strides = [1, 1]} : vector<2x128xf32> to vector<2x32xf32>
    %402 = arith.negf %401 : vector<2x32xf32>
    %403 = math.exp %402 : vector<2x32xf32>
    %cst_94 = arith.constant 1.000000e+00 : f32
    %404 = vector.broadcast %cst_94 : f32 to vector<2x32xf32>
    %405 = arith.addf %404, %403 : vector<2x32xf32>
    %406 = arith.divf %404, %405 : vector<2x32xf32>
    %407 = arith.mulf %398, %376 : vector<2x32xf32>
    %408 = arith.mulf %392, %400 : vector<2x32xf32>
    %409 = arith.addf %407, %408 : vector<2x32xf32>
    %410 = math.tanh %409 : vector<2x32xf32>
    %411 = arith.mulf %406, %410 : vector<2x32xf32>
    %412 = vector.extract_strided_slice %411 {offsets = [0, 0], sizes = [2, 16], strides = [1, 1]} : vector<2x32xf32> to vector<2x16xf32>
    %413 = vector.extract_strided_slice %411 {offsets = [0, 16], sizes = [2, 16], strides = [1, 1]} : vector<2x32xf32> to vector<2x16xf32>
    %414 = tpu.concatenate %313, %346, %379, %412 in 0 : vector<2x16xf32>, vector<2x16xf32>, vector<2x16xf32>, vector<2x16xf32> -> vector<8x16xf32>
    %c16_95 = arith.constant 16 : index
    %c0_96 = arith.constant 0 : index
    %415 = vector.load %arg21[%c16_95, %c0_96] : memref<40x32xf32, #tpu.memory_space<vmem>>, vector<8x16xf32>
    tpu.vector_store %arg21[%c16_95, %c0_96], %414 {strides = array<i32>} : memref<40x32xf32, #tpu.memory_space<vmem>>, vector<8x16xf32>,
    %416 = tpu.concatenate %413, %380, %347, %314 in 0 : vector<2x16xf32>, vector<2x16xf32>, vector<2x16xf32>, vector<2x16xf32> -> vector<8x16xf32>
    %c16_97 = arith.constant 16 : index
    %c16_98 = arith.constant 16 : index
    %417 = vector.load %arg21[%c16_97, %c16_98] : memref<40x32xf32, #tpu.memory_space<vmem>>, vector<8x16xf32>
    tpu.vector_store %arg21[%c16_97, %c16_98], %416 {strides = array<i32>} : memref<40x32xf32, #tpu.memory_space<vmem>>, vector<8x16xf32>,
    %418 = arith.truncf %411 : vector<2x32xf32> to vector<2x32xbf16>
    %cst_99 = arith.constant dense<0.000000e+00> : vector<2x128xf32>
    %419 = tpu.matmul %418, %7, %cst_99 {dimension_numbers = #tpu.dot_dimension_numbers<[1], [0], [0], [1], [0, 0, 1, 1], [], []>} : vector<2x32xbf16>, vector<32x128xbf16>, vector<2x128xf32> -> vector<2x128xf32>
    %c24_100 = arith.constant 24 : index
    %c0_101 = arith.constant 0 : index
    %420 = vector.load %arg20[%c24_100, %c0_101] : memref<40x256xf32, #tpu.memory_space<vmem>>, vector<2x128xf32>
    %421 = arith.addf %419, %420 : vector<2x128xf32>
    %c14_102 = arith.constant 14 : index
    %c128_103 = arith.constant 128 : index
    %422 = vector.load %arg20[%c14_102, %c128_103] : memref<40x256xf32, #tpu.memory_space<vmem>>, vector<2x128xf32>
    %423 = arith.addf %421, %422 : vector<2x128xf32>
    %424 = vector.extract_strided_slice %423 {offsets = [0, 0], sizes = [2, 32], strides = [1, 1]} : vector<2x128xf32> to vector<2x32xf32>
    %425 = arith.negf %424 : vector<2x32xf32>
    %426 = math.exp %425 : vector<2x32xf32>
    %cst_104 = arith.constant 1.000000e+00 : f32
    %427 = vector.broadcast %cst_104 : f32 to vector<2x32xf32>
    %428 = arith.addf %427, %426 : vector<2x32xf32>
    %429 = arith.divf %427, %428 : vector<2x32xf32>
    %430 = vector.extract_strided_slice %423 {offsets = [0, 32], sizes = [2, 32], strides = [1, 1]} : vector<2x128xf32> to vector<2x32xf32>
    %431 = arith.negf %430 : vector<2x32xf32>
    %432 = math.exp %431 : vector<2x32xf32>
    %cst_105 = arith.constant 1.000000e+00 : f32
    %433 = vector.broadcast %cst_105 : f32 to vector<2x32xf32>
    %434 = arith.addf %433, %432 : vector<2x32xf32>
    %435 = arith.divf %433, %434 : vector<2x32xf32>
    %436 = vector.extract_strided_slice %423 {offsets = [0, 64], sizes = [2, 32], strides = [1, 1]} : vector<2x128xf32> to vector<2x32xf32>
    %437 = math.tanh %436 : vector<2x32xf32>
    %438 = vector.extract_strided_slice %423 {offsets = [0, 96], sizes = [2, 32], strides = [1, 1]} : vector<2x128xf32> to vector<2x32xf32>
    %439 = arith.negf %438 : vector<2x32xf32>
    %440 = math.exp %439 : vector<2x32xf32>
    %cst_106 = arith.constant 1.000000e+00 : f32
    %441 = vector.broadcast %cst_106 : f32 to vector<2x32xf32>
    %442 = arith.addf %441, %440 : vector<2x32xf32>
    %443 = arith.divf %441, %442 : vector<2x32xf32>
    %444 = arith.mulf %435, %409 : vector<2x32xf32>
    %445 = arith.mulf %429, %437 : vector<2x32xf32>
    %446 = arith.addf %444, %445 : vector<2x32xf32>
    %447 = math.tanh %446 : vector<2x32xf32>
    %448 = arith.mulf %443, %447 : vector<2x32xf32>
    %449 = vector.extract_strided_slice %448 {offsets = [0, 0], sizes = [2, 16], strides = [1, 1]} : vector<2x32xf32> to vector<2x16xf32>
    %450 = vector.extract_strided_slice %448 {offsets = [0, 16], sizes = [2, 16], strides = [1, 1]} : vector<2x32xf32> to vector<2x16xf32>
    %451 = arith.truncf %448 : vector<2x32xf32> to vector<2x32xbf16>
    %cst_107 = arith.constant dense<0.000000e+00> : vector<2x128xf32>
    %452 = tpu.matmul %451, %7, %cst_107 {dimension_numbers = #tpu.dot_dimension_numbers<[1], [0], [0], [1], [0, 0, 1, 1], [], []>} : vector<2x32xbf16>, vector<32x128xbf16>, vector<2x128xf32> -> vector<2x128xf32>
    %c26_108 = arith.constant 26 : index
    %c0_109 = arith.constant 0 : index
    %453 = vector.load %arg20[%c26_108, %c0_109] : memref<40x256xf32, #tpu.memory_space<vmem>>, vector<2x128xf32>
    %454 = arith.addf %452, %453 : vector<2x128xf32>
    %c12_110 = arith.constant 12 : index
    %c128_111 = arith.constant 128 : index
    %455 = vector.load %arg20[%c12_110, %c128_111] : memref<40x256xf32, #tpu.memory_space<vmem>>, vector<2x128xf32>
    %456 = arith.addf %454, %455 : vector<2x128xf32>
    %457 = vector.extract_strided_slice %456 {offsets = [0, 0], sizes = [2, 32], strides = [1, 1]} : vector<2x128xf32> to vector<2x32xf32>
    %458 = arith.negf %457 : vector<2x32xf32>
    %459 = math.exp %458 : vector<2x32xf32>
    %cst_112 = arith.constant 1.000000e+00 : f32
    %460 = vector.broadcast %cst_112 : f32 to vector<2x32xf32>
    %461 = arith.addf %460, %459 : vector<2x32xf32>
    %462 = arith.divf %460, %461 : vector<2x32xf32>
    %463 = vector.extract_strided_slice %456 {offsets = [0, 32], sizes = [2, 32], strides = [1, 1]} : vector<2x128xf32> to vector<2x32xf32>
    %464 = arith.negf %463 : vector<2x32xf32>
    %465 = math.exp %464 : vector<2x32xf32>
    %cst_113 = arith.constant 1.000000e+00 : f32
    %466 = vector.broadcast %cst_113 : f32 to vector<2x32xf32>
    %467 = arith.addf %466, %465 : vector<2x32xf32>
    %468 = arith.divf %466, %467 : vector<2x32xf32>
    %469 = vector.extract_strided_slice %456 {offsets = [0, 64], sizes = [2, 32], strides = [1, 1]} : vector<2x128xf32> to vector<2x32xf32>
    %470 = math.tanh %469 : vector<2x32xf32>
    %471 = vector.extract_strided_slice %456 {offsets = [0, 96], sizes = [2, 32], strides = [1, 1]} : vector<2x128xf32> to vector<2x32xf32>
    %472 = arith.negf %471 : vector<2x32xf32>
    %473 = math.exp %472 : vector<2x32xf32>
    %cst_114 = arith.constant 1.000000e+00 : f32
    %474 = vector.broadcast %cst_114 : f32 to vector<2x32xf32>
    %475 = arith.addf %474, %473 : vector<2x32xf32>
    %476 = arith.divf %474, %475 : vector<2x32xf32>
    %477 = arith.mulf %468, %446 : vector<2x32xf32>
    %478 = arith.mulf %462, %470 : vector<2x32xf32>
    %479 = arith.addf %477, %478 : vector<2x32xf32>
    %480 = math.tanh %479 : vector<2x32xf32>
    %481 = arith.mulf %476, %480 : vector<2x32xf32>
    %482 = vector.extract_strided_slice %481 {offsets = [0, 0], sizes = [2, 16], strides = [1, 1]} : vector<2x32xf32> to vector<2x16xf32>
    %483 = vector.extract_strided_slice %481 {offsets = [0, 16], sizes = [2, 16], strides = [1, 1]} : vector<2x32xf32> to vector<2x16xf32>
    %484 = arith.truncf %481 : vector<2x32xf32> to vector<2x32xbf16>
    %cst_115 = arith.constant dense<0.000000e+00> : vector<2x128xf32>
    %485 = tpu.matmul %484, %7, %cst_115 {dimension_numbers = #tpu.dot_dimension_numbers<[1], [0], [0], [1], [0, 0, 1, 1], [], []>} : vector<2x32xbf16>, vector<32x128xbf16>, vector<2x128xf32> -> vector<2x128xf32>
    %c28_116 = arith.constant 28 : index
    %c0_117 = arith.constant 0 : index
    %486 = vector.load %arg20[%c28_116, %c0_117] : memref<40x256xf32, #tpu.memory_space<vmem>>, vector<2x128xf32>
    %487 = arith.addf %485, %486 : vector<2x128xf32>
    %c10_118 = arith.constant 10 : index
    %c128_119 = arith.constant 128 : index
    %488 = vector.load %arg20[%c10_118, %c128_119] : memref<40x256xf32, #tpu.memory_space<vmem>>, vector<2x128xf32>
    %489 = arith.addf %487, %488 : vector<2x128xf32>
    %490 = vector.extract_strided_slice %489 {offsets = [0, 0], sizes = [2, 32], strides = [1, 1]} : vector<2x128xf32> to vector<2x32xf32>
    %491 = arith.negf %490 : vector<2x32xf32>
    %492 = math.exp %491 : vector<2x32xf32>
    %cst_120 = arith.constant 1.000000e+00 : f32
    %493 = vector.broadcast %cst_120 : f32 to vector<2x32xf32>
    %494 = arith.addf %493, %492 : vector<2x32xf32>
    %495 = arith.divf %493, %494 : vector<2x32xf32>
    %496 = vector.extract_strided_slice %489 {offsets = [0, 32], sizes = [2, 32], strides = [1, 1]} : vector<2x128xf32> to vector<2x32xf32>
    %497 = arith.negf %496 : vector<2x32xf32>
    %498 = math.exp %497 : vector<2x32xf32>
    %cst_121 = arith.constant 1.000000e+00 : f32
    %499 = vector.broadcast %cst_121 : f32 to vector<2x32xf32>
    %500 = arith.addf %499, %498 : vector<2x32xf32>
    %501 = arith.divf %499, %500 : vector<2x32xf32>
    %502 = vector.extract_strided_slice %489 {offsets = [0, 64], sizes = [2, 32], strides = [1, 1]} : vector<2x128xf32> to vector<2x32xf32>
    %503 = math.tanh %502 : vector<2x32xf32>
    %504 = vector.extract_strided_slice %489 {offsets = [0, 96], sizes = [2, 32], strides = [1, 1]} : vector<2x128xf32> to vector<2x32xf32>
    %505 = arith.negf %504 : vector<2x32xf32>
    %506 = math.exp %505 : vector<2x32xf32>
    %cst_122 = arith.constant 1.000000e+00 : f32
    %507 = vector.broadcast %cst_122 : f32 to vector<2x32xf32>
    %508 = arith.addf %507, %506 : vector<2x32xf32>
    %509 = arith.divf %507, %508 : vector<2x32xf32>
    %510 = arith.mulf %501, %479 : vector<2x32xf32>
    %511 = arith.mulf %495, %503 : vector<2x32xf32>
    %512 = arith.addf %510, %511 : vector<2x32xf32>
    %513 = math.tanh %512 : vector<2x32xf32>
    %514 = arith.mulf %509, %513 : vector<2x32xf32>
    %515 = vector.extract_strided_slice %514 {offsets = [0, 0], sizes = [2, 16], strides = [1, 1]} : vector<2x32xf32> to vector<2x16xf32>
    %516 = vector.extract_strided_slice %514 {offsets = [0, 16], sizes = [2, 16], strides = [1, 1]} : vector<2x32xf32> to vector<2x16xf32>
    %517 = arith.truncf %514 : vector<2x32xf32> to vector<2x32xbf16>
    %cst_123 = arith.constant dense<0.000000e+00> : vector<2x128xf32>
    %518 = tpu.matmul %517, %7, %cst_123 {dimension_numbers = #tpu.dot_dimension_numbers<[1], [0], [0], [1], [0, 0, 1, 1], [], []>} : vector<2x32xbf16>, vector<32x128xbf16>, vector<2x128xf32> -> vector<2x128xf32>
    %c30_124 = arith.constant 30 : index
    %c0_125 = arith.constant 0 : index
    %519 = vector.load %arg20[%c30_124, %c0_125] : memref<40x256xf32, #tpu.memory_space<vmem>>, vector<2x128xf32>
    %520 = arith.addf %518, %519 : vector<2x128xf32>
    %c8_126 = arith.constant 8 : index
    %c128_127 = arith.constant 128 : index
    %521 = vector.load %arg20[%c8_126, %c128_127] : memref<40x256xf32, #tpu.memory_space<vmem>>, vector<2x128xf32>
    %522 = arith.addf %520, %521 : vector<2x128xf32>
    %523 = vector.extract_strided_slice %522 {offsets = [0, 0], sizes = [2, 32], strides = [1, 1]} : vector<2x128xf32> to vector<2x32xf32>
    %524 = arith.negf %523 : vector<2x32xf32>
    %525 = math.exp %524 : vector<2x32xf32>
    %cst_128 = arith.constant 1.000000e+00 : f32
    %526 = vector.broadcast %cst_128 : f32 to vector<2x32xf32>
    %527 = arith.addf %526, %525 : vector<2x32xf32>
    %528 = arith.divf %526, %527 : vector<2x32xf32>
    %529 = vector.extract_strided_slice %522 {offsets = [0, 32], sizes = [2, 32], strides = [1, 1]} : vector<2x128xf32> to vector<2x32xf32>
    %530 = arith.negf %529 : vector<2x32xf32>
    %531 = math.exp %530 : vector<2x32xf32>
    %cst_129 = arith.constant 1.000000e+00 : f32
    %532 = vector.broadcast %cst_129 : f32 to vector<2x32xf32>
    %533 = arith.addf %532, %531 : vector<2x32xf32>
    %534 = arith.divf %532, %533 : vector<2x32xf32>
    %535 = vector.extract_strided_slice %522 {offsets = [0, 64], sizes = [2, 32], strides = [1, 1]} : vector<2x128xf32> to vector<2x32xf32>
    %536 = math.tanh %535 : vector<2x32xf32>
    %537 = vector.extract_strided_slice %522 {offsets = [0, 96], sizes = [2, 32], strides = [1, 1]} : vector<2x128xf32> to vector<2x32xf32>
    %538 = arith.negf %537 : vector<2x32xf32>
    %539 = math.exp %538 : vector<2x32xf32>
    %cst_130 = arith.constant 1.000000e+00 : f32
    %540 = vector.broadcast %cst_130 : f32 to vector<2x32xf32>
    %541 = arith.addf %540, %539 : vector<2x32xf32>
    %542 = arith.divf %540, %541 : vector<2x32xf32>
    %543 = arith.mulf %534, %512 : vector<2x32xf32>
    %544 = arith.mulf %528, %536 : vector<2x32xf32>
    %545 = arith.addf %543, %544 : vector<2x32xf32>
    %546 = math.tanh %545 : vector<2x32xf32>
    %547 = arith.mulf %542, %546 : vector<2x32xf32>
    %548 = vector.extract_strided_slice %547 {offsets = [0, 0], sizes = [2, 16], strides = [1, 1]} : vector<2x32xf32> to vector<2x16xf32>
    %549 = vector.extract_strided_slice %547 {offsets = [0, 16], sizes = [2, 16], strides = [1, 1]} : vector<2x32xf32> to vector<2x16xf32>
    %550 = tpu.concatenate %449, %482, %515, %548 in 0 : vector<2x16xf32>, vector<2x16xf32>, vector<2x16xf32>, vector<2x16xf32> -> vector<8x16xf32>
    %c24_131 = arith.constant 24 : index
    %c0_132 = arith.constant 0 : index
    %551 = vector.load %arg21[%c24_131, %c0_132] : memref<40x32xf32, #tpu.memory_space<vmem>>, vector<8x16xf32>
    tpu.vector_store %arg21[%c24_131, %c0_132], %550 {strides = array<i32>} : memref<40x32xf32, #tpu.memory_space<vmem>>, vector<8x16xf32>,
    %552 = tpu.concatenate %549, %516, %483, %450 in 0 : vector<2x16xf32>, vector<2x16xf32>, vector<2x16xf32>, vector<2x16xf32> -> vector<8x16xf32>
    %c8_133 = arith.constant 8 : index
    %c16_134 = arith.constant 16 : index
    %553 = vector.load %arg21[%c8_133, %c16_134] : memref<40x32xf32, #tpu.memory_space<vmem>>, vector<8x16xf32>
    tpu.vector_store %arg21[%c8_133, %c16_134], %552 {strides = array<i32>} : memref<40x32xf32, #tpu.memory_space<vmem>>, vector<8x16xf32>,
    %554 = arith.truncf %547 : vector<2x32xf32> to vector<2x32xbf16>
    %cst_135 = arith.constant dense<0.000000e+00> : vector<2x128xf32>
    %555 = tpu.matmul %554, %7, %cst_135 {dimension_numbers = #tpu.dot_dimension_numbers<[1], [0], [0], [1], [0, 0, 1, 1], [], []>} : vector<2x32xbf16>, vector<32x128xbf16>, vector<2x128xf32> -> vector<2x128xf32>
    %c32_136 = arith.constant 32 : index
    %c0_137 = arith.constant 0 : index
    %556 = vector.load %arg20[%c32_136, %c0_137] : memref<40x256xf32, #tpu.memory_space<vmem>>, vector<2x128xf32>
    %557 = arith.addf %555, %556 : vector<2x128xf32>
    %c6_138 = arith.constant 6 : index
    %c128_139 = arith.constant 128 : index
    %558 = vector.load %arg20[%c6_138, %c128_139] : memref<40x256xf32, #tpu.memory_space<vmem>>, vector<2x128xf32>
    %559 = arith.addf %557, %558 : vector<2x128xf32>
    %560 = vector.extract_strided_slice %559 {offsets = [0, 0], sizes = [2, 32], strides = [1, 1]} : vector<2x128xf32> to vector<2x32xf32>
    %561 = arith.negf %560 : vector<2x32xf32>
    %562 = math.exp %561 : vector<2x32xf32>
    %cst_140 = arith.constant 1.000000e+00 : f32
    %563 = vector.broadcast %cst_140 : f32 to vector<2x32xf32>
    %564 = arith.addf %563, %562 : vector<2x32xf32>
    %565 = arith.divf %563, %564 : vector<2x32xf32>
    %566 = vector.extract_strided_slice %559 {offsets = [0, 32], sizes = [2, 32], strides = [1, 1]} : vector<2x128xf32> to vector<2x32xf32>
    %567 = arith.negf %566 : vector<2x32xf32>
    %568 = math.exp %567 : vector<2x32xf32>
    %cst_141 = arith.constant 1.000000e+00 : f32
    %569 = vector.broadcast %cst_141 : f32 to vector<2x32xf32>
    %570 = arith.addf %569, %568 : vector<2x32xf32>
    %571 = arith.divf %569, %570 : vector<2x32xf32>
    %572 = vector.extract_strided_slice %559 {offsets = [0, 64], sizes = [2, 32], strides = [1, 1]} : vector<2x128xf32> to vector<2x32xf32>
    %573 = math.tanh %572 : vector<2x32xf32>
    %574 = vector.extract_strided_slice %559 {offsets = [0, 96], sizes = [2, 32], strides = [1, 1]} : vector<2x128xf32> to vector<2x32xf32>
    %575 = arith.negf %574 : vector<2x32xf32>
    %576 = math.exp %575 : vector<2x32xf32>
    %cst_142 = arith.constant 1.000000e+00 : f32
    %577 = vector.broadcast %cst_142 : f32 to vector<2x32xf32>
    %578 = arith.addf %577, %576 : vector<2x32xf32>
    %579 = arith.divf %577, %578 : vector<2x32xf32>
    %580 = arith.mulf %571, %545 : vector<2x32xf32>
    %581 = arith.mulf %565, %573 : vector<2x32xf32>
    %582 = arith.addf %580, %581 : vector<2x32xf32>
    %583 = math.tanh %582 : vector<2x32xf32>
    %584 = arith.mulf %579, %583 : vector<2x32xf32>
    %585 = vector.extract_strided_slice %584 {offsets = [0, 0], sizes = [2, 16], strides = [1, 1]} : vector<2x32xf32> to vector<2x16xf32>
    %586 = vector.extract_strided_slice %584 {offsets = [0, 16], sizes = [2, 16], strides = [1, 1]} : vector<2x32xf32> to vector<2x16xf32>
    %587 = arith.truncf %584 : vector<2x32xf32> to vector<2x32xbf16>
    %cst_143 = arith.constant dense<0.000000e+00> : vector<2x128xf32>
    %588 = tpu.matmul %587, %7, %cst_143 {dimension_numbers = #tpu.dot_dimension_numbers<[1], [0], [0], [1], [0, 0, 1, 1], [], []>} : vector<2x32xbf16>, vector<32x128xbf16>, vector<2x128xf32> -> vector<2x128xf32>
    %c34_144 = arith.constant 34 : index
    %c0_145 = arith.constant 0 : index
    %589 = vector.load %arg20[%c34_144, %c0_145] : memref<40x256xf32, #tpu.memory_space<vmem>>, vector<2x128xf32>
    %590 = arith.addf %588, %589 : vector<2x128xf32>
    %c4_146 = arith.constant 4 : index
    %c128_147 = arith.constant 128 : index
    %591 = vector.load %arg20[%c4_146, %c128_147] : memref<40x256xf32, #tpu.memory_space<vmem>>, vector<2x128xf32>
    %592 = arith.addf %590, %591 : vector<2x128xf32>
    %593 = vector.extract_strided_slice %592 {offsets = [0, 0], sizes = [2, 32], strides = [1, 1]} : vector<2x128xf32> to vector<2x32xf32>
    %594 = arith.negf %593 : vector<2x32xf32>
    %595 = math.exp %594 : vector<2x32xf32>
    %cst_148 = arith.constant 1.000000e+00 : f32
    %596 = vector.broadcast %cst_148 : f32 to vector<2x32xf32>
    %597 = arith.addf %596, %595 : vector<2x32xf32>
    %598 = arith.divf %596, %597 : vector<2x32xf32>
    %599 = vector.extract_strided_slice %592 {offsets = [0, 32], sizes = [2, 32], strides = [1, 1]} : vector<2x128xf32> to vector<2x32xf32>
    %600 = arith.negf %599 : vector<2x32xf32>
    %601 = math.exp %600 : vector<2x32xf32>
    %cst_149 = arith.constant 1.000000e+00 : f32
    %602 = vector.broadcast %cst_149 : f32 to vector<2x32xf32>
    %603 = arith.addf %602, %601 : vector<2x32xf32>
    %604 = arith.divf %602, %603 : vector<2x32xf32>
    %605 = vector.extract_strided_slice %592 {offsets = [0, 64], sizes = [2, 32], strides = [1, 1]} : vector<2x128xf32> to vector<2x32xf32>
    %606 = math.tanh %605 : vector<2x32xf32>
    %607 = vector.extract_strided_slice %592 {offsets = [0, 96], sizes = [2, 32], strides = [1, 1]} : vector<2x128xf32> to vector<2x32xf32>
    %608 = arith.negf %607 : vector<2x32xf32>
    %609 = math.exp %608 : vector<2x32xf32>
    %cst_150 = arith.constant 1.000000e+00 : f32
    %610 = vector.broadcast %cst_150 : f32 to vector<2x32xf32>
    %611 = arith.addf %610, %609 : vector<2x32xf32>
    %612 = arith.divf %610, %611 : vector<2x32xf32>
    %613 = arith.mulf %604, %582 : vector<2x32xf32>
    %614 = arith.mulf %598, %606 : vector<2x32xf32>
    %615 = arith.addf %613, %614 : vector<2x32xf32>
    %616 = math.tanh %615 : vector<2x32xf32>
    %617 = arith.mulf %612, %616 : vector<2x32xf32>
    %618 = vector.extract_strided_slice %617 {offsets = [0, 0], sizes = [2, 16], strides = [1, 1]} : vector<2x32xf32> to vector<2x16xf32>
    %619 = vector.extract_strided_slice %617 {offsets = [0, 16], sizes = [2, 16], strides = [1, 1]} : vector<2x32xf32> to vector<2x16xf32>
    %620 = arith.truncf %617 : vector<2x32xf32> to vector<2x32xbf16>
    %cst_151 = arith.constant dense<0.000000e+00> : vector<2x128xf32>
    %621 = tpu.matmul %620, %7, %cst_151 {dimension_numbers = #tpu.dot_dimension_numbers<[1], [0], [0], [1], [0, 0, 1, 1], [], []>} : vector<2x32xbf16>, vector<32x128xbf16>, vector<2x128xf32> -> vector<2x128xf32>
    %c36_152 = arith.constant 36 : index
    %c0_153 = arith.constant 0 : index
    %622 = vector.load %arg20[%c36_152, %c0_153] : memref<40x256xf32, #tpu.memory_space<vmem>>, vector<2x128xf32>
    %623 = arith.addf %621, %622 : vector<2x128xf32>
    %c2_154 = arith.constant 2 : index
    %c128_155 = arith.constant 128 : index
    %624 = vector.load %arg20[%c2_154, %c128_155] : memref<40x256xf32, #tpu.memory_space<vmem>>, vector<2x128xf32>
    %625 = arith.addf %623, %624 : vector<2x128xf32>
    %626 = vector.extract_strided_slice %625 {offsets = [0, 0], sizes = [2, 32], strides = [1, 1]} : vector<2x128xf32> to vector<2x32xf32>
    %627 = arith.negf %626 : vector<2x32xf32>
    %628 = math.exp %627 : vector<2x32xf32>
    %cst_156 = arith.constant 1.000000e+00 : f32
    %629 = vector.broadcast %cst_156 : f32 to vector<2x32xf32>
    %630 = arith.addf %629, %628 : vector<2x32xf32>
    %631 = arith.divf %629, %630 : vector<2x32xf32>
    %632 = vector.extract_strided_slice %625 {offsets = [0, 32], sizes = [2, 32], strides = [1, 1]} : vector<2x128xf32> to vector<2x32xf32>
    %633 = arith.negf %632 : vector<2x32xf32>
    %634 = math.exp %633 : vector<2x32xf32>
    %cst_157 = arith.constant 1.000000e+00 : f32
    %635 = vector.broadcast %cst_157 : f32 to vector<2x32xf32>
    %636 = arith.addf %635, %634 : vector<2x32xf32>
    %637 = arith.divf %635, %636 : vector<2x32xf32>
    %638 = vector.extract_strided_slice %625 {offsets = [0, 64], sizes = [2, 32], strides = [1, 1]} : vector<2x128xf32> to vector<2x32xf32>
    %639 = math.tanh %638 : vector<2x32xf32>
    %640 = vector.extract_strided_slice %625 {offsets = [0, 96], sizes = [2, 32], strides = [1, 1]} : vector<2x128xf32> to vector<2x32xf32>
    %641 = arith.negf %640 : vector<2x32xf32>
    %642 = math.exp %641 : vector<2x32xf32>
    %cst_158 = arith.constant 1.000000e+00 : f32
    %643 = vector.broadcast %cst_158 : f32 to vector<2x32xf32>
    %644 = arith.addf %643, %642 : vector<2x32xf32>
    %645 = arith.divf %643, %644 : vector<2x32xf32>
    %646 = arith.mulf %637, %615 : vector<2x32xf32>
    %647 = arith.mulf %631, %639 : vector<2x32xf32>
    %648 = arith.addf %646, %647 : vector<2x32xf32>
    %649 = math.tanh %648 : vector<2x32xf32>
    %650 = arith.mulf %645, %649 : vector<2x32xf32>
    %651 = vector.extract_strided_slice %650 {offsets = [0, 0], sizes = [2, 16], strides = [1, 1]} : vector<2x32xf32> to vector<2x16xf32>
    %652 = vector.extract_strided_slice %650 {offsets = [0, 16], sizes = [2, 16], strides = [1, 1]} : vector<2x32xf32> to vector<2x16xf32>
    %653 = arith.truncf %650 : vector<2x32xf32> to vector<2x32xbf16>
    %cst_159 = arith.constant dense<0.000000e+00> : vector<2x128xf32>
    %654 = tpu.matmul %653, %7, %cst_159 {dimension_numbers = #tpu.dot_dimension_numbers<[1], [0], [0], [1], [0, 0, 1, 1], [], []>} : vector<2x32xbf16>, vector<32x128xbf16>, vector<2x128xf32> -> vector<2x128xf32>
    %c38_160 = arith.constant 38 : index
    %c0_161 = arith.constant 0 : index
    %655 = vector.load %arg20[%c38_160, %c0_161] : memref<40x256xf32, #tpu.memory_space<vmem>>, vector<2x128xf32>
    %656 = arith.addf %654, %655 : vector<2x128xf32>
    %c0_162 = arith.constant 0 : index
    %c128_163 = arith.constant 128 : index
    %657 = vector.load %arg20[%c0_162, %c128_163] : memref<40x256xf32, #tpu.memory_space<vmem>>, vector<2x128xf32>
    %658 = arith.addf %656, %657 : vector<2x128xf32>
    %659 = vector.extract_strided_slice %658 {offsets = [0, 0], sizes = [2, 32], strides = [1, 1]} : vector<2x128xf32> to vector<2x32xf32>
    %660 = arith.negf %659 : vector<2x32xf32>
    %661 = math.exp %660 : vector<2x32xf32>
    %cst_164 = arith.constant 1.000000e+00 : f32
    %662 = vector.broadcast %cst_164 : f32 to vector<2x32xf32>
    %663 = arith.addf %662, %661 : vector<2x32xf32>
    %664 = arith.divf %662, %663 : vector<2x32xf32>
    %665 = vector.extract_strided_slice %658 {offsets = [0, 32], sizes = [2, 32], strides = [1, 1]} : vector<2x128xf32> to vector<2x32xf32>
    %666 = arith.negf %665 : vector<2x32xf32>
    %667 = math.exp %666 : vector<2x32xf32>
    %cst_165 = arith.constant 1.000000e+00 : f32
    %668 = vector.broadcast %cst_165 : f32 to vector<2x32xf32>
    %669 = arith.addf %668, %667 : vector<2x32xf32>
    %670 = arith.divf %668, %669 : vector<2x32xf32>
    %671 = vector.extract_strided_slice %658 {offsets = [0, 64], sizes = [2, 32], strides = [1, 1]} : vector<2x128xf32> to vector<2x32xf32>
    %672 = math.tanh %671 : vector<2x32xf32>
    %673 = vector.extract_strided_slice %658 {offsets = [0, 96], sizes = [2, 32], strides = [1, 1]} : vector<2x128xf32> to vector<2x32xf32>
    %674 = arith.negf %673 : vector<2x32xf32>
    %675 = math.exp %674 : vector<2x32xf32>
    %cst_166 = arith.constant 1.000000e+00 : f32
    %676 = vector.broadcast %cst_166 : f32 to vector<2x32xf32>
    %677 = arith.addf %676, %675 : vector<2x32xf32>
    %678 = arith.divf %676, %677 : vector<2x32xf32>
    %679 = arith.mulf %670, %648 : vector<2x32xf32>
    %680 = arith.mulf %664, %672 : vector<2x32xf32>
    %681 = arith.addf %679, %680 : vector<2x32xf32>
    %682 = math.tanh %681 : vector<2x32xf32>
    %683 = arith.mulf %678, %682 : vector<2x32xf32>
    %684 = vector.extract_strided_slice %683 {offsets = [0, 0], sizes = [2, 16], strides = [1, 1]} : vector<2x32xf32> to vector<2x16xf32>
    %685 = vector.extract_strided_slice %683 {offsets = [0, 16], sizes = [2, 16], strides = [1, 1]} : vector<2x32xf32> to vector<2x16xf32>
    %686 = tpu.concatenate %585, %618, %651, %684 in 0 : vector<2x16xf32>, vector<2x16xf32>, vector<2x16xf32>, vector<2x16xf32> -> vector<8x16xf32>
    %c32_167 = arith.constant 32 : index
    %c0_168 = arith.constant 0 : index
    %687 = vector.load %arg21[%c32_167, %c0_168] : memref<40x32xf32, #tpu.memory_space<vmem>>, vector<8x16xf32>
    tpu.vector_store %arg21[%c32_167, %c0_168], %686 {strides = array<i32>} : memref<40x32xf32, #tpu.memory_space<vmem>>, vector<8x16xf32>,
    %688 = tpu.concatenate %685, %652, %619, %586 in 0 : vector<2x16xf32>, vector<2x16xf32>, vector<2x16xf32>, vector<2x16xf32> -> vector<8x16xf32>
    %c0_169 = arith.constant 0 : index
    %c16_170 = arith.constant 16 : index
    %689 = vector.load %arg21[%c0_169, %c16_170] : memref<40x32xf32, #tpu.memory_space<vmem>>, vector<8x16xf32>
    tpu.vector_store %arg21[%c0_169, %c16_170], %688 {strides = array<i32>} : memref<40x32xf32, #tpu.memory_space<vmem>>, vector<8x16xf32>,
    %c0_171 = arith.constant 0 : index
    %c0_172 = arith.constant 0 : index
    %690 = vector.load %arg21[%c0_171, %c0_172] : memref<40x32xf32, #tpu.memory_space<vmem>>, vector<40x32xf32>
    %691 = arith.truncf %690 : vector<40x32xf32> to vector<40x32xbf16>
    %c0_173 = arith.constant 0 : index
    %c0_174 = arith.constant 0 : index
    %692 = vector.load %arg4[%c0_173, %c0_174] : memref<32x256xbf16, #tpu.memory_space<vmem>>, vector<32x256xbf16>
    %cst_175 = arith.constant dense<0.000000e+00> : vector<40x256xf32>
    %693 = tpu.matmul %691, %692, %cst_175 {dimension_numbers = #tpu.dot_dimension_numbers<[1], [0], [0], [1], [0, 0, 1, 1], [], []>} : vector<40x32xbf16>, vector<32x256xbf16>, vector<40x256xf32> -> vector<40x256xf32>
    %c0_176 = arith.constant 0 : index
    %c0_177 = arith.constant 0 : index
    %694 = vector.load %arg5[%c0_176, %c0_177] : memref<1x256xf32, #tpu.memory_space<vmem>>, vector<1x256xf32>
    %695 = vector.broadcast %694 : vector<1x256xf32> to vector<40x256xf32>
    %696 = arith.addf %693, %695 : vector<40x256xf32>
    %c0_178 = arith.constant 0 : index
    %c0_179 = arith.constant 0 : index
    %697 = vector.load %arg20[%c0_178, %c0_179] : memref<40x256xf32, #tpu.memory_space<vmem>>, vector<40x256xf32>
    tpu.vector_store %arg20[%c0_178, %c0_179], %696 {strides = array<i32>} : memref<40x256xf32, #tpu.memory_space<vmem>>, vector<40x256xf32>,
    %c0_180 = arith.constant 0 : index
    %c0_181 = arith.constant 0 : index
    %698 = vector.load %arg6[%c0_180, %c0_181] : memref<32x128xbf16, #tpu.memory_space<vmem>>, vector<32x128xbf16>
    %cst_182 = arith.constant 0.000000e+00 : f32
    %699 = vector.broadcast %cst_182 : f32 to vector<2x32xf32>
    %cst_183 = arith.constant 0.000000e+00 : f32
    %700 = vector.broadcast %cst_183 : f32 to vector<2x32xf32>
    %701 = arith.truncf %699 : vector<2x32xf32> to vector<2x32xbf16>
    %cst_184 = arith.constant dense<0.000000e+00> : vector<2x128xf32>
    %702 = tpu.matmul %701, %698, %cst_184 {dimension_numbers = #tpu.dot_dimension_numbers<[1], [0], [0], [1], [0, 0, 1, 1], [], []>} : vector<2x32xbf16>, vector<32x128xbf16>, vector<2x128xf32> -> vector<2x128xf32>
    %c0_185 = arith.constant 0 : index
    %c0_186 = arith.constant 0 : index
    %703 = vector.load %arg20[%c0_185, %c0_186] : memref<40x256xf32, #tpu.memory_space<vmem>>, vector<2x128xf32>
    %704 = arith.addf %702, %703 : vector<2x128xf32>
    %c38_187 = arith.constant 38 : index
    %c128_188 = arith.constant 128 : index
    %705 = vector.load %arg20[%c38_187, %c128_188] : memref<40x256xf32, #tpu.memory_space<vmem>>, vector<2x128xf32>
    %706 = arith.addf %704, %705 : vector<2x128xf32>
    %707 = vector.extract_strided_slice %706 {offsets = [0, 0], sizes = [2, 32], strides = [1, 1]} : vector<2x128xf32> to vector<2x32xf32>
    %708 = arith.negf %707 : vector<2x32xf32>
    %709 = math.exp %708 : vector<2x32xf32>
    %cst_189 = arith.constant 1.000000e+00 : f32
    %710 = vector.broadcast %cst_189 : f32 to vector<2x32xf32>
    %711 = arith.addf %710, %709 : vector<2x32xf32>
    %712 = arith.divf %710, %711 : vector<2x32xf32>
    %713 = vector.extract_strided_slice %706 {offsets = [0, 32], sizes = [2, 32], strides = [1, 1]} : vector<2x128xf32> to vector<2x32xf32>
    %714 = arith.negf %713 : vector<2x32xf32>
    %715 = math.exp %714 : vector<2x32xf32>
    %cst_190 = arith.constant 1.000000e+00 : f32
    %716 = vector.broadcast %cst_190 : f32 to vector<2x32xf32>
    %717 = arith.addf %716, %715 : vector<2x32xf32>
    %718 = arith.divf %716, %717 : vector<2x32xf32>
    %719 = vector.extract_strided_slice %706 {offsets = [0, 64], sizes = [2, 32], strides = [1, 1]} : vector<2x128xf32> to vector<2x32xf32>
    %720 = math.tanh %719 : vector<2x32xf32>
    %721 = vector.extract_strided_slice %706 {offsets = [0, 96], sizes = [2, 32], strides = [1, 1]} : vector<2x128xf32> to vector<2x32xf32>
    %722 = arith.negf %721 : vector<2x32xf32>
    %723 = math.exp %722 : vector<2x32xf32>
    %cst_191 = arith.constant 1.000000e+00 : f32
    %724 = vector.broadcast %cst_191 : f32 to vector<2x32xf32>
    %725 = arith.addf %724, %723 : vector<2x32xf32>
    %726 = arith.divf %724, %725 : vector<2x32xf32>
    %727 = arith.mulf %718, %700 : vector<2x32xf32>
    %728 = arith.mulf %712, %720 : vector<2x32xf32>
    %729 = arith.addf %727, %728 : vector<2x32xf32>
    %730 = math.tanh %729 : vector<2x32xf32>
    %731 = arith.mulf %726, %730 : vector<2x32xf32>
    %732 = vector.extract_strided_slice %731 {offsets = [0, 0], sizes = [2, 16], strides = [1, 1]} : vector<2x32xf32> to vector<2x16xf32>
    %733 = vector.extract_strided_slice %731 {offsets = [0, 16], sizes = [2, 16], strides = [1, 1]} : vector<2x32xf32> to vector<2x16xf32>
    %734 = arith.truncf %731 : vector<2x32xf32> to vector<2x32xbf16>
    %cst_192 = arith.constant dense<0.000000e+00> : vector<2x128xf32>
    %735 = tpu.matmul %734, %698, %cst_192 {dimension_numbers = #tpu.dot_dimension_numbers<[1], [0], [0], [1], [0, 0, 1, 1], [], []>} : vector<2x32xbf16>, vector<32x128xbf16>, vector<2x128xf32> -> vector<2x128xf32>
    %c2_193 = arith.constant 2 : index
    %c0_194 = arith.constant 0 : index
    %736 = vector.load %arg20[%c2_193, %c0_194] : memref<40x256xf32, #tpu.memory_space<vmem>>, vector<2x128xf32>
    %737 = arith.addf %735, %736 : vector<2x128xf32>
    %c36_195 = arith.constant 36 : index
    %c128_196 = arith.constant 128 : index
    %738 = vector.load %arg20[%c36_195, %c128_196] : memref<40x256xf32, #tpu.memory_space<vmem>>, vector<2x128xf32>
    %739 = arith.addf %737, %738 : vector<2x128xf32>
    %740 = vector.extract_strided_slice %739 {offsets = [0, 0], sizes = [2, 32], strides = [1, 1]} : vector<2x128xf32> to vector<2x32xf32>
    %741 = arith.negf %740 : vector<2x32xf32>
    %742 = math.exp %741 : vector<2x32xf32>
    %cst_197 = arith.constant 1.000000e+00 : f32
    %743 = vector.broadcast %cst_197 : f32 to vector<2x32xf32>
    %744 = arith.addf %743, %742 : vector<2x32xf32>
    %745 = arith.divf %743, %744 : vector<2x32xf32>
    %746 = vector.extract_strided_slice %739 {offsets = [0, 32], sizes = [2, 32], strides = [1, 1]} : vector<2x128xf32> to vector<2x32xf32>
    %747 = arith.negf %746 : vector<2x32xf32>
    %748 = math.exp %747 : vector<2x32xf32>
    %cst_198 = arith.constant 1.000000e+00 : f32
    %749 = vector.broadcast %cst_198 : f32 to vector<2x32xf32>
    %750 = arith.addf %749, %748 : vector<2x32xf32>
    %751 = arith.divf %749, %750 : vector<2x32xf32>
    %752 = vector.extract_strided_slice %739 {offsets = [0, 64], sizes = [2, 32], strides = [1, 1]} : vector<2x128xf32> to vector<2x32xf32>
    %753 = math.tanh %752 : vector<2x32xf32>
    %754 = vector.extract_strided_slice %739 {offsets = [0, 96], sizes = [2, 32], strides = [1, 1]} : vector<2x128xf32> to vector<2x32xf32>
    %755 = arith.negf %754 : vector<2x32xf32>
    %756 = math.exp %755 : vector<2x32xf32>
    %cst_199 = arith.constant 1.000000e+00 : f32
    %757 = vector.broadcast %cst_199 : f32 to vector<2x32xf32>
    %758 = arith.addf %757, %756 : vector<2x32xf32>
    %759 = arith.divf %757, %758 : vector<2x32xf32>
    %760 = arith.mulf %751, %729 : vector<2x32xf32>
    %761 = arith.mulf %745, %753 : vector<2x32xf32>
    %762 = arith.addf %760, %761 : vector<2x32xf32>
    %763 = math.tanh %762 : vector<2x32xf32>
    %764 = arith.mulf %759, %763 : vector<2x32xf32>
    %765 = vector.extract_strided_slice %764 {offsets = [0, 0], sizes = [2, 16], strides = [1, 1]} : vector<2x32xf32> to vector<2x16xf32>
    %766 = vector.extract_strided_slice %764 {offsets = [0, 16], sizes = [2, 16], strides = [1, 1]} : vector<2x32xf32> to vector<2x16xf32>
    %767 = arith.truncf %764 : vector<2x32xf32> to vector<2x32xbf16>
    %cst_200 = arith.constant dense<0.000000e+00> : vector<2x128xf32>
    %768 = tpu.matmul %767, %698, %cst_200 {dimension_numbers = #tpu.dot_dimension_numbers<[1], [0], [0], [1], [0, 0, 1, 1], [], []>} : vector<2x32xbf16>, vector<32x128xbf16>, vector<2x128xf32> -> vector<2x128xf32>
    %c4_201 = arith.constant 4 : index
    %c0_202 = arith.constant 0 : index
    %769 = vector.load %arg20[%c4_201, %c0_202] : memref<40x256xf32, #tpu.memory_space<vmem>>, vector<2x128xf32>
    %770 = arith.addf %768, %769 : vector<2x128xf32>
    %c34_203 = arith.constant 34 : index
    %c128_204 = arith.constant 128 : index
    %771 = vector.load %arg20[%c34_203, %c128_204] : memref<40x256xf32, #tpu.memory_space<vmem>>, vector<2x128xf32>
    %772 = arith.addf %770, %771 : vector<2x128xf32>
    %773 = vector.extract_strided_slice %772 {offsets = [0, 0], sizes = [2, 32], strides = [1, 1]} : vector<2x128xf32> to vector<2x32xf32>
    %774 = arith.negf %773 : vector<2x32xf32>
    %775 = math.exp %774 : vector<2x32xf32>
    %cst_205 = arith.constant 1.000000e+00 : f32
    %776 = vector.broadcast %cst_205 : f32 to vector<2x32xf32>
    %777 = arith.addf %776, %775 : vector<2x32xf32>
    %778 = arith.divf %776, %777 : vector<2x32xf32>
    %779 = vector.extract_strided_slice %772 {offsets = [0, 32], sizes = [2, 32], strides = [1, 1]} : vector<2x128xf32> to vector<2x32xf32>
    %780 = arith.negf %779 : vector<2x32xf32>
    %781 = math.exp %780 : vector<2x32xf32>
    %cst_206 = arith.constant 1.000000e+00 : f32
    %782 = vector.broadcast %cst_206 : f32 to vector<2x32xf32>
    %783 = arith.addf %782, %781 : vector<2x32xf32>
    %784 = arith.divf %782, %783 : vector<2x32xf32>
    %785 = vector.extract_strided_slice %772 {offsets = [0, 64], sizes = [2, 32], strides = [1, 1]} : vector<2x128xf32> to vector<2x32xf32>
    %786 = math.tanh %785 : vector<2x32xf32>
    %787 = vector.extract_strided_slice %772 {offsets = [0, 96], sizes = [2, 32], strides = [1, 1]} : vector<2x128xf32> to vector<2x32xf32>
    %788 = arith.negf %787 : vector<2x32xf32>
    %789 = math.exp %788 : vector<2x32xf32>
    %cst_207 = arith.constant 1.000000e+00 : f32
    %790 = vector.broadcast %cst_207 : f32 to vector<2x32xf32>
    %791 = arith.addf %790, %789 : vector<2x32xf32>
    %792 = arith.divf %790, %791 : vector<2x32xf32>
    %793 = arith.mulf %784, %762 : vector<2x32xf32>
    %794 = arith.mulf %778, %786 : vector<2x32xf32>
    %795 = arith.addf %793, %794 : vector<2x32xf32>
    %796 = math.tanh %795 : vector<2x32xf32>
    %797 = arith.mulf %792, %796 : vector<2x32xf32>
    %798 = vector.extract_strided_slice %797 {offsets = [0, 0], sizes = [2, 16], strides = [1, 1]} : vector<2x32xf32> to vector<2x16xf32>
    %799 = vector.extract_strided_slice %797 {offsets = [0, 16], sizes = [2, 16], strides = [1, 1]} : vector<2x32xf32> to vector<2x16xf32>
    %800 = arith.truncf %797 : vector<2x32xf32> to vector<2x32xbf16>
    %cst_208 = arith.constant dense<0.000000e+00> : vector<2x128xf32>
    %801 = tpu.matmul %800, %698, %cst_208 {dimension_numbers = #tpu.dot_dimension_numbers<[1], [0], [0], [1], [0, 0, 1, 1], [], []>} : vector<2x32xbf16>, vector<32x128xbf16>, vector<2x128xf32> -> vector<2x128xf32>
    %c6_209 = arith.constant 6 : index
    %c0_210 = arith.constant 0 : index
    %802 = vector.load %arg20[%c6_209, %c0_210] : memref<40x256xf32, #tpu.memory_space<vmem>>, vector<2x128xf32>
    %803 = arith.addf %801, %802 : vector<2x128xf32>
    %c32_211 = arith.constant 32 : index
    %c128_212 = arith.constant 128 : index
    %804 = vector.load %arg20[%c32_211, %c128_212] : memref<40x256xf32, #tpu.memory_space<vmem>>, vector<2x128xf32>
    %805 = arith.addf %803, %804 : vector<2x128xf32>
    %806 = vector.extract_strided_slice %805 {offsets = [0, 0], sizes = [2, 32], strides = [1, 1]} : vector<2x128xf32> to vector<2x32xf32>
    %807 = arith.negf %806 : vector<2x32xf32>
    %808 = math.exp %807 : vector<2x32xf32>
    %cst_213 = arith.constant 1.000000e+00 : f32
    %809 = vector.broadcast %cst_213 : f32 to vector<2x32xf32>
    %810 = arith.addf %809, %808 : vector<2x32xf32>
    %811 = arith.divf %809, %810 : vector<2x32xf32>
    %812 = vector.extract_strided_slice %805 {offsets = [0, 32], sizes = [2, 32], strides = [1, 1]} : vector<2x128xf32> to vector<2x32xf32>
    %813 = arith.negf %812 : vector<2x32xf32>
    %814 = math.exp %813 : vector<2x32xf32>
    %cst_214 = arith.constant 1.000000e+00 : f32
    %815 = vector.broadcast %cst_214 : f32 to vector<2x32xf32>
    %816 = arith.addf %815, %814 : vector<2x32xf32>
    %817 = arith.divf %815, %816 : vector<2x32xf32>
    %818 = vector.extract_strided_slice %805 {offsets = [0, 64], sizes = [2, 32], strides = [1, 1]} : vector<2x128xf32> to vector<2x32xf32>
    %819 = math.tanh %818 : vector<2x32xf32>
    %820 = vector.extract_strided_slice %805 {offsets = [0, 96], sizes = [2, 32], strides = [1, 1]} : vector<2x128xf32> to vector<2x32xf32>
    %821 = arith.negf %820 : vector<2x32xf32>
    %822 = math.exp %821 : vector<2x32xf32>
    %cst_215 = arith.constant 1.000000e+00 : f32
    %823 = vector.broadcast %cst_215 : f32 to vector<2x32xf32>
    %824 = arith.addf %823, %822 : vector<2x32xf32>
    %825 = arith.divf %823, %824 : vector<2x32xf32>
    %826 = arith.mulf %817, %795 : vector<2x32xf32>
    %827 = arith.mulf %811, %819 : vector<2x32xf32>
    %828 = arith.addf %826, %827 : vector<2x32xf32>
    %829 = math.tanh %828 : vector<2x32xf32>
    %830 = arith.mulf %825, %829 : vector<2x32xf32>
    %831 = vector.extract_strided_slice %830 {offsets = [0, 0], sizes = [2, 16], strides = [1, 1]} : vector<2x32xf32> to vector<2x16xf32>
    %832 = vector.extract_strided_slice %830 {offsets = [0, 16], sizes = [2, 16], strides = [1, 1]} : vector<2x32xf32> to vector<2x16xf32>
    %833 = tpu.concatenate %732, %765, %798, %831 in 0 : vector<2x16xf32>, vector<2x16xf32>, vector<2x16xf32>, vector<2x16xf32> -> vector<8x16xf32>
    %c0_216 = arith.constant 0 : index
    %c0_217 = arith.constant 0 : index
    %834 = vector.load %arg22[%c0_216, %c0_217] : memref<40x32xf32, #tpu.memory_space<vmem>>, vector<8x16xf32>
    tpu.vector_store %arg22[%c0_216, %c0_217], %833 {strides = array<i32>} : memref<40x32xf32, #tpu.memory_space<vmem>>, vector<8x16xf32>,
    %835 = tpu.concatenate %832, %799, %766, %733 in 0 : vector<2x16xf32>, vector<2x16xf32>, vector<2x16xf32>, vector<2x16xf32> -> vector<8x16xf32>
    %c32_218 = arith.constant 32 : index
    %c16_219 = arith.constant 16 : index
    %836 = vector.load %arg22[%c32_218, %c16_219] : memref<40x32xf32, #tpu.memory_space<vmem>>, vector<8x16xf32>
    tpu.vector_store %arg22[%c32_218, %c16_219], %835 {strides = array<i32>} : memref<40x32xf32, #tpu.memory_space<vmem>>, vector<8x16xf32>,
    %837 = arith.truncf %830 : vector<2x32xf32> to vector<2x32xbf16>
    %cst_220 = arith.constant dense<0.000000e+00> : vector<2x128xf32>
    %838 = tpu.matmul %837, %698, %cst_220 {dimension_numbers = #tpu.dot_dimension_numbers<[1], [0], [0], [1], [0, 0, 1, 1], [], []>} : vector<2x32xbf16>, vector<32x128xbf16>, vector<2x128xf32> -> vector<2x128xf32>
    %c8_221 = arith.constant 8 : index
    %c0_222 = arith.constant 0 : index
    %839 = vector.load %arg20[%c8_221, %c0_222] : memref<40x256xf32, #tpu.memory_space<vmem>>, vector<2x128xf32>
    %840 = arith.addf %838, %839 : vector<2x128xf32>
    %c30_223 = arith.constant 30 : index
    %c128_224 = arith.constant 128 : index
    %841 = vector.load %arg20[%c30_223, %c128_224] : memref<40x256xf32, #tpu.memory_space<vmem>>, vector<2x128xf32>
    %842 = arith.addf %840, %841 : vector<2x128xf32>
    %843 = vector.extract_strided_slice %842 {offsets = [0, 0], sizes = [2, 32], strides = [1, 1]} : vector<2x128xf32> to vector<2x32xf32>
    %844 = arith.negf %843 : vector<2x32xf32>
    %845 = math.exp %844 : vector<2x32xf32>
    %cst_225 = arith.constant 1.000000e+00 : f32
    %846 = vector.broadcast %cst_225 : f32 to vector<2x32xf32>
    %847 = arith.addf %846, %845 : vector<2x32xf32>
    %848 = arith.divf %846, %847 : vector<2x32xf32>
    %849 = vector.extract_strided_slice %842 {offsets = [0, 32], sizes = [2, 32], strides = [1, 1]} : vector<2x128xf32> to vector<2x32xf32>
    %850 = arith.negf %849 : vector<2x32xf32>
    %851 = math.exp %850 : vector<2x32xf32>
    %cst_226 = arith.constant 1.000000e+00 : f32
    %852 = vector.broadcast %cst_226 : f32 to vector<2x32xf32>
    %853 = arith.addf %852, %851 : vector<2x32xf32>
    %854 = arith.divf %852, %853 : vector<2x32xf32>
    %855 = vector.extract_strided_slice %842 {offsets = [0, 64], sizes = [2, 32], strides = [1, 1]} : vector<2x128xf32> to vector<2x32xf32>
    %856 = math.tanh %855 : vector<2x32xf32>
    %857 = vector.extract_strided_slice %842 {offsets = [0, 96], sizes = [2, 32], strides = [1, 1]} : vector<2x128xf32> to vector<2x32xf32>
    %858 = arith.negf %857 : vector<2x32xf32>
    %859 = math.exp %858 : vector<2x32xf32>
    %cst_227 = arith.constant 1.000000e+00 : f32
    %860 = vector.broadcast %cst_227 : f32 to vector<2x32xf32>
    %861 = arith.addf %860, %859 : vector<2x32xf32>
    %862 = arith.divf %860, %861 : vector<2x32xf32>
    %863 = arith.mulf %854, %828 : vector<2x32xf32>
    %864 = arith.mulf %848, %856 : vector<2x32xf32>
    %865 = arith.addf %863, %864 : vector<2x32xf32>
    %866 = math.tanh %865 : vector<2x32xf32>
    %867 = arith.mulf %862, %866 : vector<2x32xf32>
    %868 = vector.extract_strided_slice %867 {offsets = [0, 0], sizes = [2, 16], strides = [1, 1]} : vector<2x32xf32> to vector<2x16xf32>
    %869 = vector.extract_strided_slice %867 {offsets = [0, 16], sizes = [2, 16], strides = [1, 1]} : vector<2x32xf32> to vector<2x16xf32>
    %870 = arith.truncf %867 : vector<2x32xf32> to vector<2x32xbf16>
    %cst_228 = arith.constant dense<0.000000e+00> : vector<2x128xf32>
    %871 = tpu.matmul %870, %698, %cst_228 {dimension_numbers = #tpu.dot_dimension_numbers<[1], [0], [0], [1], [0, 0, 1, 1], [], []>} : vector<2x32xbf16>, vector<32x128xbf16>, vector<2x128xf32> -> vector<2x128xf32>
    %c10_229 = arith.constant 10 : index
    %c0_230 = arith.constant 0 : index
    %872 = vector.load %arg20[%c10_229, %c0_230] : memref<40x256xf32, #tpu.memory_space<vmem>>, vector<2x128xf32>
    %873 = arith.addf %871, %872 : vector<2x128xf32>
    %c28_231 = arith.constant 28 : index
    %c128_232 = arith.constant 128 : index
    %874 = vector.load %arg20[%c28_231, %c128_232] : memref<40x256xf32, #tpu.memory_space<vmem>>, vector<2x128xf32>
    %875 = arith.addf %873, %874 : vector<2x128xf32>
    %876 = vector.extract_strided_slice %875 {offsets = [0, 0], sizes = [2, 32], strides = [1, 1]} : vector<2x128xf32> to vector<2x32xf32>
    %877 = arith.negf %876 : vector<2x32xf32>
    %878 = math.exp %877 : vector<2x32xf32>
    %cst_233 = arith.constant 1.000000e+00 : f32
    %879 = vector.broadcast %cst_233 : f32 to vector<2x32xf32>
    %880 = arith.addf %879, %878 : vector<2x32xf32>
    %881 = arith.divf %879, %880 : vector<2x32xf32>
    %882 = vector.extract_strided_slice %875 {offsets = [0, 32], sizes = [2, 32], strides = [1, 1]} : vector<2x128xf32> to vector<2x32xf32>
    %883 = arith.negf %882 : vector<2x32xf32>
    %884 = math.exp %883 : vector<2x32xf32>
    %cst_234 = arith.constant 1.000000e+00 : f32
    %885 = vector.broadcast %cst_234 : f32 to vector<2x32xf32>
    %886 = arith.addf %885, %884 : vector<2x32xf32>
    %887 = arith.divf %885, %886 : vector<2x32xf32>
    %888 = vector.extract_strided_slice %875 {offsets = [0, 64], sizes = [2, 32], strides = [1, 1]} : vector<2x128xf32> to vector<2x32xf32>
    %889 = math.tanh %888 : vector<2x32xf32>
    %890 = vector.extract_strided_slice %875 {offsets = [0, 96], sizes = [2, 32], strides = [1, 1]} : vector<2x128xf32> to vector<2x32xf32>
    %891 = arith.negf %890 : vector<2x32xf32>
    %892 = math.exp %891 : vector<2x32xf32>
    %cst_235 = arith.constant 1.000000e+00 : f32
    %893 = vector.broadcast %cst_235 : f32 to vector<2x32xf32>
    %894 = arith.addf %893, %892 : vector<2x32xf32>
    %895 = arith.divf %893, %894 : vector<2x32xf32>
    %896 = arith.mulf %887, %865 : vector<2x32xf32>
    %897 = arith.mulf %881, %889 : vector<2x32xf32>
    %898 = arith.addf %896, %897 : vector<2x32xf32>
    %899 = math.tanh %898 : vector<2x32xf32>
    %900 = arith.mulf %895, %899 : vector<2x32xf32>
    %901 = vector.extract_strided_slice %900 {offsets = [0, 0], sizes = [2, 16], strides = [1, 1]} : vector<2x32xf32> to vector<2x16xf32>
    %902 = vector.extract_strided_slice %900 {offsets = [0, 16], sizes = [2, 16], strides = [1, 1]} : vector<2x32xf32> to vector<2x16xf32>
    %903 = arith.truncf %900 : vector<2x32xf32> to vector<2x32xbf16>
    %cst_236 = arith.constant dense<0.000000e+00> : vector<2x128xf32>
    %904 = tpu.matmul %903, %698, %cst_236 {dimension_numbers = #tpu.dot_dimension_numbers<[1], [0], [0], [1], [0, 0, 1, 1], [], []>} : vector<2x32xbf16>, vector<32x128xbf16>, vector<2x128xf32> -> vector<2x128xf32>
    %c12_237 = arith.constant 12 : index
    %c0_238 = arith.constant 0 : index
    %905 = vector.load %arg20[%c12_237, %c0_238] : memref<40x256xf32, #tpu.memory_space<vmem>>, vector<2x128xf32>
    %906 = arith.addf %904, %905 : vector<2x128xf32>
    %c26_239 = arith.constant 26 : index
    %c128_240 = arith.constant 128 : index
    %907 = vector.load %arg20[%c26_239, %c128_240] : memref<40x256xf32, #tpu.memory_space<vmem>>, vector<2x128xf32>
    %908 = arith.addf %906, %907 : vector<2x128xf32>
    %909 = vector.extract_strided_slice %908 {offsets = [0, 0], sizes = [2, 32], strides = [1, 1]} : vector<2x128xf32> to vector<2x32xf32>
    %910 = arith.negf %909 : vector<2x32xf32>
    %911 = math.exp %910 : vector<2x32xf32>
    %cst_241 = arith.constant 1.000000e+00 : f32
    %912 = vector.broadcast %cst_241 : f32 to vector<2x32xf32>
    %913 = arith.addf %912, %911 : vector<2x32xf32>
    %914 = arith.divf %912, %913 : vector<2x32xf32>
    %915 = vector.extract_strided_slice %908 {offsets = [0, 32], sizes = [2, 32], strides = [1, 1]} : vector<2x128xf32> to vector<2x32xf32>
    %916 = arith.negf %915 : vector<2x32xf32>
    %917 = math.exp %916 : vector<2x32xf32>
    %cst_242 = arith.constant 1.000000e+00 : f32
    %918 = vector.broadcast %cst_242 : f32 to vector<2x32xf32>
    %919 = arith.addf %918, %917 : vector<2x32xf32>
    %920 = arith.divf %918, %919 : vector<2x32xf32>
    %921 = vector.extract_strided_slice %908 {offsets = [0, 64], sizes = [2, 32], strides = [1, 1]} : vector<2x128xf32> to vector<2x32xf32>
    %922 = math.tanh %921 : vector<2x32xf32>
    %923 = vector.extract_strided_slice %908 {offsets = [0, 96], sizes = [2, 32], strides = [1, 1]} : vector<2x128xf32> to vector<2x32xf32>
    %924 = arith.negf %923 : vector<2x32xf32>
    %925 = math.exp %924 : vector<2x32xf32>
    %cst_243 = arith.constant 1.000000e+00 : f32
    %926 = vector.broadcast %cst_243 : f32 to vector<2x32xf32>
    %927 = arith.addf %926, %925 : vector<2x32xf32>
    %928 = arith.divf %926, %927 : vector<2x32xf32>
    %929 = arith.mulf %920, %898 : vector<2x32xf32>
    %930 = arith.mulf %914, %922 : vector<2x32xf32>
    %931 = arith.addf %929, %930 : vector<2x32xf32>
    %932 = math.tanh %931 : vector<2x32xf32>
    %933 = arith.mulf %928, %932 : vector<2x32xf32>
    %934 = vector.extract_strided_slice %933 {offsets = [0, 0], sizes = [2, 16], strides = [1, 1]} : vector<2x32xf32> to vector<2x16xf32>
    %935 = vector.extract_strided_slice %933 {offsets = [0, 16], sizes = [2, 16], strides = [1, 1]} : vector<2x32xf32> to vector<2x16xf32>
    %936 = arith.truncf %933 : vector<2x32xf32> to vector<2x32xbf16>
    %cst_244 = arith.constant dense<0.000000e+00> : vector<2x128xf32>
    %937 = tpu.matmul %936, %698, %cst_244 {dimension_numbers = #tpu.dot_dimension_numbers<[1], [0], [0], [1], [0, 0, 1, 1], [], []>} : vector<2x32xbf16>, vector<32x128xbf16>, vector<2x128xf32> -> vector<2x128xf32>
    %c14_245 = arith.constant 14 : index
    %c0_246 = arith.constant 0 : index
    %938 = vector.load %arg20[%c14_245, %c0_246] : memref<40x256xf32, #tpu.memory_space<vmem>>, vector<2x128xf32>
    %939 = arith.addf %937, %938 : vector<2x128xf32>
    %c24_247 = arith.constant 24 : index
    %c128_248 = arith.constant 128 : index
    %940 = vector.load %arg20[%c24_247, %c128_248] : memref<40x256xf32, #tpu.memory_space<vmem>>, vector<2x128xf32>
    %941 = arith.addf %939, %940 : vector<2x128xf32>
    %942 = vector.extract_strided_slice %941 {offsets = [0, 0], sizes = [2, 32], strides = [1, 1]} : vector<2x128xf32> to vector<2x32xf32>
    %943 = arith.negf %942 : vector<2x32xf32>
    %944 = math.exp %943 : vector<2x32xf32>
    %cst_249 = arith.constant 1.000000e+00 : f32
    %945 = vector.broadcast %cst_249 : f32 to vector<2x32xf32>
    %946 = arith.addf %945, %944 : vector<2x32xf32>
    %947 = arith.divf %945, %946 : vector<2x32xf32>
    %948 = vector.extract_strided_slice %941 {offsets = [0, 32], sizes = [2, 32], strides = [1, 1]} : vector<2x128xf32> to vector<2x32xf32>
    %949 = arith.negf %948 : vector<2x32xf32>
    %950 = math.exp %949 : vector<2x32xf32>
    %cst_250 = arith.constant 1.000000e+00 : f32
    %951 = vector.broadcast %cst_250 : f32 to vector<2x32xf32>
    %952 = arith.addf %951, %950 : vector<2x32xf32>
    %953 = arith.divf %951, %952 : vector<2x32xf32>
    %954 = vector.extract_strided_slice %941 {offsets = [0, 64], sizes = [2, 32], strides = [1, 1]} : vector<2x128xf32> to vector<2x32xf32>
    %955 = math.tanh %954 : vector<2x32xf32>
    %956 = vector.extract_strided_slice %941 {offsets = [0, 96], sizes = [2, 32], strides = [1, 1]} : vector<2x128xf32> to vector<2x32xf32>
    %957 = arith.negf %956 : vector<2x32xf32>
    %958 = math.exp %957 : vector<2x32xf32>
    %cst_251 = arith.constant 1.000000e+00 : f32
    %959 = vector.broadcast %cst_251 : f32 to vector<2x32xf32>
    %960 = arith.addf %959, %958 : vector<2x32xf32>
    %961 = arith.divf %959, %960 : vector<2x32xf32>
    %962 = arith.mulf %953, %931 : vector<2x32xf32>
    %963 = arith.mulf %947, %955 : vector<2x32xf32>
    %964 = arith.addf %962, %963 : vector<2x32xf32>
    %965 = math.tanh %964 : vector<2x32xf32>
    %966 = arith.mulf %961, %965 : vector<2x32xf32>
    %967 = vector.extract_strided_slice %966 {offsets = [0, 0], sizes = [2, 16], strides = [1, 1]} : vector<2x32xf32> to vector<2x16xf32>
    %968 = vector.extract_strided_slice %966 {offsets = [0, 16], sizes = [2, 16], strides = [1, 1]} : vector<2x32xf32> to vector<2x16xf32>
    %969 = tpu.concatenate %868, %901, %934, %967 in 0 : vector<2x16xf32>, vector<2x16xf32>, vector<2x16xf32>, vector<2x16xf32> -> vector<8x16xf32>
    %c8_252 = arith.constant 8 : index
    %c0_253 = arith.constant 0 : index
    %970 = vector.load %arg22[%c8_252, %c0_253] : memref<40x32xf32, #tpu.memory_space<vmem>>, vector<8x16xf32>
    tpu.vector_store %arg22[%c8_252, %c0_253], %969 {strides = array<i32>} : memref<40x32xf32, #tpu.memory_space<vmem>>, vector<8x16xf32>,
    %971 = tpu.concatenate %968, %935, %902, %869 in 0 : vector<2x16xf32>, vector<2x16xf32>, vector<2x16xf32>, vector<2x16xf32> -> vector<8x16xf32>
    %c24_254 = arith.constant 24 : index
    %c16_255 = arith.constant 16 : index
    %972 = vector.load %arg22[%c24_254, %c16_255] : memref<40x32xf32, #tpu.memory_space<vmem>>, vector<8x16xf32>
    tpu.vector_store %arg22[%c24_254, %c16_255], %971 {strides = array<i32>} : memref<40x32xf32, #tpu.memory_space<vmem>>, vector<8x16xf32>,
    %973 = arith.truncf %966 : vector<2x32xf32> to vector<2x32xbf16>
    %cst_256 = arith.constant dense<0.000000e+00> : vector<2x128xf32>
    %974 = tpu.matmul %973, %698, %cst_256 {dimension_numbers = #tpu.dot_dimension_numbers<[1], [0], [0], [1], [0, 0, 1, 1], [], []>} : vector<2x32xbf16>, vector<32x128xbf16>, vector<2x128xf32> -> vector<2x128xf32>
    %c16_257 = arith.constant 16 : index
    %c0_258 = arith.constant 0 : index
    %975 = vector.load %arg20[%c16_257, %c0_258] : memref<40x256xf32, #tpu.memory_space<vmem>>, vector<2x128xf32>
    %976 = arith.addf %974, %975 : vector<2x128xf32>
    %c22_259 = arith.constant 22 : index
    %c128_260 = arith.constant 128 : index
    %977 = vector.load %arg20[%c22_259, %c128_260] : memref<40x256xf32, #tpu.memory_space<vmem>>, vector<2x128xf32>
    %978 = arith.addf %976, %977 : vector<2x128xf32>
    %979 = vector.extract_strided_slice %978 {offsets = [0, 0], sizes = [2, 32], strides = [1, 1]} : vector<2x128xf32> to vector<2x32xf32>
    %980 = arith.negf %979 : vector<2x32xf32>
    %981 = math.exp %980 : vector<2x32xf32>
    %cst_261 = arith.constant 1.000000e+00 : f32
    %982 = vector.broadcast %cst_261 : f32 to vector<2x32xf32>
    %983 = arith.addf %982, %981 : vector<2x32xf32>
    %984 = arith.divf %982, %983 : vector<2x32xf32>
    %985 = vector.extract_strided_slice %978 {offsets = [0, 32], sizes = [2, 32], strides = [1, 1]} : vector<2x128xf32> to vector<2x32xf32>
    %986 = arith.negf %985 : vector<2x32xf32>
    %987 = math.exp %986 : vector<2x32xf32>
    %cst_262 = arith.constant 1.000000e+00 : f32
    %988 = vector.broadcast %cst_262 : f32 to vector<2x32xf32>
    %989 = arith.addf %988, %987 : vector<2x32xf32>
    %990 = arith.divf %988, %989 : vector<2x32xf32>
    %991 = vector.extract_strided_slice %978 {offsets = [0, 64], sizes = [2, 32], strides = [1, 1]} : vector<2x128xf32> to vector<2x32xf32>
    %992 = math.tanh %991 : vector<2x32xf32>
    %993 = vector.extract_strided_slice %978 {offsets = [0, 96], sizes = [2, 32], strides = [1, 1]} : vector<2x128xf32> to vector<2x32xf32>
    %994 = arith.negf %993 : vector<2x32xf32>
    %995 = math.exp %994 : vector<2x32xf32>
    %cst_263 = arith.constant 1.000000e+00 : f32
    %996 = vector.broadcast %cst_263 : f32 to vector<2x32xf32>
    %997 = arith.addf %996, %995 : vector<2x32xf32>
    %998 = arith.divf %996, %997 : vector<2x32xf32>
    %999 = arith.mulf %990, %964 : vector<2x32xf32>
    %1000 = arith.mulf %984, %992 : vector<2x32xf32>
    %1001 = arith.addf %999, %1000 : vector<2x32xf32>
    %1002 = math.tanh %1001 : vector<2x32xf32>
    %1003 = arith.mulf %998, %1002 : vector<2x32xf32>
    %1004 = vector.extract_strided_slice %1003 {offsets = [0, 0], sizes = [2, 16], strides = [1, 1]} : vector<2x32xf32> to vector<2x16xf32>
    %1005 = vector.extract_strided_slice %1003 {offsets = [0, 16], sizes = [2, 16], strides = [1, 1]} : vector<2x32xf32> to vector<2x16xf32>
    %1006 = arith.truncf %1003 : vector<2x32xf32> to vector<2x32xbf16>
    %cst_264 = arith.constant dense<0.000000e+00> : vector<2x128xf32>
    %1007 = tpu.matmul %1006, %698, %cst_264 {dimension_numbers = #tpu.dot_dimension_numbers<[1], [0], [0], [1], [0, 0, 1, 1], [], []>} : vector<2x32xbf16>, vector<32x128xbf16>, vector<2x128xf32> -> vector<2x128xf32>
    %c18_265 = arith.constant 18 : index
    %c0_266 = arith.constant 0 : index
    %1008 = vector.load %arg20[%c18_265, %c0_266] : memref<40x256xf32, #tpu.memory_space<vmem>>, vector<2x128xf32>
    %1009 = arith.addf %1007, %1008 : vector<2x128xf32>
    %c20_267 = arith.constant 20 : index
    %c128_268 = arith.constant 128 : index
    %1010 = vector.load %arg20[%c20_267, %c128_268] : memref<40x256xf32, #tpu.memory_space<vmem>>, vector<2x128xf32>
    %1011 = arith.addf %1009, %1010 : vector<2x128xf32>
    %1012 = vector.extract_strided_slice %1011 {offsets = [0, 0], sizes = [2, 32], strides = [1, 1]} : vector<2x128xf32> to vector<2x32xf32>
    %1013 = arith.negf %1012 : vector<2x32xf32>
    %1014 = math.exp %1013 : vector<2x32xf32>
    %cst_269 = arith.constant 1.000000e+00 : f32
    %1015 = vector.broadcast %cst_269 : f32 to vector<2x32xf32>
    %1016 = arith.addf %1015, %1014 : vector<2x32xf32>
    %1017 = arith.divf %1015, %1016 : vector<2x32xf32>
    %1018 = vector.extract_strided_slice %1011 {offsets = [0, 32], sizes = [2, 32], strides = [1, 1]} : vector<2x128xf32> to vector<2x32xf32>
    %1019 = arith.negf %1018 : vector<2x32xf32>
    %1020 = math.exp %1019 : vector<2x32xf32>
    %cst_270 = arith.constant 1.000000e+00 : f32
    %1021 = vector.broadcast %cst_270 : f32 to vector<2x32xf32>
    %1022 = arith.addf %1021, %1020 : vector<2x32xf32>
    %1023 = arith.divf %1021, %1022 : vector<2x32xf32>
    %1024 = vector.extract_strided_slice %1011 {offsets = [0, 64], sizes = [2, 32], strides = [1, 1]} : vector<2x128xf32> to vector<2x32xf32>
    %1025 = math.tanh %1024 : vector<2x32xf32>
    %1026 = vector.extract_strided_slice %1011 {offsets = [0, 96], sizes = [2, 32], strides = [1, 1]} : vector<2x128xf32> to vector<2x32xf32>
    %1027 = arith.negf %1026 : vector<2x32xf32>
    %1028 = math.exp %1027 : vector<2x32xf32>
    %cst_271 = arith.constant 1.000000e+00 : f32
    %1029 = vector.broadcast %cst_271 : f32 to vector<2x32xf32>
    %1030 = arith.addf %1029, %1028 : vector<2x32xf32>
    %1031 = arith.divf %1029, %1030 : vector<2x32xf32>
    %1032 = arith.mulf %1023, %1001 : vector<2x32xf32>
    %1033 = arith.mulf %1017, %1025 : vector<2x32xf32>
    %1034 = arith.addf %1032, %1033 : vector<2x32xf32>
    %1035 = math.tanh %1034 : vector<2x32xf32>
    %1036 = arith.mulf %1031, %1035 : vector<2x32xf32>
    %1037 = vector.extract_strided_slice %1036 {offsets = [0, 0], sizes = [2, 16], strides = [1, 1]} : vector<2x32xf32> to vector<2x16xf32>
    %1038 = vector.extract_strided_slice %1036 {offsets = [0, 16], sizes = [2, 16], strides = [1, 1]} : vector<2x32xf32> to vector<2x16xf32>
    %1039 = arith.truncf %1036 : vector<2x32xf32> to vector<2x32xbf16>
    %cst_272 = arith.constant dense<0.000000e+00> : vector<2x128xf32>
    %1040 = tpu.matmul %1039, %698, %cst_272 {dimension_numbers = #tpu.dot_dimension_numbers<[1], [0], [0], [1], [0, 0, 1, 1], [], []>} : vector<2x32xbf16>, vector<32x128xbf16>, vector<2x128xf32> -> vector<2x128xf32>
    %c20_273 = arith.constant 20 : index
    %c0_274 = arith.constant 0 : index
    %1041 = vector.load %arg20[%c20_273, %c0_274] : memref<40x256xf32, #tpu.memory_space<vmem>>, vector<2x128xf32>
    %1042 = arith.addf %1040, %1041 : vector<2x128xf32>
    %c18_275 = arith.constant 18 : index
    %c128_276 = arith.constant 128 : index
    %1043 = vector.load %arg20[%c18_275, %c128_276] : memref<40x256xf32, #tpu.memory_space<vmem>>, vector<2x128xf32>
    %1044 = arith.addf %1042, %1043 : vector<2x128xf32>
    %1045 = vector.extract_strided_slice %1044 {offsets = [0, 0], sizes = [2, 32], strides = [1, 1]} : vector<2x128xf32> to vector<2x32xf32>
    %1046 = arith.negf %1045 : vector<2x32xf32>
    %1047 = math.exp %1046 : vector<2x32xf32>
    %cst_277 = arith.constant 1.000000e+00 : f32
    %1048 = vector.broadcast %cst_277 : f32 to vector<2x32xf32>
    %1049 = arith.addf %1048, %1047 : vector<2x32xf32>
    %1050 = arith.divf %1048, %1049 : vector<2x32xf32>
    %1051 = vector.extract_strided_slice %1044 {offsets = [0, 32], sizes = [2, 32], strides = [1, 1]} : vector<2x128xf32> to vector<2x32xf32>
    %1052 = arith.negf %1051 : vector<2x32xf32>
    %1053 = math.exp %1052 : vector<2x32xf32>
    %cst_278 = arith.constant 1.000000e+00 : f32
    %1054 = vector.broadcast %cst_278 : f32 to vector<2x32xf32>
    %1055 = arith.addf %1054, %1053 : vector<2x32xf32>
    %1056 = arith.divf %1054, %1055 : vector<2x32xf32>
    %1057 = vector.extract_strided_slice %1044 {offsets = [0, 64], sizes = [2, 32], strides = [1, 1]} : vector<2x128xf32> to vector<2x32xf32>
    %1058 = math.tanh %1057 : vector<2x32xf32>
    %1059 = vector.extract_strided_slice %1044 {offsets = [0, 96], sizes = [2, 32], strides = [1, 1]} : vector<2x128xf32> to vector<2x32xf32>
    %1060 = arith.negf %1059 : vector<2x32xf32>
    %1061 = math.exp %1060 : vector<2x32xf32>
    %cst_279 = arith.constant 1.000000e+00 : f32
    %1062 = vector.broadcast %cst_279 : f32 to vector<2x32xf32>
    %1063 = arith.addf %1062, %1061 : vector<2x32xf32>
    %1064 = arith.divf %1062, %1063 : vector<2x32xf32>
    %1065 = arith.mulf %1056, %1034 : vector<2x32xf32>
    %1066 = arith.mulf %1050, %1058 : vector<2x32xf32>
    %1067 = arith.addf %1065, %1066 : vector<2x32xf32>
    %1068 = math.tanh %1067 : vector<2x32xf32>
    %1069 = arith.mulf %1064, %1068 : vector<2x32xf32>
    %1070 = vector.extract_strided_slice %1069 {offsets = [0, 0], sizes = [2, 16], strides = [1, 1]} : vector<2x32xf32> to vector<2x16xf32>
    %1071 = vector.extract_strided_slice %1069 {offsets = [0, 16], sizes = [2, 16], strides = [1, 1]} : vector<2x32xf32> to vector<2x16xf32>
    %1072 = arith.truncf %1069 : vector<2x32xf32> to vector<2x32xbf16>
    %cst_280 = arith.constant dense<0.000000e+00> : vector<2x128xf32>
    %1073 = tpu.matmul %1072, %698, %cst_280 {dimension_numbers = #tpu.dot_dimension_numbers<[1], [0], [0], [1], [0, 0, 1, 1], [], []>} : vector<2x32xbf16>, vector<32x128xbf16>, vector<2x128xf32> -> vector<2x128xf32>
    %c22_281 = arith.constant 22 : index
    %c0_282 = arith.constant 0 : index
    %1074 = vector.load %arg20[%c22_281, %c0_282] : memref<40x256xf32, #tpu.memory_space<vmem>>, vector<2x128xf32>
    %1075 = arith.addf %1073, %1074 : vector<2x128xf32>
    %c16_283 = arith.constant 16 : index
    %c128_284 = arith.constant 128 : index
    %1076 = vector.load %arg20[%c16_283, %c128_284] : memref<40x256xf32, #tpu.memory_space<vmem>>, vector<2x128xf32>
    %1077 = arith.addf %1075, %1076 : vector<2x128xf32>
    %1078 = vector.extract_strided_slice %1077 {offsets = [0, 0], sizes = [2, 32], strides = [1, 1]} : vector<2x128xf32> to vector<2x32xf32>
    %1079 = arith.negf %1078 : vector<2x32xf32>
    %1080 = math.exp %1079 : vector<2x32xf32>
    %cst_285 = arith.constant 1.000000e+00 : f32
    %1081 = vector.broadcast %cst_285 : f32 to vector<2x32xf32>
    %1082 = arith.addf %1081, %1080 : vector<2x32xf32>
    %1083 = arith.divf %1081, %1082 : vector<2x32xf32>
    %1084 = vector.extract_strided_slice %1077 {offsets = [0, 32], sizes = [2, 32], strides = [1, 1]} : vector<2x128xf32> to vector<2x32xf32>
    %1085 = arith.negf %1084 : vector<2x32xf32>
    %1086 = math.exp %1085 : vector<2x32xf32>
    %cst_286 = arith.constant 1.000000e+00 : f32
    %1087 = vector.broadcast %cst_286 : f32 to vector<2x32xf32>
    %1088 = arith.addf %1087, %1086 : vector<2x32xf32>
    %1089 = arith.divf %1087, %1088 : vector<2x32xf32>
    %1090 = vector.extract_strided_slice %1077 {offsets = [0, 64], sizes = [2, 32], strides = [1, 1]} : vector<2x128xf32> to vector<2x32xf32>
    %1091 = math.tanh %1090 : vector<2x32xf32>
    %1092 = vector.extract_strided_slice %1077 {offsets = [0, 96], sizes = [2, 32], strides = [1, 1]} : vector<2x128xf32> to vector<2x32xf32>
    %1093 = arith.negf %1092 : vector<2x32xf32>
    %1094 = math.exp %1093 : vector<2x32xf32>
    %cst_287 = arith.constant 1.000000e+00 : f32
    %1095 = vector.broadcast %cst_287 : f32 to vector<2x32xf32>
    %1096 = arith.addf %1095, %1094 : vector<2x32xf32>
    %1097 = arith.divf %1095, %1096 : vector<2x32xf32>
    %1098 = arith.mulf %1089, %1067 : vector<2x32xf32>
    %1099 = arith.mulf %1083, %1091 : vector<2x32xf32>
    %1100 = arith.addf %1098, %1099 : vector<2x32xf32>
    %1101 = math.tanh %1100 : vector<2x32xf32>
    %1102 = arith.mulf %1097, %1101 : vector<2x32xf32>
    %1103 = vector.extract_strided_slice %1102 {offsets = [0, 0], sizes = [2, 16], strides = [1, 1]} : vector<2x32xf32> to vector<2x16xf32>
    %1104 = vector.extract_strided_slice %1102 {offsets = [0, 16], sizes = [2, 16], strides = [1, 1]} : vector<2x32xf32> to vector<2x16xf32>
    %1105 = tpu.concatenate %1004, %1037, %1070, %1103 in 0 : vector<2x16xf32>, vector<2x16xf32>, vector<2x16xf32>, vector<2x16xf32> -> vector<8x16xf32>
    %c16_288 = arith.constant 16 : index
    %c0_289 = arith.constant 0 : index
    %1106 = vector.load %arg22[%c16_288, %c0_289] : memref<40x32xf32, #tpu.memory_space<vmem>>, vector<8x16xf32>
    tpu.vector_store %arg22[%c16_288, %c0_289], %1105 {strides = array<i32>} : memref<40x32xf32, #tpu.memory_space<vmem>>, vector<8x16xf32>,
    %1107 = tpu.concatenate %1104, %1071, %1038, %1005 in 0 : vector<2x16xf32>, vector<2x16xf32>, vector<2x16xf32>, vector<2x16xf32> -> vector<8x16xf32>
    %c16_290 = arith.constant 16 : index
    %c16_291 = arith.constant 16 : index
    %1108 = vector.load %arg22[%c16_290, %c16_291] : memref<40x32xf32, #tpu.memory_space<vmem>>, vector<8x16xf32>
    tpu.vector_store %arg22[%c16_290, %c16_291], %1107 {strides = array<i32>} : memref<40x32xf32, #tpu.memory_space<vmem>>, vector<8x16xf32>,
    %1109 = arith.truncf %1102 : vector<2x32xf32> to vector<2x32xbf16>
    %cst_292 = arith.constant dense<0.000000e+00> : vector<2x128xf32>
    %1110 = tpu.matmul %1109, %698, %cst_292 {dimension_numbers = #tpu.dot_dimension_numbers<[1], [0], [0], [1], [0, 0, 1, 1], [], []>} : vector<2x32xbf16>, vector<32x128xbf16>, vector<2x128xf32> -> vector<2x128xf32>
    %c24_293 = arith.constant 24 : index
    %c0_294 = arith.constant 0 : index
    %1111 = vector.load %arg20[%c24_293, %c0_294] : memref<40x256xf32, #tpu.memory_space<vmem>>, vector<2x128xf32>
    %1112 = arith.addf %1110, %1111 : vector<2x128xf32>
    %c14_295 = arith.constant 14 : index
    %c128_296 = arith.constant 128 : index
    %1113 = vector.load %arg20[%c14_295, %c128_296] : memref<40x256xf32, #tpu.memory_space<vmem>>, vector<2x128xf32>
    %1114 = arith.addf %1112, %1113 : vector<2x128xf32>
    %1115 = vector.extract_strided_slice %1114 {offsets = [0, 0], sizes = [2, 32], strides = [1, 1]} : vector<2x128xf32> to vector<2x32xf32>
    %1116 = arith.negf %1115 : vector<2x32xf32>
    %1117 = math.exp %1116 : vector<2x32xf32>
    %cst_297 = arith.constant 1.000000e+00 : f32
    %1118 = vector.broadcast %cst_297 : f32 to vector<2x32xf32>
    %1119 = arith.addf %1118, %1117 : vector<2x32xf32>
    %1120 = arith.divf %1118, %1119 : vector<2x32xf32>
    %1121 = vector.extract_strided_slice %1114 {offsets = [0, 32], sizes = [2, 32], strides = [1, 1]} : vector<2x128xf32> to vector<2x32xf32>
    %1122 = arith.negf %1121 : vector<2x32xf32>
    %1123 = math.exp %1122 : vector<2x32xf32>
    %cst_298 = arith.constant 1.000000e+00 : f32
    %1124 = vector.broadcast %cst_298 : f32 to vector<2x32xf32>
    %1125 = arith.addf %1124, %1123 : vector<2x32xf32>
    %1126 = arith.divf %1124, %1125 : vector<2x32xf32>
    %1127 = vector.extract_strided_slice %1114 {offsets = [0, 64], sizes = [2, 32], strides = [1, 1]} : vector<2x128xf32> to vector<2x32xf32>
    %1128 = math.tanh %1127 : vector<2x32xf32>
    %1129 = vector.extract_strided_slice %1114 {offsets = [0, 96], sizes = [2, 32], strides = [1, 1]} : vector<2x128xf32> to vector<2x32xf32>
    %1130 = arith.negf %1129 : vector<2x32xf32>
    %1131 = math.exp %1130 : vector<2x32xf32>
    %cst_299 = arith.constant 1.000000e+00 : f32
    %1132 = vector.broadcast %cst_299 : f32 to vector<2x32xf32>
    %1133 = arith.addf %1132, %1131 : vector<2x32xf32>
    %1134 = arith.divf %1132, %1133 : vector<2x32xf32>
    %1135 = arith.mulf %1126, %1100 : vector<2x32xf32>
    %1136 = arith.mulf %1120, %1128 : vector<2x32xf32>
    %1137 = arith.addf %1135, %1136 : vector<2x32xf32>
    %1138 = math.tanh %1137 : vector<2x32xf32>
    %1139 = arith.mulf %1134, %1138 : vector<2x32xf32>
    %1140 = vector.extract_strided_slice %1139 {offsets = [0, 0], sizes = [2, 16], strides = [1, 1]} : vector<2x32xf32> to vector<2x16xf32>
    %1141 = vector.extract_strided_slice %1139 {offsets = [0, 16], sizes = [2, 16], strides = [1, 1]} : vector<2x32xf32> to vector<2x16xf32>
    %1142 = arith.truncf %1139 : vector<2x32xf32> to vector<2x32xbf16>
    %cst_300 = arith.constant dense<0.000000e+00> : vector<2x128xf32>
    %1143 = tpu.matmul %1142, %698, %cst_300 {dimension_numbers = #tpu.dot_dimension_numbers<[1], [0], [0], [1], [0, 0, 1, 1], [], []>} : vector<2x32xbf16>, vector<32x128xbf16>, vector<2x128xf32> -> vector<2x128xf32>
    %c26_301 = arith.constant 26 : index
    %c0_302 = arith.constant 0 : index
    %1144 = vector.load %arg20[%c26_301, %c0_302] : memref<40x256xf32, #tpu.memory_space<vmem>>, vector<2x128xf32>
    %1145 = arith.addf %1143, %1144 : vector<2x128xf32>
    %c12_303 = arith.constant 12 : index
    %c128_304 = arith.constant 128 : index
    %1146 = vector.load %arg20[%c12_303, %c128_304] : memref<40x256xf32, #tpu.memory_space<vmem>>, vector<2x128xf32>
    %1147 = arith.addf %1145, %1146 : vector<2x128xf32>
    %1148 = vector.extract_strided_slice %1147 {offsets = [0, 0], sizes = [2, 32], strides = [1, 1]} : vector<2x128xf32> to vector<2x32xf32>
    %1149 = arith.negf %1148 : vector<2x32xf32>
    %1150 = math.exp %1149 : vector<2x32xf32>
    %cst_305 = arith.constant 1.000000e+00 : f32
    %1151 = vector.broadcast %cst_305 : f32 to vector<2x32xf32>
    %1152 = arith.addf %1151, %1150 : vector<2x32xf32>
    %1153 = arith.divf %1151, %1152 : vector<2x32xf32>
    %1154 = vector.extract_strided_slice %1147 {offsets = [0, 32], sizes = [2, 32], strides = [1, 1]} : vector<2x128xf32> to vector<2x32xf32>
    %1155 = arith.negf %1154 : vector<2x32xf32>
    %1156 = math.exp %1155 : vector<2x32xf32>
    %cst_306 = arith.constant 1.000000e+00 : f32
    %1157 = vector.broadcast %cst_306 : f32 to vector<2x32xf32>
    %1158 = arith.addf %1157, %1156 : vector<2x32xf32>
    %1159 = arith.divf %1157, %1158 : vector<2x32xf32>
    %1160 = vector.extract_strided_slice %1147 {offsets = [0, 64], sizes = [2, 32], strides = [1, 1]} : vector<2x128xf32> to vector<2x32xf32>
    %1161 = math.tanh %1160 : vector<2x32xf32>
    %1162 = vector.extract_strided_slice %1147 {offsets = [0, 96], sizes = [2, 32], strides = [1, 1]} : vector<2x128xf32> to vector<2x32xf32>
    %1163 = arith.negf %1162 : vector<2x32xf32>
    %1164 = math.exp %1163 : vector<2x32xf32>
    %cst_307 = arith.constant 1.000000e+00 : f32
    %1165 = vector.broadcast %cst_307 : f32 to vector<2x32xf32>
    %1166 = arith.addf %1165, %1164 : vector<2x32xf32>
    %1167 = arith.divf %1165, %1166 : vector<2x32xf32>
    %1168 = arith.mulf %1159, %1137 : vector<2x32xf32>
    %1169 = arith.mulf %1153, %1161 : vector<2x32xf32>
    %1170 = arith.addf %1168, %1169 : vector<2x32xf32>
    %1171 = math.tanh %1170 : vector<2x32xf32>
    %1172 = arith.mulf %1167, %1171 : vector<2x32xf32>
    %1173 = vector.extract_strided_slice %1172 {offsets = [0, 0], sizes = [2, 16], strides = [1, 1]} : vector<2x32xf32> to vector<2x16xf32>
    %1174 = vector.extract_strided_slice %1172 {offsets = [0, 16], sizes = [2, 16], strides = [1, 1]} : vector<2x32xf32> to vector<2x16xf32>
    %1175 = arith.truncf %1172 : vector<2x32xf32> to vector<2x32xbf16>
    %cst_308 = arith.constant dense<0.000000e+00> : vector<2x128xf32>
    %1176 = tpu.matmul %1175, %698, %cst_308 {dimension_numbers = #tpu.dot_dimension_numbers<[1], [0], [0], [1], [0, 0, 1, 1], [], []>} : vector<2x32xbf16>, vector<32x128xbf16>, vector<2x128xf32> -> vector<2x128xf32>
    %c28_309 = arith.constant 28 : index
    %c0_310 = arith.constant 0 : index
    %1177 = vector.load %arg20[%c28_309, %c0_310] : memref<40x256xf32, #tpu.memory_space<vmem>>, vector<2x128xf32>
    %1178 = arith.addf %1176, %1177 : vector<2x128xf32>
    %c10_311 = arith.constant 10 : index
    %c128_312 = arith.constant 128 : index
    %1179 = vector.load %arg20[%c10_311, %c128_312] : memref<40x256xf32, #tpu.memory_space<vmem>>, vector<2x128xf32>
    %1180 = arith.addf %1178, %1179 : vector<2x128xf32>
    %1181 = vector.extract_strided_slice %1180 {offsets = [0, 0], sizes = [2, 32], strides = [1, 1]} : vector<2x128xf32> to vector<2x32xf32>
    %1182 = arith.negf %1181 : vector<2x32xf32>
    %1183 = math.exp %1182 : vector<2x32xf32>
    %cst_313 = arith.constant 1.000000e+00 : f32
    %1184 = vector.broadcast %cst_313 : f32 to vector<2x32xf32>
    %1185 = arith.addf %1184, %1183 : vector<2x32xf32>
    %1186 = arith.divf %1184, %1185 : vector<2x32xf32>
    %1187 = vector.extract_strided_slice %1180 {offsets = [0, 32], sizes = [2, 32], strides = [1, 1]} : vector<2x128xf32> to vector<2x32xf32>
    %1188 = arith.negf %1187 : vector<2x32xf32>
    %1189 = math.exp %1188 : vector<2x32xf32>
    %cst_314 = arith.constant 1.000000e+00 : f32
    %1190 = vector.broadcast %cst_314 : f32 to vector<2x32xf32>
    %1191 = arith.addf %1190, %1189 : vector<2x32xf32>
    %1192 = arith.divf %1190, %1191 : vector<2x32xf32>
    %1193 = vector.extract_strided_slice %1180 {offsets = [0, 64], sizes = [2, 32], strides = [1, 1]} : vector<2x128xf32> to vector<2x32xf32>
    %1194 = math.tanh %1193 : vector<2x32xf32>
    %1195 = vector.extract_strided_slice %1180 {offsets = [0, 96], sizes = [2, 32], strides = [1, 1]} : vector<2x128xf32> to vector<2x32xf32>
    %1196 = arith.negf %1195 : vector<2x32xf32>
    %1197 = math.exp %1196 : vector<2x32xf32>
    %cst_315 = arith.constant 1.000000e+00 : f32
    %1198 = vector.broadcast %cst_315 : f32 to vector<2x32xf32>
    %1199 = arith.addf %1198, %1197 : vector<2x32xf32>
    %1200 = arith.divf %1198, %1199 : vector<2x32xf32>
    %1201 = arith.mulf %1192, %1170 : vector<2x32xf32>
    %1202 = arith.mulf %1186, %1194 : vector<2x32xf32>
    %1203 = arith.addf %1201, %1202 : vector<2x32xf32>
    %1204 = math.tanh %1203 : vector<2x32xf32>
    %1205 = arith.mulf %1200, %1204 : vector<2x32xf32>
    %1206 = vector.extract_strided_slice %1205 {offsets = [0, 0], sizes = [2, 16], strides = [1, 1]} : vector<2x32xf32> to vector<2x16xf32>
    %1207 = vector.extract_strided_slice %1205 {offsets = [0, 16], sizes = [2, 16], strides = [1, 1]} : vector<2x32xf32> to vector<2x16xf32>
    %1208 = arith.truncf %1205 : vector<2x32xf32> to vector<2x32xbf16>
    %cst_316 = arith.constant dense<0.000000e+00> : vector<2x128xf32>
    %1209 = tpu.matmul %1208, %698, %cst_316 {dimension_numbers = #tpu.dot_dimension_numbers<[1], [0], [0], [1], [0, 0, 1, 1], [], []>} : vector<2x32xbf16>, vector<32x128xbf16>, vector<2x128xf32> -> vector<2x128xf32>
    %c30_317 = arith.constant 30 : index
    %c0_318 = arith.constant 0 : index
    %1210 = vector.load %arg20[%c30_317, %c0_318] : memref<40x256xf32, #tpu.memory_space<vmem>>, vector<2x128xf32>
    %1211 = arith.addf %1209, %1210 : vector<2x128xf32>
    %c8_319 = arith.constant 8 : index
    %c128_320 = arith.constant 128 : index
    %1212 = vector.load %arg20[%c8_319, %c128_320] : memref<40x256xf32, #tpu.memory_space<vmem>>, vector<2x128xf32>
    %1213 = arith.addf %1211, %1212 : vector<2x128xf32>
    %1214 = vector.extract_strided_slice %1213 {offsets = [0, 0], sizes = [2, 32], strides = [1, 1]} : vector<2x128xf32> to vector<2x32xf32>
    %1215 = arith.negf %1214 : vector<2x32xf32>
    %1216 = math.exp %1215 : vector<2x32xf32>
    %cst_321 = arith.constant 1.000000e+00 : f32
    %1217 = vector.broadcast %cst_321 : f32 to vector<2x32xf32>
    %1218 = arith.addf %1217, %1216 : vector<2x32xf32>
    %1219 = arith.divf %1217, %1218 : vector<2x32xf32>
    %1220 = vector.extract_strided_slice %1213 {offsets = [0, 32], sizes = [2, 32], strides = [1, 1]} : vector<2x128xf32> to vector<2x32xf32>
    %1221 = arith.negf %1220 : vector<2x32xf32>
    %1222 = math.exp %1221 : vector<2x32xf32>
    %cst_322 = arith.constant 1.000000e+00 : f32
    %1223 = vector.broadcast %cst_322 : f32 to vector<2x32xf32>
    %1224 = arith.addf %1223, %1222 : vector<2x32xf32>
    %1225 = arith.divf %1223, %1224 : vector<2x32xf32>
    %1226 = vector.extract_strided_slice %1213 {offsets = [0, 64], sizes = [2, 32], strides = [1, 1]} : vector<2x128xf32> to vector<2x32xf32>
    %1227 = math.tanh %1226 : vector<2x32xf32>
    %1228 = vector.extract_strided_slice %1213 {offsets = [0, 96], sizes = [2, 32], strides = [1, 1]} : vector<2x128xf32> to vector<2x32xf32>
    %1229 = arith.negf %1228 : vector<2x32xf32>
    %1230 = math.exp %1229 : vector<2x32xf32>
    %cst_323 = arith.constant 1.000000e+00 : f32
    %1231 = vector.broadcast %cst_323 : f32 to vector<2x32xf32>
    %1232 = arith.addf %1231, %1230 : vector<2x32xf32>
    %1233 = arith.divf %1231, %1232 : vector<2x32xf32>
    %1234 = arith.mulf %1225, %1203 : vector<2x32xf32>
    %1235 = arith.mulf %1219, %1227 : vector<2x32xf32>
    %1236 = arith.addf %1234, %1235 : vector<2x32xf32>
    %1237 = math.tanh %1236 : vector<2x32xf32>
    %1238 = arith.mulf %1233, %1237 : vector<2x32xf32>
    %1239 = vector.extract_strided_slice %1238 {offsets = [0, 0], sizes = [2, 16], strides = [1, 1]} : vector<2x32xf32> to vector<2x16xf32>
    %1240 = vector.extract_strided_slice %1238 {offsets = [0, 16], sizes = [2, 16], strides = [1, 1]} : vector<2x32xf32> to vector<2x16xf32>
    %1241 = tpu.concatenate %1140, %1173, %1206, %1239 in 0 : vector<2x16xf32>, vector<2x16xf32>, vector<2x16xf32>, vector<2x16xf32> -> vector<8x16xf32>
    %c24_324 = arith.constant 24 : index
    %c0_325 = arith.constant 0 : index
    %1242 = vector.load %arg22[%c24_324, %c0_325] : memref<40x32xf32, #tpu.memory_space<vmem>>, vector<8x16xf32>
    tpu.vector_store %arg22[%c24_324, %c0_325], %1241 {strides = array<i32>} : memref<40x32xf32, #tpu.memory_space<vmem>>, vector<8x16xf32>,
    %1243 = tpu.concatenate %1240, %1207, %1174, %1141 in 0 : vector<2x16xf32>, vector<2x16xf32>, vector<2x16xf32>, vector<2x16xf32> -> vector<8x16xf32>
    %c8_326 = arith.constant 8 : index
    %c16_327 = arith.constant 16 : index
    %1244 = vector.load %arg22[%c8_326, %c16_327] : memref<40x32xf32, #tpu.memory_space<vmem>>, vector<8x16xf32>
    tpu.vector_store %arg22[%c8_326, %c16_327], %1243 {strides = array<i32>} : memref<40x32xf32, #tpu.memory_space<vmem>>, vector<8x16xf32>,
    %1245 = arith.truncf %1238 : vector<2x32xf32> to vector<2x32xbf16>
    %cst_328 = arith.constant dense<0.000000e+00> : vector<2x128xf32>
    %1246 = tpu.matmul %1245, %698, %cst_328 {dimension_numbers = #tpu.dot_dimension_numbers<[1], [0], [0], [1], [0, 0, 1, 1], [], []>} : vector<2x32xbf16>, vector<32x128xbf16>, vector<2x128xf32> -> vector<2x128xf32>
    %c32_329 = arith.constant 32 : index
    %c0_330 = arith.constant 0 : index
    %1247 = vector.load %arg20[%c32_329, %c0_330] : memref<40x256xf32, #tpu.memory_space<vmem>>, vector<2x128xf32>
    %1248 = arith.addf %1246, %1247 : vector<2x128xf32>
    %c6_331 = arith.constant 6 : index
    %c128_332 = arith.constant 128 : index
    %1249 = vector.load %arg20[%c6_331, %c128_332] : memref<40x256xf32, #tpu.memory_space<vmem>>, vector<2x128xf32>
    %1250 = arith.addf %1248, %1249 : vector<2x128xf32>
    %1251 = vector.extract_strided_slice %1250 {offsets = [0, 0], sizes = [2, 32], strides = [1, 1]} : vector<2x128xf32> to vector<2x32xf32>
    %1252 = arith.negf %1251 : vector<2x32xf32>
    %1253 = math.exp %1252 : vector<2x32xf32>
    %cst_333 = arith.constant 1.000000e+00 : f32
    %1254 = vector.broadcast %cst_333 : f32 to vector<2x32xf32>
    %1255 = arith.addf %1254, %1253 : vector<2x32xf32>
    %1256 = arith.divf %1254, %1255 : vector<2x32xf32>
    %1257 = vector.extract_strided_slice %1250 {offsets = [0, 32], sizes = [2, 32], strides = [1, 1]} : vector<2x128xf32> to vector<2x32xf32>
    %1258 = arith.negf %1257 : vector<2x32xf32>
    %1259 = math.exp %1258 : vector<2x32xf32>
    %cst_334 = arith.constant 1.000000e+00 : f32
    %1260 = vector.broadcast %cst_334 : f32 to vector<2x32xf32>
    %1261 = arith.addf %1260, %1259 : vector<2x32xf32>
    %1262 = arith.divf %1260, %1261 : vector<2x32xf32>
    %1263 = vector.extract_strided_slice %1250 {offsets = [0, 64], sizes = [2, 32], strides = [1, 1]} : vector<2x128xf32> to vector<2x32xf32>
    %1264 = math.tanh %1263 : vector<2x32xf32>
    %1265 = vector.extract_strided_slice %1250 {offsets = [0, 96], sizes = [2, 32], strides = [1, 1]} : vector<2x128xf32> to vector<2x32xf32>
    %1266 = arith.negf %1265 : vector<2x32xf32>
    %1267 = math.exp %1266 : vector<2x32xf32>
    %cst_335 = arith.constant 1.000000e+00 : f32
    %1268 = vector.broadcast %cst_335 : f32 to vector<2x32xf32>
    %1269 = arith.addf %1268, %1267 : vector<2x32xf32>
    %1270 = arith.divf %1268, %1269 : vector<2x32xf32>
    %1271 = arith.mulf %1262, %1236 : vector<2x32xf32>
    %1272 = arith.mulf %1256, %1264 : vector<2x32xf32>
    %1273 = arith.addf %1271, %1272 : vector<2x32xf32>
    %1274 = math.tanh %1273 : vector<2x32xf32>
    %1275 = arith.mulf %1270, %1274 : vector<2x32xf32>
    %1276 = vector.extract_strided_slice %1275 {offsets = [0, 0], sizes = [2, 16], strides = [1, 1]} : vector<2x32xf32> to vector<2x16xf32>
    %1277 = vector.extract_strided_slice %1275 {offsets = [0, 16], sizes = [2, 16], strides = [1, 1]} : vector<2x32xf32> to vector<2x16xf32>
    %1278 = arith.truncf %1275 : vector<2x32xf32> to vector<2x32xbf16>
    %cst_336 = arith.constant dense<0.000000e+00> : vector<2x128xf32>
    %1279 = tpu.matmul %1278, %698, %cst_336 {dimension_numbers = #tpu.dot_dimension_numbers<[1], [0], [0], [1], [0, 0, 1, 1], [], []>} : vector<2x32xbf16>, vector<32x128xbf16>, vector<2x128xf32> -> vector<2x128xf32>
    %c34_337 = arith.constant 34 : index
    %c0_338 = arith.constant 0 : index
    %1280 = vector.load %arg20[%c34_337, %c0_338] : memref<40x256xf32, #tpu.memory_space<vmem>>, vector<2x128xf32>
    %1281 = arith.addf %1279, %1280 : vector<2x128xf32>
    %c4_339 = arith.constant 4 : index
    %c128_340 = arith.constant 128 : index
    %1282 = vector.load %arg20[%c4_339, %c128_340] : memref<40x256xf32, #tpu.memory_space<vmem>>, vector<2x128xf32>
    %1283 = arith.addf %1281, %1282 : vector<2x128xf32>
    %1284 = vector.extract_strided_slice %1283 {offsets = [0, 0], sizes = [2, 32], strides = [1, 1]} : vector<2x128xf32> to vector<2x32xf32>
    %1285 = arith.negf %1284 : vector<2x32xf32>
    %1286 = math.exp %1285 : vector<2x32xf32>
    %cst_341 = arith.constant 1.000000e+00 : f32
    %1287 = vector.broadcast %cst_341 : f32 to vector<2x32xf32>
    %1288 = arith.addf %1287, %1286 : vector<2x32xf32>
    %1289 = arith.divf %1287, %1288 : vector<2x32xf32>
    %1290 = vector.extract_strided_slice %1283 {offsets = [0, 32], sizes = [2, 32], strides = [1, 1]} : vector<2x128xf32> to vector<2x32xf32>
    %1291 = arith.negf %1290 : vector<2x32xf32>
    %1292 = math.exp %1291 : vector<2x32xf32>
    %cst_342 = arith.constant 1.000000e+00 : f32
    %1293 = vector.broadcast %cst_342 : f32 to vector<2x32xf32>
    %1294 = arith.addf %1293, %1292 : vector<2x32xf32>
    %1295 = arith.divf %1293, %1294 : vector<2x32xf32>
    %1296 = vector.extract_strided_slice %1283 {offsets = [0, 64], sizes = [2, 32], strides = [1, 1]} : vector<2x128xf32> to vector<2x32xf32>
    %1297 = math.tanh %1296 : vector<2x32xf32>
    %1298 = vector.extract_strided_slice %1283 {offsets = [0, 96], sizes = [2, 32], strides = [1, 1]} : vector<2x128xf32> to vector<2x32xf32>
    %1299 = arith.negf %1298 : vector<2x32xf32>
    %1300 = math.exp %1299 : vector<2x32xf32>
    %cst_343 = arith.constant 1.000000e+00 : f32
    %1301 = vector.broadcast %cst_343 : f32 to vector<2x32xf32>
    %1302 = arith.addf %1301, %1300 : vector<2x32xf32>
    %1303 = arith.divf %1301, %1302 : vector<2x32xf32>
    %1304 = arith.mulf %1295, %1273 : vector<2x32xf32>
    %1305 = arith.mulf %1289, %1297 : vector<2x32xf32>
    %1306 = arith.addf %1304, %1305 : vector<2x32xf32>
    %1307 = math.tanh %1306 : vector<2x32xf32>
    %1308 = arith.mulf %1303, %1307 : vector<2x32xf32>
    %1309 = vector.extract_strided_slice %1308 {offsets = [0, 0], sizes = [2, 16], strides = [1, 1]} : vector<2x32xf32> to vector<2x16xf32>
    %1310 = vector.extract_strided_slice %1308 {offsets = [0, 16], sizes = [2, 16], strides = [1, 1]} : vector<2x32xf32> to vector<2x16xf32>
    %1311 = arith.truncf %1308 : vector<2x32xf32> to vector<2x32xbf16>
    %cst_344 = arith.constant dense<0.000000e+00> : vector<2x128xf32>
    %1312 = tpu.matmul %1311, %698, %cst_344 {dimension_numbers = #tpu.dot_dimension_numbers<[1], [0], [0], [1], [0, 0, 1, 1], [], []>} : vector<2x32xbf16>, vector<32x128xbf16>, vector<2x128xf32> -> vector<2x128xf32>
    %c36_345 = arith.constant 36 : index
    %c0_346 = arith.constant 0 : index
    %1313 = vector.load %arg20[%c36_345, %c0_346] : memref<40x256xf32, #tpu.memory_space<vmem>>, vector<2x128xf32>
    %1314 = arith.addf %1312, %1313 : vector<2x128xf32>
    %c2_347 = arith.constant 2 : index
    %c128_348 = arith.constant 128 : index
    %1315 = vector.load %arg20[%c2_347, %c128_348] : memref<40x256xf32, #tpu.memory_space<vmem>>, vector<2x128xf32>
    %1316 = arith.addf %1314, %1315 : vector<2x128xf32>
    %1317 = vector.extract_strided_slice %1316 {offsets = [0, 0], sizes = [2, 32], strides = [1, 1]} : vector<2x128xf32> to vector<2x32xf32>
    %1318 = arith.negf %1317 : vector<2x32xf32>
    %1319 = math.exp %1318 : vector<2x32xf32>
    %cst_349 = arith.constant 1.000000e+00 : f32
    %1320 = vector.broadcast %cst_349 : f32 to vector<2x32xf32>
    %1321 = arith.addf %1320, %1319 : vector<2x32xf32>
    %1322 = arith.divf %1320, %1321 : vector<2x32xf32>
    %1323 = vector.extract_strided_slice %1316 {offsets = [0, 32], sizes = [2, 32], strides = [1, 1]} : vector<2x128xf32> to vector<2x32xf32>
    %1324 = arith.negf %1323 : vector<2x32xf32>
    %1325 = math.exp %1324 : vector<2x32xf32>
    %cst_350 = arith.constant 1.000000e+00 : f32
    %1326 = vector.broadcast %cst_350 : f32 to vector<2x32xf32>
    %1327 = arith.addf %1326, %1325 : vector<2x32xf32>
    %1328 = arith.divf %1326, %1327 : vector<2x32xf32>
    %1329 = vector.extract_strided_slice %1316 {offsets = [0, 64], sizes = [2, 32], strides = [1, 1]} : vector<2x128xf32> to vector<2x32xf32>
    %1330 = math.tanh %1329 : vector<2x32xf32>
    %1331 = vector.extract_strided_slice %1316 {offsets = [0, 96], sizes = [2, 32], strides = [1, 1]} : vector<2x128xf32> to vector<2x32xf32>
    %1332 = arith.negf %1331 : vector<2x32xf32>
    %1333 = math.exp %1332 : vector<2x32xf32>
    %cst_351 = arith.constant 1.000000e+00 : f32
    %1334 = vector.broadcast %cst_351 : f32 to vector<2x32xf32>
    %1335 = arith.addf %1334, %1333 : vector<2x32xf32>
    %1336 = arith.divf %1334, %1335 : vector<2x32xf32>
    %1337 = arith.mulf %1328, %1306 : vector<2x32xf32>
    %1338 = arith.mulf %1322, %1330 : vector<2x32xf32>
    %1339 = arith.addf %1337, %1338 : vector<2x32xf32>
    %1340 = math.tanh %1339 : vector<2x32xf32>
    %1341 = arith.mulf %1336, %1340 : vector<2x32xf32>
    %1342 = vector.extract_strided_slice %1341 {offsets = [0, 0], sizes = [2, 16], strides = [1, 1]} : vector<2x32xf32> to vector<2x16xf32>
    %1343 = vector.extract_strided_slice %1341 {offsets = [0, 16], sizes = [2, 16], strides = [1, 1]} : vector<2x32xf32> to vector<2x16xf32>
    %1344 = arith.truncf %1341 : vector<2x32xf32> to vector<2x32xbf16>
    %cst_352 = arith.constant dense<0.000000e+00> : vector<2x128xf32>
    %1345 = tpu.matmul %1344, %698, %cst_352 {dimension_numbers = #tpu.dot_dimension_numbers<[1], [0], [0], [1], [0, 0, 1, 1], [], []>} : vector<2x32xbf16>, vector<32x128xbf16>, vector<2x128xf32> -> vector<2x128xf32>
    %c38_353 = arith.constant 38 : index
    %c0_354 = arith.constant 0 : index
    %1346 = vector.load %arg20[%c38_353, %c0_354] : memref<40x256xf32, #tpu.memory_space<vmem>>, vector<2x128xf32>
    %1347 = arith.addf %1345, %1346 : vector<2x128xf32>
    %c0_355 = arith.constant 0 : index
    %c128_356 = arith.constant 128 : index
    %1348 = vector.load %arg20[%c0_355, %c128_356] : memref<40x256xf32, #tpu.memory_space<vmem>>, vector<2x128xf32>
    %1349 = arith.addf %1347, %1348 : vector<2x128xf32>
    %1350 = vector.extract_strided_slice %1349 {offsets = [0, 0], sizes = [2, 32], strides = [1, 1]} : vector<2x128xf32> to vector<2x32xf32>
    %1351 = arith.negf %1350 : vector<2x32xf32>
    %1352 = math.exp %1351 : vector<2x32xf32>
    %cst_357 = arith.constant 1.000000e+00 : f32
    %1353 = vector.broadcast %cst_357 : f32 to vector<2x32xf32>
    %1354 = arith.addf %1353, %1352 : vector<2x32xf32>
    %1355 = arith.divf %1353, %1354 : vector<2x32xf32>
    %1356 = vector.extract_strided_slice %1349 {offsets = [0, 32], sizes = [2, 32], strides = [1, 1]} : vector<2x128xf32> to vector<2x32xf32>
    %1357 = arith.negf %1356 : vector<2x32xf32>
    %1358 = math.exp %1357 : vector<2x32xf32>
    %cst_358 = arith.constant 1.000000e+00 : f32
    %1359 = vector.broadcast %cst_358 : f32 to vector<2x32xf32>
    %1360 = arith.addf %1359, %1358 : vector<2x32xf32>
    %1361 = arith.divf %1359, %1360 : vector<2x32xf32>
    %1362 = vector.extract_strided_slice %1349 {offsets = [0, 64], sizes = [2, 32], strides = [1, 1]} : vector<2x128xf32> to vector<2x32xf32>
    %1363 = math.tanh %1362 : vector<2x32xf32>
    %1364 = vector.extract_strided_slice %1349 {offsets = [0, 96], sizes = [2, 32], strides = [1, 1]} : vector<2x128xf32> to vector<2x32xf32>
    %1365 = arith.negf %1364 : vector<2x32xf32>
    %1366 = math.exp %1365 : vector<2x32xf32>
    %cst_359 = arith.constant 1.000000e+00 : f32
    %1367 = vector.broadcast %cst_359 : f32 to vector<2x32xf32>
    %1368 = arith.addf %1367, %1366 : vector<2x32xf32>
    %1369 = arith.divf %1367, %1368 : vector<2x32xf32>
    %1370 = arith.mulf %1361, %1339 : vector<2x32xf32>
    %1371 = arith.mulf %1355, %1363 : vector<2x32xf32>
    %1372 = arith.addf %1370, %1371 : vector<2x32xf32>
    %1373 = math.tanh %1372 : vector<2x32xf32>
    %1374 = arith.mulf %1369, %1373 : vector<2x32xf32>
    %1375 = vector.extract_strided_slice %1374 {offsets = [0, 0], sizes = [2, 16], strides = [1, 1]} : vector<2x32xf32> to vector<2x16xf32>
    %1376 = vector.extract_strided_slice %1374 {offsets = [0, 16], sizes = [2, 16], strides = [1, 1]} : vector<2x32xf32> to vector<2x16xf32>
    %1377 = tpu.concatenate %1276, %1309, %1342, %1375 in 0 : vector<2x16xf32>, vector<2x16xf32>, vector<2x16xf32>, vector<2x16xf32> -> vector<8x16xf32>
    %c32_360 = arith.constant 32 : index
    %c0_361 = arith.constant 0 : index
    %1378 = vector.load %arg22[%c32_360, %c0_361] : memref<40x32xf32, #tpu.memory_space<vmem>>, vector<8x16xf32>
    tpu.vector_store %arg22[%c32_360, %c0_361], %1377 {strides = array<i32>} : memref<40x32xf32, #tpu.memory_space<vmem>>, vector<8x16xf32>,
    %1379 = tpu.concatenate %1376, %1343, %1310, %1277 in 0 : vector<2x16xf32>, vector<2x16xf32>, vector<2x16xf32>, vector<2x16xf32> -> vector<8x16xf32>
    %c0_362 = arith.constant 0 : index
    %c16_363 = arith.constant 16 : index
    %1380 = vector.load %arg22[%c0_362, %c16_363] : memref<40x32xf32, #tpu.memory_space<vmem>>, vector<8x16xf32>
    tpu.vector_store %arg22[%c0_362, %c16_363], %1379 {strides = array<i32>} : memref<40x32xf32, #tpu.memory_space<vmem>>, vector<8x16xf32>,
    %c0_364 = arith.constant 0 : index
    %c0_365 = arith.constant 0 : index
    %1381 = vector.load %arg22[%c0_364, %c0_365] : memref<40x32xf32, #tpu.memory_space<vmem>>, vector<40x32xf32>
    %1382 = arith.truncf %1381 : vector<40x32xf32> to vector<40x32xbf16>
    %c0_366 = arith.constant 0 : index
    %c0_367 = arith.constant 0 : index
    %1383 = vector.load %arg7[%c0_366, %c0_367] : memref<32x16xbf16, #tpu.memory_space<vmem>>, vector<32x16xbf16>
    %cst_368 = arith.constant dense<0.000000e+00> : vector<40x16xf32>
    %1384 = tpu.matmul %1382, %1383, %cst_368 {dimension_numbers = #tpu.dot_dimension_numbers<[1], [0], [0], [1], [0, 0, 1, 1], [], []>} : vector<40x32xbf16>, vector<32x16xbf16>, vector<40x16xf32> -> vector<40x16xf32>
    %c0_369 = arith.constant 0 : index
    %c0_370 = arith.constant 0 : index
    %1385 = vector.load %arg8[%c0_369, %c0_370] : memref<1x16xf32, #tpu.memory_space<vmem>>, vector<1x16xf32>
    %1386 = vector.broadcast %1385 : vector<1x16xf32> to vector<40x16xf32>
    %1387 = arith.addf %1384, %1386 : vector<40x16xf32>
    %1388 = math.exp %1387 : vector<40x16xf32>
    %cst_371 = arith.constant 1.000000e+00 : f32
    %1389 = vector.broadcast %cst_371 : f32 to vector<40x16xf32>
    %1390 = arith.addf %1389, %1388 : vector<40x16xf32>
    %1391 = arith.mulf %1390, %1390 : vector<40x16xf32>
    %cst_372 = arith.constant 1.000000e+00 : f32
    %1392 = vector.broadcast %cst_372 : f32 to vector<40x16xf32>
    %1393 = arith.addf %1391, %1392 : vector<40x16xf32>
    %1394 = tpu.reciprocal %1393 {approx = true} : vector<40x16xf32> -> vector<40x16xf32>
    %cst_373 = arith.constant 2.000000e+00 : f32
    %1395 = vector.broadcast %cst_373 : f32 to vector<40x16xf32>
    %1396 = arith.mulf %1395, %1394 : vector<40x16xf32>
    %cst_374 = arith.constant 1.000000e+00 : f32
    %1397 = vector.broadcast %cst_374 : f32 to vector<40x16xf32>
    %1398 = arith.subf %1397, %1396 : vector<40x16xf32>
    %1399 = arith.mulf %1387, %1398 : vector<40x16xf32>
    %1400 = arith.truncf %1399 : vector<40x16xf32> to vector<40x16xbf16>
    %cst_375 = arith.constant 0.000000e+00 : bf16
    %1401 = vector.broadcast %cst_375 : bf16 to vector<4x16xbf16>
    %cst_376 = arith.constant 0.000000e+00 : bf16
    %1402 = vector.broadcast %cst_376 : bf16 to vector<4x16xbf16>
    %1403 = tpu.concatenate %1401, %1400, %1402 in 0 : vector<4x16xbf16>, vector<40x16xbf16>, vector<4x16xbf16> -> vector<48x16xbf16>
    %cst_377 = arith.constant 0.000000e+00 : f32
    %1404 = vector.broadcast %cst_377 : f32 to vector<2x16xf32>
    %c0_378 = arith.constant 0 : index
    %c0_379 = arith.constant 0 : index
    %1405 = vector.load %arg14[%c0_378, %c0_379] : memref<1x16xf32, #tpu.memory_space<vmem>>, vector<1x16xf32>
    %1406 = vector.broadcast %1405 : vector<1x16xf32> to vector<2x16xf32>
    %1407 = arith.addf %1404, %1406 : vector<2x16xf32>
    %c0_380 = arith.constant 0 : index
    %c0_381 = arith.constant 0 : index
    %1408 = vector.load %arg9[%c0_380, %c0_381] : memref<48x8xbf16, #tpu.memory_space<vmem>>, vector<48x8xbf16>
    %c0_382 = arith.constant 0 : index
    %c0_383 = arith.constant 0 : index
    %1409 = vector.load %arg10[%c0_382, %c0_383] : memref<1x8xf32, #tpu.memory_space<vmem>>, vector<1x8xf32>
    %1410 = vector.extract_strided_slice %1403 {offsets = [2, 0], sizes = [40, 16], strides = [1, 1]} : vector<48x16xbf16> to vector<40x16xbf16>
    %1411 = vector.extract_strided_slice %1408 {offsets = [0, 0], sizes = [16, 8], strides = [1, 1]} : vector<48x8xbf16> to vector<16x8xbf16>
    %cst_384 = arith.constant dense<0.000000e+00> : vector<40x8xf32>
    %1412 = tpu.matmul %1410, %1411, %cst_384 {dimension_numbers = #tpu.dot_dimension_numbers<[1], [0], [0], [1], [0, 0, 1, 1], [], []>} : vector<40x16xbf16>, vector<16x8xbf16>, vector<40x8xf32> -> vector<40x8xf32>
    %1413 = vector.broadcast %1409 : vector<1x8xf32> to vector<40x8xf32>
    %1414 = arith.addf %1413, %1412 : vector<40x8xf32>
    %1415 = vector.extract_strided_slice %1403 {offsets = [4, 0], sizes = [40, 16], strides = [1, 1]} : vector<48x16xbf16> to vector<40x16xbf16>
    %1416 = vector.extract_strided_slice %1408 {offsets = [16, 0], sizes = [16, 8], strides = [1, 1]} : vector<48x8xbf16> to vector<16x8xbf16>
    %cst_385 = arith.constant dense<0.000000e+00> : vector<40x8xf32>
    %1417 = tpu.matmul %1415, %1416, %cst_385 {dimension_numbers = #tpu.dot_dimension_numbers<[1], [0], [0], [1], [0, 0, 1, 1], [], []>} : vector<40x16xbf16>, vector<16x8xbf16>, vector<40x8xf32> -> vector<40x8xf32>
    %1418 = arith.addf %1414, %1417 : vector<40x8xf32>
    %1419 = vector.extract_strided_slice %1403 {offsets = [6, 0], sizes = [40, 16], strides = [1, 1]} : vector<48x16xbf16> to vector<40x16xbf16>
    %1420 = vector.extract_strided_slice %1408 {offsets = [32, 0], sizes = [16, 8], strides = [1, 1]} : vector<48x8xbf16> to vector<16x8xbf16>
    %cst_386 = arith.constant dense<0.000000e+00> : vector<40x8xf32>
    %1421 = tpu.matmul %1419, %1420, %cst_386 {dimension_numbers = #tpu.dot_dimension_numbers<[1], [0], [0], [1], [0, 0, 1, 1], [], []>} : vector<40x16xbf16>, vector<16x8xbf16>, vector<40x8xf32> -> vector<40x8xf32>
    %1422 = arith.addf %1418, %1421 : vector<40x8xf32>
    %1423 = math.exp %1422 : vector<40x8xf32>
    %cst_387 = arith.constant 1.000000e+00 : f32
    %1424 = vector.broadcast %cst_387 : f32 to vector<40x8xf32>
    %1425 = arith.addf %1424, %1423 : vector<40x8xf32>
    %1426 = arith.mulf %1425, %1425 : vector<40x8xf32>
    %cst_388 = arith.constant 1.000000e+00 : f32
    %1427 = vector.broadcast %cst_388 : f32 to vector<40x8xf32>
    %1428 = arith.addf %1426, %1427 : vector<40x8xf32>
    %1429 = tpu.reciprocal %1428 {approx = true} : vector<40x8xf32> -> vector<40x8xf32>
    %cst_389 = arith.constant 2.000000e+00 : f32
    %1430 = vector.broadcast %cst_389 : f32 to vector<40x8xf32>
    %1431 = arith.mulf %1430, %1429 : vector<40x8xf32>
    %cst_390 = arith.constant 1.000000e+00 : f32
    %1432 = vector.broadcast %cst_390 : f32 to vector<40x8xf32>
    %1433 = arith.subf %1432, %1431 : vector<40x8xf32>
    %1434 = arith.mulf %1422, %1433 : vector<40x8xf32>
    %1435 = arith.truncf %1434 : vector<40x8xf32> to vector<40x8xbf16>
    %1436 = vector.extract_strided_slice %1435 {offsets = [0, 0], sizes = [2, 8], strides = [1, 1]} : vector<40x8xbf16> to vector<2x8xbf16>
    %1437 = vector.extract_strided_slice %1435 {offsets = [2, 0], sizes = [2, 8], strides = [1, 1]} : vector<40x8xbf16> to vector<2x8xbf16>
    %1438 = arith.maximumf %1436, %1437 : vector<2x8xbf16>
    %c0_391 = arith.constant 0 : index
    %c0_392 = arith.constant 0 : index
    %1439 = vector.load %arg13[%c0_391, %c0_392] : memref<160x16xbf16, #tpu.memory_space<vmem>>, vector<8x16xbf16>
    %cst_393 = arith.constant dense<0.000000e+00> : vector<2x16xf32>
    %1440 = tpu.matmul %1438, %1439, %cst_393 {dimension_numbers = #tpu.dot_dimension_numbers<[1], [0], [0], [1], [0, 0, 1, 1], [], []>} : vector<2x8xbf16>, vector<8x16xbf16>, vector<2x16xf32> -> vector<2x16xf32>
    %1441 = arith.addf %1407, %1440 : vector<2x16xf32>
    %1442 = vector.extract_strided_slice %1435 {offsets = [4, 0], sizes = [2, 8], strides = [1, 1]} : vector<40x8xbf16> to vector<2x8xbf16>
    %1443 = vector.extract_strided_slice %1435 {offsets = [6, 0], sizes = [2, 8], strides = [1, 1]} : vector<40x8xbf16> to vector<2x8xbf16>
    %1444 = arith.maximumf %1442, %1443 : vector<2x8xbf16>
    %c8_394 = arith.constant 8 : index
    %c0_395 = arith.constant 0 : index
    %1445 = vector.load %arg13[%c8_394, %c0_395] : memref<160x16xbf16, #tpu.memory_space<vmem>>, vector<8x16xbf16>
    %cst_396 = arith.constant dense<0.000000e+00> : vector<2x16xf32>
    %1446 = tpu.matmul %1444, %1445, %cst_396 {dimension_numbers = #tpu.dot_dimension_numbers<[1], [0], [0], [1], [0, 0, 1, 1], [], []>} : vector<2x8xbf16>, vector<8x16xbf16>, vector<2x16xf32> -> vector<2x16xf32>
    %1447 = arith.addf %1441, %1446 : vector<2x16xf32>
    %1448 = vector.extract_strided_slice %1435 {offsets = [8, 0], sizes = [2, 8], strides = [1, 1]} : vector<40x8xbf16> to vector<2x8xbf16>
    %1449 = vector.extract_strided_slice %1435 {offsets = [10, 0], sizes = [2, 8], strides = [1, 1]} : vector<40x8xbf16> to vector<2x8xbf16>
    %1450 = arith.maximumf %1448, %1449 : vector<2x8xbf16>
    %c16_397 = arith.constant 16 : index
    %c0_398 = arith.constant 0 : index
    %1451 = vector.load %arg13[%c16_397, %c0_398] : memref<160x16xbf16, #tpu.memory_space<vmem>>, vector<8x16xbf16>
    %cst_399 = arith.constant dense<0.000000e+00> : vector<2x16xf32>
    %1452 = tpu.matmul %1450, %1451, %cst_399 {dimension_numbers = #tpu.dot_dimension_numbers<[1], [0], [0], [1], [0, 0, 1, 1], [], []>} : vector<2x8xbf16>, vector<8x16xbf16>, vector<2x16xf32> -> vector<2x16xf32>
    %1453 = arith.addf %1447, %1452 : vector<2x16xf32>
    %1454 = vector.extract_strided_slice %1435 {offsets = [12, 0], sizes = [2, 8], strides = [1, 1]} : vector<40x8xbf16> to vector<2x8xbf16>
    %1455 = vector.extract_strided_slice %1435 {offsets = [14, 0], sizes = [2, 8], strides = [1, 1]} : vector<40x8xbf16> to vector<2x8xbf16>
    %1456 = arith.maximumf %1454, %1455 : vector<2x8xbf16>
    %c24_400 = arith.constant 24 : index
    %c0_401 = arith.constant 0 : index
    %1457 = vector.load %arg13[%c24_400, %c0_401] : memref<160x16xbf16, #tpu.memory_space<vmem>>, vector<8x16xbf16>
    %cst_402 = arith.constant dense<0.000000e+00> : vector<2x16xf32>
    %1458 = tpu.matmul %1456, %1457, %cst_402 {dimension_numbers = #tpu.dot_dimension_numbers<[1], [0], [0], [1], [0, 0, 1, 1], [], []>} : vector<2x8xbf16>, vector<8x16xbf16>, vector<2x16xf32> -> vector<2x16xf32>
    %1459 = arith.addf %1453, %1458 : vector<2x16xf32>
    %1460 = vector.extract_strided_slice %1435 {offsets = [16, 0], sizes = [2, 8], strides = [1, 1]} : vector<40x8xbf16> to vector<2x8xbf16>
    %1461 = vector.extract_strided_slice %1435 {offsets = [18, 0], sizes = [2, 8], strides = [1, 1]} : vector<40x8xbf16> to vector<2x8xbf16>
    %1462 = arith.maximumf %1460, %1461 : vector<2x8xbf16>
    %c32_403 = arith.constant 32 : index
    %c0_404 = arith.constant 0 : index
    %1463 = vector.load %arg13[%c32_403, %c0_404] : memref<160x16xbf16, #tpu.memory_space<vmem>>, vector<8x16xbf16>
    %cst_405 = arith.constant dense<0.000000e+00> : vector<2x16xf32>
    %1464 = tpu.matmul %1462, %1463, %cst_405 {dimension_numbers = #tpu.dot_dimension_numbers<[1], [0], [0], [1], [0, 0, 1, 1], [], []>} : vector<2x8xbf16>, vector<8x16xbf16>, vector<2x16xf32> -> vector<2x16xf32>
    %1465 = arith.addf %1459, %1464 : vector<2x16xf32>
    %1466 = vector.extract_strided_slice %1435 {offsets = [20, 0], sizes = [2, 8], strides = [1, 1]} : vector<40x8xbf16> to vector<2x8xbf16>
    %1467 = vector.extract_strided_slice %1435 {offsets = [22, 0], sizes = [2, 8], strides = [1, 1]} : vector<40x8xbf16> to vector<2x8xbf16>
    %1468 = arith.maximumf %1466, %1467 : vector<2x8xbf16>
    %c40 = arith.constant 40 : index
    %c0_406 = arith.constant 0 : index
    %1469 = vector.load %arg13[%c40, %c0_406] : memref<160x16xbf16, #tpu.memory_space<vmem>>, vector<8x16xbf16>
    %cst_407 = arith.constant dense<0.000000e+00> : vector<2x16xf32>
    %1470 = tpu.matmul %1468, %1469, %cst_407 {dimension_numbers = #tpu.dot_dimension_numbers<[1], [0], [0], [1], [0, 0, 1, 1], [], []>} : vector<2x8xbf16>, vector<8x16xbf16>, vector<2x16xf32> -> vector<2x16xf32>
    %1471 = arith.addf %1465, %1470 : vector<2x16xf32>
    %1472 = vector.extract_strided_slice %1435 {offsets = [24, 0], sizes = [2, 8], strides = [1, 1]} : vector<40x8xbf16> to vector<2x8xbf16>
    %1473 = vector.extract_strided_slice %1435 {offsets = [26, 0], sizes = [2, 8], strides = [1, 1]} : vector<40x8xbf16> to vector<2x8xbf16>
    %1474 = arith.maximumf %1472, %1473 : vector<2x8xbf16>
    %c48 = arith.constant 48 : index
    %c0_408 = arith.constant 0 : index
    %1475 = vector.load %arg13[%c48, %c0_408] : memref<160x16xbf16, #tpu.memory_space<vmem>>, vector<8x16xbf16>
    %cst_409 = arith.constant dense<0.000000e+00> : vector<2x16xf32>
    %1476 = tpu.matmul %1474, %1475, %cst_409 {dimension_numbers = #tpu.dot_dimension_numbers<[1], [0], [0], [1], [0, 0, 1, 1], [], []>} : vector<2x8xbf16>, vector<8x16xbf16>, vector<2x16xf32> -> vector<2x16xf32>
    %1477 = arith.addf %1471, %1476 : vector<2x16xf32>
    %1478 = vector.extract_strided_slice %1435 {offsets = [28, 0], sizes = [2, 8], strides = [1, 1]} : vector<40x8xbf16> to vector<2x8xbf16>
    %1479 = vector.extract_strided_slice %1435 {offsets = [30, 0], sizes = [2, 8], strides = [1, 1]} : vector<40x8xbf16> to vector<2x8xbf16>
    %1480 = arith.maximumf %1478, %1479 : vector<2x8xbf16>
    %c56 = arith.constant 56 : index
    %c0_410 = arith.constant 0 : index
    %1481 = vector.load %arg13[%c56, %c0_410] : memref<160x16xbf16, #tpu.memory_space<vmem>>, vector<8x16xbf16>
    %cst_411 = arith.constant dense<0.000000e+00> : vector<2x16xf32>
    %1482 = tpu.matmul %1480, %1481, %cst_411 {dimension_numbers = #tpu.dot_dimension_numbers<[1], [0], [0], [1], [0, 0, 1, 1], [], []>} : vector<2x8xbf16>, vector<8x16xbf16>, vector<2x16xf32> -> vector<2x16xf32>
    %1483 = arith.addf %1477, %1482 : vector<2x16xf32>
    %1484 = vector.extract_strided_slice %1435 {offsets = [32, 0], sizes = [2, 8], strides = [1, 1]} : vector<40x8xbf16> to vector<2x8xbf16>
    %1485 = vector.extract_strided_slice %1435 {offsets = [34, 0], sizes = [2, 8], strides = [1, 1]} : vector<40x8xbf16> to vector<2x8xbf16>
    %1486 = arith.maximumf %1484, %1485 : vector<2x8xbf16>
    %c64 = arith.constant 64 : index
    %c0_412 = arith.constant 0 : index
    %1487 = vector.load %arg13[%c64, %c0_412] : memref<160x16xbf16, #tpu.memory_space<vmem>>, vector<8x16xbf16>
    %cst_413 = arith.constant dense<0.000000e+00> : vector<2x16xf32>
    %1488 = tpu.matmul %1486, %1487, %cst_413 {dimension_numbers = #tpu.dot_dimension_numbers<[1], [0], [0], [1], [0, 0, 1, 1], [], []>} : vector<2x8xbf16>, vector<8x16xbf16>, vector<2x16xf32> -> vector<2x16xf32>
    %1489 = arith.addf %1483, %1488 : vector<2x16xf32>
    %1490 = vector.extract_strided_slice %1435 {offsets = [36, 0], sizes = [2, 8], strides = [1, 1]} : vector<40x8xbf16> to vector<2x8xbf16>
    %1491 = vector.extract_strided_slice %1435 {offsets = [38, 0], sizes = [2, 8], strides = [1, 1]} : vector<40x8xbf16> to vector<2x8xbf16>
    %1492 = arith.maximumf %1490, %1491 : vector<2x8xbf16>
    %c72 = arith.constant 72 : index
    %c0_414 = arith.constant 0 : index
    %1493 = vector.load %arg13[%c72, %c0_414] : memref<160x16xbf16, #tpu.memory_space<vmem>>, vector<8x16xbf16>
    %cst_415 = arith.constant dense<0.000000e+00> : vector<2x16xf32>
    %1494 = tpu.matmul %1492, %1493, %cst_415 {dimension_numbers = #tpu.dot_dimension_numbers<[1], [0], [0], [1], [0, 0, 1, 1], [], []>} : vector<2x8xbf16>, vector<8x16xbf16>, vector<2x16xf32> -> vector<2x16xf32>
    %1495 = arith.addf %1489, %1494 : vector<2x16xf32>
    %c0_416 = arith.constant 0 : index
    %c0_417 = arith.constant 0 : index
    %1496 = vector.load %arg11[%c0_416, %c0_417] : memref<80x8xbf16, #tpu.memory_space<vmem>>, vector<80x8xbf16>
    %c0_418 = arith.constant 0 : index
    %c0_419 = arith.constant 0 : index
    %1497 = vector.load %arg12[%c0_418, %c0_419] : memref<1x8xf32, #tpu.memory_space<vmem>>, vector<1x8xf32>
    %1498 = vector.extract_strided_slice %1403 {offsets = [0, 0], sizes = [40, 16], strides = [1, 1]} : vector<48x16xbf16> to vector<40x16xbf16>
    %1499 = vector.extract_strided_slice %1496 {offsets = [0, 0], sizes = [16, 8], strides = [1, 1]} : vector<80x8xbf16> to vector<16x8xbf16>
    %cst_420 = arith.constant dense<0.000000e+00> : vector<40x8xf32>
    %1500 = tpu.matmul %1498, %1499, %cst_420 {dimension_numbers = #tpu.dot_dimension_numbers<[1], [0], [0], [1], [0, 0, 1, 1], [], []>} : vector<40x16xbf16>, vector<16x8xbf16>, vector<40x8xf32> -> vector<40x8xf32>
    %1501 = vector.broadcast %1497 : vector<1x8xf32> to vector<40x8xf32>
    %1502 = arith.addf %1501, %1500 : vector<40x8xf32>
    %1503 = vector.extract_strided_slice %1403 {offsets = [2, 0], sizes = [40, 16], strides = [1, 1]} : vector<48x16xbf16> to vector<40x16xbf16>
    %1504 = vector.extract_strided_slice %1496 {offsets = [16, 0], sizes = [16, 8], strides = [1, 1]} : vector<80x8xbf16> to vector<16x8xbf16>
    %cst_421 = arith.constant dense<0.000000e+00> : vector<40x8xf32>
    %1505 = tpu.matmul %1503, %1504, %cst_421 {dimension_numbers = #tpu.dot_dimension_numbers<[1], [0], [0], [1], [0, 0, 1, 1], [], []>} : vector<40x16xbf16>, vector<16x8xbf16>, vector<40x8xf32> -> vector<40x8xf32>
    %1506 = arith.addf %1502, %1505 : vector<40x8xf32>
    %1507 = vector.extract_strided_slice %1403 {offsets = [4, 0], sizes = [40, 16], strides = [1, 1]} : vector<48x16xbf16> to vector<40x16xbf16>
    %1508 = vector.extract_strided_slice %1496 {offsets = [32, 0], sizes = [16, 8], strides = [1, 1]} : vector<80x8xbf16> to vector<16x8xbf16>
    %cst_422 = arith.constant dense<0.000000e+00> : vector<40x8xf32>
    %1509 = tpu.matmul %1507, %1508, %cst_422 {dimension_numbers = #tpu.dot_dimension_numbers<[1], [0], [0], [1], [0, 0, 1, 1], [], []>} : vector<40x16xbf16>, vector<16x8xbf16>, vector<40x8xf32> -> vector<40x8xf32>
    %1510 = arith.addf %1506, %1509 : vector<40x8xf32>
    %1511 = vector.extract_strided_slice %1403 {offsets = [6, 0], sizes = [40, 16], strides = [1, 1]} : vector<48x16xbf16> to vector<40x16xbf16>
    %1512 = vector.extract_strided_slice %1496 {offsets = [48, 0], sizes = [16, 8], strides = [1, 1]} : vector<80x8xbf16> to vector<16x8xbf16>
    %cst_423 = arith.constant dense<0.000000e+00> : vector<40x8xf32>
    %1513 = tpu.matmul %1511, %1512, %cst_423 {dimension_numbers = #tpu.dot_dimension_numbers<[1], [0], [0], [1], [0, 0, 1, 1], [], []>} : vector<40x16xbf16>, vector<16x8xbf16>, vector<40x8xf32> -> vector<40x8xf32>
    %1514 = arith.addf %1510, %1513 : vector<40x8xf32>
    %1515 = vector.extract_strided_slice %1403 {offsets = [8, 0], sizes = [40, 16], strides = [1, 1]} : vector<48x16xbf16> to vector<40x16xbf16>
    %1516 = vector.extract_strided_slice %1496 {offsets = [64, 0], sizes = [16, 8], strides = [1, 1]} : vector<80x8xbf16> to vector<16x8xbf16>
    %cst_424 = arith.constant dense<0.000000e+00> : vector<40x8xf32>
    %1517 = tpu.matmul %1515, %1516, %cst_424 {dimension_numbers = #tpu.dot_dimension_numbers<[1], [0], [0], [1], [0, 0, 1, 1], [], []>} : vector<40x16xbf16>, vector<16x8xbf16>, vector<40x8xf32> -> vector<40x8xf32>
    %1518 = arith.addf %1514, %1517 : vector<40x8xf32>
    %1519 = math.exp %1518 : vector<40x8xf32>
    %cst_425 = arith.constant 1.000000e+00 : f32
    %1520 = vector.broadcast %cst_425 : f32 to vector<40x8xf32>
    %1521 = arith.addf %1520, %1519 : vector<40x8xf32>
    %1522 = arith.mulf %1521, %1521 : vector<40x8xf32>
    %cst_426 = arith.constant 1.000000e+00 : f32
    %1523 = vector.broadcast %cst_426 : f32 to vector<40x8xf32>
    %1524 = arith.addf %1522, %1523 : vector<40x8xf32>
    %1525 = tpu.reciprocal %1524 {approx = true} : vector<40x8xf32> -> vector<40x8xf32>
    %cst_427 = arith.constant 2.000000e+00 : f32
    %1526 = vector.broadcast %cst_427 : f32 to vector<40x8xf32>
    %1527 = arith.mulf %1526, %1525 : vector<40x8xf32>
    %cst_428 = arith.constant 1.000000e+00 : f32
    %1528 = vector.broadcast %cst_428 : f32 to vector<40x8xf32>
    %1529 = arith.subf %1528, %1527 : vector<40x8xf32>
    %1530 = arith.mulf %1518, %1529 : vector<40x8xf32>
    %1531 = arith.truncf %1530 : vector<40x8xf32> to vector<40x8xbf16>
    %1532 = vector.extract_strided_slice %1531 {offsets = [0, 0], sizes = [2, 8], strides = [1, 1]} : vector<40x8xbf16> to vector<2x8xbf16>
    %1533 = vector.extract_strided_slice %1531 {offsets = [2, 0], sizes = [2, 8], strides = [1, 1]} : vector<40x8xbf16> to vector<2x8xbf16>
    %1534 = arith.maximumf %1532, %1533 : vector<2x8xbf16>
    %c80 = arith.constant 80 : index
    %c0_429 = arith.constant 0 : index
    %1535 = vector.load %arg13[%c80, %c0_429] : memref<160x16xbf16, #tpu.memory_space<vmem>>, vector<8x16xbf16>
    %cst_430 = arith.constant dense<0.000000e+00> : vector<2x16xf32>
    %1536 = tpu.matmul %1534, %1535, %cst_430 {dimension_numbers = #tpu.dot_dimension_numbers<[1], [0], [0], [1], [0, 0, 1, 1], [], []>} : vector<2x8xbf16>, vector<8x16xbf16>, vector<2x16xf32> -> vector<2x16xf32>
    %1537 = arith.addf %1495, %1536 : vector<2x16xf32>
    %1538 = vector.extract_strided_slice %1531 {offsets = [4, 0], sizes = [2, 8], strides = [1, 1]} : vector<40x8xbf16> to vector<2x8xbf16>
    %1539 = vector.extract_strided_slice %1531 {offsets = [6, 0], sizes = [2, 8], strides = [1, 1]} : vector<40x8xbf16> to vector<2x8xbf16>
    %1540 = arith.maximumf %1538, %1539 : vector<2x8xbf16>
    %c88 = arith.constant 88 : index
    %c0_431 = arith.constant 0 : index
    %1541 = vector.load %arg13[%c88, %c0_431] : memref<160x16xbf16, #tpu.memory_space<vmem>>, vector<8x16xbf16>
    %cst_432 = arith.constant dense<0.000000e+00> : vector<2x16xf32>
    %1542 = tpu.matmul %1540, %1541, %cst_432 {dimension_numbers = #tpu.dot_dimension_numbers<[1], [0], [0], [1], [0, 0, 1, 1], [], []>} : vector<2x8xbf16>, vector<8x16xbf16>, vector<2x16xf32> -> vector<2x16xf32>
    %1543 = arith.addf %1537, %1542 : vector<2x16xf32>
    %1544 = vector.extract_strided_slice %1531 {offsets = [8, 0], sizes = [2, 8], strides = [1, 1]} : vector<40x8xbf16> to vector<2x8xbf16>
    %1545 = vector.extract_strided_slice %1531 {offsets = [10, 0], sizes = [2, 8], strides = [1, 1]} : vector<40x8xbf16> to vector<2x8xbf16>
    %1546 = arith.maximumf %1544, %1545 : vector<2x8xbf16>
    %c96 = arith.constant 96 : index
    %c0_433 = arith.constant 0 : index
    %1547 = vector.load %arg13[%c96, %c0_433] : memref<160x16xbf16, #tpu.memory_space<vmem>>, vector<8x16xbf16>
    %cst_434 = arith.constant dense<0.000000e+00> : vector<2x16xf32>
    %1548 = tpu.matmul %1546, %1547, %cst_434 {dimension_numbers = #tpu.dot_dimension_numbers<[1], [0], [0], [1], [0, 0, 1, 1], [], []>} : vector<2x8xbf16>, vector<8x16xbf16>, vector<2x16xf32> -> vector<2x16xf32>
    %1549 = arith.addf %1543, %1548 : vector<2x16xf32>
    %1550 = vector.extract_strided_slice %1531 {offsets = [12, 0], sizes = [2, 8], strides = [1, 1]} : vector<40x8xbf16> to vector<2x8xbf16>
    %1551 = vector.extract_strided_slice %1531 {offsets = [14, 0], sizes = [2, 8], strides = [1, 1]} : vector<40x8xbf16> to vector<2x8xbf16>
    %1552 = arith.maximumf %1550, %1551 : vector<2x8xbf16>
    %c104 = arith.constant 104 : index
    %c0_435 = arith.constant 0 : index
    %1553 = vector.load %arg13[%c104, %c0_435] : memref<160x16xbf16, #tpu.memory_space<vmem>>, vector<8x16xbf16>
    %cst_436 = arith.constant dense<0.000000e+00> : vector<2x16xf32>
    %1554 = tpu.matmul %1552, %1553, %cst_436 {dimension_numbers = #tpu.dot_dimension_numbers<[1], [0], [0], [1], [0, 0, 1, 1], [], []>} : vector<2x8xbf16>, vector<8x16xbf16>, vector<2x16xf32> -> vector<2x16xf32>
    %1555 = arith.addf %1549, %1554 : vector<2x16xf32>
    %1556 = vector.extract_strided_slice %1531 {offsets = [16, 0], sizes = [2, 8], strides = [1, 1]} : vector<40x8xbf16> to vector<2x8xbf16>
    %1557 = vector.extract_strided_slice %1531 {offsets = [18, 0], sizes = [2, 8], strides = [1, 1]} : vector<40x8xbf16> to vector<2x8xbf16>
    %1558 = arith.maximumf %1556, %1557 : vector<2x8xbf16>
    %c112 = arith.constant 112 : index
    %c0_437 = arith.constant 0 : index
    %1559 = vector.load %arg13[%c112, %c0_437] : memref<160x16xbf16, #tpu.memory_space<vmem>>, vector<8x16xbf16>
    %cst_438 = arith.constant dense<0.000000e+00> : vector<2x16xf32>
    %1560 = tpu.matmul %1558, %1559, %cst_438 {dimension_numbers = #tpu.dot_dimension_numbers<[1], [0], [0], [1], [0, 0, 1, 1], [], []>} : vector<2x8xbf16>, vector<8x16xbf16>, vector<2x16xf32> -> vector<2x16xf32>
    %1561 = arith.addf %1555, %1560 : vector<2x16xf32>
    %1562 = vector.extract_strided_slice %1531 {offsets = [20, 0], sizes = [2, 8], strides = [1, 1]} : vector<40x8xbf16> to vector<2x8xbf16>
    %1563 = vector.extract_strided_slice %1531 {offsets = [22, 0], sizes = [2, 8], strides = [1, 1]} : vector<40x8xbf16> to vector<2x8xbf16>
    %1564 = arith.maximumf %1562, %1563 : vector<2x8xbf16>
    %c120 = arith.constant 120 : index
    %c0_439 = arith.constant 0 : index
    %1565 = vector.load %arg13[%c120, %c0_439] : memref<160x16xbf16, #tpu.memory_space<vmem>>, vector<8x16xbf16>
    %cst_440 = arith.constant dense<0.000000e+00> : vector<2x16xf32>
    %1566 = tpu.matmul %1564, %1565, %cst_440 {dimension_numbers = #tpu.dot_dimension_numbers<[1], [0], [0], [1], [0, 0, 1, 1], [], []>} : vector<2x8xbf16>, vector<8x16xbf16>, vector<2x16xf32> -> vector<2x16xf32>
    %1567 = arith.addf %1561, %1566 : vector<2x16xf32>
    %1568 = vector.extract_strided_slice %1531 {offsets = [24, 0], sizes = [2, 8], strides = [1, 1]} : vector<40x8xbf16> to vector<2x8xbf16>
    %1569 = vector.extract_strided_slice %1531 {offsets = [26, 0], sizes = [2, 8], strides = [1, 1]} : vector<40x8xbf16> to vector<2x8xbf16>
    %1570 = arith.maximumf %1568, %1569 : vector<2x8xbf16>
    %c128_441 = arith.constant 128 : index
    %c0_442 = arith.constant 0 : index
    %1571 = vector.load %arg13[%c128_441, %c0_442] : memref<160x16xbf16, #tpu.memory_space<vmem>>, vector<8x16xbf16>
    %cst_443 = arith.constant dense<0.000000e+00> : vector<2x16xf32>
    %1572 = tpu.matmul %1570, %1571, %cst_443 {dimension_numbers = #tpu.dot_dimension_numbers<[1], [0], [0], [1], [0, 0, 1, 1], [], []>} : vector<2x8xbf16>, vector<8x16xbf16>, vector<2x16xf32> -> vector<2x16xf32>
    %1573 = arith.addf %1567, %1572 : vector<2x16xf32>
    %1574 = vector.extract_strided_slice %1531 {offsets = [28, 0], sizes = [2, 8], strides = [1, 1]} : vector<40x8xbf16> to vector<2x8xbf16>
    %1575 = vector.extract_strided_slice %1531 {offsets = [30, 0], sizes = [2, 8], strides = [1, 1]} : vector<40x8xbf16> to vector<2x8xbf16>
    %1576 = arith.maximumf %1574, %1575 : vector<2x8xbf16>
    %c136 = arith.constant 136 : index
    %c0_444 = arith.constant 0 : index
    %1577 = vector.load %arg13[%c136, %c0_444] : memref<160x16xbf16, #tpu.memory_space<vmem>>, vector<8x16xbf16>
    %cst_445 = arith.constant dense<0.000000e+00> : vector<2x16xf32>
    %1578 = tpu.matmul %1576, %1577, %cst_445 {dimension_numbers = #tpu.dot_dimension_numbers<[1], [0], [0], [1], [0, 0, 1, 1], [], []>} : vector<2x8xbf16>, vector<8x16xbf16>, vector<2x16xf32> -> vector<2x16xf32>
    %1579 = arith.addf %1573, %1578 : vector<2x16xf32>
    %1580 = vector.extract_strided_slice %1531 {offsets = [32, 0], sizes = [2, 8], strides = [1, 1]} : vector<40x8xbf16> to vector<2x8xbf16>
    %1581 = vector.extract_strided_slice %1531 {offsets = [34, 0], sizes = [2, 8], strides = [1, 1]} : vector<40x8xbf16> to vector<2x8xbf16>
    %1582 = arith.maximumf %1580, %1581 : vector<2x8xbf16>
    %c144 = arith.constant 144 : index
    %c0_446 = arith.constant 0 : index
    %1583 = vector.load %arg13[%c144, %c0_446] : memref<160x16xbf16, #tpu.memory_space<vmem>>, vector<8x16xbf16>
    %cst_447 = arith.constant dense<0.000000e+00> : vector<2x16xf32>
    %1584 = tpu.matmul %1582, %1583, %cst_447 {dimension_numbers = #tpu.dot_dimension_numbers<[1], [0], [0], [1], [0, 0, 1, 1], [], []>} : vector<2x8xbf16>, vector<8x16xbf16>, vector<2x16xf32> -> vector<2x16xf32>
    %1585 = arith.addf %1579, %1584 : vector<2x16xf32>
    %1586 = vector.extract_strided_slice %1531 {offsets = [36, 0], sizes = [2, 8], strides = [1, 1]} : vector<40x8xbf16> to vector<2x8xbf16>
    %1587 = vector.extract_strided_slice %1531 {offsets = [38, 0], sizes = [2, 8], strides = [1, 1]} : vector<40x8xbf16> to vector<2x8xbf16>
    %1588 = arith.maximumf %1586, %1587 : vector<2x8xbf16>
    %c152 = arith.constant 152 : index
    %c0_448 = arith.constant 0 : index
    %1589 = vector.load %arg13[%c152, %c0_448] : memref<160x16xbf16, #tpu.memory_space<vmem>>, vector<8x16xbf16>
    %cst_449 = arith.constant dense<0.000000e+00> : vector<2x16xf32>
    %1590 = tpu.matmul %1588, %1589, %cst_449 {dimension_numbers = #tpu.dot_dimension_numbers<[1], [0], [0], [1], [0, 0, 1, 1], [], []>} : vector<2x8xbf16>, vector<8x16xbf16>, vector<2x16xf32> -> vector<2x16xf32>
    %1591 = arith.addf %1585, %1590 : vector<2x16xf32>
    %1592 = math.exp %1591 : vector<2x16xf32>
    %cst_450 = arith.constant 1.000000e+00 : f32
    %1593 = vector.broadcast %cst_450 : f32 to vector<2x16xf32>
    %1594 = arith.addf %1593, %1592 : vector<2x16xf32>
    %1595 = arith.mulf %1594, %1594 : vector<2x16xf32>
    %cst_451 = arith.constant 1.000000e+00 : f32
    %1596 = vector.broadcast %cst_451 : f32 to vector<2x16xf32>
    %1597 = arith.addf %1595, %1596 : vector<2x16xf32>
    %1598 = tpu.reciprocal %1597 {approx = true} : vector<2x16xf32> -> vector<2x16xf32>
    %cst_452 = arith.constant 2.000000e+00 : f32
    %1599 = vector.broadcast %cst_452 : f32 to vector<2x16xf32>
    %1600 = arith.mulf %1599, %1598 : vector<2x16xf32>
    %cst_453 = arith.constant 1.000000e+00 : f32
    %1601 = vector.broadcast %cst_453 : f32 to vector<2x16xf32>
    %1602 = arith.subf %1601, %1600 : vector<2x16xf32>
    %1603 = arith.mulf %1591, %1602 : vector<2x16xf32>
    %1604 = arith.truncf %1603 : vector<2x16xf32> to vector<2x16xbf16>
    %c0_454 = arith.constant 0 : index
    %c0_455 = arith.constant 0 : index
    %1605 = vector.load %arg15[%c0_454, %c0_455] : memref<16x8xbf16, #tpu.memory_space<vmem>>, vector<16x8xbf16>
    %cst_456 = arith.constant dense<0.000000e+00> : vector<2x8xf32>
    %1606 = tpu.matmul %1604, %1605, %cst_456 {dimension_numbers = #tpu.dot_dimension_numbers<[1], [0], [0], [1], [0, 0, 1, 1], [], []>} : vector<2x16xbf16>, vector<16x8xbf16>, vector<2x8xf32> -> vector<2x8xf32>
    %c0_457 = arith.constant 0 : index
    %c0_458 = arith.constant 0 : index
    %1607 = vector.load %arg16[%c0_457, %c0_458] : memref<1x8xf32, #tpu.memory_space<vmem>>, vector<1x8xf32>
    %1608 = vector.broadcast %1607 : vector<1x8xf32> to vector<2x8xf32>
    %1609 = arith.addf %1606, %1608 : vector<2x8xf32>
    %1610 = math.exp %1609 : vector<2x8xf32>
    %cst_459 = arith.constant 1.000000e+00 : f32
    %1611 = vector.broadcast %cst_459 : f32 to vector<2x8xf32>
    %1612 = arith.addf %1611, %1610 : vector<2x8xf32>
    %1613 = arith.mulf %1612, %1612 : vector<2x8xf32>
    %cst_460 = arith.constant 1.000000e+00 : f32
    %1614 = vector.broadcast %cst_460 : f32 to vector<2x8xf32>
    %1615 = arith.addf %1613, %1614 : vector<2x8xf32>
    %1616 = tpu.reciprocal %1615 {approx = true} : vector<2x8xf32> -> vector<2x8xf32>
    %cst_461 = arith.constant 2.000000e+00 : f32
    %1617 = vector.broadcast %cst_461 : f32 to vector<2x8xf32>
    %1618 = arith.mulf %1617, %1616 : vector<2x8xf32>
    %cst_462 = arith.constant 1.000000e+00 : f32
    %1619 = vector.broadcast %cst_462 : f32 to vector<2x8xf32>
    %1620 = arith.subf %1619, %1618 : vector<2x8xf32>
    %1621 = arith.mulf %1609, %1620 : vector<2x8xf32>
    %1622 = arith.truncf %1621 : vector<2x8xf32> to vector<2x8xbf16>
    %c0_463 = arith.constant 0 : index
    %c0_464 = arith.constant 0 : index
    %1623 = vector.load %arg17[%c0_463, %c0_464] : memref<8x4xbf16, #tpu.memory_space<vmem>>, vector<8x4xbf16>
    %cst_465 = arith.constant dense<0.000000e+00> : vector<2x4xf32>
    %1624 = tpu.matmul %1622, %1623, %cst_465 {dimension_numbers = #tpu.dot_dimension_numbers<[1], [0], [0], [1], [0, 0, 1, 1], [], []>} : vector<2x8xbf16>, vector<8x4xbf16>, vector<2x4xf32> -> vector<2x4xf32>
    %c0_466 = arith.constant 0 : index
    %c0_467 = arith.constant 0 : index
    %1625 = vector.load %arg18[%c0_466, %c0_467] : memref<1x4xf32, #tpu.memory_space<vmem>>, vector<1x4xf32>
    %1626 = vector.broadcast %1625 : vector<1x4xf32> to vector<2x4xf32>
    %1627 = arith.addf %1624, %1626 : vector<2x4xf32>
    %c0_468 = arith.constant 0 : index
    %c0_469 = arith.constant 0 : index
    %1628 = vector.load %arg19[%c0_468, %c0_469] : memref<2x4xf32, #tpu.memory_space<vmem>>, vector<2x4xf32>
    tpu.vector_store %arg19[%c0_468, %c0_469], %1627 {strides = array<i32>} : memref<2x4xf32, #tpu.memory_space<vmem>>, vector<2x4xf32>,
    return
  }
}

</mosaic_0001>

<llo_original>
// kernel: rcnn_forward.1
$region0: #{rcnn_forward.1}
  #allocation0 [shape = 'u32[]', space=smem, size = 0x4, offset = 0x4, fixed_abs, tag = 'smem constant byte address 0x4 - core index']
  #allocation1 [shape = 'u32[144,128]{1,0:T(1,128)}', space=vmem, size = 0x12000, scoped, tag = 'internal scratch']
  #allocation2 [shape = 'f32[40,256]{1,0:T(8,128)}', space=vmem, size = 0xa000, scoped, tag = 'scratch operand']
  #allocation3 [shape = 'f32[40,32]{1,0:T(8,128)}', space=vmem, size = 0x5000, scoped, tag = 'scratch operand']
  #allocation4 [shape = 'f32[40,32]{1,0:T(8,128)}', space=vmem, size = 0x5000, scoped, tag = 'scratch operand']
  %s0 = inlined_call_operand.vmem [shape: bf16[40,16], index: 0, kind: input, shape index: {}]
  %s1 = inlined_call_operand.vmem [shape: bf16[16,256], index: 1, kind: input, shape index: {}]
  %s2 = inlined_call_operand.vmem [shape: f32[1,256], index: 2, kind: input, shape index: {}]
  %s3 = inlined_call_operand.vmem [shape: bf16[32,128], index: 3, kind: input, shape index: {}]
  %s4 = inlined_call_operand.vmem [shape: bf16[32,256], index: 4, kind: input, shape index: {}]
  %s5 = inlined_call_operand.vmem [shape: f32[1,256], index: 5, kind: input, shape index: {}]
  %s6 = inlined_call_operand.vmem [shape: bf16[32,128], index: 6, kind: input, shape index: {}]
  %s7 = inlined_call_operand.vmem [shape: bf16[32,16], index: 7, kind: input, shape index: {}]
  %s8 = inlined_call_operand.vmem [shape: f32[1,16], index: 8, kind: input, shape index: {}]
  %s9 = inlined_call_operand.vmem [shape: bf16[48,8], index: 9, kind: input, shape index: {}]
  %s10 = inlined_call_operand.vmem [shape: f32[1,8], index: 10, kind: input, shape index: {}]
  %s11 = inlined_call_operand.vmem [shape: bf16[80,8], index: 11, kind: input, shape index: {}]
  %s12 = inlined_call_operand.vmem [shape: f32[1,8], index: 12, kind: input, shape index: {}]
  %s13 = inlined_call_operand.vmem [shape: bf16[160,16], index: 13, kind: input, shape index: {}]
  %s14 = inlined_call_operand.vmem [shape: f32[1,16], index: 14, kind: input, shape index: {}]
  %s15 = inlined_call_operand.vmem [shape: bf16[16,8], index: 15, kind: input, shape index: {}]
  %s16 = inlined_call_operand.vmem [shape: f32[1,8], index: 16, kind: input, shape index: {}]
  %s17 = inlined_call_operand.vmem [shape: bf16[8,4], index: 17, kind: input, shape index: {}]
  %s18 = inlined_call_operand.vmem [shape: f32[1,4], index: 18, kind: input, shape index: {}]
  %s19 = inlined_call_operand.hbm [shape: f32[2,4], index: 19, kind: output, shape index: {}]
  %s20 = sld [smem:[#allocation0]]
  $region86: #{rcnn_forward.1} parent=0
    _
  %s22 = ssub.s32 1, %s20
  %s23 = scalar_select 0, %s22, %s20
  $region1: #{rcnn_forward.1} parent=0
    #allocation5 [shape = 'u8[1024]{0}', space=vmem, size = 0x400, scoped, tag = 'output window, operand 0, single buffered']
    #allocation6 [shape = 's32[1]{0}', space=sflag, size = 0x4, scoped, tag = 'scoped memory for rcnn_forward.1']
    %24 = vsyncpa [#allocation6], 0
    // Predicated region
    $region2: #{rcnn_forward.1} parent=1 // pred_check
      _
    $region3: #{rcnn_forward.1} parent=1 // pred_check_branch
      %26 = sbr.rel (0) target = $region5
    $region4: #{rcnn_forward.1} parent=1 // pred_region
      _
    $region5: #{rcnn_forward.1} parent=1 // pred_fallthru
      _
    // Predicated region
    $region6: #{rcnn_forward.1} parent=1 // pred_check
      _
    $region7: #{rcnn_forward.1} parent=1 // pred_check_branch
      %28 = sbr.rel (0) target = $region9
    $region8: #{rcnn_forward.1} parent=1 // pred_region
      _
    $region9: #{rcnn_forward.1} parent=1 // pred_fallthru
      _
    // Predicated region
    $region10: #{rcnn_forward.1} parent=1 // pred_check
      _
    $region11: #{rcnn_forward.1} parent=1 // pred_check_branch
      %30 = sbr.rel (0) target = $region13
    $region12: #{rcnn_forward.1} parent=1 // pred_region
      _
    $region13: #{rcnn_forward.1} parent=1 // pred_fallthru
      _
    // Predicated region
    $region14: #{rcnn_forward.1} parent=1 // pred_check
      _
    $region15: #{rcnn_forward.1} parent=1 // pred_check_branch
      %32 = sbr.rel (0) target = $region17
    $region16: #{rcnn_forward.1} parent=1 // pred_region
      _
    $region17: #{rcnn_forward.1} parent=1 // pred_fallthru
      _
    // Predicated region
    $region18: #{rcnn_forward.1} parent=1 // pred_check
      _
    $region19: #{rcnn_forward.1} parent=1 // pred_check_branch
      %34 = sbr.rel (0) target = $region21
    $region20: #{rcnn_forward.1} parent=1 // pred_region
      _
    $region21: #{rcnn_forward.1} parent=1 // pred_fallthru
      _
    // Predicated region
    $region22: #{rcnn_forward.1} parent=1 // pred_check
      _
    $region23: #{rcnn_forward.1} parent=1 // pred_check_branch
      %36 = sbr.rel (0) target = $region25
    $region24: #{rcnn_forward.1} parent=1 // pred_region
      _
    $region25: #{rcnn_forward.1} parent=1 // pred_fallthru
      _
    // Predicated region
    $region26: #{rcnn_forward.1} parent=1 // pred_check
      _
    $region27: #{rcnn_forward.1} parent=1 // pred_check_branch
      %38 = sbr.rel (0) target = $region29
    $region28: #{rcnn_forward.1} parent=1 // pred_region
      _
    $region29: #{rcnn_forward.1} parent=1 // pred_fallthru
      _
    // Predicated region
    $region30: #{rcnn_forward.1} parent=1 // pred_check
      _
    $region31: #{rcnn_forward.1} parent=1 // pred_check_branch
      %40 = sbr.rel (0) target = $region33
    $region32: #{rcnn_forward.1} parent=1 // pred_region
      _
    $region33: #{rcnn_forward.1} parent=1 // pred_fallthru
      _
    // Predicated region
    $region34: #{rcnn_forward.1} parent=1 // pred_check
      _
    $region35: #{rcnn_forward.1} parent=1 // pred_check_branch
      %42 = sbr.rel (0) target = $region37
    $region36: #{rcnn_forward.1} parent=1 // pred_region
      _
    $region37: #{rcnn_forward.1} parent=1 // pred_fallthru
      _
    // Predicated region
    $region38: #{rcnn_forward.1} parent=1 // pred_check
      _
    $region39: #{rcnn_forward.1} parent=1 // pred_check_branch
      %44 = sbr.rel (0) target = $region41
    $region40: #{rcnn_forward.1} parent=1 // pred_region
      _
    $region41: #{rcnn_forward.1} parent=1 // pred_fallthru
      _
    // Predicated region
    $region42: #{rcnn_forward.1} parent=1 // pred_check
      _
    $region43: #{rcnn_forward.1} parent=1 // pred_check_branch
      %46 = sbr.rel (0) target = $region45
    $region44: #{rcnn_forward.1} parent=1 // pred_region
      _
    $region45: #{rcnn_forward.1} parent=1 // pred_fallthru
      _
    // Predicated region
    $region46: #{rcnn_forward.1} parent=1 // pred_check
      _
    $region47: #{rcnn_forward.1} parent=1 // pred_check_branch
      %48 = sbr.rel (0) target = $region49
    $region48: #{rcnn_forward.1} parent=1 // pred_region
      _
    $region49: #{rcnn_forward.1} parent=1 // pred_fallthru
      _
    // Predicated region
    $region50: #{rcnn_forward.1} parent=1 // pred_check
      _
    $region51: #{rcnn_forward.1} parent=1 // pred_check_branch
      %50 = sbr.rel (0) target = $region53
    $region52: #{rcnn_forward.1} parent=1 // pred_region
      _
    $region53: #{rcnn_forward.1} parent=1 // pred_fallthru
      _
    // Predicated region
    $region54: #{rcnn_forward.1} parent=1 // pred_check
      _
    $region55: #{rcnn_forward.1} parent=1 // pred_check_branch
      %52 = sbr.rel (0) target = $region57
    $region56: #{rcnn_forward.1} parent=1 // pred_region
      _
    $region57: #{rcnn_forward.1} parent=1 // pred_fallthru
      _
    // Predicated region
    $region58: #{rcnn_forward.1} parent=1 // pred_check
      _
    $region59: #{rcnn_forward.1} parent=1 // pred_check_branch
      %54 = sbr.rel (0) target = $region61
    $region60: #{rcnn_forward.1} parent=1 // pred_region
      _
    $region61: #{rcnn_forward.1} parent=1 // pred_fallthru
      _
    // Predicated region
    $region62: #{rcnn_forward.1} parent=1 // pred_check
      _
    $region63: #{rcnn_forward.1} parent=1 // pred_check_branch
      %56 = sbr.rel (0) target = $region65
    $region64: #{rcnn_forward.1} parent=1 // pred_region
      _
    $region65: #{rcnn_forward.1} parent=1 // pred_fallthru
      _
    // Predicated region
    $region66: #{rcnn_forward.1} parent=1 // pred_check
      _
    $region67: #{rcnn_forward.1} parent=1 // pred_check_branch
      %58 = sbr.rel (0) target = $region69
    $region68: #{rcnn_forward.1} parent=1 // pred_region
      _
    $region69: #{rcnn_forward.1} parent=1 // pred_fallthru
      _
    // Predicated region
    $region70: #{rcnn_forward.1} parent=1 // pred_check
      _
    $region71: #{rcnn_forward.1} parent=1 // pred_check_branch
      %60 = sbr.rel (0) target = $region73
    $region72: #{rcnn_forward.1} parent=1 // pred_region
      _
    $region73: #{rcnn_forward.1} parent=1 // pred_fallthru
      _
    // Predicated region
    $region74: #{rcnn_forward.1} parent=1 // pred_check
      _
    $region75: #{rcnn_forward.1} parent=1 // pred_check_branch
      %62 = sbr.rel (0) target = $region77
    $region76: #{rcnn_forward.1} parent=1 // pred_region
      _
    $region77: #{rcnn_forward.1} parent=1 // pred_fallthru
      _
    %v64 = vld [vmem:[%s0] sm:$0xf]
    %v65 = vld [vmem:[%s0 + $0x4] sm:$0xf]
    %v66 = vld [vmem:[%s0 + $0x8] sm:$0xf]
    %v67 = vld [vmem:[%s0 + $0xc] sm:$0xf]
    %v68 = vld [vmem:[%s0 + $0x10] sm:$0xf]
    %v69 = vld [vmem:[%s1] sm:$0xff]
    %v70 = vld [vmem:[%s1 + $0x8] sm:$0xff]
    %v71 = vld [vmem:[%s2] sm:$0x3]
    %v73 = vlaneseq
    %v74 = vshrl.u32 %v73, 7
    %v75 = vsub.s32 0, %v74
    %v76 = vrot.slane %v71, %v75
    %v77 = vlaneseq
    %v78 = vshrl.u32 %v77, 7
    %v79 = vsub.s32 1, %v78
    %v80 = vrot.slane %v71, %v79
    %v88 = vunpack.c.l.b16 %v64
    %v89 = vunpack.c.l.b16 %v65
    %v90 = vunpack.c.l.b16 %v66
    %v91 = vunpack.c.l.b16 %v67
    %v92 = vunpack.c.l.b16 %v68
    %v93 = vpack.c.b16 %v89, %v88
    %v94 = vpack.c.b16 %v91, %v90
    %v95 = vpack.c.b16 %v92, %v92
    %v98 = vunpack.c.l.b16 %v69
    %v99 = vunpack.c.h.b16 %v69
    %v100 = vunpack.c.l.b16 %v70
    %v101 = vunpack.c.h.b16 %v70
    %v102 = vpack.c.b16 %v100, %v98
    %v103 = vpack.c.b16 %v101, %v99
    %vm106 = vcmask 130048
    %v108 = vsel %vm106, %v93, 0
    %v111 = vsel %vm106, %v94, 0
    %v114 = vsel %vm106, %v95, 0
    %116 = vmatprep.subr.bf16.mxu0 %v103
    %117 = vmatpush1.bf16.msra.mxu0 %v102
    %118 = vmatprep.subr.bf16.mxu0 0
    %119 = vmatpush1.bf16.msra.mxu0 0
    %120 = vmatprep.subr.bf16.mxu0 0
    %121 = vmatpush1.bf16.msra.mxu0 0
    %122 = vmatprep.subr.bf16.mxu0 0
    %123 = vmatpush1.bf16.msra.mxu0 0
    %124 = vmatprep.subr.bf16.mxu0 0
    %125 = vmatpush1.bf16.msra.mxu0 0
    %126 = vmatprep.subr.bf16.mxu0 0
    %127 = vmatpush1.bf16.msra.mxu0 0
    %128 = vmatprep.subr.bf16.mxu0 0
    %129 = vmatpush1.bf16.msra.mxu0 0
    %130 = vmatprep.subr.bf16.mxu0 0
    %131 = vmatpush1.bf16.msra.mxu0 0
    %132 = vmatprep.subr.bf16.mxu0 0
    %133 = vmatpush1.bf16.msra.mxu0 0
    %134 = vmatprep.subr.bf16.mxu0 0
    %135 = vmatpush1.bf16.msra.mxu0 0
    %136 = vmatprep.subr.bf16.mxu0 0
    %137 = vmatpush1.bf16.msra.mxu0 0
    %138 = vmatprep.subr.bf16.mxu0 0
    %139 = vmatpush1.bf16.msra.mxu0 0
    %140 = vmatprep.subr.bf16.mxu0 0
    %141 = vmatpush1.bf16.msra.mxu0 0
    %142 = vmatprep.subr.bf16.mxu0 0
    %143 = vmatpush1.bf16.msra.mxu0 0
    %144 = vmatprep.subr.bf16.mxu0 0
    %145 = vmatpush1.bf16.msra.mxu0 0
    %146 = vmatprep.subr.bf16.mxu0 0
    %147 = vmatpush1.bf16.msra.mxu0 0
    %148 = vmatprep.mubr.bf16.mxu0 0
    %149 = vmatmul.mubr.bf16.gmra.mrb[0].mxu0 %v108
    %v150 = vpop.f32.mrb[0].mxu0
    %v151 = vadd.f32 %v76, %v150
    %v152 = vpop.f32.mrb[0].mxu0
    %v153 = vadd.f32 %v80, %v152
    %v154 = vpop.f32.mrb[0].mxu0
    %v155 = vadd.f32 %v76, %v154
    %v156 = vpop.f32.mrb[0].mxu0
    %v157 = vadd.f32 %v80, %v156
    %158 = vmatprep.mubr.bf16.mxu0 0
    %159 = vmatmul.mubr.bf16.gmra.mrb[0].mxu0 %v111
    %v160 = vpop.f32.mrb[0].mxu0
    %v161 = vadd.f32 %v76, %v160
    %v162 = vpop.f32.mrb[0].mxu0
    %v163 = vadd.f32 %v80, %v162
    %v164 = vpop.f32.mrb[0].mxu0
    %v165 = vadd.f32 %v76, %v164
    %v166 = vpop.f32.mrb[0].mxu0
    %v167 = vadd.f32 %v80, %v166
    %168 = vmatprep.mubr.bf16.mxu0 0
    %169 = vmatmul.mubr.bf16.gmra.mrb[0].mxu0 %v114
    %v170 = vpop.f32.mrb[0].mxu0
    %v171 = vadd.f32 %v76, %v170
    %v172 = vpop.f32.mrb[0].mxu0
    %v173 = vadd.f32 %v80, %v172
    %v174 = vpop.f32.mrb[0].mxu0
    %v175 = vpop.f32.mrb[0].mxu0
    %176 = vdwg.mxu0
    %177 = vst [vmem:[#allocation2] sm:$0xff] %v151
    %178 = vst [vmem:[#allocation2 + $0x8] sm:$0xff] %v153
    %179 = vst [vmem:[#allocation2 + $0x10] sm:$0xff] %v155
    %180 = vst [vmem:[#allocation2 + $0x18] sm:$0xff] %v157
    %181 = vst [vmem:[#allocation2 + $0x20] sm:$0xff] %v161
    %182 = vst [vmem:[#allocation2 + $0x28] sm:$0xff] %v163
    %183 = vst [vmem:[#allocation2 + $0x30] sm:$0xff] %v165
    %184 = vst [vmem:[#allocation2 + $0x38] sm:$0xff] %v167
    %185 = vst [vmem:[#allocation2 + $0x40] sm:$0xff] %v171
    %186 = vst [vmem:[#allocation2 + $0x48] sm:$0xff] %v173
    %v187 = vld [vmem:[%s3] sm:$0xf]
    %v188 = vld [vmem:[%s3 + $0x4] sm:$0xf]
    %v189 = vld [vmem:[%s3 + $0x8] sm:$0xf]
    %v190 = vld [vmem:[%s3 + $0xc] sm:$0xf]
    %v191 = vld [vmem:[#allocation2] sm:$0x3]
    %v196 = vunpack.c.l.b16 %v187
    %v197 = vunpack.c.l.b16 %v188
    %v198 = vunpack.c.l.b16 %v189
    %v199 = vunpack.c.l.b16 %v190
    %v200 = vpack.c.b16 %v197, %v196
    %v201 = vpack.c.b16 %v199, %v198
    %vm204 = vcmask 261120
    %v206 = vsel %vm204, 0, 0
    %208 = vmatprep.subr.bf16.mxu0 0
    %209 = vmatpush1.bf16.msra.mxu0 %v200
    %210 = vmatprep.subr.bf16.mxu0 0
    %211 = vmatpush1.bf16.msra.mxu0 %v201
    %212 = vmatprep.subr.bf16.mxu0 0
    %213 = vmatpush1.bf16.msra.mxu0 0
    %214 = vmatprep.subr.bf16.mxu0 0
    %215 = vmatpush1.bf16.msra.mxu0 0
    %216 = vmatprep.subr.bf16.mxu0 0
    %217 = vmatpush1.bf16.msra.mxu0 0
    %218 = vmatprep.subr.bf16.mxu0 0
    %219 = vmatpush1.bf16.msra.mxu0 0
    %220 = vmatprep.subr.bf16.mxu0 0
    %221 = vmatpush1.bf16.msra.mxu0 0
    %222 = vmatprep.subr.bf16.mxu0 0
    %223 = vmatpush1.bf16.msra.mxu0 0
    %224 = vmatprep.subr.bf16.mxu0 0
    %225 = vmatpush1.bf16.msra.mxu0 0
    %226 = vmatprep.subr.bf16.mxu0 0
    %227 = vmatpush1.bf16.msra.mxu0 0
    %228 = vmatprep.subr.bf16.mxu0 0
    %229 = vmatpush1.bf16.msra.mxu0 0
    %230 = vmatprep.subr.bf16.mxu0 0
    %231 = vmatpush1.bf16.msra.mxu0 0
    %232 = vmatprep.subr.bf16.mxu0 0
    %233 = vmatpush1.bf16.msra.mxu0 0
    %234 = vmatprep.subr.bf16.mxu0 0
    %235 = vmatpush1.bf16.msra.mxu0 0
    %236 = vmatprep.subr.bf16.mxu0 0
    %237 = vmatpush1.bf16.msra.mxu0 0
    %238 = vmatprep.subr.bf16.mxu0 0
    %239 = vmatpush1.bf16.msra.mxu0 0
    %240 = vmatprep.mubr.bf16.mxu0 0
    %241 = vmatmul.mubr.bf16.gmra.mrb[0].mxu0 %v206
    %v242 = vpop.f32.mrb[0].mxu0
    %v243 = vadd.f32 %v191, %v242
    %v244 = vpop.f32.mrb[0].mxu0
    %v245 = vpop.f32.mrb[0].mxu0
    %v246 = vpop.f32.mrb[0].mxu0
    %247 = vdwg.mxu0
    %v248 = vld [vmem:[#allocation2 + $0x48] sm:$0xc0]
    %v250 = vrot.slane %v248, 6
    %v252 = vadd.f32 %v243, %v250
    %v253 = vxor.u32 %v252, 2147483648
    %v254 = vmul.f32 %v253, 1.442695
    %v255 = vpow.pop %v254
    %v256 = vadd.f32 %v255, 1.0
    %v257 = vrcp.pop %v256
    %v258 = vmul.f32 1.0, %v257
    %v259 = vtanh.pop %v252
    %v260 = vmul.f32 %v258, 0.0
    %262 = vrot.lane.b32.xlu0 %v259, 64
    %v263 = vpop.permute.xlu0 %262
    %v265 = vmul.f32 %v258, %v263
    %267 = vrot.lane.b32.xlu0 %v265, 32
    %v268 = vpop.permute.xlu0 %267
    %v270 = vadd.f32 %v260, %v268
    %v271 = vtanh.pop %v270
    %273 = vrot.lane.b32.xlu0 %v271, 64
    %v274 = vpop.permute.xlu0 %273
    %v276 = vmul.f32 %v258, %v274
    %v277 = vpack.c.bf16 %v276, %v276
    %v278 = vld [vmem:[#allocation2] sm:$0xc]
    %280 = vrot.lane.b32.xlu0 %v277, 32
    %v281 = vpop.permute.xlu0 %280
    %v283 = vrot.slane %v278, 2
    %v286 = vsel %vm204, %v281, 0
    %288 = vmatprep.subr.bf16.mxu0 0
    %289 = vmatpush1.bf16.msra.mxu0 %v200
    %290 = vmatprep.subr.bf16.mxu0 0
    %291 = vmatpush1.bf16.msra.mxu0 %v201
    %292 = vmatprep.subr.bf16.mxu0 0
    %293 = vmatpush1.bf16.msra.mxu0 0
    %294 = vmatprep.subr.bf16.mxu0 0
    %295 = vmatpush1.bf16.msra.mxu0 0
    %296 = vmatprep.subr.bf16.mxu0 0
    %297 = vmatpush1.bf16.msra.mxu0 0
    %298 = vmatprep.subr.bf16.mxu0 0
    %299 = vmatpush1.bf16.msra.mxu0 0
    %300 = vmatprep.subr.bf16.mxu0 0
    %301 = vmatpush1.bf16.msra.mxu0 0
    %302 = vmatprep.subr.bf16.mxu0 0
    %303 = vmatpush1.bf16.msra.mxu0 0
    %304 = vmatprep.subr.bf16.mxu0 0
    %305 = vmatpush1.bf16.msra.mxu0 0
    %306 = vmatprep.subr.bf16.mxu0 0
    %307 = vmatpush1.bf16.msra.mxu0 0
    %308 = vmatprep.subr.bf16.mxu0 0
    %309 = vmatpush1.bf16.msra.mxu0 0
    %310 = vmatprep.subr.bf16.mxu0 0
    %311 = vmatpush1.bf16.msra.mxu0 0
    %312 = vmatprep.subr.bf16.mxu0 0
    %313 = vmatpush1.bf16.msra.mxu0 0
    %314 = vmatprep.subr.bf16.mxu0 0
    %315 = vmatpush1.bf16.msra.mxu0 0
    %316 = vmatprep.subr.bf16.mxu0 0
    %317 = vmatpush1.bf16.msra.mxu0 0
    %318 = vmatprep.subr.bf16.mxu0 0
    %319 = vmatpush1.bf16.msra.mxu0 0
    %320 = vmatprep.mubr.bf16.mxu0 0
    %321 = vmatmul.mubr.bf16.gmra.mrb[0].mxu0 %v286
    %v322 = vpop.f32.mrb[0].mxu0
    %v323 = vadd.f32 %v283, %v322
    %v324 = vpop.f32.mrb[0].mxu0
    %v325 = vpop.f32.mrb[0].mxu0
    %v326 = vpop.f32.mrb[0].mxu0
    %327 = vdwg.mxu0
    %v328 = vld [vmem:[#allocation2 + $0x48] sm:$0x30]
    %v330 = vrot.slane %v328, 4
    %v332 = vadd.f32 %v323, %v330
    %v333 = vxor.u32 %v332, 2147483648
    %v334 = vmul.f32 %v333, 1.442695
    %v335 = vpow.pop %v334
    %v336 = vadd.f32 %v335, 1.0
    %v337 = vrcp.pop %v336
    %v338 = vmul.f32 1.0, %v337
    %v339 = vtanh.pop %v332
    %v340 = vmul.f32 %v338, %v270
    %342 = vrot.lane.b32.xlu0 %v339, 64
    %v343 = vpop.permute.xlu0 %342
    %v345 = vmul.f32 %v338, %v343
    %347 = vrot.lane.b32.xlu0 %v345, 32
    %v348 = vpop.permute.xlu0 %347
    %v350 = vadd.f32 %v340, %v348
    %v351 = vtanh.pop %v350
    %353 = vrot.lane.b32.xlu0 %v351, 64
    %v354 = vpop.permute.xlu0 %353
    %v356 = vmul.f32 %v338, %v354
    %v357 = vpack.c.bf16 %v356, %v356
    %v358 = vld [vmem:[#allocation2] sm:$0x30]
    %360 = vrot.lane.b32.xlu0 %v357, 32
    %v361 = vpop.permute.xlu0 %360
    %v363 = vrot.slane %v358, 4
    %v366 = vsel %vm204, %v361, 0
    %368 = vmatprep.subr.bf16.mxu0 0
    %369 = vmatpush1.bf16.msra.mxu0 %v200
    %370 = vmatprep.subr.bf16.mxu0 0
    %371 = vmatpush1.bf16.msra.mxu0 %v201
    %372 = vmatprep.subr.bf16.mxu0 0
    %373 = vmatpush1.bf16.msra.mxu0 0
    %374 = vmatprep.subr.bf16.mxu0 0
    %375 = vmatpush1.bf16.msra.mxu0 0
    %376 = vmatprep.subr.bf16.mxu0 0
    %377 = vmatpush1.bf16.msra.mxu0 0
    %378 = vmatprep.subr.bf16.mxu0 0
    %379 = vmatpush1.bf16.msra.mxu0 0
    %380 = vmatprep.subr.bf16.mxu0 0
    %381 = vmatpush1.bf16.msra.mxu0 0
    %382 = vmatprep.subr.bf16.mxu0 0
    %383 = vmatpush1.bf16.msra.mxu0 0
    %384 = vmatprep.subr.bf16.mxu0 0
    %385 = vmatpush1.bf16.msra.mxu0 0
    %386 = vmatprep.subr.bf16.mxu0 0
    %387 = vmatpush1.bf16.msra.mxu0 0
    %388 = vmatprep.subr.bf16.mxu0 0
    %389 = vmatpush1.bf16.msra.mxu0 0
    %390 = vmatprep.subr.bf16.mxu0 0
    %391 = vmatpush1.bf16.msra.mxu0 0
    %392 = vmatprep.subr.bf16.mxu0 0
    %393 = vmatpush1.bf16.msra.mxu0 0
    %394 = vmatprep.subr.bf16.mxu0 0
    %395 = vmatpush1.bf16.msra.mxu0 0
    %396 = vmatprep.subr.bf16.mxu0 0
    %397 = vmatpush1.bf16.msra.mxu0 0
    %398 = vmatprep.subr.bf16.mxu0 0
    %399 = vmatpush1.bf16.msra.mxu0 0
    %400 = vmatprep.mubr.bf16.mxu0 0
    %401 = vmatmul.mubr.bf16.gmra.mrb[0].mxu0 %v366
    %v402 = vpop.f32.mrb[0].mxu0
    %v403 = vadd.f32 %v363, %v402
    %v404 = vpop.f32.mrb[0].mxu0
    %v405 = vpop.f32.mrb[0].mxu0
    %v406 = vpop.f32.mrb[0].mxu0
    %407 = vdwg.mxu0
    %v408 = vld [vmem:[#allocation2 + $0x48] sm:$0xc]
    %v410 = vrot.slane %v408, 2
    %v412 = vadd.f32 %v403, %v410
    %v413 = vxor.u32 %v412, 2147483648
    %v414 = vmul.f32 %v413, 1.442695
    %v415 = vpow.pop %v414
    %v416 = vadd.f32 %v415, 1.0
    %v417 = vrcp.pop %v416
    %v418 = vmul.f32 1.0, %v417
    %v419 = vtanh.pop %v412
    %v420 = vmul.f32 %v418, %v350
    %422 = vrot.lane.b32.xlu0 %v419, 64
    %v423 = vpop.permute.xlu0 %422
    %v425 = vmul.f32 %v418, %v423
    %427 = vrot.lane.b32.xlu0 %v425, 32
    %v428 = vpop.permute.xlu0 %427
    %v430 = vadd.f32 %v420, %v428
    %v431 = vtanh.pop %v430
    %433 = vrot.lane.b32.xlu0 %v431, 64
    %v434 = vpop.permute.xlu0 %433
    %v436 = vmul.f32 %v418, %v434
    %v437 = vpack.c.bf16 %v436, %v436
    %v438 = vld [vmem:[#allocation2] sm:$0xc0]
    %440 = vrot.lane.b32.xlu0 %v437, 32
    %v441 = vpop.permute.xlu0 %440
    %v443 = vrot.slane %v438, 6
    %v446 = vsel %vm204, %v441, 0
    %448 = vmatprep.subr.bf16.mxu0 0
    %449 = vmatpush1.bf16.msra.mxu0 %v200
    %450 = vmatprep.subr.bf16.mxu0 0
    %451 = vmatpush1.bf16.msra.mxu0 %v201
    %452 = vmatprep.subr.bf16.mxu0 0
    %453 = vmatpush1.bf16.msra.mxu0 0
    %454 = vmatprep.subr.bf16.mxu0 0
    %455 = vmatpush1.bf16.msra.mxu0 0
    %456 = vmatprep.subr.bf16.mxu0 0
    %457 = vmatpush1.bf16.msra.mxu0 0
    %458 = vmatprep.subr.bf16.mxu0 0
    %459 = vmatpush1.bf16.msra.mxu0 0
    %460 = vmatprep.subr.bf16.mxu0 0
    %461 = vmatpush1.bf16.msra.mxu0 0
    %462 = vmatprep.subr.bf16.mxu0 0
    %463 = vmatpush1.bf16.msra.mxu0 0
    %464 = vmatprep.subr.bf16.mxu0 0
    %465 = vmatpush1.bf16.msra.mxu0 0
    %466 = vmatprep.subr.bf16.mxu0 0
    %467 = vmatpush1.bf16.msra.mxu0 0
    %468 = vmatprep.subr.bf16.mxu0 0
    %469 = vmatpush1.bf16.msra.mxu0 0
    %470 = vmatprep.subr.bf16.mxu0 0
    %471 = vmatpush1.bf16.msra.mxu0 0
    %472 = vmatprep.subr.bf16.mxu0 0
    %473 = vmatpush1.bf16.msra.mxu0 0
    %474 = vmatprep.subr.bf16.mxu0 0
    %475 = vmatpush1.bf16.msra.mxu0 0
    %476 = vmatprep.subr.bf16.mxu0 0
    %477 = vmatpush1.bf16.msra.mxu0 0
    %478 = vmatprep.subr.bf16.mxu0 0
    %479 = vmatpush1.bf16.msra.mxu0 0
    %480 = vmatprep.mubr.bf16.mxu0 0
    %481 = vmatmul.mubr.bf16.gmra.mrb[0].mxu0 %v446
    %v482 = vpop.f32.mrb[0].mxu0
    %v483 = vadd.f32 %v443, %v482
    %v484 = vpop.f32.mrb[0].mxu0
    %v485 = vpop.f32.mrb[0].mxu0
    %v486 = vpop.f32.mrb[0].mxu0
    %487 = vdwg.mxu0
    %v488 = vld [vmem:[#allocation2 + $0x48] sm:$0x3]
    %v489 = vadd.f32 %v483, %v488
    %v490 = vxor.u32 %v489, 2147483648
    %v491 = vmul.f32 %v490, 1.442695
    %v492 = vpow.pop %v491
    %v493 = vadd.f32 %v492, 1.0
    %v494 = vrcp.pop %v493
    %v495 = vmul.f32 1.0, %v494
    %v496 = vtanh.pop %v489
    %v497 = vmul.f32 %v495, %v430
    %499 = vrot.lane.b32.xlu0 %v496, 64
    %v500 = vpop.permute.xlu0 %499
    %v502 = vmul.f32 %v495, %v500
    %504 = vrot.lane.b32.xlu0 %v502, 32
    %v505 = vpop.permute.xlu0 %504
    %v507 = vadd.f32 %v497, %v505
    %v508 = vtanh.pop %v507
    %510 = vrot.lane.b32.xlu0 %v508, 64
    %v511 = vpop.permute.xlu0 %510
    %v513 = vmul.f32 %v495, %v511
    %v515 = vrot.slane %v356, 6
    %v518 = vrot.slane %v436, 4
    %v521 = vrot.slane %v513, 2
    %vm523 = vcmask 1041408
    %v524 = vsel %vm523, %v276, %v515
    %vm525 = vcmask 1043456
    %v526 = vsel %vm525, %v524, %v518
    %vm527 = vcmask 1045504
    %v528 = vsel %vm527, %v526, %v521
    %530 = vrot.lane.b32.xlu0 %v528, 32
    %v531 = vpop.permute.xlu0 %530
    %533 = vst.msk [vmem:[#allocation3] sm:$0xff] %vm106, %v531
    %v534 = vrot.slane %v436, 6
    %v536 = vrot.slane %v356, 4
    %v539 = vrot.slane %v276, 2
    %v541 = vsel %vm523, %v513, %v534
    %v542 = vsel %vm525, %v541, %v536
    %v543 = vsel %vm527, %v542, %v539
    %545 = vrot.lane.b32.xlu0 %v543, 32
    %v546 = vpop.permute.xlu0 %545
    %vm548 = vcmask 261248
    %549 = vst.msk [vmem:[#allocation3 + $0x20] sm:$0xff] %vm548, %v546
    %v550 = vpack.c.bf16 %v513, %v513
    %v551 = vld [vmem:[#allocation2 + $0x10] sm:$0x3]
    %553 = vrot.lane.b32.xlu0 %v550, 32
    %v554 = vpop.permute.xlu0 %553
    %v556 = vsel %vm204, %v554, 0
    %558 = vmatprep.subr.bf16.mxu0 0
    %559 = vmatpush1.bf16.msra.mxu0 %v200
    %560 = vmatprep.subr.bf16.mxu0 0
    %561 = vmatpush1.bf16.msra.mxu0 %v201
    %562 = vmatprep.subr.bf16.mxu0 0
    %563 = vmatpush1.bf16.msra.mxu0 0
    %564 = vmatprep.subr.bf16.mxu0 0
    %565 = vmatpush1.bf16.msra.mxu0 0
    %566 = vmatprep.subr.bf16.mxu0 0
    %567 = vmatpush1.bf16.msra.mxu0 0
    %568 = vmatprep.subr.bf16.mxu0 0
    %569 = vmatpush1.bf16.msra.mxu0 0
    %570 = vmatprep.subr.bf16.mxu0 0
    %571 = vmatpush1.bf16.msra.mxu0 0
    %572 = vmatprep.subr.bf16.mxu0 0
    %573 = vmatpush1.bf16.msra.mxu0 0
    %574 = vmatprep.subr.bf16.mxu0 0
    %575 = vmatpush1.bf16.msra.mxu0 0
    %576 = vmatprep.subr.bf16.mxu0 0
    %577 = vmatpush1.bf16.msra.mxu0 0
    %578 = vmatprep.subr.bf16.mxu0 0
    %579 = vmatpush1.bf16.msra.mxu0 0
    %580 = vmatprep.subr.bf16.mxu0 0
    %581 = vmatpush1.bf16.msra.mxu0 0
    %582 = vmatprep.subr.bf16.mxu0 0
    %583 = vmatpush1.bf16.msra.mxu0 0
    %584 = vmatprep.subr.bf16.mxu0 0
    %585 = vmatpush1.bf16.msra.mxu0 0
    %586 = vmatprep.subr.bf16.mxu0 0
    %587 = vmatpush1.bf16.msra.mxu0 0
    %588 = vmatprep.subr.bf16.mxu0 0
    %589 = vmatpush1.bf16.msra.mxu0 0
    %590 = vmatprep.mubr.bf16.mxu0 0
    %591 = vmatmul.mubr.bf16.gmra.mrb[0].mxu0 %v556
    %v592 = vpop.f32.mrb[0].mxu0
    %v593 = vadd.f32 %v551, %v592
    %v594 = vpop.f32.mrb[0].mxu0
    %v595 = vpop.f32.mrb[0].mxu0
    %v596 = vpop.f32.mrb[0].mxu0
    %597 = vdwg.mxu0
    %v598 = vld [vmem:[#allocation2 + $0x38] sm:$0xc0]
    %v600 = vrot.slane %v598, 6
    %v602 = vadd.f32 %v593, %v600
    %v603 = vxor.u32 %v602, 2147483648
    %v604 = vmul.f32 %v603, 1.442695
    %v605 = vpow.pop %v604
    %v606 = vadd.f32 %v605, 1.0
    %v607 = vrcp.pop %v606
    %v608 = vmul.f32 1.0, %v607
    %v609 = vtanh.pop %v602
    %v610 = vmul.f32 %v608, %v507
    %612 = vrot.lane.b32.xlu0 %v609, 64
    %v613 = vpop.permute.xlu0 %612
    %v615 = vmul.f32 %v608, %v613
    %617 = vrot.lane.b32.xlu0 %v615, 32
    %v618 = vpop.permute.xlu0 %617
    %v620 = vadd.f32 %v610, %v618
    %v621 = vtanh.pop %v620
    %623 = vrot.lane.b32.xlu0 %v621, 64
    %v624 = vpop.permute.xlu0 %623
    %v626 = vmul.f32 %v608, %v624
    %v627 = vpack.c.bf16 %v626, %v626
    %v628 = vld [vmem:[#allocation2 + $0x10] sm:$0xc]
    %630 = vrot.lane.b32.xlu0 %v627, 32
    %v631 = vpop.permute.xlu0 %630
    %v633 = vrot.slane %v628, 2
    %v636 = vsel %vm204, %v631, 0
    %638 = vmatprep.subr.bf16.mxu0 0
    %639 = vmatpush1.bf16.msra.mxu0 %v200
    %640 = vmatprep.subr.bf16.mxu0 0
    %641 = vmatpush1.bf16.msra.mxu0 %v201
    %642 = vmatprep.subr.bf16.mxu0 0
    %643 = vmatpush1.bf16.msra.mxu0 0
    %644 = vmatprep.subr.bf16.mxu0 0
    %645 = vmatpush1.bf16.msra.mxu0 0
    %646 = vmatprep.subr.bf16.mxu0 0
    %647 = vmatpush1.bf16.msra.mxu0 0
    %648 = vmatprep.subr.bf16.mxu0 0
    %649 = vmatpush1.bf16.msra.mxu0 0
    %650 = vmatprep.subr.bf16.mxu0 0
    %651 = vmatpush1.bf16.msra.mxu0 0
    %652 = vmatprep.subr.bf16.mxu0 0
    %653 = vmatpush1.bf16.msra.mxu0 0
    %654 = vmatprep.subr.bf16.mxu0 0
    %655 = vmatpush1.bf16.msra.mxu0 0
    %656 = vmatprep.subr.bf16.mxu0 0
    %657 = vmatpush1.bf16.msra.mxu0 0
    %658 = vmatprep.subr.bf16.mxu0 0
    %659 = vmatpush1.bf16.msra.mxu0 0
    %660 = vmatprep.subr.bf16.mxu0 0
    %661 = vmatpush1.bf16.msra.mxu0 0
    %662 = vmatprep.subr.bf16.mxu0 0
    %663 = vmatpush1.bf16.msra.mxu0 0
    %664 = vmatprep.subr.bf16.mxu0 0
    %665 = vmatpush1.bf16.msra.mxu0 0
    %666 = vmatprep.subr.bf16.mxu0 0
    %667 = vmatpush1.bf16.msra.mxu0 0
    %668 = vmatprep.subr.bf16.mxu0 0
    %669 = vmatpush1.bf16.msra.mxu0 0
    %670 = vmatprep.mubr.bf16.mxu0 0
    %671 = vmatmul.mubr.bf16.gmra.mrb[0].mxu0 %v636
    %v672 = vpop.f32.mrb[0].mxu0
    %v673 = vadd.f32 %v633, %v672
    %v674 = vpop.f32.mrb[0].mxu0
    %v675 = vpop.f32.mrb[0].mxu0
    %v676 = vpop.f32.mrb[0].mxu0
    %677 = vdwg.mxu0
    %v678 = vld [vmem:[#allocation2 + $0x38] sm:$0x30]
    %v680 = vrot.slane %v678, 4
    %v682 = vadd.f32 %v673, %v680
    %v683 = vxor.u32 %v682, 2147483648
    %v684 = vmul.f32 %v683, 1.442695
    %v685 = vpow.pop %v684
    %v686 = vadd.f32 %v685, 1.0
    %v687 = vrcp.pop %v686
    %v688 = vmul.f32 1.0, %v687
    %v689 = vtanh.pop %v682
    %v690 = vmul.f32 %v688, %v620
    %692 = vrot.lane.b32.xlu0 %v689, 64
    %v693 = vpop.permute.xlu0 %692
    %v695 = vmul.f32 %v688, %v693
    %697 = vrot.lane.b32.xlu0 %v695, 32
    %v698 = vpop.permute.xlu0 %697
    %v700 = vadd.f32 %v690, %v698
    %v701 = vtanh.pop %v700
    %703 = vrot.lane.b32.xlu0 %v701, 64
    %v704 = vpop.permute.xlu0 %703
    %v706 = vmul.f32 %v688, %v704
    %v707 = vpack.c.bf16 %v706, %v706
    %v708 = vld [vmem:[#allocation2 + $0x10] sm:$0x30]
    %710 = vrot.lane.b32.xlu0 %v707, 32
    %v711 = vpop.permute.xlu0 %710
    %v713 = vrot.slane %v708, 4
    %v716 = vsel %vm204, %v711, 0
    %718 = vmatprep.subr.bf16.mxu0 0
    %719 = vmatpush1.bf16.msra.mxu0 %v200
    %720 = vmatprep.subr.bf16.mxu0 0
    %721 = vmatpush1.bf16.msra.mxu0 %v201
    %722 = vmatprep.subr.bf16.mxu0 0
    %723 = vmatpush1.bf16.msra.mxu0 0
    %724 = vmatprep.subr.bf16.mxu0 0
    %725 = vmatpush1.bf16.msra.mxu0 0
    %726 = vmatprep.subr.bf16.mxu0 0
    %727 = vmatpush1.bf16.msra.mxu0 0
    %728 = vmatprep.subr.bf16.mxu0 0
    %729 = vmatpush1.bf16.msra.mxu0 0
    %730 = vmatprep.subr.bf16.mxu0 0
    %731 = vmatpush1.bf16.msra.mxu0 0
    %732 = vmatprep.subr.bf16.mxu0 0
    %733 = vmatpush1.bf16.msra.mxu0 0
    %734 = vmatprep.subr.bf16.mxu0 0
    %735 = vmatpush1.bf16.msra.mxu0 0
    %736 = vmatprep.subr.bf16.mxu0 0
    %737 = vmatpush1.bf16.msra.mxu0 0
    %738 = vmatprep.subr.bf16.mxu0 0
    %739 = vmatpush1.bf16.msra.mxu0 0
    %740 = vmatprep.subr.bf16.mxu0 0
    %741 = vmatpush1.bf16.msra.mxu0 0
    %742 = vmatprep.subr.bf16.mxu0 0
    %743 = vmatpush1.bf16.msra.mxu0 0
    %744 = vmatprep.subr.bf16.mxu0 0
    %745 = vmatpush1.bf16.msra.mxu0 0
    %746 = vmatprep.subr.bf16.mxu0 0
    %747 = vmatpush1.bf16.msra.mxu0 0
    %748 = vmatprep.subr.bf16.mxu0 0
    %749 = vmatpush1.bf16.msra.mxu0 0
    %750 = vmatprep.mubr.bf16.mxu0 0
    %751 = vmatmul.mubr.bf16.gmra.mrb[0].mxu0 %v716
    %v752 = vpop.f32.mrb[0].mxu0
    %v753 = vadd.f32 %v713, %v752
    %v754 = vpop.f32.mrb[0].mxu0
    %v755 = vpop.f32.mrb[0].mxu0
    %v756 = vpop.f32.mrb[0].mxu0
    %757 = vdwg.mxu0
    %v758 = vld [vmem:[#allocation2 + $0x38] sm:$0xc]
    %v760 = vrot.slane %v758, 2
    %v762 = vadd.f32 %v753, %v760
    %v763 = vxor.u32 %v762, 2147483648
    %v764 = vmul.f32 %v763, 1.442695
    %v765 = vpow.pop %v764
    %v766 = vadd.f32 %v765, 1.0
    %v767 = vrcp.pop %v766
    %v768 = vmul.f32 1.0, %v767
    %v769 = vtanh.pop %v762
    %v770 = vmul.f32 %v768, %v700
    %772 = vrot.lane.b32.xlu0 %v769, 64
    %v773 = vpop.permute.xlu0 %772
    %v775 = vmul.f32 %v768, %v773
    %777 = vrot.lane.b32.xlu0 %v775, 32
    %v778 = vpop.permute.xlu0 %777
    %v780 = vadd.f32 %v770, %v778
    %v781 = vtanh.pop %v780
    %783 = vrot.lane.b32.xlu0 %v781, 64
    %v784 = vpop.permute.xlu0 %783
    %v786 = vmul.f32 %v768, %v784
    %v787 = vpack.c.bf16 %v786, %v786
    %v788 = vld [vmem:[#allocation2 + $0x10] sm:$0xc0]
    %790 = vrot.lane.b32.xlu0 %v787, 32
    %v791 = vpop.permute.xlu0 %790
    %v793 = vrot.slane %v788, 6
    %v796 = vsel %vm204, %v791, 0
    %798 = vmatprep.subr.bf16.mxu0 0
    %799 = vmatpush1.bf16.msra.mxu0 %v200
    %800 = vmatprep.subr.bf16.mxu0 0
    %801 = vmatpush1.bf16.msra.mxu0 %v201
    %802 = vmatprep.subr.bf16.mxu0 0
    %803 = vmatpush1.bf16.msra.mxu0 0
    %804 = vmatprep.subr.bf16.mxu0 0
    %805 = vmatpush1.bf16.msra.mxu0 0
    %806 = vmatprep.subr.bf16.mxu0 0
    %807 = vmatpush1.bf16.msra.mxu0 0
    %808 = vmatprep.subr.bf16.mxu0 0
    %809 = vmatpush1.bf16.msra.mxu0 0
    %810 = vmatprep.subr.bf16.mxu0 0
    %811 = vmatpush1.bf16.msra.mxu0 0
    %812 = vmatprep.subr.bf16.mxu0 0
    %813 = vmatpush1.bf16.msra.mxu0 0
    %814 = vmatprep.subr.bf16.mxu0 0
    %815 = vmatpush1.bf16.msra.mxu0 0
    %816 = vmatprep.subr.bf16.mxu0 0
    %817 = vmatpush1.bf16.msra.mxu0 0
    %818 = vmatprep.subr.bf16.mxu0 0
    %819 = vmatpush1.bf16.msra.mxu0 0
    %820 = vmatprep.subr.bf16.mxu0 0
    %821 = vmatpush1.bf16.msra.mxu0 0
    %822 = vmatprep.subr.bf16.mxu0 0
    %823 = vmatpush1.bf16.msra.mxu0 0
    %824 = vmatprep.subr.bf16.mxu0 0
    %825 = vmatpush1.bf16.msra.mxu0 0
    %826 = vmatprep.subr.bf16.mxu0 0
    %827 = vmatpush1.bf16.msra.mxu0 0
    %828 = vmatprep.subr.bf16.mxu0 0
    %829 = vmatpush1.bf16.msra.mxu0 0
    %830 = vmatprep.mubr.bf16.mxu0 0
    %831 = vmatmul.mubr.bf16.gmra.mrb[0].mxu0 %v796
    %v832 = vpop.f32.mrb[0].mxu0
    %v833 = vadd.f32 %v793, %v832
    %v834 = vpop.f32.mrb[0].mxu0
    %v835 = vpop.f32.mrb[0].mxu0
    %v836 = vpop.f32.mrb[0].mxu0
    %837 = vdwg.mxu0
    %v838 = vld [vmem:[#allocation2 + $0x38] sm:$0x3]
    %v839 = vadd.f32 %v833, %v838
    %v840 = vxor.u32 %v839, 2147483648
    %v841 = vmul.f32 %v840, 1.442695
    %v842 = vpow.pop %v841
    %v843 = vadd.f32 %v842, 1.0
    %v844 = vrcp.pop %v843
    %v845 = vmul.f32 1.0, %v844
    %v846 = vtanh.pop %v839
    %v847 = vmul.f32 %v845, %v780
    %849 = vrot.lane.b32.xlu0 %v846, 64
    %v850 = vpop.permute.xlu0 %849
    %v852 = vmul.f32 %v845, %v850
    %854 = vrot.lane.b32.xlu0 %v852, 32
    %v855 = vpop.permute.xlu0 %854
    %v857 = vadd.f32 %v847, %v855
    %v858 = vtanh.pop %v857
    %860 = vrot.lane.b32.xlu0 %v858, 64
    %v861 = vpop.permute.xlu0 %860
    %v863 = vmul.f32 %v845, %v861
    %v865 = vrot.slane %v706, 6
    %v868 = vrot.slane %v786, 4
    %v871 = vrot.slane %v863, 2
    %v873 = vsel %vm523, %v626, %v865
    %v874 = vsel %vm525, %v873, %v868
    %v875 = vsel %vm527, %v874, %v871
    %877 = vrot.lane.b32.xlu0 %v875, 32
    %v878 = vpop.permute.xlu0 %877
    %880 = vst.msk [vmem:[#allocation3 + $0x8] sm:$0xff] %vm106, %v878
    %v881 = vrot.slane %v786, 6
    %v883 = vrot.slane %v706, 4
    %v886 = vrot.slane %v626, 2
    %v888 = vsel %vm523, %v863, %v881
    %v889 = vsel %vm525, %v888, %v883
    %v890 = vsel %vm527, %v889, %v886
    %892 = vrot.lane.b32.xlu0 %v890, 32
    %v893 = vpop.permute.xlu0 %892
    %895 = vst.msk [vmem:[#allocation3 + $0x18] sm:$0xff] %vm548, %v893
    %v896 = vpack.c.bf16 %v863, %v863
    %v897 = vld [vmem:[#allocation2 + $0x20] sm:$0x3]
    %899 = vrot.lane.b32.xlu0 %v896, 32
    %v900 = vpop.permute.xlu0 %899
    %v902 = vsel %vm204, %v900, 0
    %904 = vmatprep.subr.bf16.mxu0 0
    %905 = vmatpush1.bf16.msra.mxu0 %v200
    %906 = vmatprep.subr.bf16.mxu0 0
    %907 = vmatpush1.bf16.msra.mxu0 %v201
    %908 = vmatprep.subr.bf16.mxu0 0
    %909 = vmatpush1.bf16.msra.mxu0 0
    %910 = vmatprep.subr.bf16.mxu0 0
    %911 = vmatpush1.bf16.msra.mxu0 0
    %912 = vmatprep.subr.bf16.mxu0 0
    %913 = vmatpush1.bf16.msra.mxu0 0
    %914 = vmatprep.subr.bf16.mxu0 0
    %915 = vmatpush1.bf16.msra.mxu0 0
    %916 = vmatprep.subr.bf16.mxu0 0
    %917 = vmatpush1.bf16.msra.mxu0 0
    %918 = vmatprep.subr.bf16.mxu0 0
    %919 = vmatpush1.bf16.msra.mxu0 0
    %920 = vmatprep.subr.bf16.mxu0 0
    %921 = vmatpush1.bf16.msra.mxu0 0
    %922 = vmatprep.subr.bf16.mxu0 0
    %923 = vmatpush1.bf16.msra.mxu0 0
    %924 = vmatprep.subr.bf16.mxu0 0
    %925 = vmatpush1.bf16.msra.mxu0 0
    %926 = vmatprep.subr.bf16.mxu0 0
    %927 = vmatpush1.bf16.msra.mxu0 0
    %928 = vmatprep.subr.bf16.mxu0 0
    %929 = vmatpush1.bf16.msra.mxu0 0
    %930 = vmatprep.subr.bf16.mxu0 0
    %931 = vmatpush1.bf16.msra.mxu0 0
    %932 = vmatprep.subr.bf16.mxu0 0
    %933 = vmatpush1.bf16.msra.mxu0 0
    %934 = vmatprep.subr.bf16.mxu0 0
    %935 = vmatpush1.bf16.msra.mxu0 0
    %936 = vmatprep.mubr.bf16.mxu0 0
    %937 = vmatmul.mubr.bf16.gmra.mrb[0].mxu0 %v902
    %v938 = vpop.f32.mrb[0].mxu0
    %v939 = vadd.f32 %v897, %v938
    %v940 = vpop.f32.mrb[0].mxu0
    %v941 = vpop.f32.mrb[0].mxu0
    %v942 = vpop.f32.mrb[0].mxu0
    %943 = vdwg.mxu0
    %v944 = vld [vmem:[#allocation2 + $0x28] sm:$0xc0]
    %v946 = vrot.slane %v944, 6
    %v948 = vadd.f32 %v939, %v946
    %v949 = vxor.u32 %v948, 2147483648
    %v950 = vmul.f32 %v949, 1.442695
    %v951 = vpow.pop %v950
    %v952 = vadd.f32 %v951, 1.0
    %v953 = vrcp.pop %v952
    %v954 = vmul.f32 1.0, %v953
    %v955 = vtanh.pop %v948
    %v956 = vmul.f32 %v954, %v857
    %958 = vrot.lane.b32.xlu0 %v955, 64
    %v959 = vpop.permute.xlu0 %958
    %v961 = vmul.f32 %v954, %v959
    %963 = vrot.lane.b32.xlu0 %v961, 32
    %v964 = vpop.permute.xlu0 %963
    %v966 = vadd.f32 %v956, %v964
    %v967 = vtanh.pop %v966
    %969 = vrot.lane.b32.xlu0 %v967, 64
    %v970 = vpop.permute.xlu0 %969
    %v972 = vmul.f32 %v954, %v970
    %v973 = vpack.c.bf16 %v972, %v972
    %v974 = vld [vmem:[#allocation2 + $0x20] sm:$0xc]
    %976 = vrot.lane.b32.xlu0 %v973, 32
    %v977 = vpop.permute.xlu0 %976
    %v979 = vrot.slane %v974, 2
    %v982 = vsel %vm204, %v977, 0
    %984 = vmatprep.subr.bf16.mxu0 0
    %985 = vmatpush1.bf16.msra.mxu0 %v200
    %986 = vmatprep.subr.bf16.mxu0 0
    %987 = vmatpush1.bf16.msra.mxu0 %v201
    %988 = vmatprep.subr.bf16.mxu0 0
    %989 = vmatpush1.bf16.msra.mxu0 0
    %990 = vmatprep.subr.bf16.mxu0 0
    %991 = vmatpush1.bf16.msra.mxu0 0
    %992 = vmatprep.subr.bf16.mxu0 0
    %993 = vmatpush1.bf16.msra.mxu0 0
    %994 = vmatprep.subr.bf16.mxu0 0
    %995 = vmatpush1.bf16.msra.mxu0 0
    %996 = vmatprep.subr.bf16.mxu0 0
    %997 = vmatpush1.bf16.msra.mxu0 0
    %998 = vmatprep.subr.bf16.mxu0 0
    %999 = vmatpush1.bf16.msra.mxu0 0
    %1000 = vmatprep.subr.bf16.mxu0 0
    %1001 = vmatpush1.bf16.msra.mxu0 0
    %1002 = vmatprep.subr.bf16.mxu0 0
    %1003 = vmatpush1.bf16.msra.mxu0 0
    %1004 = vmatprep.subr.bf16.mxu0 0
    %1005 = vmatpush1.bf16.msra.mxu0 0
    %1006 = vmatprep.subr.bf16.mxu0 0
    %1007 = vmatpush1.bf16.msra.mxu0 0
    %1008 = vmatprep.subr.bf16.mxu0 0
    %1009 = vmatpush1.bf16.msra.mxu0 0
    %1010 = vmatprep.subr.bf16.mxu0 0
    %1011 = vmatpush1.bf16.msra.mxu0 0
    %1012 = vmatprep.subr.bf16.mxu0 0
    %1013 = vmatpush1.bf16.msra.mxu0 0
    %1014 = vmatprep.subr.bf16.mxu0 0
    %1015 = vmatpush1.bf16.msra.mxu0 0
    %1016 = vmatprep.mubr.bf16.mxu0 0
    %1017 = vmatmul.mubr.bf16.gmra.mrb[0].mxu0 %v982
    %v1018 = vpop.f32.mrb[0].mxu0
    %v1019 = vadd.f32 %v979, %v1018
    %v1020 = vpop.f32.mrb[0].mxu0
    %v1021 = vpop.f32.mrb[0].mxu0
    %v1022 = vpop.f32.mrb[0].mxu0
    %1023 = vdwg.mxu0
    %v1024 = vld [vmem:[#allocation2 + $0x28] sm:$0x30]
    %v1026 = vrot.slane %v1024, 4
    %v1028 = vadd.f32 %v1019, %v1026
    %v1029 = vxor.u32 %v1028, 2147483648
    %v1030 = vmul.f32 %v1029, 1.442695
    %v1031 = vpow.pop %v1030
    %v1032 = vadd.f32 %v1031, 1.0
    %v1033 = vrcp.pop %v1032
    %v1034 = vmul.f32 1.0, %v1033
    %v1035 = vtanh.pop %v1028
    %v1036 = vmul.f32 %v1034, %v966
    %1038 = vrot.lane.b32.xlu0 %v1035, 64
    %v1039 = vpop.permute.xlu0 %1038
    %v1041 = vmul.f32 %v1034, %v1039
    %1043 = vrot.lane.b32.xlu0 %v1041, 32
    %v1044 = vpop.permute.xlu0 %1043
    %v1046 = vadd.f32 %v1036, %v1044
    %v1047 = vtanh.pop %v1046
    %1049 = vrot.lane.b32.xlu0 %v1047, 64
    %v1050 = vpop.permute.xlu0 %1049
    %v1052 = vmul.f32 %v1034, %v1050
    %v1053 = vpack.c.bf16 %v1052, %v1052
    %v1054 = vld [vmem:[#allocation2 + $0x20] sm:$0x30]
    %1056 = vrot.lane.b32.xlu0 %v1053, 32
    %v1057 = vpop.permute.xlu0 %1056
    %v1059 = vrot.slane %v1054, 4
    %v1062 = vsel %vm204, %v1057, 0
    %1064 = vmatprep.subr.bf16.mxu0 0
    %1065 = vmatpush1.bf16.msra.mxu0 %v200
    %1066 = vmatprep.subr.bf16.mxu0 0
    %1067 = vmatpush1.bf16.msra.mxu0 %v201
    %1068 = vmatprep.subr.bf16.mxu0 0
    %1069 = vmatpush1.bf16.msra.mxu0 0
    %1070 = vmatprep.subr.bf16.mxu0 0
    %1071 = vmatpush1.bf16.msra.mxu0 0
    %1072 = vmatprep.subr.bf16.mxu0 0
    %1073 = vmatpush1.bf16.msra.mxu0 0
    %1074 = vmatprep.subr.bf16.mxu0 0
    %1075 = vmatpush1.bf16.msra.mxu0 0
    %1076 = vmatprep.subr.bf16.mxu0 0
    %1077 = vmatpush1.bf16.msra.mxu0 0
    %1078 = vmatprep.subr.bf16.mxu0 0
    %1079 = vmatpush1.bf16.msra.mxu0 0
    %1080 = vmatprep.subr.bf16.mxu0 0
    %1081 = vmatpush1.bf16.msra.mxu0 0
    %1082 = vmatprep.subr.bf16.mxu0 0
    %1083 = vmatpush1.bf16.msra.mxu0 0
    %1084 = vmatprep.subr.bf16.mxu0 0
    %1085 = vmatpush1.bf16.msra.mxu0 0
    %1086 = vmatprep.subr.bf16.mxu0 0
    %1087 = vmatpush1.bf16.msra.mxu0 0
    %1088 = vmatprep.subr.bf16.mxu0 0
    %1089 = vmatpush1.bf16.msra.mxu0 0
    %1090 = vmatprep.subr.bf16.mxu0 0
    %1091 = vmatpush1.bf16.msra.mxu0 0
    %1092 = vmatprep.subr.bf16.mxu0 0
    %1093 = vmatpush1.bf16.msra.mxu0 0
    %1094 = vmatprep.subr.bf16.mxu0 0
    %1095 = vmatpush1.bf16.msra.mxu0 0
    %1096 = vmatprep.mubr.bf16.mxu0 0
    %1097 = vmatmul.mubr.bf16.gmra.mrb[0].mxu0 %v1062
    %v1098 = vpop.f32.mrb[0].mxu0
    %v1099 = vadd.f32 %v1059, %v1098
    %v1100 = vpop.f32.mrb[0].mxu0
    %v1101 = vpop.f32.mrb[0].mxu0
    %v1102 = vpop.f32.mrb[0].mxu0
    %1103 = vdwg.mxu0
    %v1104 = vld [vmem:[#allocation2 + $0x28] sm:$0xc]
    %v1106 = vrot.slane %v1104, 2
    %v1108 = vadd.f32 %v1099, %v1106
    %v1109 = vxor.u32 %v1108, 2147483648
    %v1110 = vmul.f32 %v1109, 1.442695
    %v1111 = vpow.pop %v1110
    %v1112 = vadd.f32 %v1111, 1.0
    %v1113 = vrcp.pop %v1112
    %v1114 = vmul.f32 1.0, %v1113
    %v1115 = vtanh.pop %v1108
    %v1116 = vmul.f32 %v1114, %v1046
    %1118 = vrot.lane.b32.xlu0 %v1115, 64
    %v1119 = vpop.permute.xlu0 %1118
    %v1121 = vmul.f32 %v1114, %v1119
    %1123 = vrot.lane.b32.xlu0 %v1121, 32
    %v1124 = vpop.permute.xlu0 %1123
    %v1126 = vadd.f32 %v1116, %v1124
    %v1127 = vtanh.pop %v1126
    %1129 = vrot.lane.b32.xlu0 %v1127, 64
    %v1130 = vpop.permute.xlu0 %1129
    %v1132 = vmul.f32 %v1114, %v1130
    %v1133 = vpack.c.bf16 %v1132, %v1132
    %v1134 = vld [vmem:[#allocation2 + $0x20] sm:$0xc0]
    %1136 = vrot.lane.b32.xlu0 %v1133, 32
    %v1137 = vpop.permute.xlu0 %1136
    %v1139 = vrot.slane %v1134, 6
    %v1142 = vsel %vm204, %v1137, 0
    %1144 = vmatprep.subr.bf16.mxu0 0
    %1145 = vmatpush1.bf16.msra.mxu0 %v200
    %1146 = vmatprep.subr.bf16.mxu0 0
    %1147 = vmatpush1.bf16.msra.mxu0 %v201
    %1148 = vmatprep.subr.bf16.mxu0 0
    %1149 = vmatpush1.bf16.msra.mxu0 0
    %1150 = vmatprep.subr.bf16.mxu0 0
    %1151 = vmatpush1.bf16.msra.mxu0 0
    %1152 = vmatprep.subr.bf16.mxu0 0
    %1153 = vmatpush1.bf16.msra.mxu0 0
    %1154 = vmatprep.subr.bf16.mxu0 0
    %1155 = vmatpush1.bf16.msra.mxu0 0
    %1156 = vmatprep.subr.bf16.mxu0 0
    %1157 = vmatpush1.bf16.msra.mxu0 0
    %1158 = vmatprep.subr.bf16.mxu0 0
    %1159 = vmatpush1.bf16.msra.mxu0 0
    %1160 = vmatprep.subr.bf16.mxu0 0
    %1161 = vmatpush1.bf16.msra.mxu0 0
    %1162 = vmatprep.subr.bf16.mxu0 0
    %1163 = vmatpush1.bf16.msra.mxu0 0
    %1164 = vmatprep.subr.bf16.mxu0 0
    %1165 = vmatpush1.bf16.msra.mxu0 0
    %1166 = vmatprep.subr.bf16.mxu0 0
    %1167 = vmatpush1.bf16.msra.mxu0 0
    %1168 = vmatprep.subr.bf16.mxu0 0
    %1169 = vmatpush1.bf16.msra.mxu0 0
    %1170 = vmatprep.subr.bf16.mxu0 0
    %1171 = vmatpush1.bf16.msra.mxu0 0
    %1172 = vmatprep.subr.bf16.mxu0 0
    %1173 = vmatpush1.bf16.msra.mxu0 0
    %1174 = vmatprep.subr.bf16.mxu0 0
    %1175 = vmatpush1.bf16.msra.mxu0 0
    %1176 = vmatprep.mubr.bf16.mxu0 0
    %1177 = vmatmul.mubr.bf16.gmra.mrb[0].mxu0 %v1142
    %v1178 = vpop.f32.mrb[0].mxu0
    %v1179 = vadd.f32 %v1139, %v1178
    %v1180 = vpop.f32.mrb[0].mxu0
    %v1181 = vpop.f32.mrb[0].mxu0
    %v1182 = vpop.f32.mrb[0].mxu0
    %1183 = vdwg.mxu0
    %v1184 = vld [vmem:[#allocation2 + $0x28] sm:$0x3]
    %v1185 = vadd.f32 %v1179, %v1184
    %v1186 = vxor.u32 %v1185, 2147483648
    %v1187 = vmul.f32 %v1186, 1.442695
    %v1188 = vpow.pop %v1187
    %v1189 = vadd.f32 %v1188, 1.0
    %v1190 = vrcp.pop %v1189
    %v1191 = vmul.f32 1.0, %v1190
    %v1192 = vtanh.pop %v1185
    %v1193 = vmul.f32 %v1191, %v1126
    %1195 = vrot.lane.b32.xlu0 %v1192, 64
    %v1196 = vpop.permute.xlu0 %1195
    %v1198 = vmul.f32 %v1191, %v1196
    %1200 = vrot.lane.b32.xlu0 %v1198, 32
    %v1201 = vpop.permute.xlu0 %1200
    %v1203 = vadd.f32 %v1193, %v1201
    %v1204 = vtanh.pop %v1203
    %1206 = vrot.lane.b32.xlu0 %v1204, 64
    %v1207 = vpop.permute.xlu0 %1206
    %v1209 = vmul.f32 %v1191, %v1207
    %v1211 = vrot.slane %v1052, 6
    %v1214 = vrot.slane %v1132, 4
    %v1217 = vrot.slane %v1209, 2
    %v1219 = vsel %vm523, %v972, %v1211
    %v1220 = vsel %vm525, %v1219, %v1214
    %v1221 = vsel %vm527, %v1220, %v1217
    %1223 = vrot.lane.b32.xlu0 %v1221, 32
    %v1224 = vpop.permute.xlu0 %1223
    %1226 = vst.msk [vmem:[#allocation3 + $0x10] sm:$0xff] %vm106, %v1224
    %v1227 = vrot.slane %v1132, 6
    %v1229 = vrot.slane %v1052, 4
    %v1232 = vrot.slane %v972, 2
    %v1234 = vsel %vm523, %v1209, %v1227
    %v1235 = vsel %vm525, %v1234, %v1229
    %v1236 = vsel %vm527, %v1235, %v1232
    %1238 = vrot.lane.b32.xlu0 %v1236, 32
    %v1239 = vpop.permute.xlu0 %1238
    %1241 = vst.msk [vmem:[#allocation3 + $0x10] sm:$0xff] %vm548, %v1239
    %v1242 = vpack.c.bf16 %v1209, %v1209
    %v1243 = vld [vmem:[#allocation2 + $0x30] sm:$0x3]
    %1245 = vrot.lane.b32.xlu0 %v1242, 32
    %v1246 = vpop.permute.xlu0 %1245
    %v1248 = vsel %vm204, %v1246, 0
    %1250 = vmatprep.subr.bf16.mxu0 0
    %1251 = vmatpush1.bf16.msra.mxu0 %v200
    %1252 = vmatprep.subr.bf16.mxu0 0
    %1253 = vmatpush1.bf16.msra.mxu0 %v201
    %1254 = vmatprep.subr.bf16.mxu0 0
    %1255 = vmatpush1.bf16.msra.mxu0 0
    %1256 = vmatprep.subr.bf16.mxu0 0
    %1257 = vmatpush1.bf16.msra.mxu0 0
    %1258 = vmatprep.subr.bf16.mxu0 0
    %1259 = vmatpush1.bf16.msra.mxu0 0
    %1260 = vmatprep.subr.bf16.mxu0 0
    %1261 = vmatpush1.bf16.msra.mxu0 0
    %1262 = vmatprep.subr.bf16.mxu0 0
    %1263 = vmatpush1.bf16.msra.mxu0 0
    %1264 = vmatprep.subr.bf16.mxu0 0
    %1265 = vmatpush1.bf16.msra.mxu0 0
    %1266 = vmatprep.subr.bf16.mxu0 0
    %1267 = vmatpush1.bf16.msra.mxu0 0
    %1268 = vmatprep.subr.bf16.mxu0 0
    %1269 = vmatpush1.bf16.msra.mxu0 0
    %1270 = vmatprep.subr.bf16.mxu0 0
    %1271 = vmatpush1.bf16.msra.mxu0 0
    %1272 = vmatprep.subr.bf16.mxu0 0
    %1273 = vmatpush1.bf16.msra.mxu0 0
    %1274 = vmatprep.subr.bf16.mxu0 0
    %1275 = vmatpush1.bf16.msra.mxu0 0
    %1276 = vmatprep.subr.bf16.mxu0 0
    %1277 = vmatpush1.bf16.msra.mxu0 0
    %1278 = vmatprep.subr.bf16.mxu0 0
    %1279 = vmatpush1.bf16.msra.mxu0 0
    %1280 = vmatprep.subr.bf16.mxu0 0
    %1281 = vmatpush1.bf16.msra.mxu0 0
    %1282 = vmatprep.mubr.bf16.mxu0 0
    %1283 = vmatmul.mubr.bf16.gmra.mrb[0].mxu0 %v1248
    %v1284 = vpop.f32.mrb[0].mxu0
    %v1285 = vadd.f32 %v1243, %v1284
    %v1286 = vpop.f32.mrb[0].mxu0
    %v1287 = vpop.f32.mrb[0].mxu0
    %v1288 = vpop.f32.mrb[0].mxu0
    %1289 = vdwg.mxu0
    %v1290 = vld [vmem:[#allocation2 + $0x18] sm:$0xc0]
    %v1292 = vrot.slane %v1290, 6
    %v1294 = vadd.f32 %v1285, %v1292
    %v1295 = vxor.u32 %v1294, 2147483648
    %v1296 = vmul.f32 %v1295, 1.442695
    %v1297 = vpow.pop %v1296
    %v1298 = vadd.f32 %v1297, 1.0
    %v1299 = vrcp.pop %v1298
    %v1300 = vmul.f32 1.0, %v1299
    %v1301 = vtanh.pop %v1294
    %v1302 = vmul.f32 %v1300, %v1203
    %1304 = vrot.lane.b32.xlu0 %v1301, 64
    %v1305 = vpop.permute.xlu0 %1304
    %v1307 = vmul.f32 %v1300, %v1305
    %1309 = vrot.lane.b32.xlu0 %v1307, 32
    %v1310 = vpop.permute.xlu0 %1309
    %v1312 = vadd.f32 %v1302, %v1310
    %v1313 = vtanh.pop %v1312
    %1315 = vrot.lane.b32.xlu0 %v1313, 64
    %v1316 = vpop.permute.xlu0 %1315
    %v1318 = vmul.f32 %v1300, %v1316
    %v1319 = vpack.c.bf16 %v1318, %v1318
    %v1320 = vld [vmem:[#allocation2 + $0x30] sm:$0xc]
    %1322 = vrot.lane.b32.xlu0 %v1319, 32
    %v1323 = vpop.permute.xlu0 %1322
    %v1325 = vrot.slane %v1320, 2
    %v1328 = vsel %vm204, %v1323, 0
    %1330 = vmatprep.subr.bf16.mxu0 0
    %1331 = vmatpush1.bf16.msra.mxu0 %v200
    %1332 = vmatprep.subr.bf16.mxu0 0
    %1333 = vmatpush1.bf16.msra.mxu0 %v201
    %1334 = vmatprep.subr.bf16.mxu0 0
    %1335 = vmatpush1.bf16.msra.mxu0 0
    %1336 = vmatprep.subr.bf16.mxu0 0
    %1337 = vmatpush1.bf16.msra.mxu0 0
    %1338 = vmatprep.subr.bf16.mxu0 0
    %1339 = vmatpush1.bf16.msra.mxu0 0
    %1340 = vmatprep.subr.bf16.mxu0 0
    %1341 = vmatpush1.bf16.msra.mxu0 0
    %1342 = vmatprep.subr.bf16.mxu0 0
    %1343 = vmatpush1.bf16.msra.mxu0 0
    %1344 = vmatprep.subr.bf16.mxu0 0
    %1345 = vmatpush1.bf16.msra.mxu0 0
    %1346 = vmatprep.subr.bf16.mxu0 0
    %1347 = vmatpush1.bf16.msra.mxu0 0
    %1348 = vmatprep.subr.bf16.mxu0 0
    %1349 = vmatpush1.bf16.msra.mxu0 0
    %1350 = vmatprep.subr.bf16.mxu0 0
    %1351 = vmatpush1.bf16.msra.mxu0 0
    %1352 = vmatprep.subr.bf16.mxu0 0
    %1353 = vmatpush1.bf16.msra.mxu0 0
    %1354 = vmatprep.subr.bf16.mxu0 0
    %1355 = vmatpush1.bf16.msra.mxu0 0
    %1356 = vmatprep.subr.bf16.mxu0 0
    %1357 = vmatpush1.bf16.msra.mxu0 0
    %1358 = vmatprep.subr.bf16.mxu0 0
    %1359 = vmatpush1.bf16.msra.mxu0 0
    %1360 = vmatprep.subr.bf16.mxu0 0
    %1361 = vmatpush1.bf16.msra.mxu0 0
    %1362 = vmatprep.mubr.bf16.mxu0 0
    %1363 = vmatmul.mubr.bf16.gmra.mrb[0].mxu0 %v1328
    %v1364 = vpop.f32.mrb[0].mxu0
    %v1365 = vadd.f32 %v1325, %v1364
    %v1366 = vpop.f32.mrb[0].mxu0
    %v1367 = vpop.f32.mrb[0].mxu0
    %v1368 = vpop.f32.mrb[0].mxu0
    %1369 = vdwg.mxu0
    %v1370 = vld [vmem:[#allocation2 + $0x18] sm:$0x30]
    %v1372 = vrot.slane %v1370, 4
    %v1374 = vadd.f32 %v1365, %v1372
    %v1375 = vxor.u32 %v1374, 2147483648
    %v1376 = vmul.f32 %v1375, 1.442695
    %v1377 = vpow.pop %v1376
    %v1378 = vadd.f32 %v1377, 1.0
    %v1379 = vrcp.pop %v1378
    %v1380 = vmul.f32 1.0, %v1379
    %v1381 = vtanh.pop %v1374
    %v1382 = vmul.f32 %v1380, %v1312
    %1384 = vrot.lane.b32.xlu0 %v1381, 64
    %v1385 = vpop.permute.xlu0 %1384
    %v1387 = vmul.f32 %v1380, %v1385
    %1389 = vrot.lane.b32.xlu0 %v1387, 32
    %v1390 = vpop.permute.xlu0 %1389
    %v1392 = vadd.f32 %v1382, %v1390
    %v1393 = vtanh.pop %v1392
    %1395 = vrot.lane.b32.xlu0 %v1393, 64
    %v1396 = vpop.permute.xlu0 %1395
    %v1398 = vmul.f32 %v1380, %v1396
    %v1399 = vpack.c.bf16 %v1398, %v1398
    %v1400 = vld [vmem:[#allocation2 + $0x30] sm:$0x30]
    %1402 = vrot.lane.b32.xlu0 %v1399, 32
    %v1403 = vpop.permute.xlu0 %1402
    %v1405 = vrot.slane %v1400, 4
    %v1408 = vsel %vm204, %v1403, 0
    %1410 = vmatprep.subr.bf16.mxu0 0
    %1411 = vmatpush1.bf16.msra.mxu0 %v200
    %1412 = vmatprep.subr.bf16.mxu0 0
    %1413 = vmatpush1.bf16.msra.mxu0 %v201
    %1414 = vmatprep.subr.bf16.mxu0 0
    %1415 = vmatpush1.bf16.msra.mxu0 0
    %1416 = vmatprep.subr.bf16.mxu0 0
    %1417 = vmatpush1.bf16.msra.mxu0 0
    %1418 = vmatprep.subr.bf16.mxu0 0
    %1419 = vmatpush1.bf16.msra.mxu0 0
    %1420 = vmatprep.subr.bf16.mxu0 0
    %1421 = vmatpush1.bf16.msra.mxu0 0
    %1422 = vmatprep.subr.bf16.mxu0 0
    %1423 = vmatpush1.bf16.msra.mxu0 0
    %1424 = vmatprep.subr.bf16.mxu0 0
    %1425 = vmatpush1.bf16.msra.mxu0 0
    %1426 = vmatprep.subr.bf16.mxu0 0
    %1427 = vmatpush1.bf16.msra.mxu0 0
    %1428 = vmatprep.subr.bf16.mxu0 0
    %1429 = vmatpush1.bf16.msra.mxu0 0
    %1430 = vmatprep.subr.bf16.mxu0 0
    %1431 = vmatpush1.bf16.msra.mxu0 0
    %1432 = vmatprep.subr.bf16.mxu0 0
    %1433 = vmatpush1.bf16.msra.mxu0 0
    %1434 = vmatprep.subr.bf16.mxu0 0
    %1435 = vmatpush1.bf16.msra.mxu0 0
    %1436 = vmatprep.subr.bf16.mxu0 0
    %1437 = vmatpush1.bf16.msra.mxu0 0
    %1438 = vmatprep.subr.bf16.mxu0 0
    %1439 = vmatpush1.bf16.msra.mxu0 0
    %1440 = vmatprep.subr.bf16.mxu0 0
    %1441 = vmatpush1.bf16.msra.mxu0 0
    %1442 = vmatprep.mubr.bf16.mxu0 0
    %1443 = vmatmul.mubr.bf16.gmra.mrb[0].mxu0 %v1408
    %v1444 = vpop.f32.mrb[0].mxu0
    %v1445 = vadd.f32 %v1405, %v1444
    %v1446 = vpop.f32.mrb[0].mxu0
    %v1447 = vpop.f32.mrb[0].mxu0
    %v1448 = vpop.f32.mrb[0].mxu0
    %1449 = vdwg.mxu0
    %v1450 = vld [vmem:[#allocation2 + $0x18] sm:$0xc]
    %v1452 = vrot.slane %v1450, 2
    %v1454 = vadd.f32 %v1445, %v1452
    %v1455 = vxor.u32 %v1454, 2147483648
    %v1456 = vmul.f32 %v1455, 1.442695
    %v1457 = vpow.pop %v1456
    %v1458 = vadd.f32 %v1457, 1.0
    %v1459 = vrcp.pop %v1458
    %v1460 = vmul.f32 1.0, %v1459
    %v1461 = vtanh.pop %v1454
    %v1462 = vmul.f32 %v1460, %v1392
    %1464 = vrot.lane.b32.xlu0 %v1461, 64
    %v1465 = vpop.permute.xlu0 %1464
    %v1467 = vmul.f32 %v1460, %v1465
    %1469 = vrot.lane.b32.xlu0 %v1467, 32
    %v1470 = vpop.permute.xlu0 %1469
    %v1472 = vadd.f32 %v1462, %v1470
    %v1473 = vtanh.pop %v1472
    %1475 = vrot.lane.b32.xlu0 %v1473, 64
    %v1476 = vpop.permute.xlu0 %1475
    %v1478 = vmul.f32 %v1460, %v1476
    %v1479 = vpack.c.bf16 %v1478, %v1478
    %v1480 = vld [vmem:[#allocation2 + $0x30] sm:$0xc0]
    %1482 = vrot.lane.b32.xlu0 %v1479, 32
    %v1483 = vpop.permute.xlu0 %1482
    %v1485 = vrot.slane %v1480, 6
    %v1488 = vsel %vm204, %v1483, 0
    %1490 = vmatprep.subr.bf16.mxu0 0
    %1491 = vmatpush1.bf16.msra.mxu0 %v200
    %1492 = vmatprep.subr.bf16.mxu0 0
    %1493 = vmatpush1.bf16.msra.mxu0 %v201
    %1494 = vmatprep.subr.bf16.mxu0 0
    %1495 = vmatpush1.bf16.msra.mxu0 0
    %1496 = vmatprep.subr.bf16.mxu0 0
    %1497 = vmatpush1.bf16.msra.mxu0 0
    %1498 = vmatprep.subr.bf16.mxu0 0
    %1499 = vmatpush1.bf16.msra.mxu0 0
    %1500 = vmatprep.subr.bf16.mxu0 0
    %1501 = vmatpush1.bf16.msra.mxu0 0
    %1502 = vmatprep.subr.bf16.mxu0 0
    %1503 = vmatpush1.bf16.msra.mxu0 0
    %1504 = vmatprep.subr.bf16.mxu0 0
    %1505 = vmatpush1.bf16.msra.mxu0 0
    %1506 = vmatprep.subr.bf16.mxu0 0
    %1507 = vmatpush1.bf16.msra.mxu0 0
    %1508 = vmatprep.subr.bf16.mxu0 0
    %1509 = vmatpush1.bf16.msra.mxu0 0
    %1510 = vmatprep.subr.bf16.mxu0 0
    %1511 = vmatpush1.bf16.msra.mxu0 0
    %1512 = vmatprep.subr.bf16.mxu0 0
    %1513 = vmatpush1.bf16.msra.mxu0 0
    %1514 = vmatprep.subr.bf16.mxu0 0
    %1515 = vmatpush1.bf16.msra.mxu0 0
    %1516 = vmatprep.subr.bf16.mxu0 0
    %1517 = vmatpush1.bf16.msra.mxu0 0
    %1518 = vmatprep.subr.bf16.mxu0 0
    %1519 = vmatpush1.bf16.msra.mxu0 0
    %1520 = vmatprep.subr.bf16.mxu0 0
    %1521 = vmatpush1.bf16.msra.mxu0 0
    %1522 = vmatprep.mubr.bf16.mxu0 0
    %1523 = vmatmul.mubr.bf16.gmra.mrb[0].mxu0 %v1488
    %v1524 = vpop.f32.mrb[0].mxu0
    %v1525 = vadd.f32 %v1485, %v1524
    %v1526 = vpop.f32.mrb[0].mxu0
    %v1527 = vpop.f32.mrb[0].mxu0
    %v1528 = vpop.f32.mrb[0].mxu0
    %1529 = vdwg.mxu0
    %v1530 = vld [vmem:[#allocation2 + $0x18] sm:$0x3]
    %v1531 = vadd.f32 %v1525, %v1530
    %v1532 = vxor.u32 %v1531, 2147483648
    %v1533 = vmul.f32 %v1532, 1.442695
    %v1534 = vpow.pop %v1533
    %v1535 = vadd.f32 %v1534, 1.0
    %v1536 = vrcp.pop %v1535
    %v1537 = vmul.f32 1.0, %v1536
    %v1538 = vtanh.pop %v1531
    %v1539 = vmul.f32 %v1537, %v1472
    %1541 = vrot.lane.b32.xlu0 %v1538, 64
    %v1542 = vpop.permute.xlu0 %1541
    %v1544 = vmul.f32 %v1537, %v1542
    %1546 = vrot.lane.b32.xlu0 %v1544, 32
    %v1547 = vpop.permute.xlu0 %1546
    %v1549 = vadd.f32 %v1539, %v1547
    %v1550 = vtanh.pop %v1549
    %1552 = vrot.lane.b32.xlu0 %v1550, 64
    %v1553 = vpop.permute.xlu0 %1552
    %v1555 = vmul.f32 %v1537, %v1553
    %v1557 = vrot.slane %v1398, 6
    %v1560 = vrot.slane %v1478, 4
    %v1563 = vrot.slane %v1555, 2
    %v1565 = vsel %vm523, %v1318, %v1557
    %v1566 = vsel %vm525, %v1565, %v1560
    %v1567 = vsel %vm527, %v1566, %v1563
    %1569 = vrot.lane.b32.xlu0 %v1567, 32
    %v1570 = vpop.permute.xlu0 %1569
    %1572 = vst.msk [vmem:[#allocation3 + $0x18] sm:$0xff] %vm106, %v1570
    %v1573 = vrot.slane %v1478, 6
    %v1575 = vrot.slane %v1398, 4
    %v1578 = vrot.slane %v1318, 2
    %v1580 = vsel %vm523, %v1555, %v1573
    %v1581 = vsel %vm525, %v1580, %v1575
    %v1582 = vsel %vm527, %v1581, %v1578
    %1584 = vrot.lane.b32.xlu0 %v1582, 32
    %v1585 = vpop.permute.xlu0 %1584
    %1587 = vst.msk [vmem:[#allocation3 + $0x8] sm:$0xff] %vm548, %v1585
    %v1588 = vpack.c.bf16 %v1555, %v1555
    %v1589 = vld [vmem:[#allocation2 + $0x40] sm:$0x3]
    %1591 = vrot.lane.b32.xlu0 %v1588, 32
    %v1592 = vpop.permute.xlu0 %1591
    %v1594 = vsel %vm204, %v1592, 0
    %1596 = vmatprep.subr.bf16.mxu0 0
    %1597 = vmatpush1.bf16.msra.mxu0 %v200
    %1598 = vmatprep.subr.bf16.mxu0 0
    %1599 = vmatpush1.bf16.msra.mxu0 %v201
    %1600 = vmatprep.subr.bf16.mxu0 0
    %1601 = vmatpush1.bf16.msra.mxu0 0
    %1602 = vmatprep.subr.bf16.mxu0 0
    %1603 = vmatpush1.bf16.msra.mxu0 0
    %1604 = vmatprep.subr.bf16.mxu0 0
    %1605 = vmatpush1.bf16.msra.mxu0 0
    %1606 = vmatprep.subr.bf16.mxu0 0
    %1607 = vmatpush1.bf16.msra.mxu0 0
    %1608 = vmatprep.subr.bf16.mxu0 0
    %1609 = vmatpush1.bf16.msra.mxu0 0
    %1610 = vmatprep.subr.bf16.mxu0 0
    %1611 = vmatpush1.bf16.msra.mxu0 0
    %1612 = vmatprep.subr.bf16.mxu0 0
    %1613 = vmatpush1.bf16.msra.mxu0 0
    %1614 = vmatprep.subr.bf16.mxu0 0
    %1615 = vmatpush1.bf16.msra.mxu0 0
    %1616 = vmatprep.subr.bf16.mxu0 0
    %1617 = vmatpush1.bf16.msra.mxu0 0
    %1618 = vmatprep.subr.bf16.mxu0 0
    %1619 = vmatpush1.bf16.msra.mxu0 0
    %1620 = vmatprep.subr.bf16.mxu0 0
    %1621 = vmatpush1.bf16.msra.mxu0 0
    %1622 = vmatprep.subr.bf16.mxu0 0
    %1623 = vmatpush1.bf16.msra.mxu0 0
    %1624 = vmatprep.subr.bf16.mxu0 0
    %1625 = vmatpush1.bf16.msra.mxu0 0
    %1626 = vmatprep.subr.bf16.mxu0 0
    %1627 = vmatpush1.bf16.msra.mxu0 0
    %1628 = vmatprep.mubr.bf16.mxu0 0
    %1629 = vmatmul.mubr.bf16.gmra.mrb[0].mxu0 %v1594
    %v1630 = vpop.f32.mrb[0].mxu0
    %v1631 = vadd.f32 %v1589, %v1630
    %v1632 = vpop.f32.mrb[0].mxu0
    %v1633 = vpop.f32.mrb[0].mxu0
    %v1634 = vpop.f32.mrb[0].mxu0
    %1635 = vdwg.mxu0
    %v1636 = vld [vmem:[#allocation2 + $0x8] sm:$0xc0]
    %v1638 = vrot.slane %v1636, 6
    %v1640 = vadd.f32 %v1631, %v1638
    %v1641 = vxor.u32 %v1640, 2147483648
    %v1642 = vmul.f32 %v1641, 1.442695
    %v1643 = vpow.pop %v1642
    %v1644 = vadd.f32 %v1643, 1.0
    %v1645 = vrcp.pop %v1644
    %v1646 = vmul.f32 1.0, %v1645
    %v1647 = vtanh.pop %v1640
    %v1648 = vmul.f32 %v1646, %v1549
    %1650 = vrot.lane.b32.xlu0 %v1647, 64
    %v1651 = vpop.permute.xlu0 %1650
    %v1653 = vmul.f32 %v1646, %v1651
    %1655 = vrot.lane.b32.xlu0 %v1653, 32
    %v1656 = vpop.permute.xlu0 %1655
    %v1658 = vadd.f32 %v1648, %v1656
    %v1659 = vtanh.pop %v1658
    %1661 = vrot.lane.b32.xlu0 %v1659, 64
    %v1662 = vpop.permute.xlu0 %1661
    %v1664 = vmul.f32 %v1646, %v1662
    %v1665 = vpack.c.bf16 %v1664, %v1664
    %v1666 = vld [vmem:[#allocation2 + $0x40] sm:$0xc]
    %1668 = vrot.lane.b32.xlu0 %v1665, 32
    %v1669 = vpop.permute.xlu0 %1668
    %v1671 = vrot.slane %v1666, 2
    %v1674 = vsel %vm204, %v1669, 0
    %1676 = vmatprep.subr.bf16.mxu0 0
    %1677 = vmatpush1.bf16.msra.mxu0 %v200
    %1678 = vmatprep.subr.bf16.mxu0 0
    %1679 = vmatpush1.bf16.msra.mxu0 %v201
    %1680 = vmatprep.subr.bf16.mxu0 0
    %1681 = vmatpush1.bf16.msra.mxu0 0
    %1682 = vmatprep.subr.bf16.mxu0 0
    %1683 = vmatpush1.bf16.msra.mxu0 0
    %1684 = vmatprep.subr.bf16.mxu0 0
    %1685 = vmatpush1.bf16.msra.mxu0 0
    %1686 = vmatprep.subr.bf16.mxu0 0
    %1687 = vmatpush1.bf16.msra.mxu0 0
    %1688 = vmatprep.subr.bf16.mxu0 0
    %1689 = vmatpush1.bf16.msra.mxu0 0
    %1690 = vmatprep.subr.bf16.mxu0 0
    %1691 = vmatpush1.bf16.msra.mxu0 0
    %1692 = vmatprep.subr.bf16.mxu0 0
    %1693 = vmatpush1.bf16.msra.mxu0 0
    %1694 = vmatprep.subr.bf16.mxu0 0
    %1695 = vmatpush1.bf16.msra.mxu0 0
    %1696 = vmatprep.subr.bf16.mxu0 0
    %1697 = vmatpush1.bf16.msra.mxu0 0
    %1698 = vmatprep.subr.bf16.mxu0 0
    %1699 = vmatpush1.bf16.msra.mxu0 0
    %1700 = vmatprep.subr.bf16.mxu0 0
    %1701 = vmatpush1.bf16.msra.mxu0 0
    %1702 = vmatprep.subr.bf16.mxu0 0
    %1703 = vmatpush1.bf16.msra.mxu0 0
    %1704 = vmatprep.subr.bf16.mxu0 0
    %1705 = vmatpush1.bf16.msra.mxu0 0
    %1706 = vmatprep.subr.bf16.mxu0 0
    %1707 = vmatpush1.bf16.msra.mxu0 0
    %1708 = vmatprep.mubr.bf16.mxu0 0
    %1709 = vmatmul.mubr.bf16.gmra.mrb[0].mxu0 %v1674
    %v1710 = vpop.f32.mrb[0].mxu0
    %v1711 = vadd.f32 %v1671, %v1710
    %v1712 = vpop.f32.mrb[0].mxu0
    %v1713 = vpop.f32.mrb[0].mxu0
    %v1714 = vpop.f32.mrb[0].mxu0
    %1715 = vdwg.mxu0
    %v1716 = vld [vmem:[#allocation2 + $0x8] sm:$0x30]
    %v1718 = vrot.slane %v1716, 4
    %v1720 = vadd.f32 %v1711, %v1718
    %v1721 = vxor.u32 %v1720, 2147483648
    %v1722 = vmul.f32 %v1721, 1.442695
    %v1723 = vpow.pop %v1722
    %v1724 = vadd.f32 %v1723, 1.0
    %v1725 = vrcp.pop %v1724
    %v1726 = vmul.f32 1.0, %v1725
    %v1727 = vtanh.pop %v1720
    %v1728 = vmul.f32 %v1726, %v1658
    %1730 = vrot.lane.b32.xlu0 %v1727, 64
    %v1731 = vpop.permute.xlu0 %1730
    %v1733 = vmul.f32 %v1726, %v1731
    %1735 = vrot.lane.b32.xlu0 %v1733, 32
    %v1736 = vpop.permute.xlu0 %1735
    %v1738 = vadd.f32 %v1728, %v1736
    %v1739 = vtanh.pop %v1738
    %1741 = vrot.lane.b32.xlu0 %v1739, 64
    %v1742 = vpop.permute.xlu0 %1741
    %v1744 = vmul.f32 %v1726, %v1742
    %v1745 = vpack.c.bf16 %v1744, %v1744
    %v1746 = vld [vmem:[#allocation2 + $0x40] sm:$0x30]
    %1748 = vrot.lane.b32.xlu0 %v1745, 32
    %v1749 = vpop.permute.xlu0 %1748
    %v1751 = vrot.slane %v1746, 4
    %v1754 = vsel %vm204, %v1749, 0
    %1756 = vmatprep.subr.bf16.mxu0 0
    %1757 = vmatpush1.bf16.msra.mxu0 %v200
    %1758 = vmatprep.subr.bf16.mxu0 0
    %1759 = vmatpush1.bf16.msra.mxu0 %v201
    %1760 = vmatprep.subr.bf16.mxu0 0
    %1761 = vmatpush1.bf16.msra.mxu0 0
    %1762 = vmatprep.subr.bf16.mxu0 0
    %1763 = vmatpush1.bf16.msra.mxu0 0
    %1764 = vmatprep.subr.bf16.mxu0 0
    %1765 = vmatpush1.bf16.msra.mxu0 0
    %1766 = vmatprep.subr.bf16.mxu0 0
    %1767 = vmatpush1.bf16.msra.mxu0 0
    %1768 = vmatprep.subr.bf16.mxu0 0
    %1769 = vmatpush1.bf16.msra.mxu0 0
    %1770 = vmatprep.subr.bf16.mxu0 0
    %1771 = vmatpush1.bf16.msra.mxu0 0
    %1772 = vmatprep.subr.bf16.mxu0 0
    %1773 = vmatpush1.bf16.msra.mxu0 0
    %1774 = vmatprep.subr.bf16.mxu0 0
    %1775 = vmatpush1.bf16.msra.mxu0 0
    %1776 = vmatprep.subr.bf16.mxu0 0
    %1777 = vmatpush1.bf16.msra.mxu0 0
    %1778 = vmatprep.subr.bf16.mxu0 0
    %1779 = vmatpush1.bf16.msra.mxu0 0
    %1780 = vmatprep.subr.bf16.mxu0 0
    %1781 = vmatpush1.bf16.msra.mxu0 0
    %1782 = vmatprep.subr.bf16.mxu0 0
    %1783 = vmatpush1.bf16.msra.mxu0 0
    %1784 = vmatprep.subr.bf16.mxu0 0
    %1785 = vmatpush1.bf16.msra.mxu0 0
    %1786 = vmatprep.subr.bf16.mxu0 0
    %1787 = vmatpush1.bf16.msra.mxu0 0
    %1788 = vmatprep.mubr.bf16.mxu0 0
    %1789 = vmatmul.mubr.bf16.gmra.mrb[0].mxu0 %v1754
    %v1790 = vpop.f32.mrb[0].mxu0
    %v1791 = vadd.f32 %v1751, %v1790
    %v1792 = vpop.f32.mrb[0].mxu0
    %v1793 = vpop.f32.mrb[0].mxu0
    %v1794 = vpop.f32.mrb[0].mxu0
    %1795 = vdwg.mxu0
    %v1796 = vld [vmem:[#allocation2 + $0x8] sm:$0xc]
    %v1798 = vrot.slane %v1796, 2
    %v1800 = vadd.f32 %v1791, %v1798
    %v1801 = vxor.u32 %v1800, 2147483648
    %v1802 = vmul.f32 %v1801, 1.442695
    %v1803 = vpow.pop %v1802
    %v1804 = vadd.f32 %v1803, 1.0
    %v1805 = vrcp.pop %v1804
    %v1806 = vmul.f32 1.0, %v1805
    %v1807 = vtanh.pop %v1800
    %v1808 = vmul.f32 %v1806, %v1738
    %1810 = vrot.lane.b32.xlu0 %v1807, 64
    %v1811 = vpop.permute.xlu0 %1810
    %v1813 = vmul.f32 %v1806, %v1811
    %1815 = vrot.lane.b32.xlu0 %v1813, 32
    %v1816 = vpop.permute.xlu0 %1815
    %v1818 = vadd.f32 %v1808, %v1816
    %v1819 = vtanh.pop %v1818
    %1821 = vrot.lane.b32.xlu0 %v1819, 64
    %v1822 = vpop.permute.xlu0 %1821
    %v1824 = vmul.f32 %v1806, %v1822
    %v1825 = vpack.c.bf16 %v1824, %v1824
    %v1826 = vld [vmem:[#allocation2 + $0x40] sm:$0xc0]
    %1828 = vrot.lane.b32.xlu0 %v1825, 32
    %v1829 = vpop.permute.xlu0 %1828
    %v1831 = vrot.slane %v1826, 6
    %v1834 = vsel %vm204, %v1829, 0
    %1836 = vmatprep.subr.bf16.mxu0 0
    %1837 = vmatpush1.bf16.msra.mxu0 %v200
    %1838 = vmatprep.subr.bf16.mxu0 0
    %1839 = vmatpush1.bf16.msra.mxu0 %v201
    %1840 = vmatprep.subr.bf16.mxu0 0
    %1841 = vmatpush1.bf16.msra.mxu0 0
    %1842 = vmatprep.subr.bf16.mxu0 0
    %1843 = vmatpush1.bf16.msra.mxu0 0
    %1844 = vmatprep.subr.bf16.mxu0 0
    %1845 = vmatpush1.bf16.msra.mxu0 0
    %1846 = vmatprep.subr.bf16.mxu0 0
    %1847 = vmatpush1.bf16.msra.mxu0 0
    %1848 = vmatprep.subr.bf16.mxu0 0
    %1849 = vmatpush1.bf16.msra.mxu0 0
    %1850 = vmatprep.subr.bf16.mxu0 0
    %1851 = vmatpush1.bf16.msra.mxu0 0
    %1852 = vmatprep.subr.bf16.mxu0 0
    %1853 = vmatpush1.bf16.msra.mxu0 0
    %1854 = vmatprep.subr.bf16.mxu0 0
    %1855 = vmatpush1.bf16.msra.mxu0 0
    %1856 = vmatprep.subr.bf16.mxu0 0
    %1857 = vmatpush1.bf16.msra.mxu0 0
    %1858 = vmatprep.subr.bf16.mxu0 0
    %1859 = vmatpush1.bf16.msra.mxu0 0
    %1860 = vmatprep.subr.bf16.mxu0 0
    %1861 = vmatpush1.bf16.msra.mxu0 0
    %1862 = vmatprep.subr.bf16.mxu0 0
    %1863 = vmatpush1.bf16.msra.mxu0 0
    %1864 = vmatprep.subr.bf16.mxu0 0
    %1865 = vmatpush1.bf16.msra.mxu0 0
    %1866 = vmatprep.subr.bf16.mxu0 0
    %1867 = vmatpush1.bf16.msra.mxu0 0
    %1868 = vmatprep.mubr.bf16.mxu0 0
    %1869 = vmatmul.mubr.bf16.gmra.mrb[0].mxu0 %v1834
    %v1870 = vpop.f32.mrb[0].mxu0
    %v1871 = vadd.f32 %v1831, %v1870
    %v1872 = vpop.f32.mrb[0].mxu0
    %v1873 = vpop.f32.mrb[0].mxu0
    %v1874 = vpop.f32.mrb[0].mxu0
    %1875 = vdwg.mxu0
    %v1876 = vld [vmem:[#allocation2 + $0x8] sm:$0x3]
    %v1877 = vadd.f32 %v1871, %v1876
    %v1878 = vxor.u32 %v1877, 2147483648
    %v1879 = vmul.f32 %v1878, 1.442695
    %v1880 = vpow.pop %v1879
    %v1881 = vadd.f32 %v1880, 1.0
    %v1882 = vrcp.pop %v1881
    %v1883 = vmul.f32 1.0, %v1882
    %v1884 = vtanh.pop %v1877
    %v1885 = vmul.f32 %v1883, %v1818
    %1887 = vrot.lane.b32.xlu0 %v1884, 64
    %v1888 = vpop.permute.xlu0 %1887
    %v1890 = vmul.f32 %v1883, %v1888
    %1892 = vrot.lane.b32.xlu0 %v1890, 32
    %v1893 = vpop.permute.xlu0 %1892
    %v1895 = vadd.f32 %v1885, %v1893
    %v1896 = vtanh.pop %v1895
    %1898 = vrot.lane.b32.xlu0 %v1896, 64
    %v1899 = vpop.permute.xlu0 %1898
    %v1901 = vmul.f32 %v1883, %v1899
    %v1903 = vrot.slane %v1744, 6
    %v1906 = vrot.slane %v1824, 4
    %v1909 = vrot.slane %v1901, 2
    %v1911 = vsel %vm523, %v1664, %v1903
    %v1912 = vsel %vm525, %v1911, %v1906
    %v1913 = vsel %vm527, %v1912, %v1909
    %1915 = vrot.lane.b32.xlu0 %v1913, 32
    %v1916 = vpop.permute.xlu0 %1915
    %1918 = vst.msk [vmem:[#allocation3 + $0x20] sm:$0xff] %vm106, %v1916
    %v1919 = vrot.slane %v1824, 6
    %v1921 = vrot.slane %v1744, 4
    %v1924 = vrot.slane %v1664, 2
    %v1926 = vsel %vm523, %v1901, %v1919
    %v1927 = vsel %vm525, %v1926, %v1921
    %v1928 = vsel %vm527, %v1927, %v1924
    %1930 = vrot.lane.b32.xlu0 %v1928, 32
    %v1931 = vpop.permute.xlu0 %1930
    %1933 = vst.msk [vmem:[#allocation3] sm:$0xff] %vm548, %v1931
    %v1934 = vld [vmem:[#allocation3] sm:$0xff]
    %v1935 = vld [vmem:[#allocation3 + $0x8] sm:$0xff]
    %v1936 = vld [vmem:[#allocation3 + $0x10] sm:$0xff]
    %v1937 = vld [vmem:[#allocation3 + $0x18] sm:$0xff]
    %v1938 = vld [vmem:[#allocation3 + $0x20] sm:$0xff]
    %v1939 = vpack.c.bf16 %v1935, %v1934
    %v1940 = vpack.c.bf16 %v1937, %v1936
    %v1941 = vpack.c.bf16 %v1938, %v1938
    %v1942 = vld [vmem:[%s4] sm:$0xff]
    %v1943 = vld [vmem:[%s4 + $0x8] sm:$0xff]
    %v1944 = vld [vmem:[%s4 + $0x10] sm:$0xff]
    %v1945 = vld [vmem:[%s4 + $0x18] sm:$0xff]
    %v1946 = vld [vmem:[%s5] sm:$0x3]
    %v1948 = vlaneseq
    %v1949 = vshrl.u32 %v1948, 7
    %v1950 = vsub.s32 0, %v1949
    %v1951 = vrot.slane %v1946, %v1950
    %v1952 = vlaneseq
    %v1953 = vshrl.u32 %v1952, 7
    %v1954 = vsub.s32 1, %v1953
    %v1955 = vrot.slane %v1946, %v1954
    %v1962 = vunpack.c.l.b16 %v1942
    %v1963 = vunpack.c.h.b16 %v1942
    %v1964 = vunpack.c.l.b16 %v1943
    %v1965 = vunpack.c.h.b16 %v1943
    %v1966 = vunpack.c.l.b16 %v1944
    %v1967 = vunpack.c.h.b16 %v1944
    %v1968 = vunpack.c.l.b16 %v1945
    %v1969 = vunpack.c.h.b16 %v1945
    %v1970 = vpack.c.b16 %v1964, %v1962
    %v1971 = vpack.c.b16 %v1965, %v1963
    %v1972 = vpack.c.b16 %v1968, %v1966
    %v1973 = vpack.c.b16 %v1969, %v1967
    %v1979 = vsel %vm204, %v1939, 0
    %v1982 = vsel %vm204, %v1940, 0
    %v1985 = vsel %vm204, %v1941, 0
    %1987 = vmatprep.subr.bf16.mxu0 %v1971
    %1988 = vmatpush1.bf16.msra.mxu0 %v1970
    %1989 = vmatprep.subr.bf16.mxu0 %v1973
    %1990 = vmatpush1.bf16.msra.mxu0 %v1972
    %1991 = vmatprep.subr.bf16.mxu0 0
    %1992 = vmatpush1.bf16.msra.mxu0 0
    %1993 = vmatprep.subr.bf16.mxu0 0
    %1994 = vmatpush1.bf16.msra.mxu0 0
    %1995 = vmatprep.subr.bf16.mxu0 0
    %1996 = vmatpush1.bf16.msra.mxu0 0
    %1997 = vmatprep.subr.bf16.mxu0 0
    %1998 = vmatpush1.bf16.msra.mxu0 0
    %1999 = vmatprep.subr.bf16.mxu0 0
    %2000 = vmatpush1.bf16.msra.mxu0 0
    %2001 = vmatprep.subr.bf16.mxu0 0
    %2002 = vmatpush1.bf16.msra.mxu0 0
    %2003 = vmatprep.subr.bf16.mxu0 0
    %2004 = vmatpush1.bf16.msra.mxu0 0
    %2005 = vmatprep.subr.bf16.mxu0 0
    %2006 = vmatpush1.bf16.msra.mxu0 0
    %2007 = vmatprep.subr.bf16.mxu0 0
    %2008 = vmatpush1.bf16.msra.mxu0 0
    %2009 = vmatprep.subr.bf16.mxu0 0
    %2010 = vmatpush1.bf16.msra.mxu0 0
    %2011 = vmatprep.subr.bf16.mxu0 0
    %2012 = vmatpush1.bf16.msra.mxu0 0
    %2013 = vmatprep.subr.bf16.mxu0 0
    %2014 = vmatpush1.bf16.msra.mxu0 0
    %2015 = vmatprep.subr.bf16.mxu0 0
    %2016 = vmatpush1.bf16.msra.mxu0 0
    %2017 = vmatprep.subr.bf16.mxu0 0
    %2018 = vmatpush1.bf16.msra.mxu0 0
    %2019 = vmatprep.mubr.bf16.mxu0 0
    %2020 = vmatmul.mubr.bf16.gmra.mrb[0].mxu0 %v1979
    %v2021 = vpop.f32.mrb[0].mxu0
    %v2022 = vadd.f32 %v1951, %v2021
    %v2023 = vpop.f32.mrb[0].mxu0
    %v2024 = vadd.f32 %v1955, %v2023
    %v2025 = vpop.f32.mrb[0].mxu0
    %v2026 = vadd.f32 %v1951, %v2025
    %v2027 = vpop.f32.mrb[0].mxu0
    %v2028 = vadd.f32 %v1955, %v2027
    %2029 = vmatprep.mubr.bf16.mxu0 0
    %2030 = vmatmul.mubr.bf16.gmra.mrb[0].mxu0 %v1982
    %v2031 = vpop.f32.mrb[0].mxu0
    %v2032 = vadd.f32 %v1951, %v2031
    %v2033 = vpop.f32.mrb[0].mxu0
    %v2034 = vadd.f32 %v1955, %v2033
    %v2035 = vpop.f32.mrb[0].mxu0
    %v2036 = vadd.f32 %v1951, %v2035
    %v2037 = vpop.f32.mrb[0].mxu0
    %v2038 = vadd.f32 %v1955, %v2037
    %2039 = vmatprep.mubr.bf16.mxu0 0
    %2040 = vmatmul.mubr.bf16.gmra.mrb[0].mxu0 %v1985
    %v2041 = vpop.f32.mrb[0].mxu0
    %v2042 = vadd.f32 %v1951, %v2041
    %v2043 = vpop.f32.mrb[0].mxu0
    %v2044 = vadd.f32 %v1955, %v2043
    %v2045 = vpop.f32.mrb[0].mxu0
    %v2046 = vpop.f32.mrb[0].mxu0
    %2047 = vdwg.mxu0
    %2048 = vst [vmem:[#allocation2] sm:$0xff] %v2022
    %2049 = vst [vmem:[#allocation2 + $0x8] sm:$0xff] %v2024
    %2050 = vst [vmem:[#allocation2 + $0x10] sm:$0xff] %v2026
    %2051 = vst [vmem:[#allocation2 + $0x18] sm:$0xff] %v2028
    %2052 = vst [vmem:[#allocation2 + $0x20] sm:$0xff] %v2032
    %2053 = vst [vmem:[#allocation2 + $0x28] sm:$0xff] %v2034
    %2054 = vst [vmem:[#allocation2 + $0x30] sm:$0xff] %v2036
    %2055 = vst [vmem:[#allocation2 + $0x38] sm:$0xff] %v2038
    %2056 = vst [vmem:[#allocation2 + $0x40] sm:$0xff] %v2042
    %2057 = vst [vmem:[#allocation2 + $0x48] sm:$0xff] %v2044
    %v2058 = vld [vmem:[%s6] sm:$0xf]
    %v2059 = vld [vmem:[%s6 + $0x4] sm:$0xf]
    %v2060 = vld [vmem:[%s6 + $0x8] sm:$0xf]
    %v2061 = vld [vmem:[%s6 + $0xc] sm:$0xf]
    %v2062 = vld [vmem:[#allocation2] sm:$0x3]
    %v2067 = vunpack.c.l.b16 %v2058
    %v2068 = vunpack.c.l.b16 %v2059
    %v2069 = vunpack.c.l.b16 %v2060
    %v2070 = vunpack.c.l.b16 %v2061
    %v2071 = vpack.c.b16 %v2068, %v2067
    %v2072 = vpack.c.b16 %v2070, %v2069
    %2075 = vmatprep.subr.bf16.mxu0 0
    %2076 = vmatpush1.bf16.msra.mxu0 %v2071
    %2077 = vmatprep.subr.bf16.mxu0 0
    %2078 = vmatpush1.bf16.msra.mxu0 %v2072
    %2079 = vmatprep.subr.bf16.mxu0 0
    %2080 = vmatpush1.bf16.msra.mxu0 0
    %2081 = vmatprep.subr.bf16.mxu0 0
    %2082 = vmatpush1.bf16.msra.mxu0 0
    %2083 = vmatprep.subr.bf16.mxu0 0
    %2084 = vmatpush1.bf16.msra.mxu0 0
    %2085 = vmatprep.subr.bf16.mxu0 0
    %2086 = vmatpush1.bf16.msra.mxu0 0
    %2087 = vmatprep.subr.bf16.mxu0 0
    %2088 = vmatpush1.bf16.msra.mxu0 0
    %2089 = vmatprep.subr.bf16.mxu0 0
    %2090 = vmatpush1.bf16.msra.mxu0 0
    %2091 = vmatprep.subr.bf16.mxu0 0
    %2092 = vmatpush1.bf16.msra.mxu0 0
    %2093 = vmatprep.subr.bf16.mxu0 0
    %2094 = vmatpush1.bf16.msra.mxu0 0
    %2095 = vmatprep.subr.bf16.mxu0 0
    %2096 = vmatpush1.bf16.msra.mxu0 0
    %2097 = vmatprep.subr.bf16.mxu0 0
    %2098 = vmatpush1.bf16.msra.mxu0 0
    %2099 = vmatprep.subr.bf16.mxu0 0
    %2100 = vmatpush1.bf16.msra.mxu0 0
    %2101 = vmatprep.subr.bf16.mxu0 0
    %2102 = vmatpush1.bf16.msra.mxu0 0
    %2103 = vmatprep.subr.bf16.mxu0 0
    %2104 = vmatpush1.bf16.msra.mxu0 0
    %2105 = vmatprep.subr.bf16.mxu0 0
    %2106 = vmatpush1.bf16.msra.mxu0 0
    %2107 = vmatprep.mubr.bf16.mxu0 0
    %2108 = vmatmul.mubr.bf16.gmra.mrb[0].mxu0 %v206
    %v2109 = vpop.f32.mrb[0].mxu0
    %v2110 = vadd.f32 %v2062, %v2109
    %v2111 = vpop.f32.mrb[0].mxu0
    %v2112 = vpop.f32.mrb[0].mxu0
    %v2113 = vpop.f32.mrb[0].mxu0
    %2114 = vdwg.mxu0
    %v2115 = vld [vmem:[#allocation2 + $0x48] sm:$0xc0]
    %v2117 = vrot.slane %v2115, 6
    %v2119 = vadd.f32 %v2110, %v2117
    %v2120 = vxor.u32 %v2119, 2147483648
    %v2121 = vmul.f32 %v2120, 1.442695
    %v2122 = vpow.pop %v2121
    %v2123 = vadd.f32 %v2122, 1.0
    %v2124 = vrcp.pop %v2123
    %v2125 = vmul.f32 1.0, %v2124
    %v2126 = vtanh.pop %v2119
    %v2127 = vmul.f32 %v2125, 0.0
    %2129 = vrot.lane.b32.xlu0 %v2126, 64
    %v2130 = vpop.permute.xlu0 %2129
    %v2132 = vmul.f32 %v2125, %v2130
    %2134 = vrot.lane.b32.xlu0 %v2132, 32
    %v2135 = vpop.permute.xlu0 %2134
    %v2137 = vadd.f32 %v2127, %v2135
    %v2138 = vtanh.pop %v2137
    %2140 = vrot.lane.b32.xlu0 %v2138, 64
    %v2141 = vpop.permute.xlu0 %2140
    %v2143 = vmul.f32 %v2125, %v2141
    %v2144 = vpack.c.bf16 %v2143, %v2143
    %v2145 = vld [vmem:[#allocation2] sm:$0xc]
    %2147 = vrot.lane.b32.xlu0 %v2144, 32
    %v2148 = vpop.permute.xlu0 %2147
    %v2150 = vrot.slane %v2145, 2
    %v2153 = vsel %vm204, %v2148, 0
    %2155 = vmatprep.subr.bf16.mxu0 0
    %2156 = vmatpush1.bf16.msra.mxu0 %v2071
    %2157 = vmatprep.subr.bf16.mxu0 0
    %2158 = vmatpush1.bf16.msra.mxu0 %v2072
    %2159 = vmatprep.subr.bf16.mxu0 0
    %2160 = vmatpush1.bf16.msra.mxu0 0
    %2161 = vmatprep.subr.bf16.mxu0 0
    %2162 = vmatpush1.bf16.msra.mxu0 0
    %2163 = vmatprep.subr.bf16.mxu0 0
    %2164 = vmatpush1.bf16.msra.mxu0 0
    %2165 = vmatprep.subr.bf16.mxu0 0
    %2166 = vmatpush1.bf16.msra.mxu0 0
    %2167 = vmatprep.subr.bf16.mxu0 0
    %2168 = vmatpush1.bf16.msra.mxu0 0
    %2169 = vmatprep.subr.bf16.mxu0 0
    %2170 = vmatpush1.bf16.msra.mxu0 0
    %2171 = vmatprep.subr.bf16.mxu0 0
    %2172 = vmatpush1.bf16.msra.mxu0 0
    %2173 = vmatprep.subr.bf16.mxu0 0
    %2174 = vmatpush1.bf16.msra.mxu0 0
    %2175 = vmatprep.subr.bf16.mxu0 0
    %2176 = vmatpush1.bf16.msra.mxu0 0
    %2177 = vmatprep.subr.bf16.mxu0 0
    %2178 = vmatpush1.bf16.msra.mxu0 0
    %2179 = vmatprep.subr.bf16.mxu0 0
    %2180 = vmatpush1.bf16.msra.mxu0 0
    %2181 = vmatprep.subr.bf16.mxu0 0
    %2182 = vmatpush1.bf16.msra.mxu0 0
    %2183 = vmatprep.subr.bf16.mxu0 0
    %2184 = vmatpush1.bf16.msra.mxu0 0
    %2185 = vmatprep.subr.bf16.mxu0 0
    %2186 = vmatpush1.bf16.msra.mxu0 0
    %2187 = vmatprep.mubr.bf16.mxu0 0
    %2188 = vmatmul.mubr.bf16.gmra.mrb[0].mxu0 %v2153
    %v2189 = vpop.f32.mrb[0].mxu0
    %v2190 = vadd.f32 %v2150, %v2189
    %v2191 = vpop.f32.mrb[0].mxu0
    %v2192 = vpop.f32.mrb[0].mxu0
    %v2193 = vpop.f32.mrb[0].mxu0
    %2194 = vdwg.mxu0
    %v2195 = vld [vmem:[#allocation2 + $0x48] sm:$0x30]
    %v2197 = vrot.slane %v2195, 4
    %v2199 = vadd.f32 %v2190, %v2197
    %v2200 = vxor.u32 %v2199, 2147483648
    %v2201 = vmul.f32 %v2200, 1.442695
    %v2202 = vpow.pop %v2201
    %v2203 = vadd.f32 %v2202, 1.0
    %v2204 = vrcp.pop %v2203
    %v2205 = vmul.f32 1.0, %v2204
    %v2206 = vtanh.pop %v2199
    %v2207 = vmul.f32 %v2205, %v2137
    %2209 = vrot.lane.b32.xlu0 %v2206, 64
    %v2210 = vpop.permute.xlu0 %2209
    %v2212 = vmul.f32 %v2205, %v2210
    %2214 = vrot.lane.b32.xlu0 %v2212, 32
    %v2215 = vpop.permute.xlu0 %2214
    %v2217 = vadd.f32 %v2207, %v2215
    %v2218 = vtanh.pop %v2217
    %2220 = vrot.lane.b32.xlu0 %v2218, 64
    %v2221 = vpop.permute.xlu0 %2220
    %v2223 = vmul.f32 %v2205, %v2221
    %v2224 = vpack.c.bf16 %v2223, %v2223
    %v2225 = vld [vmem:[#allocation2] sm:$0x30]
    %2227 = vrot.lane.b32.xlu0 %v2224, 32
    %v2228 = vpop.permute.xlu0 %2227
    %v2230 = vrot.slane %v2225, 4
    %v2233 = vsel %vm204, %v2228, 0
    %2235 = vmatprep.subr.bf16.mxu0 0
    %2236 = vmatpush1.bf16.msra.mxu0 %v2071
    %2237 = vmatprep.subr.bf16.mxu0 0
    %2238 = vmatpush1.bf16.msra.mxu0 %v2072
    %2239 = vmatprep.subr.bf16.mxu0 0
    %2240 = vmatpush1.bf16.msra.mxu0 0
    %2241 = vmatprep.subr.bf16.mxu0 0
    %2242 = vmatpush1.bf16.msra.mxu0 0
    %2243 = vmatprep.subr.bf16.mxu0 0
    %2244 = vmatpush1.bf16.msra.mxu0 0
    %2245 = vmatprep.subr.bf16.mxu0 0
    %2246 = vmatpush1.bf16.msra.mxu0 0
    %2247 = vmatprep.subr.bf16.mxu0 0
    %2248 = vmatpush1.bf16.msra.mxu0 0
    %2249 = vmatprep.subr.bf16.mxu0 0
    %2250 = vmatpush1.bf16.msra.mxu0 0
    %2251 = vmatprep.subr.bf16.mxu0 0
    %2252 = vmatpush1.bf16.msra.mxu0 0
    %2253 = vmatprep.subr.bf16.mxu0 0
    %2254 = vmatpush1.bf16.msra.mxu0 0
    %2255 = vmatprep.subr.bf16.mxu0 0
    %2256 = vmatpush1.bf16.msra.mxu0 0
    %2257 = vmatprep.subr.bf16.mxu0 0
    %2258 = vmatpush1.bf16.msra.mxu0 0
    %2259 = vmatprep.subr.bf16.mxu0 0
    %2260 = vmatpush1.bf16.msra.mxu0 0
    %2261 = vmatprep.subr.bf16.mxu0 0
    %2262 = vmatpush1.bf16.msra.mxu0 0
    %2263 = vmatprep.subr.bf16.mxu0 0
    %2264 = vmatpush1.bf16.msra.mxu0 0
    %2265 = vmatprep.subr.bf16.mxu0 0
    %2266 = vmatpush1.bf16.msra.mxu0 0
    %2267 = vmatprep.mubr.bf16.mxu0 0
    %2268 = vmatmul.mubr.bf16.gmra.mrb[0].mxu0 %v2233
    %v2269 = vpop.f32.mrb[0].mxu0
    %v2270 = vadd.f32 %v2230, %v2269
    %v2271 = vpop.f32.mrb[0].mxu0
    %v2272 = vpop.f32.mrb[0].mxu0
    %v2273 = vpop.f32.mrb[0].mxu0
    %2274 = vdwg.mxu0
    %v2275 = vld [vmem:[#allocation2 + $0x48] sm:$0xc]
    %v2277 = vrot.slane %v2275, 2
    %v2279 = vadd.f32 %v2270, %v2277
    %v2280 = vxor.u32 %v2279, 2147483648
    %v2281 = vmul.f32 %v2280, 1.442695
    %v2282 = vpow.pop %v2281
    %v2283 = vadd.f32 %v2282, 1.0
    %v2284 = vrcp.pop %v2283
    %v2285 = vmul.f32 1.0, %v2284
    %v2286 = vtanh.pop %v2279
    %v2287 = vmul.f32 %v2285, %v2217
    %2289 = vrot.lane.b32.xlu0 %v2286, 64
    %v2290 = vpop.permute.xlu0 %2289
    %v2292 = vmul.f32 %v2285, %v2290
    %2294 = vrot.lane.b32.xlu0 %v2292, 32
    %v2295 = vpop.permute.xlu0 %2294
    %v2297 = vadd.f32 %v2287, %v2295
    %v2298 = vtanh.pop %v2297
    %2300 = vrot.lane.b32.xlu0 %v2298, 64
    %v2301 = vpop.permute.xlu0 %2300
    %v2303 = vmul.f32 %v2285, %v2301
    %v2304 = vpack.c.bf16 %v2303, %v2303
    %v2305 = vld [vmem:[#allocation2] sm:$0xc0]
    %2307 = vrot.lane.b32.xlu0 %v2304, 32
    %v2308 = vpop.permute.xlu0 %2307
    %v2310 = vrot.slane %v2305, 6
    %v2313 = vsel %vm204, %v2308, 0
    %2315 = vmatprep.subr.bf16.mxu0 0
    %2316 = vmatpush1.bf16.msra.mxu0 %v2071
    %2317 = vmatprep.subr.bf16.mxu0 0
    %2318 = vmatpush1.bf16.msra.mxu0 %v2072
    %2319 = vmatprep.subr.bf16.mxu0 0
    %2320 = vmatpush1.bf16.msra.mxu0 0
    %2321 = vmatprep.subr.bf16.mxu0 0
    %2322 = vmatpush1.bf16.msra.mxu0 0
    %2323 = vmatprep.subr.bf16.mxu0 0
    %2324 = vmatpush1.bf16.msra.mxu0 0
    %2325 = vmatprep.subr.bf16.mxu0 0
    %2326 = vmatpush1.bf16.msra.mxu0 0
    %2327 = vmatprep.subr.bf16.mxu0 0
    %2328 = vmatpush1.bf16.msra.mxu0 0
    %2329 = vmatprep.subr.bf16.mxu0 0
    %2330 = vmatpush1.bf16.msra.mxu0 0
    %2331 = vmatprep.subr.bf16.mxu0 0
    %2332 = vmatpush1.bf16.msra.mxu0 0
    %2333 = vmatprep.subr.bf16.mxu0 0
    %2334 = vmatpush1.bf16.msra.mxu0 0
    %2335 = vmatprep.subr.bf16.mxu0 0
    %2336 = vmatpush1.bf16.msra.mxu0 0
    %2337 = vmatprep.subr.bf16.mxu0 0
    %2338 = vmatpush1.bf16.msra.mxu0 0
    %2339 = vmatprep.subr.bf16.mxu0 0
    %2340 = vmatpush1.bf16.msra.mxu0 0
    %2341 = vmatprep.subr.bf16.mxu0 0
    %2342 = vmatpush1.bf16.msra.mxu0 0
    %2343 = vmatprep.subr.bf16.mxu0 0
    %2344 = vmatpush1.bf16.msra.mxu0 0
    %2345 = vmatprep.subr.bf16.mxu0 0
    %2346 = vmatpush1.bf16.msra.mxu0 0
    %2347 = vmatprep.mubr.bf16.mxu0 0
    %2348 = vmatmul.mubr.bf16.gmra.mrb[0].mxu0 %v2313
    %v2349 = vpop.f32.mrb[0].mxu0
    %v2350 = vadd.f32 %v2310, %v2349
    %v2351 = vpop.f32.mrb[0].mxu0
    %v2352 = vpop.f32.mrb[0].mxu0
    %v2353 = vpop.f32.mrb[0].mxu0
    %2354 = vdwg.mxu0
    %v2355 = vld [vmem:[#allocation2 + $0x48] sm:$0x3]
    %v2356 = vadd.f32 %v2350, %v2355
    %v2357 = vxor.u32 %v2356, 2147483648
    %v2358 = vmul.f32 %v2357, 1.442695
    %v2359 = vpow.pop %v2358
    %v2360 = vadd.f32 %v2359, 1.0
    %v2361 = vrcp.pop %v2360
    %v2362 = vmul.f32 1.0, %v2361
    %v2363 = vtanh.pop %v2356
    %v2364 = vmul.f32 %v2362, %v2297
    %2366 = vrot.lane.b32.xlu0 %v2363, 64
    %v2367 = vpop.permute.xlu0 %2366
    %v2369 = vmul.f32 %v2362, %v2367
    %2371 = vrot.lane.b32.xlu0 %v2369, 32
    %v2372 = vpop.permute.xlu0 %2371
    %v2374 = vadd.f32 %v2364, %v2372
    %v2375 = vtanh.pop %v2374
    %2377 = vrot.lane.b32.xlu0 %v2375, 64
    %v2378 = vpop.permute.xlu0 %2377
    %v2380 = vmul.f32 %v2362, %v2378
    %v2382 = vrot.slane %v2223, 6
    %v2385 = vrot.slane %v2303, 4
    %v2388 = vrot.slane %v2380, 2
    %v2390 = vsel %vm523, %v2143, %v2382
    %v2391 = vsel %vm525, %v2390, %v2385
    %v2392 = vsel %vm527, %v2391, %v2388
    %2394 = vrot.lane.b32.xlu0 %v2392, 32
    %v2395 = vpop.permute.xlu0 %2394
    %2397 = vst.msk [vmem:[#allocation4] sm:$0xff] %vm106, %v2395
    %v2398 = vrot.slane %v2303, 6
    %v2400 = vrot.slane %v2223, 4
    %v2403 = vrot.slane %v2143, 2
    %v2405 = vsel %vm523, %v2380, %v2398
    %v2406 = vsel %vm525, %v2405, %v2400
    %v2407 = vsel %vm527, %v2406, %v2403
    %2409 = vrot.lane.b32.xlu0 %v2407, 32
    %v2410 = vpop.permute.xlu0 %2409
    %2412 = vst.msk [vmem:[#allocation4 + $0x20] sm:$0xff] %vm548, %v2410
    %v2413 = vpack.c.bf16 %v2380, %v2380
    %v2414 = vld [vmem:[#allocation2 + $0x10] sm:$0x3]
    %2416 = vrot.lane.b32.xlu0 %v2413, 32
    %v2417 = vpop.permute.xlu0 %2416
    %v2419 = vsel %vm204, %v2417, 0
    %2421 = vmatprep.subr.bf16.mxu0 0
    %2422 = vmatpush1.bf16.msra.mxu0 %v2071
    %2423 = vmatprep.subr.bf16.mxu0 0
    %2424 = vmatpush1.bf16.msra.mxu0 %v2072
    %2425 = vmatprep.subr.bf16.mxu0 0
    %2426 = vmatpush1.bf16.msra.mxu0 0
    %2427 = vmatprep.subr.bf16.mxu0 0
    %2428 = vmatpush1.bf16.msra.mxu0 0
    %2429 = vmatprep.subr.bf16.mxu0 0
    %2430 = vmatpush1.bf16.msra.mxu0 0
    %2431 = vmatprep.subr.bf16.mxu0 0
    %2432 = vmatpush1.bf16.msra.mxu0 0
    %2433 = vmatprep.subr.bf16.mxu0 0
    %2434 = vmatpush1.bf16.msra.mxu0 0
    %2435 = vmatprep.subr.bf16.mxu0 0
    %2436 = vmatpush1.bf16.msra.mxu0 0
    %2437 = vmatprep.subr.bf16.mxu0 0
    %2438 = vmatpush1.bf16.msra.mxu0 0
    %2439 = vmatprep.subr.bf16.mxu0 0
    %2440 = vmatpush1.bf16.msra.mxu0 0
    %2441 = vmatprep.subr.bf16.mxu0 0
    %2442 = vmatpush1.bf16.msra.mxu0 0
    %2443 = vmatprep.subr.bf16.mxu0 0
    %2444 = vmatpush1.bf16.msra.mxu0 0
    %2445 = vmatprep.subr.bf16.mxu0 0
    %2446 = vmatpush1.bf16.msra.mxu0 0
    %2447 = vmatprep.subr.bf16.mxu0 0
    %2448 = vmatpush1.bf16.msra.mxu0 0
    %2449 = vmatprep.subr.bf16.mxu0 0
    %2450 = vmatpush1.bf16.msra.mxu0 0
    %2451 = vmatprep.subr.bf16.mxu0 0
    %2452 = vmatpush1.bf16.msra.mxu0 0
    %2453 = vmatprep.mubr.bf16.mxu0 0
    %2454 = vmatmul.mubr.bf16.gmra.mrb[0].mxu0 %v2419
    %v2455 = vpop.f32.mrb[0].mxu0
    %v2456 = vadd.f32 %v2414, %v2455
    %v2457 = vpop.f32.mrb[0].mxu0
    %v2458 = vpop.f32.mrb[0].mxu0
    %v2459 = vpop.f32.mrb[0].mxu0
    %2460 = vdwg.mxu0
    %v2461 = vld [vmem:[#allocation2 + $0x38] sm:$0xc0]
    %v2463 = vrot.slane %v2461, 6
    %v2465 = vadd.f32 %v2456, %v2463
    %v2466 = vxor.u32 %v2465, 2147483648
    %v2467 = vmul.f32 %v2466, 1.442695
    %v2468 = vpow.pop %v2467
    %v2469 = vadd.f32 %v2468, 1.0
    %v2470 = vrcp.pop %v2469
    %v2471 = vmul.f32 1.0, %v2470
    %v2472 = vtanh.pop %v2465
    %v2473 = vmul.f32 %v2471, %v2374
    %2475 = vrot.lane.b32.xlu0 %v2472, 64
    %v2476 = vpop.permute.xlu0 %2475
    %v2478 = vmul.f32 %v2471, %v2476
    %2480 = vrot.lane.b32.xlu0 %v2478, 32
    %v2481 = vpop.permute.xlu0 %2480
    %v2483 = vadd.f32 %v2473, %v2481
    %v2484 = vtanh.pop %v2483
    %2486 = vrot.lane.b32.xlu0 %v2484, 64
    %v2487 = vpop.permute.xlu0 %2486
    %v2489 = vmul.f32 %v2471, %v2487
    %v2490 = vpack.c.bf16 %v2489, %v2489
    %v2491 = vld [vmem:[#allocation2 + $0x10] sm:$0xc]
    %2493 = vrot.lane.b32.xlu0 %v2490, 32
    %v2494 = vpop.permute.xlu0 %2493
    %v2496 = vrot.slane %v2491, 2
    %v2499 = vsel %vm204, %v2494, 0
    %2501 = vmatprep.subr.bf16.mxu0 0
    %2502 = vmatpush1.bf16.msra.mxu0 %v2071
    %2503 = vmatprep.subr.bf16.mxu0 0
    %2504 = vmatpush1.bf16.msra.mxu0 %v2072
    %2505 = vmatprep.subr.bf16.mxu0 0
    %2506 = vmatpush1.bf16.msra.mxu0 0
    %2507 = vmatprep.subr.bf16.mxu0 0
    %2508 = vmatpush1.bf16.msra.mxu0 0
    %2509 = vmatprep.subr.bf16.mxu0 0
    %2510 = vmatpush1.bf16.msra.mxu0 0
    %2511 = vmatprep.subr.bf16.mxu0 0
    %2512 = vmatpush1.bf16.msra.mxu0 0
    %2513 = vmatprep.subr.bf16.mxu0 0
    %2514 = vmatpush1.bf16.msra.mxu0 0
    %2515 = vmatprep.subr.bf16.mxu0 0
    %2516 = vmatpush1.bf16.msra.mxu0 0
    %2517 = vmatprep.subr.bf16.mxu0 0
    %2518 = vmatpush1.bf16.msra.mxu0 0
    %2519 = vmatprep.subr.bf16.mxu0 0
    %2520 = vmatpush1.bf16.msra.mxu0 0
    %2521 = vmatprep.subr.bf16.mxu0 0
    %2522 = vmatpush1.bf16.msra.mxu0 0
    %2523 = vmatprep.subr.bf16.mxu0 0
    %2524 = vmatpush1.bf16.msra.mxu0 0
    %2525 = vmatprep.subr.bf16.mxu0 0
    %2526 = vmatpush1.bf16.msra.mxu0 0
    %2527 = vmatprep.subr.bf16.mxu0 0
    %2528 = vmatpush1.bf16.msra.mxu0 0
    %2529 = vmatprep.subr.bf16.mxu0 0
    %2530 = vmatpush1.bf16.msra.mxu0 0
    %2531 = vmatprep.subr.bf16.mxu0 0
    %2532 = vmatpush1.bf16.msra.mxu0 0
    %2533 = vmatprep.mubr.bf16.mxu0 0
    %2534 = vmatmul.mubr.bf16.gmra.mrb[0].mxu0 %v2499
    %v2535 = vpop.f32.mrb[0].mxu0
    %v2536 = vadd.f32 %v2496, %v2535
    %v2537 = vpop.f32.mrb[0].mxu0
    %v2538 = vpop.f32.mrb[0].mxu0
    %v2539 = vpop.f32.mrb[0].mxu0
    %2540 = vdwg.mxu0
    %v2541 = vld [vmem:[#allocation2 + $0x38] sm:$0x30]
    %v2543 = vrot.slane %v2541, 4
    %v2545 = vadd.f32 %v2536, %v2543
    %v2546 = vxor.u32 %v2545, 2147483648
    %v2547 = vmul.f32 %v2546, 1.442695
    %v2548 = vpow.pop %v2547
    %v2549 = vadd.f32 %v2548, 1.0
    %v2550 = vrcp.pop %v2549
    %v2551 = vmul.f32 1.0, %v2550
    %v2552 = vtanh.pop %v2545
    %v2553 = vmul.f32 %v2551, %v2483
    %2555 = vrot.lane.b32.xlu0 %v2552, 64
    %v2556 = vpop.permute.xlu0 %2555
    %v2558 = vmul.f32 %v2551, %v2556
    %2560 = vrot.lane.b32.xlu0 %v2558, 32
    %v2561 = vpop.permute.xlu0 %2560
    %v2563 = vadd.f32 %v2553, %v2561
    %v2564 = vtanh.pop %v2563
    %2566 = vrot.lane.b32.xlu0 %v2564, 64
    %v2567 = vpop.permute.xlu0 %2566
    %v2569 = vmul.f32 %v2551, %v2567
    %v2570 = vpack.c.bf16 %v2569, %v2569
    %v2571 = vld [vmem:[#allocation2 + $0x10] sm:$0x30]
    %2573 = vrot.lane.b32.xlu0 %v2570, 32
    %v2574 = vpop.permute.xlu0 %2573
    %v2576 = vrot.slane %v2571, 4
    %v2579 = vsel %vm204, %v2574, 0
    %2581 = vmatprep.subr.bf16.mxu0 0
    %2582 = vmatpush1.bf16.msra.mxu0 %v2071
    %2583 = vmatprep.subr.bf16.mxu0 0
    %2584 = vmatpush1.bf16.msra.mxu0 %v2072
    %2585 = vmatprep.subr.bf16.mxu0 0
    %2586 = vmatpush1.bf16.msra.mxu0 0
    %2587 = vmatprep.subr.bf16.mxu0 0
    %2588 = vmatpush1.bf16.msra.mxu0 0
    %2589 = vmatprep.subr.bf16.mxu0 0
    %2590 = vmatpush1.bf16.msra.mxu0 0
    %2591 = vmatprep.subr.bf16.mxu0 0
    %2592 = vmatpush1.bf16.msra.mxu0 0
    %2593 = vmatprep.subr.bf16.mxu0 0
    %2594 = vmatpush1.bf16.msra.mxu0 0
    %2595 = vmatprep.subr.bf16.mxu0 0
    %2596 = vmatpush1.bf16.msra.mxu0 0
    %2597 = vmatprep.subr.bf16.mxu0 0
    %2598 = vmatpush1.bf16.msra.mxu0 0
    %2599 = vmatprep.subr.bf16.mxu0 0
    %2600 = vmatpush1.bf16.msra.mxu0 0
    %2601 = vmatprep.subr.bf16.mxu0 0
    %2602 = vmatpush1.bf16.msra.mxu0 0
    %2603 = vmatprep.subr.bf16.mxu0 0
    %2604 = vmatpush1.bf16.msra.mxu0 0
    %2605 = vmatprep.subr.bf16.mxu0 0
    %2606 = vmatpush1.bf16.msra.mxu0 0
    %2607 = vmatprep.subr.bf16.mxu0 0
    %2608 = vmatpush1.bf16.msra.mxu0 0
    %2609 = vmatprep.subr.bf16.mxu0 0
    %2610 = vmatpush1.bf16.msra.mxu0 0
    %2611 = vmatprep.subr.bf16.mxu0 0
    %2612 = vmatpush1.bf16.msra.mxu0 0
    %2613 = vmatprep.mubr.bf16.mxu0 0
    %2614 = vmatmul.mubr.bf16.gmra.mrb[0].mxu0 %v2579
    %v2615 = vpop.f32.mrb[0].mxu0
    %v2616 = vadd.f32 %v2576, %v2615
    %v2617 = vpop.f32.mrb[0].mxu0
    %v2618 = vpop.f32.mrb[0].mxu0
    %v2619 = vpop.f32.mrb[0].mxu0
    %2620 = vdwg.mxu0
    %v2621 = vld [vmem:[#allocation2 + $0x38] sm:$0xc]
    %v2623 = vrot.slane %v2621, 2
    %v2625 = vadd.f32 %v2616, %v2623
    %v2626 = vxor.u32 %v2625, 2147483648
    %v2627 = vmul.f32 %v2626, 1.442695
    %v2628 = vpow.pop %v2627
    %v2629 = vadd.f32 %v2628, 1.0
    %v2630 = vrcp.pop %v2629
    %v2631 = vmul.f32 1.0, %v2630
    %v2632 = vtanh.pop %v2625
    %v2633 = vmul.f32 %v2631, %v2563
    %2635 = vrot.lane.b32.xlu0 %v2632, 64
    %v2636 = vpop.permute.xlu0 %2635
    %v2638 = vmul.f32 %v2631, %v2636
    %2640 = vrot.lane.b32.xlu0 %v2638, 32
    %v2641 = vpop.permute.xlu0 %2640
    %v2643 = vadd.f32 %v2633, %v2641
    %v2644 = vtanh.pop %v2643
    %2646 = vrot.lane.b32.xlu0 %v2644, 64
    %v2647 = vpop.permute.xlu0 %2646
    %v2649 = vmul.f32 %v2631, %v2647
    %v2650 = vpack.c.bf16 %v2649, %v2649
    %v2651 = vld [vmem:[#allocation2 + $0x10] sm:$0xc0]
    %2653 = vrot.lane.b32.xlu0 %v2650, 32
    %v2654 = vpop.permute.xlu0 %2653
    %v2656 = vrot.slane %v2651, 6
    %v2659 = vsel %vm204, %v2654, 0
    %2661 = vmatprep.subr.bf16.mxu0 0
    %2662 = vmatpush1.bf16.msra.mxu0 %v2071
    %2663 = vmatprep.subr.bf16.mxu0 0
    %2664 = vmatpush1.bf16.msra.mxu0 %v2072
    %2665 = vmatprep.subr.bf16.mxu0 0
    %2666 = vmatpush1.bf16.msra.mxu0 0
    %2667 = vmatprep.subr.bf16.mxu0 0
    %2668 = vmatpush1.bf16.msra.mxu0 0
    %2669 = vmatprep.subr.bf16.mxu0 0
    %2670 = vmatpush1.bf16.msra.mxu0 0
    %2671 = vmatprep.subr.bf16.mxu0 0
    %2672 = vmatpush1.bf16.msra.mxu0 0
    %2673 = vmatprep.subr.bf16.mxu0 0
    %2674 = vmatpush1.bf16.msra.mxu0 0
    %2675 = vmatprep.subr.bf16.mxu0 0
    %2676 = vmatpush1.bf16.msra.mxu0 0
    %2677 = vmatprep.subr.bf16.mxu0 0
    %2678 = vmatpush1.bf16.msra.mxu0 0
    %2679 = vmatprep.subr.bf16.mxu0 0
    %2680 = vmatpush1.bf16.msra.mxu0 0
    %2681 = vmatprep.subr.bf16.mxu0 0
    %2682 = vmatpush1.bf16.msra.mxu0 0
    %2683 = vmatprep.subr.bf16.mxu0 0
    %2684 = vmatpush1.bf16.msra.mxu0 0
    %2685 = vmatprep.subr.bf16.mxu0 0
    %2686 = vmatpush1.bf16.msra.mxu0 0
    %2687 = vmatprep.subr.bf16.mxu0 0
    %2688 = vmatpush1.bf16.msra.mxu0 0
    %2689 = vmatprep.subr.bf16.mxu0 0
    %2690 = vmatpush1.bf16.msra.mxu0 0
    %2691 = vmatprep.subr.bf16.mxu0 0
    %2692 = vmatpush1.bf16.msra.mxu0 0
    %2693 = vmatprep.mubr.bf16.mxu0 0
    %2694 = vmatmul.mubr.bf16.gmra.mrb[0].mxu0 %v2659
    %v2695 = vpop.f32.mrb[0].mxu0
    %v2696 = vadd.f32 %v2656, %v2695
    %v2697 = vpop.f32.mrb[0].mxu0
    %v2698 = vpop.f32.mrb[0].mxu0
    %v2699 = vpop.f32.mrb[0].mxu0
    %2700 = vdwg.mxu0
    %v2701 = vld [vmem:[#allocation2 + $0x38] sm:$0x3]
    %v2702 = vadd.f32 %v2696, %v2701
    %v2703 = vxor.u32 %v2702, 2147483648
    %v2704 = vmul.f32 %v2703, 1.442695
    %v2705 = vpow.pop %v2704
    %v2706 = vadd.f32 %v2705, 1.0
    %v2707 = vrcp.pop %v2706
    %v2708 = vmul.f32 1.0, %v2707
    %v2709 = vtanh.pop %v2702
    %v2710 = vmul.f32 %v2708, %v2643
    %2712 = vrot.lane.b32.xlu0 %v2709, 64
    %v2713 = vpop.permute.xlu0 %2712
    %v2715 = vmul.f32 %v2708, %v2713
    %2717 = vrot.lane.b32.xlu0 %v2715, 32
    %v2718 = vpop.permute.xlu0 %2717
    %v2720 = vadd.f32 %v2710, %v2718
    %v2721 = vtanh.pop %v2720
    %2723 = vrot.lane.b32.xlu0 %v2721, 64
    %v2724 = vpop.permute.xlu0 %2723
    %v2726 = vmul.f32 %v2708, %v2724
    %v2728 = vrot.slane %v2569, 6
    %v2731 = vrot.slane %v2649, 4
    %v2734 = vrot.slane %v2726, 2
    %v2736 = vsel %vm523, %v2489, %v2728
    %v2737 = vsel %vm525, %v2736, %v2731
    %v2738 = vsel %vm527, %v2737, %v2734
    %2740 = vrot.lane.b32.xlu0 %v2738, 32
    %v2741 = vpop.permute.xlu0 %2740
    %2743 = vst.msk [vmem:[#allocation4 + $0x8] sm:$0xff] %vm106, %v2741
    %v2744 = vrot.slane %v2649, 6
    %v2746 = vrot.slane %v2569, 4
    %v2749 = vrot.slane %v2489, 2
    %v2751 = vsel %vm523, %v2726, %v2744
    %v2752 = vsel %vm525, %v2751, %v2746
    %v2753 = vsel %vm527, %v2752, %v2749
    %2755 = vrot.lane.b32.xlu0 %v2753, 32
    %v2756 = vpop.permute.xlu0 %2755
    %2758 = vst.msk [vmem:[#allocation4 + $0x18] sm:$0xff] %vm548, %v2756
    %v2759 = vpack.c.bf16 %v2726, %v2726
    %v2760 = vld [vmem:[#allocation2 + $0x20] sm:$0x3]
    %2762 = vrot.lane.b32.xlu0 %v2759, 32
    %v2763 = vpop.permute.xlu0 %2762
    %v2765 = vsel %vm204, %v2763, 0
    %2767 = vmatprep.subr.bf16.mxu0 0
    %2768 = vmatpush1.bf16.msra.mxu0 %v2071
    %2769 = vmatprep.subr.bf16.mxu0 0
    %2770 = vmatpush1.bf16.msra.mxu0 %v2072
    %2771 = vmatprep.subr.bf16.mxu0 0
    %2772 = vmatpush1.bf16.msra.mxu0 0
    %2773 = vmatprep.subr.bf16.mxu0 0
    %2774 = vmatpush1.bf16.msra.mxu0 0
    %2775 = vmatprep.subr.bf16.mxu0 0
    %2776 = vmatpush1.bf16.msra.mxu0 0
    %2777 = vmatprep.subr.bf16.mxu0 0
    %2778 = vmatpush1.bf16.msra.mxu0 0
    %2779 = vmatprep.subr.bf16.mxu0 0
    %2780 = vmatpush1.bf16.msra.mxu0 0
    %2781 = vmatprep.subr.bf16.mxu0 0
    %2782 = vmatpush1.bf16.msra.mxu0 0
    %2783 = vmatprep.subr.bf16.mxu0 0
    %2784 = vmatpush1.bf16.msra.mxu0 0
    %2785 = vmatprep.subr.bf16.mxu0 0
    %2786 = vmatpush1.bf16.msra.mxu0 0
    %2787 = vmatprep.subr.bf16.mxu0 0
    %2788 = vmatpush1.bf16.msra.mxu0 0
    %2789 = vmatprep.subr.bf16.mxu0 0
    %2790 = vmatpush1.bf16.msra.mxu0 0
    %2791 = vmatprep.subr.bf16.mxu0 0
    %2792 = vmatpush1.bf16.msra.mxu0 0
    %2793 = vmatprep.subr.bf16.mxu0 0
    %2794 = vmatpush1.bf16.msra.mxu0 0
    %2795 = vmatprep.subr.bf16.mxu0 0
    %2796 = vmatpush1.bf16.msra.mxu0 0
    %2797 = vmatprep.subr.bf16.mxu0 0
    %2798 = vmatpush1.bf16.msra.mxu0 0
    %2799 = vmatprep.mubr.bf16.mxu0 0
    %2800 = vmatmul.mubr.bf16.gmra.mrb[0].mxu0 %v2765
    %v2801 = vpop.f32.mrb[0].mxu0
    %v2802 = vadd.f32 %v2760, %v2801
    %v2803 = vpop.f32.mrb[0].mxu0
    %v2804 = vpop.f32.mrb[0].mxu0
    %v2805 = vpop.f32.mrb[0].mxu0
    %2806 = vdwg.mxu0
    %v2807 = vld [vmem:[#allocation2 + $0x28] sm:$0xc0]
    %v2809 = vrot.slane %v2807, 6
    %v2811 = vadd.f32 %v2802, %v2809
    %v2812 = vxor.u32 %v2811, 2147483648
    %v2813 = vmul.f32 %v2812, 1.442695
    %v2814 = vpow.pop %v2813
    %v2815 = vadd.f32 %v2814, 1.0
    %v2816 = vrcp.pop %v2815
    %v2817 = vmul.f32 1.0, %v2816
    %v2818 = vtanh.pop %v2811
    %v2819 = vmul.f32 %v2817, %v2720
    %2821 = vrot.lane.b32.xlu0 %v2818, 64
    %v2822 = vpop.permute.xlu0 %2821
    %v2824 = vmul.f32 %v2817, %v2822
    %2826 = vrot.lane.b32.xlu0 %v2824, 32
    %v2827 = vpop.permute.xlu0 %2826
    %v2829 = vadd.f32 %v2819, %v2827
    %v2830 = vtanh.pop %v2829
    %2832 = vrot.lane.b32.xlu0 %v2830, 64
    %v2833 = vpop.permute.xlu0 %2832
    %v2835 = vmul.f32 %v2817, %v2833
    %v2836 = vpack.c.bf16 %v2835, %v2835
    %v2837 = vld [vmem:[#allocation2 + $0x20] sm:$0xc]
    %2839 = vrot.lane.b32.xlu0 %v2836, 32
    %v2840 = vpop.permute.xlu0 %2839
    %v2842 = vrot.slane %v2837, 2
    %v2845 = vsel %vm204, %v2840, 0
    %2847 = vmatprep.subr.bf16.mxu0 0
    %2848 = vmatpush1.bf16.msra.mxu0 %v2071
    %2849 = vmatprep.subr.bf16.mxu0 0
    %2850 = vmatpush1.bf16.msra.mxu0 %v2072
    %2851 = vmatprep.subr.bf16.mxu0 0
    %2852 = vmatpush1.bf16.msra.mxu0 0
    %2853 = vmatprep.subr.bf16.mxu0 0
    %2854 = vmatpush1.bf16.msra.mxu0 0
    %2855 = vmatprep.subr.bf16.mxu0 0
    %2856 = vmatpush1.bf16.msra.mxu0 0
    %2857 = vmatprep.subr.bf16.mxu0 0
    %2858 = vmatpush1.bf16.msra.mxu0 0
    %2859 = vmatprep.subr.bf16.mxu0 0
    %2860 = vmatpush1.bf16.msra.mxu0 0
    %2861 = vmatprep.subr.bf16.mxu0 0
    %2862 = vmatpush1.bf16.msra.mxu0 0
    %2863 = vmatprep.subr.bf16.mxu0 0
    %2864 = vmatpush1.bf16.msra.mxu0 0
    %2865 = vmatprep.subr.bf16.mxu0 0
    %2866 = vmatpush1.bf16.msra.mxu0 0
    %2867 = vmatprep.subr.bf16.mxu0 0
    %2868 = vmatpush1.bf16.msra.mxu0 0
    %2869 = vmatprep.subr.bf16.mxu0 0
    %2870 = vmatpush1.bf16.msra.mxu0 0
    %2871 = vmatprep.subr.bf16.mxu0 0
    %2872 = vmatpush1.bf16.msra.mxu0 0
    %2873 = vmatprep.subr.bf16.mxu0 0
    %2874 = vmatpush1.bf16.msra.mxu0 0
    %2875 = vmatprep.subr.bf16.mxu0 0
    %2876 = vmatpush1.bf16.msra.mxu0 0
    %2877 = vmatprep.subr.bf16.mxu0 0
    %2878 = vmatpush1.bf16.msra.mxu0 0
    %2879 = vmatprep.mubr.bf16.mxu0 0
    %2880 = vmatmul.mubr.bf16.gmra.mrb[0].mxu0 %v2845
    %v2881 = vpop.f32.mrb[0].mxu0
    %v2882 = vadd.f32 %v2842, %v2881
    %v2883 = vpop.f32.mrb[0].mxu0
    %v2884 = vpop.f32.mrb[0].mxu0
    %v2885 = vpop.f32.mrb[0].mxu0
    %2886 = vdwg.mxu0
    %v2887 = vld [vmem:[#allocation2 + $0x28] sm:$0x30]
    %v2889 = vrot.slane %v2887, 4
    %v2891 = vadd.f32 %v2882, %v2889
    %v2892 = vxor.u32 %v2891, 2147483648
    %v2893 = vmul.f32 %v2892, 1.442695
    %v2894 = vpow.pop %v2893
    %v2895 = vadd.f32 %v2894, 1.0
    %v2896 = vrcp.pop %v2895
    %v2897 = vmul.f32 1.0, %v2896
    %v2898 = vtanh.pop %v2891
    %v2899 = vmul.f32 %v2897, %v2829
    %2901 = vrot.lane.b32.xlu0 %v2898, 64
    %v2902 = vpop.permute.xlu0 %2901
    %v2904 = vmul.f32 %v2897, %v2902
    %2906 = vrot.lane.b32.xlu0 %v2904, 32
    %v2907 = vpop.permute.xlu0 %2906
    %v2909 = vadd.f32 %v2899, %v2907
    %v2910 = vtanh.pop %v2909
    %2912 = vrot.lane.b32.xlu0 %v2910, 64
    %v2913 = vpop.permute.xlu0 %2912
    %v2915 = vmul.f32 %v2897, %v2913
    %v2916 = vpack.c.bf16 %v2915, %v2915
    %v2917 = vld [vmem:[#allocation2 + $0x20] sm:$0x30]
    %2919 = vrot.lane.b32.xlu0 %v2916, 32
    %v2920 = vpop.permute.xlu0 %2919
    %v2922 = vrot.slane %v2917, 4
    %v2925 = vsel %vm204, %v2920, 0
    %2927 = vmatprep.subr.bf16.mxu0 0
    %2928 = vmatpush1.bf16.msra.mxu0 %v2071
    %2929 = vmatprep.subr.bf16.mxu0 0
    %2930 = vmatpush1.bf16.msra.mxu0 %v2072
    %2931 = vmatprep.subr.bf16.mxu0 0
    %2932 = vmatpush1.bf16.msra.mxu0 0
    %2933 = vmatprep.subr.bf16.mxu0 0
    %2934 = vmatpush1.bf16.msra.mxu0 0
    %2935 = vmatprep.subr.bf16.mxu0 0
    %2936 = vmatpush1.bf16.msra.mxu0 0
    %2937 = vmatprep.subr.bf16.mxu0 0
    %2938 = vmatpush1.bf16.msra.mxu0 0
    %2939 = vmatprep.subr.bf16.mxu0 0
    %2940 = vmatpush1.bf16.msra.mxu0 0
    %2941 = vmatprep.subr.bf16.mxu0 0
    %2942 = vmatpush1.bf16.msra.mxu0 0
    %2943 = vmatprep.subr.bf16.mxu0 0
    %2944 = vmatpush1.bf16.msra.mxu0 0
    %2945 = vmatprep.subr.bf16.mxu0 0
    %2946 = vmatpush1.bf16.msra.mxu0 0
    %2947 = vmatprep.subr.bf16.mxu0 0
    %2948 = vmatpush1.bf16.msra.mxu0 0
    %2949 = vmatprep.subr.bf16.mxu0 0
    %2950 = vmatpush1.bf16.msra.mxu0 0
    %2951 = vmatprep.subr.bf16.mxu0 0
    %2952 = vmatpush1.bf16.msra.mxu0 0
    %2953 = vmatprep.subr.bf16.mxu0 0
    %2954 = vmatpush1.bf16.msra.mxu0 0
    %2955 = vmatprep.subr.bf16.mxu0 0
    %2956 = vmatpush1.bf16.msra.mxu0 0
    %2957 = vmatprep.subr.bf16.mxu0 0
    %2958 = vmatpush1.bf16.msra.mxu0 0
    %2959 = vmatprep.mubr.bf16.mxu0 0
    %2960 = vmatmul.mubr.bf16.gmra.mrb[0].mxu0 %v2925
    %v2961 = vpop.f32.mrb[0].mxu0
    %v2962 = vadd.f32 %v2922, %v2961
    %v2963 = vpop.f32.mrb[0].mxu0
    %v2964 = vpop.f32.mrb[0].mxu0
    %v2965 = vpop.f32.mrb[0].mxu0
    %2966 = vdwg.mxu0
    %v2967 = vld [vmem:[#allocation2 + $0x28] sm:$0xc]
    %v2969 = vrot.slane %v2967, 2
    %v2971 = vadd.f32 %v2962, %v2969
    %v2972 = vxor.u32 %v2971, 2147483648
    %v2973 = vmul.f32 %v2972, 1.442695
    %v2974 = vpow.pop %v2973
    %v2975 = vadd.f32 %v2974, 1.0
    %v2976 = vrcp.pop %v2975
    %v2977 = vmul.f32 1.0, %v2976
    %v2978 = vtanh.pop %v2971
    %v2979 = vmul.f32 %v2977, %v2909
    %2981 = vrot.lane.b32.xlu0 %v2978, 64
    %v2982 = vpop.permute.xlu0 %2981
    %v2984 = vmul.f32 %v2977, %v2982
    %2986 = vrot.lane.b32.xlu0 %v2984, 32
    %v2987 = vpop.permute.xlu0 %2986
    %v2989 = vadd.f32 %v2979, %v2987
    %v2990 = vtanh.pop %v2989
    %2992 = vrot.lane.b32.xlu0 %v2990, 64
    %v2993 = vpop.permute.xlu0 %2992
    %v2995 = vmul.f32 %v2977, %v2993
    %v2996 = vpack.c.bf16 %v2995, %v2995
    %v2997 = vld [vmem:[#allocation2 + $0x20] sm:$0xc0]
    %2999 = vrot.lane.b32.xlu0 %v2996, 32
    %v3000 = vpop.permute.xlu0 %2999
    %v3002 = vrot.slane %v2997, 6
    %v3005 = vsel %vm204, %v3000, 0
    %3007 = vmatprep.subr.bf16.mxu0 0
    %3008 = vmatpush1.bf16.msra.mxu0 %v2071
    %3009 = vmatprep.subr.bf16.mxu0 0
    %3010 = vmatpush1.bf16.msra.mxu0 %v2072
    %3011 = vmatprep.subr.bf16.mxu0 0
    %3012 = vmatpush1.bf16.msra.mxu0 0
    %3013 = vmatprep.subr.bf16.mxu0 0
    %3014 = vmatpush1.bf16.msra.mxu0 0
    %3015 = vmatprep.subr.bf16.mxu0 0
    %3016 = vmatpush1.bf16.msra.mxu0 0
    %3017 = vmatprep.subr.bf16.mxu0 0
    %3018 = vmatpush1.bf16.msra.mxu0 0
    %3019 = vmatprep.subr.bf16.mxu0 0
    %3020 = vmatpush1.bf16.msra.mxu0 0
    %3021 = vmatprep.subr.bf16.mxu0 0
    %3022 = vmatpush1.bf16.msra.mxu0 0
    %3023 = vmatprep.subr.bf16.mxu0 0
    %3024 = vmatpush1.bf16.msra.mxu0 0
    %3025 = vmatprep.subr.bf16.mxu0 0
    %3026 = vmatpush1.bf16.msra.mxu0 0
    %3027 = vmatprep.subr.bf16.mxu0 0
    %3028 = vmatpush1.bf16.msra.mxu0 0
    %3029 = vmatprep.subr.bf16.mxu0 0
    %3030 = vmatpush1.bf16.msra.mxu0 0
    %3031 = vmatprep.subr.bf16.mxu0 0
    %3032 = vmatpush1.bf16.msra.mxu0 0
    %3033 = vmatprep.subr.bf16.mxu0 0
    %3034 = vmatpush1.bf16.msra.mxu0 0
    %3035 = vmatprep.subr.bf16.mxu0 0
    %3036 = vmatpush1.bf16.msra.mxu0 0
    %3037 = vmatprep.subr.bf16.mxu0 0
    %3038 = vmatpush1.bf16.msra.mxu0 0
    %3039 = vmatprep.mubr.bf16.mxu0 0
    %3040 = vmatmul.mubr.bf16.gmra.mrb[0].mxu0 %v3005
    %v3041 = vpop.f32.mrb[0].mxu0
    %v3042 = vadd.f32 %v3002, %v3041
    %v3043 = vpop.f32.mrb[0].mxu0
    %v3044 = vpop.f32.mrb[0].mxu0
    %v3045 = vpop.f32.mrb[0].mxu0
    %3046 = vdwg.mxu0
    %v3047 = vld [vmem:[#allocation2 + $0x28] sm:$0x3]
    %v3048 = vadd.f32 %v3042, %v3047
    %v3049 = vxor.u32 %v3048, 2147483648
    %v3050 = vmul.f32 %v3049, 1.442695
    %v3051 = vpow.pop %v3050
    %v3052 = vadd.f32 %v3051, 1.0
    %v3053 = vrcp.pop %v3052
    %v3054 = vmul.f32 1.0, %v3053
    %v3055 = vtanh.pop %v3048
    %v3056 = vmul.f32 %v3054, %v2989
    %3058 = vrot.lane.b32.xlu0 %v3055, 64
    %v3059 = vpop.permute.xlu0 %3058
    %v3061 = vmul.f32 %v3054, %v3059
    %3063 = vrot.lane.b32.xlu0 %v3061, 32
    %v3064 = vpop.permute.xlu0 %3063
    %v3066 = vadd.f32 %v3056, %v3064
    %v3067 = vtanh.pop %v3066
    %3069 = vrot.lane.b32.xlu0 %v3067, 64
    %v3070 = vpop.permute.xlu0 %3069
    %v3072 = vmul.f32 %v3054, %v3070
    %v3074 = vrot.slane %v2915, 6
    %v3077 = vrot.slane %v2995, 4
    %v3080 = vrot.slane %v3072, 2
    %v3082 = vsel %vm523, %v2835, %v3074
    %v3083 = vsel %vm525, %v3082, %v3077
    %v3084 = vsel %vm527, %v3083, %v3080
    %3086 = vrot.lane.b32.xlu0 %v3084, 32
    %v3087 = vpop.permute.xlu0 %3086
    %3089 = vst.msk [vmem:[#allocation4 + $0x10] sm:$0xff] %vm106, %v3087
    %v3090 = vrot.slane %v2995, 6
    %v3092 = vrot.slane %v2915, 4
    %v3095 = vrot.slane %v2835, 2
    %v3097 = vsel %vm523, %v3072, %v3090
    %v3098 = vsel %vm525, %v3097, %v3092
    %v3099 = vsel %vm527, %v3098, %v3095
    %3101 = vrot.lane.b32.xlu0 %v3099, 32
    %v3102 = vpop.permute.xlu0 %3101
    %3104 = vst.msk [vmem:[#allocation4 + $0x10] sm:$0xff] %vm548, %v3102
    %v3105 = vpack.c.bf16 %v3072, %v3072
    %v3106 = vld [vmem:[#allocation2 + $0x30] sm:$0x3]
    %3108 = vrot.lane.b32.xlu0 %v3105, 32
    %v3109 = vpop.permute.xlu0 %3108
    %v3111 = vsel %vm204, %v3109, 0
    %3113 = vmatprep.subr.bf16.mxu0 0
    %3114 = vmatpush1.bf16.msra.mxu0 %v2071
    %3115 = vmatprep.subr.bf16.mxu0 0
    %3116 = vmatpush1.bf16.msra.mxu0 %v2072
    %3117 = vmatprep.subr.bf16.mxu0 0
    %3118 = vmatpush1.bf16.msra.mxu0 0
    %3119 = vmatprep.subr.bf16.mxu0 0
    %3120 = vmatpush1.bf16.msra.mxu0 0
    %3121 = vmatprep.subr.bf16.mxu0 0
    %3122 = vmatpush1.bf16.msra.mxu0 0
    %3123 = vmatprep.subr.bf16.mxu0 0
    %3124 = vmatpush1.bf16.msra.mxu0 0
    %3125 = vmatprep.subr.bf16.mxu0 0
    %3126 = vmatpush1.bf16.msra.mxu0 0
    %3127 = vmatprep.subr.bf16.mxu0 0
    %3128 = vmatpush1.bf16.msra.mxu0 0
    %3129 = vmatprep.subr.bf16.mxu0 0
    %3130 = vmatpush1.bf16.msra.mxu0 0
    %3131 = vmatprep.subr.bf16.mxu0 0
    %3132 = vmatpush1.bf16.msra.mxu0 0
    %3133 = vmatprep.subr.bf16.mxu0 0
    %3134 = vmatpush1.bf16.msra.mxu0 0
    %3135 = vmatprep.subr.bf16.mxu0 0
    %3136 = vmatpush1.bf16.msra.mxu0 0
    %3137 = vmatprep.subr.bf16.mxu0 0
    %3138 = vmatpush1.bf16.msra.mxu0 0
    %3139 = vmatprep.subr.bf16.mxu0 0
    %3140 = vmatpush1.bf16.msra.mxu0 0
    %3141 = vmatprep.subr.bf16.mxu0 0
    %3142 = vmatpush1.bf16.msra.mxu0 0
    %3143 = vmatprep.subr.bf16.mxu0 0
    %3144 = vmatpush1.bf16.msra.mxu0 0
    %3145 = vmatprep.mubr.bf16.mxu0 0
    %3146 = vmatmul.mubr.bf16.gmra.mrb[0].mxu0 %v3111
    %v3147 = vpop.f32.mrb[0].mxu0
    %v3148 = vadd.f32 %v3106, %v3147
    %v3149 = vpop.f32.mrb[0].mxu0
    %v3150 = vpop.f32.mrb[0].mxu0
    %v3151 = vpop.f32.mrb[0].mxu0
    %3152 = vdwg.mxu0
    %v3153 = vld [vmem:[#allocation2 + $0x18] sm:$0xc0]
    %v3155 = vrot.slane %v3153, 6
    %v3157 = vadd.f32 %v3148, %v3155
    %v3158 = vxor.u32 %v3157, 2147483648
    %v3159 = vmul.f32 %v3158, 1.442695
    %v3160 = vpow.pop %v3159
    %v3161 = vadd.f32 %v3160, 1.0
    %v3162 = vrcp.pop %v3161
    %v3163 = vmul.f32 1.0, %v3162
    %v3164 = vtanh.pop %v3157
    %v3165 = vmul.f32 %v3163, %v3066
    %3167 = vrot.lane.b32.xlu0 %v3164, 64
    %v3168 = vpop.permute.xlu0 %3167
    %v3170 = vmul.f32 %v3163, %v3168
    %3172 = vrot.lane.b32.xlu0 %v3170, 32
    %v3173 = vpop.permute.xlu0 %3172
    %v3175 = vadd.f32 %v3165, %v3173
    %v3176 = vtanh.pop %v3175
    %3178 = vrot.lane.b32.xlu0 %v3176, 64
    %v3179 = vpop.permute.xlu0 %3178
    %v3181 = vmul.f32 %v3163, %v3179
    %v3182 = vpack.c.bf16 %v3181, %v3181
    %v3183 = vld [vmem:[#allocation2 + $0x30] sm:$0xc]
    %3185 = vrot.lane.b32.xlu0 %v3182, 32
    %v3186 = vpop.permute.xlu0 %3185
    %v3188 = vrot.slane %v3183, 2
    %v3191 = vsel %vm204, %v3186, 0
    %3193 = vmatprep.subr.bf16.mxu0 0
    %3194 = vmatpush1.bf16.msra.mxu0 %v2071
    %3195 = vmatprep.subr.bf16.mxu0 0
    %3196 = vmatpush1.bf16.msra.mxu0 %v2072
    %3197 = vmatprep.subr.bf16.mxu0 0
    %3198 = vmatpush1.bf16.msra.mxu0 0
    %3199 = vmatprep.subr.bf16.mxu0 0
    %3200 = vmatpush1.bf16.msra.mxu0 0
    %3201 = vmatprep.subr.bf16.mxu0 0
    %3202 = vmatpush1.bf16.msra.mxu0 0
    %3203 = vmatprep.subr.bf16.mxu0 0
    %3204 = vmatpush1.bf16.msra.mxu0 0
    %3205 = vmatprep.subr.bf16.mxu0 0
    %3206 = vmatpush1.bf16.msra.mxu0 0
    %3207 = vmatprep.subr.bf16.mxu0 0
    %3208 = vmatpush1.bf16.msra.mxu0 0
    %3209 = vmatprep.subr.bf16.mxu0 0
    %3210 = vmatpush1.bf16.msra.mxu0 0
    %3211 = vmatprep.subr.bf16.mxu0 0
    %3212 = vmatpush1.bf16.msra.mxu0 0
    %3213 = vmatprep.subr.bf16.mxu0 0
    %3214 = vmatpush1.bf16.msra.mxu0 0
    %3215 = vmatprep.subr.bf16.mxu0 0
    %3216 = vmatpush1.bf16.msra.mxu0 0
    %3217 = vmatprep.subr.bf16.mxu0 0
    %3218 = vmatpush1.bf16.msra.mxu0 0
    %3219 = vmatprep.subr.bf16.mxu0 0
    %3220 = vmatpush1.bf16.msra.mxu0 0
    %3221 = vmatprep.subr.bf16.mxu0 0
    %3222 = vmatpush1.bf16.msra.mxu0 0
    %3223 = vmatprep.subr.bf16.mxu0 0
    %3224 = vmatpush1.bf16.msra.mxu0 0
    %3225 = vmatprep.mubr.bf16.mxu0 0
    %3226 = vmatmul.mubr.bf16.gmra.mrb[0].mxu0 %v3191
    %v3227 = vpop.f32.mrb[0].mxu0
    %v3228 = vadd.f32 %v3188, %v3227
    %v3229 = vpop.f32.mrb[0].mxu0
    %v3230 = vpop.f32.mrb[0].mxu0
    %v3231 = vpop.f32.mrb[0].mxu0
    %3232 = vdwg.mxu0
    %v3233 = vld [vmem:[#allocation2 + $0x18] sm:$0x30]
    %v3235 = vrot.slane %v3233, 4
    %v3237 = vadd.f32 %v3228, %v3235
    %v3238 = vxor.u32 %v3237, 2147483648
    %v3239 = vmul.f32 %v3238, 1.442695
    %v3240 = vpow.pop %v3239
    %v3241 = vadd.f32 %v3240, 1.0
    %v3242 = vrcp.pop %v3241
    %v3243 = vmul.f32 1.0, %v3242
    %v3244 = vtanh.pop %v3237
    %v3245 = vmul.f32 %v3243, %v3175
    %3247 = vrot.lane.b32.xlu0 %v3244, 64
    %v3248 = vpop.permute.xlu0 %3247
    %v3250 = vmul.f32 %v3243, %v3248
    %3252 = vrot.lane.b32.xlu0 %v3250, 32
    %v3253 = vpop.permute.xlu0 %3252
    %v3255 = vadd.f32 %v3245, %v3253
    %v3256 = vtanh.pop %v3255
    %3258 = vrot.lane.b32.xlu0 %v3256, 64
    %v3259 = vpop.permute.xlu0 %3258
    %v3261 = vmul.f32 %v3243, %v3259
    %v3262 = vpack.c.bf16 %v3261, %v3261
    %v3263 = vld [vmem:[#allocation2 + $0x30] sm:$0x30]
    %3265 = vrot.lane.b32.xlu0 %v3262, 32
    %v3266 = vpop.permute.xlu0 %3265
    %v3268 = vrot.slane %v3263, 4
    %v3271 = vsel %vm204, %v3266, 0
    %3273 = vmatprep.subr.bf16.mxu0 0
    %3274 = vmatpush1.bf16.msra.mxu0 %v2071
    %3275 = vmatprep.subr.bf16.mxu0 0
    %3276 = vmatpush1.bf16.msra.mxu0 %v2072
    %3277 = vmatprep.subr.bf16.mxu0 0
    %3278 = vmatpush1.bf16.msra.mxu0 0
    %3279 = vmatprep.subr.bf16.mxu0 0
    %3280 = vmatpush1.bf16.msra.mxu0 0
    %3281 = vmatprep.subr.bf16.mxu0 0
    %3282 = vmatpush1.bf16.msra.mxu0 0
    %3283 = vmatprep.subr.bf16.mxu0 0
    %3284 = vmatpush1.bf16.msra.mxu0 0
    %3285 = vmatprep.subr.bf16.mxu0 0
    %3286 = vmatpush1.bf16.msra.mxu0 0
    %3287 = vmatprep.subr.bf16.mxu0 0
    %3288 = vmatpush1.bf16.msra.mxu0 0
    %3289 = vmatprep.subr.bf16.mxu0 0
    %3290 = vmatpush1.bf16.msra.mxu0 0
    %3291 = vmatprep.subr.bf16.mxu0 0
    %3292 = vmatpush1.bf16.msra.mxu0 0
    %3293 = vmatprep.subr.bf16.mxu0 0
    %3294 = vmatpush1.bf16.msra.mxu0 0
    %3295 = vmatprep.subr.bf16.mxu0 0
    %3296 = vmatpush1.bf16.msra.mxu0 0
    %3297 = vmatprep.subr.bf16.mxu0 0
    %3298 = vmatpush1.bf16.msra.mxu0 0
    %3299 = vmatprep.subr.bf16.mxu0 0
    %3300 = vmatpush1.bf16.msra.mxu0 0
    %3301 = vmatprep.subr.bf16.mxu0 0
    %3302 = vmatpush1.bf16.msra.mxu0 0
    %3303 = vmatprep.subr.bf16.mxu0 0
    %3304 = vmatpush1.bf16.msra.mxu0 0
    %3305 = vmatprep.mubr.bf16.mxu0 0
    %3306 = vmatmul.mubr.bf16.gmra.mrb[0].mxu0 %v3271
    %v3307 = vpop.f32.mrb[0].mxu0
    %v3308 = vadd.f32 %v3268, %v3307
    %v3309 = vpop.f32.mrb[0].mxu0
    %v3310 = vpop.f32.mrb[0].mxu0
    %v3311 = vpop.f32.mrb[0].mxu0
    %3312 = vdwg.mxu0
    %v3313 = vld [vmem:[#allocation2 + $0x18] sm:$0xc]
    %v3315 = vrot.slane %v3313, 2
    %v3317 = vadd.f32 %v3308, %v3315
    %v3318 = vxor.u32 %v3317, 2147483648
    %v3319 = vmul.f32 %v3318, 1.442695
    %v3320 = vpow.pop %v3319
    %v3321 = vadd.f32 %v3320, 1.0
    %v3322 = vrcp.pop %v3321
    %v3323 = vmul.f32 1.0, %v3322
    %v3324 = vtanh.pop %v3317
    %v3325 = vmul.f32 %v3323, %v3255
    %3327 = vrot.lane.b32.xlu0 %v3324, 64
    %v3328 = vpop.permute.xlu0 %3327
    %v3330 = vmul.f32 %v3323, %v3328
    %3332 = vrot.lane.b32.xlu0 %v3330, 32
    %v3333 = vpop.permute.xlu0 %3332
    %v3335 = vadd.f32 %v3325, %v3333
    %v3336 = vtanh.pop %v3335
    %3338 = vrot.lane.b32.xlu0 %v3336, 64
    %v3339 = vpop.permute.xlu0 %3338
    %v3341 = vmul.f32 %v3323, %v3339
    %v3342 = vpack.c.bf16 %v3341, %v3341
    %v3343 = vld [vmem:[#allocation2 + $0x30] sm:$0xc0]
    %3345 = vrot.lane.b32.xlu0 %v3342, 32
    %v3346 = vpop.permute.xlu0 %3345
    %v3348 = vrot.slane %v3343, 6
    %v3351 = vsel %vm204, %v3346, 0
    %3353 = vmatprep.subr.bf16.mxu0 0
    %3354 = vmatpush1.bf16.msra.mxu0 %v2071
    %3355 = vmatprep.subr.bf16.mxu0 0
    %3356 = vmatpush1.bf16.msra.mxu0 %v2072
    %3357 = vmatprep.subr.bf16.mxu0 0
    %3358 = vmatpush1.bf16.msra.mxu0 0
    %3359 = vmatprep.subr.bf16.mxu0 0
    %3360 = vmatpush1.bf16.msra.mxu0 0
    %3361 = vmatprep.subr.bf16.mxu0 0
    %3362 = vmatpush1.bf16.msra.mxu0 0
    %3363 = vmatprep.subr.bf16.mxu0 0
    %3364 = vmatpush1.bf16.msra.mxu0 0
    %3365 = vmatprep.subr.bf16.mxu0 0
    %3366 = vmatpush1.bf16.msra.mxu0 0
    %3367 = vmatprep.subr.bf16.mxu0 0
    %3368 = vmatpush1.bf16.msra.mxu0 0
    %3369 = vmatprep.subr.bf16.mxu0 0
    %3370 = vmatpush1.bf16.msra.mxu0 0
    %3371 = vmatprep.subr.bf16.mxu0 0
    %3372 = vmatpush1.bf16.msra.mxu0 0
    %3373 = vmatprep.subr.bf16.mxu0 0
    %3374 = vmatpush1.bf16.msra.mxu0 0
    %3375 = vmatprep.subr.bf16.mxu0 0
    %3376 = vmatpush1.bf16.msra.mxu0 0
    %3377 = vmatprep.subr.bf16.mxu0 0
    %3378 = vmatpush1.bf16.msra.mxu0 0
    %3379 = vmatprep.subr.bf16.mxu0 0
    %3380 = vmatpush1.bf16.msra.mxu0 0
    %3381 = vmatprep.subr.bf16.mxu0 0
    %3382 = vmatpush1.bf16.msra.mxu0 0
    %3383 = vmatprep.subr.bf16.mxu0 0
    %3384 = vmatpush1.bf16.msra.mxu0 0
    %3385 = vmatprep.mubr.bf16.mxu0 0
    %3386 = vmatmul.mubr.bf16.gmra.mrb[0].mxu0 %v3351
    %v3387 = vpop.f32.mrb[0].mxu0
    %v3388 = vadd.f32 %v3348, %v3387
    %v3389 = vpop.f32.mrb[0].mxu0
    %v3390 = vpop.f32.mrb[0].mxu0
    %v3391 = vpop.f32.mrb[0].mxu0
    %3392 = vdwg.mxu0
    %v3393 = vld [vmem:[#allocation2 + $0x18] sm:$0x3]
    %v3394 = vadd.f32 %v3388, %v3393
    %v3395 = vxor.u32 %v3394, 2147483648
    %v3396 = vmul.f32 %v3395, 1.442695
    %v3397 = vpow.pop %v3396
    %v3398 = vadd.f32 %v3397, 1.0
    %v3399 = vrcp.pop %v3398
    %v3400 = vmul.f32 1.0, %v3399
    %v3401 = vtanh.pop %v3394
    %v3402 = vmul.f32 %v3400, %v3335
    %3404 = vrot.lane.b32.xlu0 %v3401, 64
    %v3405 = vpop.permute.xlu0 %3404
    %v3407 = vmul.f32 %v3400, %v3405
    %3409 = vrot.lane.b32.xlu0 %v3407, 32
    %v3410 = vpop.permute.xlu0 %3409
    %v3412 = vadd.f32 %v3402, %v3410
    %v3413 = vtanh.pop %v3412
    %3415 = vrot.lane.b32.xlu0 %v3413, 64
    %v3416 = vpop.permute.xlu0 %3415
    %v3418 = vmul.f32 %v3400, %v3416
    %v3420 = vrot.slane %v3261, 6
    %v3423 = vrot.slane %v3341, 4
    %v3426 = vrot.slane %v3418, 2
    %v3428 = vsel %vm523, %v3181, %v3420
    %v3429 = vsel %vm525, %v3428, %v3423
    %v3430 = vsel %vm527, %v3429, %v3426
    %3432 = vrot.lane.b32.xlu0 %v3430, 32
    %v3433 = vpop.permute.xlu0 %3432
    %3435 = vst.msk [vmem:[#allocation4 + $0x18] sm:$0xff] %vm106, %v3433
    %v3436 = vrot.slane %v3341, 6
    %v3438 = vrot.slane %v3261, 4
    %v3441 = vrot.slane %v3181, 2
    %v3443 = vsel %vm523, %v3418, %v3436
    %v3444 = vsel %vm525, %v3443, %v3438
    %v3445 = vsel %vm527, %v3444, %v3441
    %3447 = vrot.lane.b32.xlu0 %v3445, 32
    %v3448 = vpop.permute.xlu0 %3447
    %3450 = vst.msk [vmem:[#allocation4 + $0x8] sm:$0xff] %vm548, %v3448
    %v3451 = vpack.c.bf16 %v3418, %v3418
    %v3452 = vld [vmem:[#allocation2 + $0x40] sm:$0x3]
    %3454 = vrot.lane.b32.xlu0 %v3451, 32
    %v3455 = vpop.permute.xlu0 %3454
    %v3457 = vsel %vm204, %v3455, 0
    %3459 = vmatprep.subr.bf16.mxu0 0
    %3460 = vmatpush1.bf16.msra.mxu0 %v2071
    %3461 = vmatprep.subr.bf16.mxu0 0
    %3462 = vmatpush1.bf16.msra.mxu0 %v2072
    %3463 = vmatprep.subr.bf16.mxu0 0
    %3464 = vmatpush1.bf16.msra.mxu0 0
    %3465 = vmatprep.subr.bf16.mxu0 0
    %3466 = vmatpush1.bf16.msra.mxu0 0
    %3467 = vmatprep.subr.bf16.mxu0 0
    %3468 = vmatpush1.bf16.msra.mxu0 0
    %3469 = vmatprep.subr.bf16.mxu0 0
    %3470 = vmatpush1.bf16.msra.mxu0 0
    %3471 = vmatprep.subr.bf16.mxu0 0
    %3472 = vmatpush1.bf16.msra.mxu0 0
    %3473 = vmatprep.subr.bf16.mxu0 0
    %3474 = vmatpush1.bf16.msra.mxu0 0
    %3475 = vmatprep.subr.bf16.mxu0 0
    %3476 = vmatpush1.bf16.msra.mxu0 0
    %3477 = vmatprep.subr.bf16.mxu0 0
    %3478 = vmatpush1.bf16.msra.mxu0 0
    %3479 = vmatprep.subr.bf16.mxu0 0
    %3480 = vmatpush1.bf16.msra.mxu0 0
    %3481 = vmatprep.subr.bf16.mxu0 0
    %3482 = vmatpush1.bf16.msra.mxu0 0
    %3483 = vmatprep.subr.bf16.mxu0 0
    %3484 = vmatpush1.bf16.msra.mxu0 0
    %3485 = vmatprep.subr.bf16.mxu0 0
    %3486 = vmatpush1.bf16.msra.mxu0 0
    %3487 = vmatprep.subr.bf16.mxu0 0
    %3488 = vmatpush1.bf16.msra.mxu0 0
    %3489 = vmatprep.subr.bf16.mxu0 0
    %3490 = vmatpush1.bf16.msra.mxu0 0
    %3491 = vmatprep.mubr.bf16.mxu0 0
    %3492 = vmatmul.mubr.bf16.gmra.mrb[0].mxu0 %v3457
    %v3493 = vpop.f32.mrb[0].mxu0
    %v3494 = vadd.f32 %v3452, %v3493
    %v3495 = vpop.f32.mrb[0].mxu0
    %v3496 = vpop.f32.mrb[0].mxu0
    %v3497 = vpop.f32.mrb[0].mxu0
    %3498 = vdwg.mxu0
    %v3499 = vld [vmem:[#allocation2 + $0x8] sm:$0xc0]
    %v3501 = vrot.slane %v3499, 6
    %v3503 = vadd.f32 %v3494, %v3501
    %v3504 = vxor.u32 %v3503, 2147483648
    %v3505 = vmul.f32 %v3504, 1.442695
    %v3506 = vpow.pop %v3505
    %v3507 = vadd.f32 %v3506, 1.0
    %v3508 = vrcp.pop %v3507
    %v3509 = vmul.f32 1.0, %v3508
    %v3510 = vtanh.pop %v3503
    %v3511 = vmul.f32 %v3509, %v3412
    %3513 = vrot.lane.b32.xlu0 %v3510, 64
    %v3514 = vpop.permute.xlu0 %3513
    %v3516 = vmul.f32 %v3509, %v3514
    %3518 = vrot.lane.b32.xlu0 %v3516, 32
    %v3519 = vpop.permute.xlu0 %3518
    %v3521 = vadd.f32 %v3511, %v3519
    %v3522 = vtanh.pop %v3521
    %3524 = vrot.lane.b32.xlu0 %v3522, 64
    %v3525 = vpop.permute.xlu0 %3524
    %v3527 = vmul.f32 %v3509, %v3525
    %v3528 = vpack.c.bf16 %v3527, %v3527
    %v3529 = vld [vmem:[#allocation2 + $0x40] sm:$0xc]
    %3531 = vrot.lane.b32.xlu0 %v3528, 32
    %v3532 = vpop.permute.xlu0 %3531
    %v3534 = vrot.slane %v3529, 2
    %v3537 = vsel %vm204, %v3532, 0
    %3539 = vmatprep.subr.bf16.mxu0 0
    %3540 = vmatpush1.bf16.msra.mxu0 %v2071
    %3541 = vmatprep.subr.bf16.mxu0 0
    %3542 = vmatpush1.bf16.msra.mxu0 %v2072
    %3543 = vmatprep.subr.bf16.mxu0 0
    %3544 = vmatpush1.bf16.msra.mxu0 0
    %3545 = vmatprep.subr.bf16.mxu0 0
    %3546 = vmatpush1.bf16.msra.mxu0 0
    %3547 = vmatprep.subr.bf16.mxu0 0
    %3548 = vmatpush1.bf16.msra.mxu0 0
    %3549 = vmatprep.subr.bf16.mxu0 0
    %3550 = vmatpush1.bf16.msra.mxu0 0
    %3551 = vmatprep.subr.bf16.mxu0 0
    %3552 = vmatpush1.bf16.msra.mxu0 0
    %3553 = vmatprep.subr.bf16.mxu0 0
    %3554 = vmatpush1.bf16.msra.mxu0 0
    %3555 = vmatprep.subr.bf16.mxu0 0
    %3556 = vmatpush1.bf16.msra.mxu0 0
    %3557 = vmatprep.subr.bf16.mxu0 0
    %3558 = vmatpush1.bf16.msra.mxu0 0
    %3559 = vmatprep.subr.bf16.mxu0 0
    %3560 = vmatpush1.bf16.msra.mxu0 0
    %3561 = vmatprep.subr.bf16.mxu0 0
    %3562 = vmatpush1.bf16.msra.mxu0 0
    %3563 = vmatprep.subr.bf16.mxu0 0
    %3564 = vmatpush1.bf16.msra.mxu0 0
    %3565 = vmatprep.subr.bf16.mxu0 0
    %3566 = vmatpush1.bf16.msra.mxu0 0
    %3567 = vmatprep.subr.bf16.mxu0 0
    %3568 = vmatpush1.bf16.msra.mxu0 0
    %3569 = vmatprep.subr.bf16.mxu0 0
    %3570 = vmatpush1.bf16.msra.mxu0 0
    %3571 = vmatprep.mubr.bf16.mxu0 0
    %3572 = vmatmul.mubr.bf16.gmra.mrb[0].mxu0 %v3537
    %v3573 = vpop.f32.mrb[0].mxu0
    %v3574 = vadd.f32 %v3534, %v3573
    %v3575 = vpop.f32.mrb[0].mxu0
    %v3576 = vpop.f32.mrb[0].mxu0
    %v3577 = vpop.f32.mrb[0].mxu0
    %3578 = vdwg.mxu0
    %v3579 = vld [vmem:[#allocation2 + $0x8] sm:$0x30]
    %v3581 = vrot.slane %v3579, 4
    %v3583 = vadd.f32 %v3574, %v3581
    %v3584 = vxor.u32 %v3583, 2147483648
    %v3585 = vmul.f32 %v3584, 1.442695
    %v3586 = vpow.pop %v3585
    %v3587 = vadd.f32 %v3586, 1.0
    %v3588 = vrcp.pop %v3587
    %v3589 = vmul.f32 1.0, %v3588
    %v3590 = vtanh.pop %v3583
    %v3591 = vmul.f32 %v3589, %v3521
    %3593 = vrot.lane.b32.xlu0 %v3590, 64
    %v3594 = vpop.permute.xlu0 %3593
    %v3596 = vmul.f32 %v3589, %v3594
    %3598 = vrot.lane.b32.xlu0 %v3596, 32
    %v3599 = vpop.permute.xlu0 %3598
    %v3601 = vadd.f32 %v3591, %v3599
    %v3602 = vtanh.pop %v3601
    %3604 = vrot.lane.b32.xlu0 %v3602, 64
    %v3605 = vpop.permute.xlu0 %3604
    %v3607 = vmul.f32 %v3589, %v3605
    %v3608 = vpack.c.bf16 %v3607, %v3607
    %v3609 = vld [vmem:[#allocation2 + $0x40] sm:$0x30]
    %3611 = vrot.lane.b32.xlu0 %v3608, 32
    %v3612 = vpop.permute.xlu0 %3611
    %v3614 = vrot.slane %v3609, 4
    %v3617 = vsel %vm204, %v3612, 0
    %3619 = vmatprep.subr.bf16.mxu0 0
    %3620 = vmatpush1.bf16.msra.mxu0 %v2071
    %3621 = vmatprep.subr.bf16.mxu0 0
    %3622 = vmatpush1.bf16.msra.mxu0 %v2072
    %3623 = vmatprep.subr.bf16.mxu0 0
    %3624 = vmatpush1.bf16.msra.mxu0 0
    %3625 = vmatprep.subr.bf16.mxu0 0
    %3626 = vmatpush1.bf16.msra.mxu0 0
    %3627 = vmatprep.subr.bf16.mxu0 0
    %3628 = vmatpush1.bf16.msra.mxu0 0
    %3629 = vmatprep.subr.bf16.mxu0 0
    %3630 = vmatpush1.bf16.msra.mxu0 0
    %3631 = vmatprep.subr.bf16.mxu0 0
    %3632 = vmatpush1.bf16.msra.mxu0 0
    %3633 = vmatprep.subr.bf16.mxu0 0
    %3634 = vmatpush1.bf16.msra.mxu0 0
    %3635 = vmatprep.subr.bf16.mxu0 0
    %3636 = vmatpush1.bf16.msra.mxu0 0
    %3637 = vmatprep.subr.bf16.mxu0 0
    %3638 = vmatpush1.bf16.msra.mxu0 0
    %3639 = vmatprep.subr.bf16.mxu0 0
    %3640 = vmatpush1.bf16.msra.mxu0 0
    %3641 = vmatprep.subr.bf16.mxu0 0
    %3642 = vmatpush1.bf16.msra.mxu0 0
    %3643 = vmatprep.subr.bf16.mxu0 0
    %3644 = vmatpush1.bf16.msra.mxu0 0
    %3645 = vmatprep.subr.bf16.mxu0 0
    %3646 = vmatpush1.bf16.msra.mxu0 0
    %3647 = vmatprep.subr.bf16.mxu0 0
    %3648 = vmatpush1.bf16.msra.mxu0 0
    %3649 = vmatprep.subr.bf16.mxu0 0
    %3650 = vmatpush1.bf16.msra.mxu0 0
    %3651 = vmatprep.mubr.bf16.mxu0 0
    %3652 = vmatmul.mubr.bf16.gmra.mrb[0].mxu0 %v3617
    %v3653 = vpop.f32.mrb[0].mxu0
    %v3654 = vadd.f32 %v3614, %v3653
    %v3655 = vpop.f32.mrb[0].mxu0
    %v3656 = vpop.f32.mrb[0].mxu0
    %v3657 = vpop.f32.mrb[0].mxu0
    %3658 = vdwg.mxu0
    %v3659 = vld [vmem:[#allocation2 + $0x8] sm:$0xc]
    %v3661 = vrot.slane %v3659, 2
    %v3663 = vadd.f32 %v3654, %v3661
    %v3664 = vxor.u32 %v3663, 2147483648
    %v3665 = vmul.f32 %v3664, 1.442695
    %v3666 = vpow.pop %v3665
    %v3667 = vadd.f32 %v3666, 1.0
    %v3668 = vrcp.pop %v3667
    %v3669 = vmul.f32 1.0, %v3668
    %v3670 = vtanh.pop %v3663
    %v3671 = vmul.f32 %v3669, %v3601
    %3673 = vrot.lane.b32.xlu0 %v3670, 64
    %v3674 = vpop.permute.xlu0 %3673
    %v3676 = vmul.f32 %v3669, %v3674
    %3678 = vrot.lane.b32.xlu0 %v3676, 32
    %v3679 = vpop.permute.xlu0 %3678
    %v3681 = vadd.f32 %v3671, %v3679
    %v3682 = vtanh.pop %v3681
    %3684 = vrot.lane.b32.xlu0 %v3682, 64
    %v3685 = vpop.permute.xlu0 %3684
    %v3687 = vmul.f32 %v3669, %v3685
    %v3688 = vpack.c.bf16 %v3687, %v3687
    %v3689 = vld [vmem:[#allocation2 + $0x40] sm:$0xc0]
    %3691 = vrot.lane.b32.xlu0 %v3688, 32
    %v3692 = vpop.permute.xlu0 %3691
    %v3694 = vrot.slane %v3689, 6
    %v3697 = vsel %vm204, %v3692, 0
    %3699 = vmatprep.subr.bf16.mxu0 0
    %3700 = vmatpush1.bf16.msra.mxu0 %v2071
    %3701 = vmatprep.subr.bf16.mxu0 0
    %3702 = vmatpush1.bf16.msra.mxu0 %v2072
    %3703 = vmatprep.subr.bf16.mxu0 0
    %3704 = vmatpush1.bf16.msra.mxu0 0
    %3705 = vmatprep.subr.bf16.mxu0 0
    %3706 = vmatpush1.bf16.msra.mxu0 0
    %3707 = vmatprep.subr.bf16.mxu0 0
    %3708 = vmatpush1.bf16.msra.mxu0 0
    %3709 = vmatprep.subr.bf16.mxu0 0
    %3710 = vmatpush1.bf16.msra.mxu0 0
    %3711 = vmatprep.subr.bf16.mxu0 0
    %3712 = vmatpush1.bf16.msra.mxu0 0
    %3713 = vmatprep.subr.bf16.mxu0 0
    %3714 = vmatpush1.bf16.msra.mxu0 0
    %3715 = vmatprep.subr.bf16.mxu0 0
    %3716 = vmatpush1.bf16.msra.mxu0 0
    %3717 = vmatprep.subr.bf16.mxu0 0
    %3718 = vmatpush1.bf16.msra.mxu0 0
    %3719 = vmatprep.subr.bf16.mxu0 0
    %3720 = vmatpush1.bf16.msra.mxu0 0
    %3721 = vmatprep.subr.bf16.mxu0 0
    %3722 = vmatpush1.bf16.msra.mxu0 0
    %3723 = vmatprep.subr.bf16.mxu0 0
    %3724 = vmatpush1.bf16.msra.mxu0 0
    %3725 = vmatprep.subr.bf16.mxu0 0
    %3726 = vmatpush1.bf16.msra.mxu0 0
    %3727 = vmatprep.subr.bf16.mxu0 0
    %3728 = vmatpush1.bf16.msra.mxu0 0
    %3729 = vmatprep.subr.bf16.mxu0 0
    %3730 = vmatpush1.bf16.msra.mxu0 0
    %3731 = vmatprep.mubr.bf16.mxu0 0
    %3732 = vmatmul.mubr.bf16.gmra.mrb[0].mxu0 %v3697
    %v3733 = vpop.f32.mrb[0].mxu0
    %v3734 = vadd.f32 %v3694, %v3733
    %v3735 = vpop.f32.mrb[0].mxu0
    %v3736 = vpop.f32.mrb[0].mxu0
    %v3737 = vpop.f32.mrb[0].mxu0
    %3738 = vdwg.mxu0
    %v3739 = vld [vmem:[#allocation2 + $0x8] sm:$0x3]
    %v3740 = vadd.f32 %v3734, %v3739
    %v3741 = vxor.u32 %v3740, 2147483648
    %v3742 = vmul.f32 %v3741, 1.442695
    %v3743 = vpow.pop %v3742
    %v3744 = vadd.f32 %v3743, 1.0
    %v3745 = vrcp.pop %v3744
    %v3746 = vmul.f32 1.0, %v3745
    %v3747 = vtanh.pop %v3740
    %v3748 = vmul.f32 %v3746, %v3681
    %3750 = vrot.lane.b32.xlu0 %v3747, 64
    %v3751 = vpop.permute.xlu0 %3750
    %v3753 = vmul.f32 %v3746, %v3751
    %3755 = vrot.lane.b32.xlu0 %v3753, 32
    %v3756 = vpop.permute.xlu0 %3755
    %v3758 = vadd.f32 %v3748, %v3756
    %v3759 = vtanh.pop %v3758
    %3761 = vrot.lane.b32.xlu0 %v3759, 64
    %v3762 = vpop.permute.xlu0 %3761
    %v3764 = vmul.f32 %v3746, %v3762
    %v3766 = vrot.slane %v3607, 6
    %v3769 = vrot.slane %v3687, 4
    %v3772 = vrot.slane %v3764, 2
    %v3774 = vsel %vm523, %v3527, %v3766
    %v3775 = vsel %vm525, %v3774, %v3769
    %v3776 = vsel %vm527, %v3775, %v3772
    %3778 = vrot.lane.b32.xlu0 %v3776, 32
    %v3779 = vpop.permute.xlu0 %3778
    %3781 = vst.msk [vmem:[#allocation4 + $0x20] sm:$0xff] %vm106, %v3779
    %v3782 = vrot.slane %v3687, 6
    %v3784 = vrot.slane %v3607, 4
    %v3787 = vrot.slane %v3527, 2
    %v3789 = vsel %vm523, %v3764, %v3782
    %v3790 = vsel %vm525, %v3789, %v3784
    %v3791 = vsel %vm527, %v3790, %v3787
    %3793 = vrot.lane.b32.xlu0 %v3791, 32
    %v3794 = vpop.permute.xlu0 %3793
    %3796 = vst.msk [vmem:[#allocation4] sm:$0xff] %vm548, %v3794
    %v3797 = vld [vmem:[#allocation4] sm:$0xff]
    %v3798 = vld [vmem:[#allocation4 + $0x8] sm:$0xff]
    %v3799 = vld [vmem:[#allocation4 + $0x10] sm:$0xff]
    %v3800 = vld [vmem:[#allocation4 + $0x18] sm:$0xff]
    %v3801 = vld [vmem:[#allocation4 + $0x20] sm:$0xff]
    %v3802 = vpack.c.bf16 %v3798, %v3797
    %v3803 = vpack.c.bf16 %v3800, %v3799
    %v3804 = vpack.c.bf16 %v3801, %v3801
    %v3805 = vld [vmem:[%s7] sm:$0xf]
    %v3806 = vld [vmem:[%s7 + $0x4] sm:$0xf]
    %v3807 = vld [vmem:[%s7 + $0x8] sm:$0xf]
    %v3808 = vld [vmem:[%s7 + $0xc] sm:$0xf]
    %v3809 = vld [vmem:[%s8] sm:$0x1]
    %v3811 = vlaneseq
    %v3812 = vshrl.u32 %v3811, 7
    %v3813 = vsub.s32 0, %v3812
    %v3814 = vrot.slane %v3809, %v3813
    %v3820 = vunpack.c.l.b16 %v3805
    %v3821 = vunpack.c.l.b16 %v3806
    %v3822 = vunpack.c.l.b16 %v3807
    %v3823 = vunpack.c.l.b16 %v3808
    %v3824 = vpack.c.b16 %v3821, %v3820
    %v3825 = vpack.c.b16 %v3823, %v3822
    %v3829 = vsel %vm204, %v3802, 0
    %v3832 = vsel %vm204, %v3803, 0
    %v3835 = vsel %vm204, %v3804, 0
    %3837 = vmatprep.subr.bf16.mxu0 0
    %3838 = vmatpush1.bf16.msra.mxu0 %v3824
    %3839 = vmatprep.subr.bf16.mxu0 0
    %3840 = vmatpush1.bf16.msra.mxu0 %v3825
    %3841 = vmatprep.subr.bf16.mxu0 0
    %3842 = vmatpush1.bf16.msra.mxu0 0
    %3843 = vmatprep.subr.bf16.mxu0 0
    %3844 = vmatpush1.bf16.msra.mxu0 0
    %3845 = vmatprep.subr.bf16.mxu0 0
    %3846 = vmatpush1.bf16.msra.mxu0 0
    %3847 = vmatprep.subr.bf16.mxu0 0
    %3848 = vmatpush1.bf16.msra.mxu0 0
    %3849 = vmatprep.subr.bf16.mxu0 0
    %3850 = vmatpush1.bf16.msra.mxu0 0
    %3851 = vmatprep.subr.bf16.mxu0 0
    %3852 = vmatpush1.bf16.msra.mxu0 0
    %3853 = vmatprep.subr.bf16.mxu0 0
    %3854 = vmatpush1.bf16.msra.mxu0 0
    %3855 = vmatprep.subr.bf16.mxu0 0
    %3856 = vmatpush1.bf16.msra.mxu0 0
    %3857 = vmatprep.subr.bf16.mxu0 0
    %3858 = vmatpush1.bf16.msra.mxu0 0
    %3859 = vmatprep.subr.bf16.mxu0 0
    %3860 = vmatpush1.bf16.msra.mxu0 0
    %3861 = vmatprep.subr.bf16.mxu0 0
    %3862 = vmatpush1.bf16.msra.mxu0 0
    %3863 = vmatprep.subr.bf16.mxu0 0
    %3864 = vmatpush1.bf16.msra.mxu0 0
    %3865 = vmatprep.subr.bf16.mxu0 0
    %3866 = vmatpush1.bf16.msra.mxu0 0
    %3867 = vmatprep.subr.bf16.mxu0 0
    %3868 = vmatpush1.bf16.msra.mxu0 0
    %3869 = vmatprep.mubr.bf16.mxu0 0
    %3870 = vmatmul.mubr.bf16.gmra.mrb[0].mxu0 %v3829
    %v3871 = vpop.f32.mrb[0].mxu0
    %v3872 = vadd.f32 %v3814, %v3871
    %v3873 = vpop.f32.mrb[0].mxu0
    %v3874 = vpop.f32.mrb[0].mxu0
    %v3875 = vadd.f32 %v3814, %v3874
    %v3876 = vpop.f32.mrb[0].mxu0
    %3877 = vmatprep.mubr.bf16.mxu0 0
    %3878 = vmatmul.mubr.bf16.gmra.mrb[0].mxu0 %v3832
    %v3879 = vpop.f32.mrb[0].mxu0
    %v3880 = vadd.f32 %v3814, %v3879
    %v3881 = vpop.f32.mrb[0].mxu0
    %v3882 = vpop.f32.mrb[0].mxu0
    %v3883 = vadd.f32 %v3814, %v3882
    %v3884 = vpop.f32.mrb[0].mxu0
    %3885 = vmatprep.mubr.bf16.mxu0 0
    %3886 = vmatmul.mubr.bf16.gmra.mrb[0].mxu0 %v3835
    %v3887 = vpop.f32.mrb[0].mxu0
    %v3888 = vadd.f32 %v3814, %v3887
    %v3889 = vpop.f32.mrb[0].mxu0
    %v3890 = vpop.f32.mrb[0].mxu0
    %v3891 = vpop.f32.mrb[0].mxu0
    %3892 = vdwg.mxu0
    %v3893 = vmul.f32 %v3872, 1.442695
    %v3894 = vpow.pop %v3893
    %v3895 = vmul.f32 %v3875, 1.442695
    %v3896 = vpow.pop %v3895
    %v3897 = vmul.f32 %v3880, 1.442695
    %v3898 = vpow.pop %v3897
    %v3899 = vmul.f32 %v3883, 1.442695
    %v3900 = vpow.pop %v3899
    %v3901 = vmul.f32 %v3888, 1.442695
    %v3902 = vpow.pop %v3901
    %v3903 = vadd.f32 %v3894, 1.0
    %v3904 = vadd.f32 %v3896, 1.0
    %v3905 = vadd.f32 %v3898, 1.0
    %v3906 = vadd.f32 %v3900, 1.0
    %v3907 = vadd.f32 %v3902, 1.0
    %v3908 = vmul.f32 %v3903, %v3903
    %v3909 = vmul.f32 %v3904, %v3904
    %v3910 = vmul.f32 %v3905, %v3905
    %v3911 = vmul.f32 %v3906, %v3906
    %v3912 = vmul.f32 %v3907, %v3907
    %v3913 = vadd.f32 %v3908, 1.0
    %v3914 = vadd.f32 %v3909, 1.0
    %v3915 = vadd.f32 %v3910, 1.0
    %v3916 = vadd.f32 %v3911, 1.0
    %v3917 = vadd.f32 %v3912, 1.0
    %v3918 = vrcp.pop %v3913
    %v3919 = vrcp.pop %v3914
    %v3920 = vrcp.pop %v3915
    %v3921 = vrcp.pop %v3916
    %v3922 = vrcp.pop %v3917
    %v3923 = vmul.f32 %v3918, 2.0
    %v3924 = vmul.f32 %v3919, 2.0
    %v3925 = vmul.f32 %v3920, 2.0
    %v3926 = vmul.f32 %v3921, 2.0
    %v3927 = vmul.f32 %v3922, 2.0
    %v3928 = vsub.f32 1.0, %v3923
    %v3929 = vsub.f32 1.0, %v3924
    %v3930 = vsub.f32 1.0, %v3925
    %v3931 = vsub.f32 1.0, %v3926
    %v3932 = vsub.f32 1.0, %v3927
    %v3933 = vmul.f32 %v3872, %v3928
    %v3934 = vmul.f32 %v3875, %v3929
    %v3935 = vmul.f32 %v3880, %v3930
    %v3936 = vmul.f32 %v3883, %v3931
    %v3937 = vmul.f32 %v3888, %v3932
    %v3938 = vpack.c.bf16 %v3934, %v3933
    %v3939 = vpack.c.bf16 %v3936, %v3935
    %v3940 = vpack.c.bf16 %v3937, %v3937
    %vm3944 = vcmask 1041408
    %v3945 = vrot.slane %v3938, 6
    %v3946 = vrot.slane %v3939, 6
    %v3947 = vsel %vm3944, %v3945, %v3946
    %v3948 = vrot.slane %v3940, 6
    %v3949 = vsel %vm3944, %v3946, %v3948
    %v3951 = vsel %vm523, 0, %v3945
    %v3953 = vsel %vm527, %v3949, 0
    %v3954 = vld [vmem:[%s14] sm:$0x1]
    %v3956 = vlaneseq
    %v3957 = vshrl.u32 %v3956, 7
    %v3958 = vsub.s32 0, %v3957
    %v3959 = vrot.slane %v3954, %v3958
    %v3961 = vadd.f32 %v3959, 0.0
    %v3962 = vld [vmem:[%s9] sm:$0xf]
    %v3963 = vld [vmem:[%s9 + $0x4] sm:$0xf]
    %v3964 = vld [vmem:[%s9 + $0x8] sm:$0xf]
    %v3965 = vld [vmem:[%s9 + $0xc] sm:$0xf]
    %v3966 = vld [vmem:[%s9 + $0x10] sm:$0xf]
    %v3967 = vld [vmem:[%s9 + $0x14] sm:$0xf]
    %v3968 = vld [vmem:[%s10] sm:$0x1]
    %vm3971 = vcmask 1046528
    %v3972 = vrot.slane %v3951, 1
    %v3973 = vrot.slane %v3947, 1
    %v3974 = vsel %vm3971, %v3972, %v3973
    %v3975 = vrot.slane %v3953, 1
    %v3976 = vsel %vm3971, %v3973, %v3975
    %v3979 = vunpack.c.l.b16 %v3962
    %v3980 = vunpack.c.l.b16 %v3963
    %v3981 = vpack.c.b16 %v3980, %v3979
    %v3984 = vsel %vm106, %v3974, 0
    %v3987 = vsel %vm106, %v3976, 0
    %v3990 = vsel %vm106, %v3975, 0
    %3992 = vmatprep.subr.bf16.mxu0 0
    %3993 = vmatpush1.bf16.msra.mxu0 %v3981
    %3994 = vmatprep.subr.bf16.mxu0 0
    %3995 = vmatpush1.bf16.msra.mxu0 0
    %3996 = vmatprep.subr.bf16.mxu0 0
    %3997 = vmatpush1.bf16.msra.mxu0 0
    %3998 = vmatprep.subr.bf16.mxu0 0
    %3999 = vmatpush1.bf16.msra.mxu0 0
    %4000 = vmatprep.subr.bf16.mxu0 0
    %4001 = vmatpush1.bf16.msra.mxu0 0
    %4002 = vmatprep.subr.bf16.mxu0 0
    %4003 = vmatpush1.bf16.msra.mxu0 0
    %4004 = vmatprep.subr.bf16.mxu0 0
    %4005 = vmatpush1.bf16.msra.mxu0 0
    %4006 = vmatprep.subr.bf16.mxu0 0
    %4007 = vmatpush1.bf16.msra.mxu0 0
    %4008 = vmatprep.subr.bf16.mxu0 0
    %4009 = vmatpush1.bf16.msra.mxu0 0
    %4010 = vmatprep.subr.bf16.mxu0 0
    %4011 = vmatpush1.bf16.msra.mxu0 0
    %4012 = vmatprep.subr.bf16.mxu0 0
    %4013 = vmatpush1.bf16.msra.mxu0 0
    %4014 = vmatprep.subr.bf16.mxu0 0
    %4015 = vmatpush1.bf16.msra.mxu0 0
    %4016 = vmatprep.subr.bf16.mxu0 0
    %4017 = vmatpush1.bf16.msra.mxu0 0
    %4018 = vmatprep.subr.bf16.mxu0 0
    %4019 = vmatpush1.bf16.msra.mxu0 0
    %4020 = vmatprep.subr.bf16.mxu0 0
    %4021 = vmatpush1.bf16.msra.mxu0 0
    %4022 = vmatprep.subr.bf16.mxu0 0
    %4023 = vmatpush1.bf16.msra.mxu0 0
    %4024 = vmatprep.mubr.bf16.mxu0 0
    %4025 = vmatmul.mubr.bf16.gmra.mrb[0].mxu0 %v3984
    %v4026 = vpop.f32.mrb[0].mxu0
    %v4027 = vadd.f32 0.0, %v4026
    %v4028 = vpop.f32.mrb[0].mxu0
    %v4029 = vpop.f32.mrb[0].mxu0
    %v4030 = vadd.f32 0.0, %v4029
    %v4031 = vpop.f32.mrb[0].mxu0
    %4032 = vmatprep.mubr.bf16.mxu0 0
    %4033 = vmatmul.mubr.bf16.gmra.mrb[0].mxu0 %v3987
    %v4034 = vpop.f32.mrb[0].mxu0
    %v4035 = vadd.f32 0.0, %v4034
    %v4036 = vpop.f32.mrb[0].mxu0
    %v4037 = vpop.f32.mrb[0].mxu0
    %v4038 = vadd.f32 0.0, %v4037
    %v4039 = vpop.f32.mrb[0].mxu0
    %4040 = vmatprep.mubr.bf16.mxu0 0
    %4041 = vmatmul.mubr.bf16.gmra.mrb[0].mxu0 %v3990
    %v4042 = vpop.f32.mrb[0].mxu0
    %v4043 = vadd.f32 0.0, %v4042
    %v4044 = vpop.f32.mrb[0].mxu0
    %v4045 = vpop.f32.mrb[0].mxu0
    %v4046 = vpop.f32.mrb[0].mxu0
    %4047 = vdwg.mxu0
    %v4049 = vlaneseq
    %v4050 = vshrl.u32 %v4049, 7
    %v4051 = vsub.s32 0, %v4050
    %v4052 = vrot.slane %v3968, %v4051
    %v4054 = vadd.f32 %v4052, %v4027
    %v4055 = vadd.f32 %v4052, %v4030
    %v4056 = vadd.f32 %v4052, %v4035
    %v4057 = vadd.f32 %v4052, %v4038
    %v4058 = vadd.f32 %v4052, %v4043
    %vm4059 = vcmask 1045504
    %v4060 = vrot.slane %v3951, 2
    %v4061 = vrot.slane %v3947, 2
    %v4062 = vsel %vm4059, %v4060, %v4061
    %v4063 = vrot.slane %v3953, 2
    %v4064 = vsel %vm4059, %v4061, %v4063
    %v4067 = vunpack.c.l.b16 %v3964
    %v4068 = vunpack.c.l.b16 %v3965
    %v4069 = vpack.c.b16 %v4068, %v4067
    %v4072 = vsel %vm106, %v4062, 0
    %v4075 = vsel %vm106, %v4064, 0
    %v4078 = vsel %vm106, %v4063, 0
    %4080 = vmatprep.subr.bf16.mxu0 0
    %4081 = vmatpush1.bf16.msra.mxu0 %v4069
    %4082 = vmatprep.subr.bf16.mxu0 0
    %4083 = vmatpush1.bf16.msra.mxu0 0
    %4084 = vmatprep.subr.bf16.mxu0 0
    %4085 = vmatpush1.bf16.msra.mxu0 0
    %4086 = vmatprep.subr.bf16.mxu0 0
    %4087 = vmatpush1.bf16.msra.mxu0 0
    %4088 = vmatprep.subr.bf16.mxu0 0
    %4089 = vmatpush1.bf16.msra.mxu0 0
    %4090 = vmatprep.subr.bf16.mxu0 0
    %4091 = vmatpush1.bf16.msra.mxu0 0
    %4092 = vmatprep.subr.bf16.mxu0 0
    %4093 = vmatpush1.bf16.msra.mxu0 0
    %4094 = vmatprep.subr.bf16.mxu0 0
    %4095 = vmatpush1.bf16.msra.mxu0 0
    %4096 = vmatprep.subr.bf16.mxu0 0
    %4097 = vmatpush1.bf16.msra.mxu0 0
    %4098 = vmatprep.subr.bf16.mxu0 0
    %4099 = vmatpush1.bf16.msra.mxu0 0
    %4100 = vmatprep.subr.bf16.mxu0 0
    %4101 = vmatpush1.bf16.msra.mxu0 0
    %4102 = vmatprep.subr.bf16.mxu0 0
    %4103 = vmatpush1.bf16.msra.mxu0 0
    %4104 = vmatprep.subr.bf16.mxu0 0
    %4105 = vmatpush1.bf16.msra.mxu0 0
    %4106 = vmatprep.subr.bf16.mxu0 0
    %4107 = vmatpush1.bf16.msra.mxu0 0
    %4108 = vmatprep.subr.bf16.mxu0 0
    %4109 = vmatpush1.bf16.msra.mxu0 0
    %4110 = vmatprep.subr.bf16.mxu0 0
    %4111 = vmatpush1.bf16.msra.mxu0 0
    %4112 = vmatprep.mubr.bf16.mxu0 0
    %4113 = vmatmul.mubr.bf16.gmra.mrb[0].mxu0 %v4072
    %v4114 = vpop.f32.mrb[0].mxu0
    %v4115 = vadd.f32 0.0, %v4114
    %v4116 = vpop.f32.mrb[0].mxu0
    %v4117 = vpop.f32.mrb[0].mxu0
    %v4118 = vadd.f32 0.0, %v4117
    %v4119 = vpop.f32.mrb[0].mxu0
    %4120 = vmatprep.mubr.bf16.mxu0 0
    %4121 = vmatmul.mubr.bf16.gmra.mrb[0].mxu0 %v4075
    %v4122 = vpop.f32.mrb[0].mxu0
    %v4123 = vadd.f32 0.0, %v4122
    %v4124 = vpop.f32.mrb[0].mxu0
    %v4125 = vpop.f32.mrb[0].mxu0
    %v4126 = vadd.f32 0.0, %v4125
    %v4127 = vpop.f32.mrb[0].mxu0
    %4128 = vmatprep.mubr.bf16.mxu0 0
    %4129 = vmatmul.mubr.bf16.gmra.mrb[0].mxu0 %v4078
    %v4130 = vpop.f32.mrb[0].mxu0
    %v4131 = vadd.f32 0.0, %v4130
    %v4132 = vpop.f32.mrb[0].mxu0
    %v4133 = vpop.f32.mrb[0].mxu0
    %v4134 = vpop.f32.mrb[0].mxu0
    %4135 = vdwg.mxu0
    %v4136 = vadd.f32 %v4054, %v4115
    %v4137 = vadd.f32 %v4055, %v4118
    %v4138 = vadd.f32 %v4056, %v4123
    %v4139 = vadd.f32 %v4057, %v4126
    %v4140 = vadd.f32 %v4058, %v4131
    %vm4141 = vcmask 1044480
    %v4142 = vrot.slane %v3951, 3
    %v4143 = vrot.slane %v3947, 3
    %v4144 = vsel %vm4141, %v4142, %v4143
    %v4145 = vrot.slane %v3953, 3
    %v4146 = vsel %vm4141, %v4143, %v4145
    %v4149 = vunpack.c.l.b16 %v3966
    %v4150 = vunpack.c.l.b16 %v3967
    %v4151 = vpack.c.b16 %v4150, %v4149
    %v4154 = vsel %vm106, %v4144, 0
    %v4157 = vsel %vm106, %v4146, 0
    %v4160 = vsel %vm106, %v4145, 0
    %4162 = vmatprep.subr.bf16.mxu0 0
    %4163 = vmatpush1.bf16.msra.mxu0 %v4151
    %4164 = vmatprep.subr.bf16.mxu0 0
    %4165 = vmatpush1.bf16.msra.mxu0 0
    %4166 = vmatprep.subr.bf16.mxu0 0
    %4167 = vmatpush1.bf16.msra.mxu0 0
    %4168 = vmatprep.subr.bf16.mxu0 0
    %4169 = vmatpush1.bf16.msra.mxu0 0
    %4170 = vmatprep.subr.bf16.mxu0 0
    %4171 = vmatpush1.bf16.msra.mxu0 0
    %4172 = vmatprep.subr.bf16.mxu0 0
    %4173 = vmatpush1.bf16.msra.mxu0 0
    %4174 = vmatprep.subr.bf16.mxu0 0
    %4175 = vmatpush1.bf16.msra.mxu0 0
    %4176 = vmatprep.subr.bf16.mxu0 0
    %4177 = vmatpush1.bf16.msra.mxu0 0
    %4178 = vmatprep.subr.bf16.mxu0 0
    %4179 = vmatpush1.bf16.msra.mxu0 0
    %4180 = vmatprep.subr.bf16.mxu0 0
    %4181 = vmatpush1.bf16.msra.mxu0 0
    %4182 = vmatprep.subr.bf16.mxu0 0
    %4183 = vmatpush1.bf16.msra.mxu0 0
    %4184 = vmatprep.subr.bf16.mxu0 0
    %4185 = vmatpush1.bf16.msra.mxu0 0
    %4186 = vmatprep.subr.bf16.mxu0 0
    %4187 = vmatpush1.bf16.msra.mxu0 0
    %4188 = vmatprep.subr.bf16.mxu0 0
    %4189 = vmatpush1.bf16.msra.mxu0 0
    %4190 = vmatprep.subr.bf16.mxu0 0
    %4191 = vmatpush1.bf16.msra.mxu0 0
    %4192 = vmatprep.subr.bf16.mxu0 0
    %4193 = vmatpush1.bf16.msra.mxu0 0
    %4194 = vmatprep.mubr.bf16.mxu0 0
    %4195 = vmatmul.mubr.bf16.gmra.mrb[0].mxu0 %v4154
    %v4196 = vpop.f32.mrb[0].mxu0
    %v4197 = vadd.f32 0.0, %v4196
    %v4198 = vpop.f32.mrb[0].mxu0
    %v4199 = vpop.f32.mrb[0].mxu0
    %v4200 = vadd.f32 0.0, %v4199
    %v4201 = vpop.f32.mrb[0].mxu0
    %4202 = vmatprep.mubr.bf16.mxu0 0
    %4203 = vmatmul.mubr.bf16.gmra.mrb[0].mxu0 %v4157
    %v4204 = vpop.f32.mrb[0].mxu0
    %v4205 = vadd.f32 0.0, %v4204
    %v4206 = vpop.f32.mrb[0].mxu0
    %v4207 = vpop.f32.mrb[0].mxu0
    %v4208 = vadd.f32 0.0, %v4207
    %v4209 = vpop.f32.mrb[0].mxu0
    %4210 = vmatprep.mubr.bf16.mxu0 0
    %4211 = vmatmul.mubr.bf16.gmra.mrb[0].mxu0 %v4160
    %v4212 = vpop.f32.mrb[0].mxu0
    %v4213 = vadd.f32 0.0, %v4212
    %v4214 = vpop.f32.mrb[0].mxu0
    %v4215 = vpop.f32.mrb[0].mxu0
    %v4216 = vpop.f32.mrb[0].mxu0
    %4217 = vdwg.mxu0
    %v4218 = vadd.f32 %v4136, %v4197
    %v4219 = vadd.f32 %v4137, %v4200
    %v4220 = vadd.f32 %v4138, %v4205
    %v4221 = vadd.f32 %v4139, %v4208
    %v4222 = vadd.f32 %v4140, %v4213
    %v4223 = vmul.f32 %v4218, 1.442695
    %v4224 = vpow.pop %v4223
    %v4225 = vmul.f32 %v4219, 1.442695
    %v4226 = vpow.pop %v4225
    %v4227 = vmul.f32 %v4220, 1.442695
    %v4228 = vpow.pop %v4227
    %v4229 = vmul.f32 %v4221, 1.442695
    %v4230 = vpow.pop %v4229
    %v4231 = vmul.f32 %v4222, 1.442695
    %v4232 = vpow.pop %v4231
    %v4233 = vadd.f32 %v4224, 1.0
    %v4234 = vadd.f32 %v4226, 1.0
    %v4235 = vadd.f32 %v4228, 1.0
    %v4236 = vadd.f32 %v4230, 1.0
    %v4237 = vadd.f32 %v4232, 1.0
    %v4238 = vmul.f32 %v4233, %v4233
    %v4239 = vmul.f32 %v4234, %v4234
    %v4240 = vmul.f32 %v4235, %v4235
    %v4241 = vmul.f32 %v4236, %v4236
    %v4242 = vmul.f32 %v4237, %v4237
    %v4243 = vadd.f32 %v4238, 1.0
    %v4244 = vadd.f32 %v4239, 1.0
    %v4245 = vadd.f32 %v4240, 1.0
    %v4246 = vadd.f32 %v4241, 1.0
    %v4247 = vadd.f32 %v4242, 1.0
    %v4248 = vrcp.pop %v4243
    %v4249 = vrcp.pop %v4244
    %v4250 = vrcp.pop %v4245
    %v4251 = vrcp.pop %v4246
    %v4252 = vrcp.pop %v4247
    %v4253 = vmul.f32 %v4248, 2.0
    %v4254 = vmul.f32 %v4249, 2.0
    %v4255 = vmul.f32 %v4250, 2.0
    %v4256 = vmul.f32 %v4251, 2.0
    %v4257 = vmul.f32 %v4252, 2.0
    %v4258 = vsub.f32 1.0, %v4253
    %v4259 = vsub.f32 1.0, %v4254
    %v4260 = vsub.f32 1.0, %v4255
    %v4261 = vsub.f32 1.0, %v4256
    %v4262 = vsub.f32 1.0, %v4257
    %v4263 = vmul.f32 %v4218, %v4258
    %v4264 = vmul.f32 %v4219, %v4259
    %v4265 = vmul.f32 %v4220, %v4260
    %v4266 = vmul.f32 %v4221, %v4261
    %v4267 = vmul.f32 %v4222, %v4262
    %v4268 = vpack.c.bf16 %v4264, %v4263
    %v4269 = vpack.c.bf16 %v4266, %v4265
    %v4270 = vpack.c.bf16 %v4267, %v4267
    %v4272 = vrot.slane %v4268, 1
    %v4274 = vmax.bf16 %v4268, %v4272
    %v4275 = vld [vmem:[%s13] sm:$0xf]
    %vm4276 = vcmask 64512
    %v4278 = vsel %vm4276, %v4274, 0
    %v4281 = vsel %vm525, %v4275, 0
    %4283 = vmatprep.subr.bf16.mxu0 0
    %4284 = vmatpush1.bf16.msra.mxu0 %v4281
    %4285 = vmatprep.subr.bf16.mxu0 0
    %4286 = vmatpush1.bf16.msra.mxu0 0
    %4287 = vmatprep.subr.bf16.mxu0 0
    %4288 = vmatpush1.bf16.msra.mxu0 0
    %4289 = vmatprep.subr.bf16.mxu0 0
    %4290 = vmatpush1.bf16.msra.mxu0 0
    %4291 = vmatprep.subr.bf16.mxu0 0
    %4292 = vmatpush1.bf16.msra.mxu0 0
    %4293 = vmatprep.subr.bf16.mxu0 0
    %4294 = vmatpush1.bf16.msra.mxu0 0
    %4295 = vmatprep.subr.bf16.mxu0 0
    %4296 = vmatpush1.bf16.msra.mxu0 0
    %4297 = vmatprep.subr.bf16.mxu0 0
    %4298 = vmatpush1.bf16.msra.mxu0 0
    %4299 = vmatprep.subr.bf16.mxu0 0
    %4300 = vmatpush1.bf16.msra.mxu0 0
    %4301 = vmatprep.subr.bf16.mxu0 0
    %4302 = vmatpush1.bf16.msra.mxu0 0
    %4303 = vmatprep.subr.bf16.mxu0 0
    %4304 = vmatpush1.bf16.msra.mxu0 0
    %4305 = vmatprep.subr.bf16.mxu0 0
    %4306 = vmatpush1.bf16.msra.mxu0 0
    %4307 = vmatprep.subr.bf16.mxu0 0
    %4308 = vmatpush1.bf16.msra.mxu0 0
    %4309 = vmatprep.subr.bf16.mxu0 0
    %4310 = vmatpush1.bf16.msra.mxu0 0
    %4311 = vmatprep.subr.bf16.mxu0 0
    %4312 = vmatpush1.bf16.msra.mxu0 0
    %4313 = vmatprep.subr.bf16.mxu0 0
    %4314 = vmatpush1.bf16.msra.mxu0 0
    %4315 = vmatprep.mubr.bf16.mxu0 0
    %4316 = vmatmul.mubr.bf16.gmra.mrb[0].mxu0 %v4278
    %v4317 = vpop.f32.mrb[0].mxu0
    %v4318 = vadd.f32 0.0, %v4317
    %v4319 = vpop.f32.mrb[0].mxu0
    %v4320 = vpop.f32.mrb[0].mxu0
    %v4321 = vpop.f32.mrb[0].mxu0
    %4322 = vdwg.mxu0
    %v4323 = vadd.f32 %v3961, %v4318
    %v4324 = vld [vmem:[%s13 + $0x4] sm:$0xf]
    %v4326 = vrot.slane %v4274, 2
    %v4328 = vsel %vm4276, %v4326, 0
    %v4331 = vsel %vm525, %v4324, 0
    %4333 = vmatprep.subr.bf16.mxu0 0
    %4334 = vmatpush1.bf16.msra.mxu0 %v4331
    %4335 = vmatprep.subr.bf16.mxu0 0
    %4336 = vmatpush1.bf16.msra.mxu0 0
    %4337 = vmatprep.subr.bf16.mxu0 0
    %4338 = vmatpush1.bf16.msra.mxu0 0
    %4339 = vmatprep.subr.bf16.mxu0 0
    %4340 = vmatpush1.bf16.msra.mxu0 0
    %4341 = vmatprep.subr.bf16.mxu0 0
    %4342 = vmatpush1.bf16.msra.mxu0 0
    %4343 = vmatprep.subr.bf16.mxu0 0
    %4344 = vmatpush1.bf16.msra.mxu0 0
    %4345 = vmatprep.subr.bf16.mxu0 0
    %4346 = vmatpush1.bf16.msra.mxu0 0
    %4347 = vmatprep.subr.bf16.mxu0 0
    %4348 = vmatpush1.bf16.msra.mxu0 0
    %4349 = vmatprep.subr.bf16.mxu0 0
    %4350 = vmatpush1.bf16.msra.mxu0 0
    %4351 = vmatprep.subr.bf16.mxu0 0
    %4352 = vmatpush1.bf16.msra.mxu0 0
    %4353 = vmatprep.subr.bf16.mxu0 0
    %4354 = vmatpush1.bf16.msra.mxu0 0
    %4355 = vmatprep.subr.bf16.mxu0 0
    %4356 = vmatpush1.bf16.msra.mxu0 0
    %4357 = vmatprep.subr.bf16.mxu0 0
    %4358 = vmatpush1.bf16.msra.mxu0 0
    %4359 = vmatprep.subr.bf16.mxu0 0
    %4360 = vmatpush1.bf16.msra.mxu0 0
    %4361 = vmatprep.subr.bf16.mxu0 0
    %4362 = vmatpush1.bf16.msra.mxu0 0
    %4363 = vmatprep.subr.bf16.mxu0 0
    %4364 = vmatpush1.bf16.msra.mxu0 0
    %4365 = vmatprep.mubr.bf16.mxu0 0
    %4366 = vmatmul.mubr.bf16.gmra.mrb[0].mxu0 %v4328
    %v4367 = vpop.f32.mrb[0].mxu0
    %v4368 = vadd.f32 0.0, %v4367
    %v4369 = vpop.f32.mrb[0].mxu0
    %v4370 = vpop.f32.mrb[0].mxu0
    %v4371 = vpop.f32.mrb[0].mxu0
    %4372 = vdwg.mxu0
    %v4373 = vadd.f32 %v4323, %v4368
    %v4374 = vld [vmem:[%s13 + $0x8] sm:$0xf]
    %v4375 = vrot.slane %v4274, 4
    %v4377 = vsel %vm4276, %v4375, 0
    %v4380 = vsel %vm525, %v4374, 0
    %4382 = vmatprep.subr.bf16.mxu0 0
    %4383 = vmatpush1.bf16.msra.mxu0 %v4380
    %4384 = vmatprep.subr.bf16.mxu0 0
    %4385 = vmatpush1.bf16.msra.mxu0 0
    %4386 = vmatprep.subr.bf16.mxu0 0
    %4387 = vmatpush1.bf16.msra.mxu0 0
    %4388 = vmatprep.subr.bf16.mxu0 0
    %4389 = vmatpush1.bf16.msra.mxu0 0
    %4390 = vmatprep.subr.bf16.mxu0 0
    %4391 = vmatpush1.bf16.msra.mxu0 0
    %4392 = vmatprep.subr.bf16.mxu0 0
    %4393 = vmatpush1.bf16.msra.mxu0 0
    %4394 = vmatprep.subr.bf16.mxu0 0
    %4395 = vmatpush1.bf16.msra.mxu0 0
    %4396 = vmatprep.subr.bf16.mxu0 0
    %4397 = vmatpush1.bf16.msra.mxu0 0
    %4398 = vmatprep.subr.bf16.mxu0 0
    %4399 = vmatpush1.bf16.msra.mxu0 0
    %4400 = vmatprep.subr.bf16.mxu0 0
    %4401 = vmatpush1.bf16.msra.mxu0 0
    %4402 = vmatprep.subr.bf16.mxu0 0
    %4403 = vmatpush1.bf16.msra.mxu0 0
    %4404 = vmatprep.subr.bf16.mxu0 0
    %4405 = vmatpush1.bf16.msra.mxu0 0
    %4406 = vmatprep.subr.bf16.mxu0 0
    %4407 = vmatpush1.bf16.msra.mxu0 0
    %4408 = vmatprep.subr.bf16.mxu0 0
    %4409 = vmatpush1.bf16.msra.mxu0 0
    %4410 = vmatprep.subr.bf16.mxu0 0
    %4411 = vmatpush1.bf16.msra.mxu0 0
    %4412 = vmatprep.subr.bf16.mxu0 0
    %4413 = vmatpush1.bf16.msra.mxu0 0
    %4414 = vmatprep.mubr.bf16.mxu0 0
    %4415 = vmatmul.mubr.bf16.gmra.mrb[0].mxu0 %v4377
    %v4416 = vpop.f32.mrb[0].mxu0
    %v4417 = vadd.f32 0.0, %v4416
    %v4418 = vpop.f32.mrb[0].mxu0
    %v4419 = vpop.f32.mrb[0].mxu0
    %v4420 = vpop.f32.mrb[0].mxu0
    %4421 = vdwg.mxu0
    %v4422 = vadd.f32 %v4373, %v4417
    %v4423 = vld [vmem:[%s13 + $0xc] sm:$0xf]
    %v4424 = vrot.slane %v4274, 6
    %v4426 = vsel %vm4276, %v4424, 0
    %v4429 = vsel %vm525, %v4423, 0
    %4431 = vmatprep.subr.bf16.mxu0 0
    %4432 = vmatpush1.bf16.msra.mxu0 %v4429
    %4433 = vmatprep.subr.bf16.mxu0 0
    %4434 = vmatpush1.bf16.msra.mxu0 0
    %4435 = vmatprep.subr.bf16.mxu0 0
    %4436 = vmatpush1.bf16.msra.mxu0 0
    %4437 = vmatprep.subr.bf16.mxu0 0
    %4438 = vmatpush1.bf16.msra.mxu0 0
    %4439 = vmatprep.subr.bf16.mxu0 0
    %4440 = vmatpush1.bf16.msra.mxu0 0
    %4441 = vmatprep.subr.bf16.mxu0 0
    %4442 = vmatpush1.bf16.msra.mxu0 0
    %4443 = vmatprep.subr.bf16.mxu0 0
    %4444 = vmatpush1.bf16.msra.mxu0 0
    %4445 = vmatprep.subr.bf16.mxu0 0
    %4446 = vmatpush1.bf16.msra.mxu0 0
    %4447 = vmatprep.subr.bf16.mxu0 0
    %4448 = vmatpush1.bf16.msra.mxu0 0
    %4449 = vmatprep.subr.bf16.mxu0 0
    %4450 = vmatpush1.bf16.msra.mxu0 0
    %4451 = vmatprep.subr.bf16.mxu0 0
    %4452 = vmatpush1.bf16.msra.mxu0 0
    %4453 = vmatprep.subr.bf16.mxu0 0
    %4454 = vmatpush1.bf16.msra.mxu0 0
    %4455 = vmatprep.subr.bf16.mxu0 0
    %4456 = vmatpush1.bf16.msra.mxu0 0
    %4457 = vmatprep.subr.bf16.mxu0 0
    %4458 = vmatpush1.bf16.msra.mxu0 0
    %4459 = vmatprep.subr.bf16.mxu0 0
    %4460 = vmatpush1.bf16.msra.mxu0 0
    %4461 = vmatprep.subr.bf16.mxu0 0
    %4462 = vmatpush1.bf16.msra.mxu0 0
    %4463 = vmatprep.mubr.bf16.mxu0 0
    %4464 = vmatmul.mubr.bf16.gmra.mrb[0].mxu0 %v4426
    %v4465 = vpop.f32.mrb[0].mxu0
    %v4466 = vadd.f32 0.0, %v4465
    %v4467 = vpop.f32.mrb[0].mxu0
    %v4468 = vpop.f32.mrb[0].mxu0
    %v4469 = vpop.f32.mrb[0].mxu0
    %4470 = vdwg.mxu0
    %v4471 = vadd.f32 %v4422, %v4466
    %v4473 = vrot.slane %v4269, 1
    %v4475 = vmax.bf16 %v4269, %v4473
    %v4476 = vld [vmem:[%s13 + $0x10] sm:$0xf]
    %v4478 = vsel %vm4276, %v4475, 0
    %v4481 = vsel %vm525, %v4476, 0
    %4483 = vmatprep.subr.bf16.mxu0 0
    %4484 = vmatpush1.bf16.msra.mxu0 %v4481
    %4485 = vmatprep.subr.bf16.mxu0 0
    %4486 = vmatpush1.bf16.msra.mxu0 0
    %4487 = vmatprep.subr.bf16.mxu0 0
    %4488 = vmatpush1.bf16.msra.mxu0 0
    %4489 = vmatprep.subr.bf16.mxu0 0
    %4490 = vmatpush1.bf16.msra.mxu0 0
    %4491 = vmatprep.subr.bf16.mxu0 0
    %4492 = vmatpush1.bf16.msra.mxu0 0
    %4493 = vmatprep.subr.bf16.mxu0 0
    %4494 = vmatpush1.bf16.msra.mxu0 0
    %4495 = vmatprep.subr.bf16.mxu0 0
    %4496 = vmatpush1.bf16.msra.mxu0 0
    %4497 = vmatprep.subr.bf16.mxu0 0
    %4498 = vmatpush1.bf16.msra.mxu0 0
    %4499 = vmatprep.subr.bf16.mxu0 0
    %4500 = vmatpush1.bf16.msra.mxu0 0
    %4501 = vmatprep.subr.bf16.mxu0 0
    %4502 = vmatpush1.bf16.msra.mxu0 0
    %4503 = vmatprep.subr.bf16.mxu0 0
    %4504 = vmatpush1.bf16.msra.mxu0 0
    %4505 = vmatprep.subr.bf16.mxu0 0
    %4506 = vmatpush1.bf16.msra.mxu0 0
    %4507 = vmatprep.subr.bf16.mxu0 0
    %4508 = vmatpush1.bf16.msra.mxu0 0
    %4509 = vmatprep.subr.bf16.mxu0 0
    %4510 = vmatpush1.bf16.msra.mxu0 0
    %4511 = vmatprep.subr.bf16.mxu0 0
    %4512 = vmatpush1.bf16.msra.mxu0 0
    %4513 = vmatprep.subr.bf16.mxu0 0
    %4514 = vmatpush1.bf16.msra.mxu0 0
    %4515 = vmatprep.mubr.bf16.mxu0 0
    %4516 = vmatmul.mubr.bf16.gmra.mrb[0].mxu0 %v4478
    %v4517 = vpop.f32.mrb[0].mxu0
    %v4518 = vadd.f32 0.0, %v4517
    %v4519 = vpop.f32.mrb[0].mxu0
    %v4520 = vpop.f32.mrb[0].mxu0
    %v4521 = vpop.f32.mrb[0].mxu0
    %4522 = vdwg.mxu0
    %v4523 = vadd.f32 %v4471, %v4518
    %v4524 = vld [vmem:[%s13 + $0x14] sm:$0xf]
    %v4526 = vrot.slane %v4475, 2
    %v4528 = vsel %vm4276, %v4526, 0
    %v4531 = vsel %vm525, %v4524, 0
    %4533 = vmatprep.subr.bf16.mxu0 0
    %4534 = vmatpush1.bf16.msra.mxu0 %v4531
    %4535 = vmatprep.subr.bf16.mxu0 0
    %4536 = vmatpush1.bf16.msra.mxu0 0
    %4537 = vmatprep.subr.bf16.mxu0 0
    %4538 = vmatpush1.bf16.msra.mxu0 0
    %4539 = vmatprep.subr.bf16.mxu0 0
    %4540 = vmatpush1.bf16.msra.mxu0 0
    %4541 = vmatprep.subr.bf16.mxu0 0
    %4542 = vmatpush1.bf16.msra.mxu0 0
    %4543 = vmatprep.subr.bf16.mxu0 0
    %4544 = vmatpush1.bf16.msra.mxu0 0
    %4545 = vmatprep.subr.bf16.mxu0 0
    %4546 = vmatpush1.bf16.msra.mxu0 0
    %4547 = vmatprep.subr.bf16.mxu0 0
    %4548 = vmatpush1.bf16.msra.mxu0 0
    %4549 = vmatprep.subr.bf16.mxu0 0
    %4550 = vmatpush1.bf16.msra.mxu0 0
    %4551 = vmatprep.subr.bf16.mxu0 0
    %4552 = vmatpush1.bf16.msra.mxu0 0
    %4553 = vmatprep.subr.bf16.mxu0 0
    %4554 = vmatpush1.bf16.msra.mxu0 0
    %4555 = vmatprep.subr.bf16.mxu0 0
    %4556 = vmatpush1.bf16.msra.mxu0 0
    %4557 = vmatprep.subr.bf16.mxu0 0
    %4558 = vmatpush1.bf16.msra.mxu0 0
    %4559 = vmatprep.subr.bf16.mxu0 0
    %4560 = vmatpush1.bf16.msra.mxu0 0
    %4561 = vmatprep.subr.bf16.mxu0 0
    %4562 = vmatpush1.bf16.msra.mxu0 0
    %4563 = vmatprep.subr.bf16.mxu0 0
    %4564 = vmatpush1.bf16.msra.mxu0 0
    %4565 = vmatprep.mubr.bf16.mxu0 0
    %4566 = vmatmul.mubr.bf16.gmra.mrb[0].mxu0 %v4528
    %v4567 = vpop.f32.mrb[0].mxu0
    %v4568 = vadd.f32 0.0, %v4567
    %v4569 = vpop.f32.mrb[0].mxu0
    %v4570 = vpop.f32.mrb[0].mxu0
    %v4571 = vpop.f32.mrb[0].mxu0
    %4572 = vdwg.mxu0
    %v4573 = vadd.f32 %v4523, %v4568
    %v4574 = vld [vmem:[%s13 + $0x18] sm:$0xf]
    %v4575 = vrot.slane %v4475, 4
    %v4577 = vsel %vm4276, %v4575, 0
    %v4580 = vsel %vm525, %v4574, 0
    %4582 = vmatprep.subr.bf16.mxu0 0
    %4583 = vmatpush1.bf16.msra.mxu0 %v4580
    %4584 = vmatprep.subr.bf16.mxu0 0
    %4585 = vmatpush1.bf16.msra.mxu0 0
    %4586 = vmatprep.subr.bf16.mxu0 0
    %4587 = vmatpush1.bf16.msra.mxu0 0
    %4588 = vmatprep.subr.bf16.mxu0 0
    %4589 = vmatpush1.bf16.msra.mxu0 0
    %4590 = vmatprep.subr.bf16.mxu0 0
    %4591 = vmatpush1.bf16.msra.mxu0 0
    %4592 = vmatprep.subr.bf16.mxu0 0
    %4593 = vmatpush1.bf16.msra.mxu0 0
    %4594 = vmatprep.subr.bf16.mxu0 0
    %4595 = vmatpush1.bf16.msra.mxu0 0
    %4596 = vmatprep.subr.bf16.mxu0 0
    %4597 = vmatpush1.bf16.msra.mxu0 0
    %4598 = vmatprep.subr.bf16.mxu0 0
    %4599 = vmatpush1.bf16.msra.mxu0 0
    %4600 = vmatprep.subr.bf16.mxu0 0
    %4601 = vmatpush1.bf16.msra.mxu0 0
    %4602 = vmatprep.subr.bf16.mxu0 0
    %4603 = vmatpush1.bf16.msra.mxu0 0
    %4604 = vmatprep.subr.bf16.mxu0 0
    %4605 = vmatpush1.bf16.msra.mxu0 0
    %4606 = vmatprep.subr.bf16.mxu0 0
    %4607 = vmatpush1.bf16.msra.mxu0 0
    %4608 = vmatprep.subr.bf16.mxu0 0
    %4609 = vmatpush1.bf16.msra.mxu0 0
    %4610 = vmatprep.subr.bf16.mxu0 0
    %4611 = vmatpush1.bf16.msra.mxu0 0
    %4612 = vmatprep.subr.bf16.mxu0 0
    %4613 = vmatpush1.bf16.msra.mxu0 0
    %4614 = vmatprep.mubr.bf16.mxu0 0
    %4615 = vmatmul.mubr.bf16.gmra.mrb[0].mxu0 %v4577
    %v4616 = vpop.f32.mrb[0].mxu0
    %v4617 = vadd.f32 0.0, %v4616
    %v4618 = vpop.f32.mrb[0].mxu0
    %v4619 = vpop.f32.mrb[0].mxu0
    %v4620 = vpop.f32.mrb[0].mxu0
    %4621 = vdwg.mxu0
    %v4622 = vadd.f32 %v4573, %v4617
    %v4623 = vld [vmem:[%s13 + $0x1c] sm:$0xf]
    %v4624 = vrot.slane %v4475, 6
    %v4626 = vsel %vm4276, %v4624, 0
    %v4629 = vsel %vm525, %v4623, 0
    %4631 = vmatprep.subr.bf16.mxu0 0
    %4632 = vmatpush1.bf16.msra.mxu0 %v4629
    %4633 = vmatprep.subr.bf16.mxu0 0
    %4634 = vmatpush1.bf16.msra.mxu0 0
    %4635 = vmatprep.subr.bf16.mxu0 0
    %4636 = vmatpush1.bf16.msra.mxu0 0
    %4637 = vmatprep.subr.bf16.mxu0 0
    %4638 = vmatpush1.bf16.msra.mxu0 0
    %4639 = vmatprep.subr.bf16.mxu0 0
    %4640 = vmatpush1.bf16.msra.mxu0 0
    %4641 = vmatprep.subr.bf16.mxu0 0
    %4642 = vmatpush1.bf16.msra.mxu0 0
    %4643 = vmatprep.subr.bf16.mxu0 0
    %4644 = vmatpush1.bf16.msra.mxu0 0
    %4645 = vmatprep.subr.bf16.mxu0 0
    %4646 = vmatpush1.bf16.msra.mxu0 0
    %4647 = vmatprep.subr.bf16.mxu0 0
    %4648 = vmatpush1.bf16.msra.mxu0 0
    %4649 = vmatprep.subr.bf16.mxu0 0
    %4650 = vmatpush1.bf16.msra.mxu0 0
    %4651 = vmatprep.subr.bf16.mxu0 0
    %4652 = vmatpush1.bf16.msra.mxu0 0
    %4653 = vmatprep.subr.bf16.mxu0 0
    %4654 = vmatpush1.bf16.msra.mxu0 0
    %4655 = vmatprep.subr.bf16.mxu0 0
    %4656 = vmatpush1.bf16.msra.mxu0 0
    %4657 = vmatprep.subr.bf16.mxu0 0
    %4658 = vmatpush1.bf16.msra.mxu0 0
    %4659 = vmatprep.subr.bf16.mxu0 0
    %4660 = vmatpush1.bf16.msra.mxu0 0
    %4661 = vmatprep.subr.bf16.mxu0 0
    %4662 = vmatpush1.bf16.msra.mxu0 0
    %4663 = vmatprep.mubr.bf16.mxu0 0
    %4664 = vmatmul.mubr.bf16.gmra.mrb[0].mxu0 %v4626
    %v4665 = vpop.f32.mrb[0].mxu0
    %v4666 = vadd.f32 0.0, %v4665
    %v4667 = vpop.f32.mrb[0].mxu0
    %v4668 = vpop.f32.mrb[0].mxu0
    %v4669 = vpop.f32.mrb[0].mxu0
    %4670 = vdwg.mxu0
    %v4671 = vadd.f32 %v4622, %v4666
    %v4673 = vrot.slane %v4270, 1
    %v4675 = vmax.bf16 %v4270, %v4673
    %v4676 = vld [vmem:[%s13 + $0x20] sm:$0xf]
    %v4678 = vsel %vm4276, %v4675, 0
    %v4681 = vsel %vm525, %v4676, 0
    %4683 = vmatprep.subr.bf16.mxu0 0
    %4684 = vmatpush1.bf16.msra.mxu0 %v4681
    %4685 = vmatprep.subr.bf16.mxu0 0
    %4686 = vmatpush1.bf16.msra.mxu0 0
    %4687 = vmatprep.subr.bf16.mxu0 0
    %4688 = vmatpush1.bf16.msra.mxu0 0
    %4689 = vmatprep.subr.bf16.mxu0 0
    %4690 = vmatpush1.bf16.msra.mxu0 0
    %4691 = vmatprep.subr.bf16.mxu0 0
    %4692 = vmatpush1.bf16.msra.mxu0 0
    %4693 = vmatprep.subr.bf16.mxu0 0
    %4694 = vmatpush1.bf16.msra.mxu0 0
    %4695 = vmatprep.subr.bf16.mxu0 0
    %4696 = vmatpush1.bf16.msra.mxu0 0
    %4697 = vmatprep.subr.bf16.mxu0 0
    %4698 = vmatpush1.bf16.msra.mxu0 0
    %4699 = vmatprep.subr.bf16.mxu0 0
    %4700 = vmatpush1.bf16.msra.mxu0 0
    %4701 = vmatprep.subr.bf16.mxu0 0
    %4702 = vmatpush1.bf16.msra.mxu0 0
    %4703 = vmatprep.subr.bf16.mxu0 0
    %4704 = vmatpush1.bf16.msra.mxu0 0
    %4705 = vmatprep.subr.bf16.mxu0 0
    %4706 = vmatpush1.bf16.msra.mxu0 0
    %4707 = vmatprep.subr.bf16.mxu0 0
    %4708 = vmatpush1.bf16.msra.mxu0 0
    %4709 = vmatprep.subr.bf16.mxu0 0
    %4710 = vmatpush1.bf16.msra.mxu0 0
    %4711 = vmatprep.subr.bf16.mxu0 0
    %4712 = vmatpush1.bf16.msra.mxu0 0
    %4713 = vmatprep.subr.bf16.mxu0 0
    %4714 = vmatpush1.bf16.msra.mxu0 0
    %4715 = vmatprep.mubr.bf16.mxu0 0
    %4716 = vmatmul.mubr.bf16.gmra.mrb[0].mxu0 %v4678
    %v4717 = vpop.f32.mrb[0].mxu0
    %v4718 = vadd.f32 0.0, %v4717
    %v4719 = vpop.f32.mrb[0].mxu0
    %v4720 = vpop.f32.mrb[0].mxu0
    %v4721 = vpop.f32.mrb[0].mxu0
    %4722 = vdwg.mxu0
    %v4723 = vadd.f32 %v4671, %v4718
    %v4724 = vld [vmem:[%s13 + $0x24] sm:$0xf]
    %v4726 = vrot.slane %v4675, 2
    %v4728 = vsel %vm4276, %v4726, 0
    %v4731 = vsel %vm525, %v4724, 0
    %4733 = vmatprep.subr.bf16.mxu0 0
    %4734 = vmatpush1.bf16.msra.mxu0 %v4731
    %4735 = vmatprep.subr.bf16.mxu0 0
    %4736 = vmatpush1.bf16.msra.mxu0 0
    %4737 = vmatprep.subr.bf16.mxu0 0
    %4738 = vmatpush1.bf16.msra.mxu0 0
    %4739 = vmatprep.subr.bf16.mxu0 0
    %4740 = vmatpush1.bf16.msra.mxu0 0
    %4741 = vmatprep.subr.bf16.mxu0 0
    %4742 = vmatpush1.bf16.msra.mxu0 0
    %4743 = vmatprep.subr.bf16.mxu0 0
    %4744 = vmatpush1.bf16.msra.mxu0 0
    %4745 = vmatprep.subr.bf16.mxu0 0
    %4746 = vmatpush1.bf16.msra.mxu0 0
    %4747 = vmatprep.subr.bf16.mxu0 0
    %4748 = vmatpush1.bf16.msra.mxu0 0
    %4749 = vmatprep.subr.bf16.mxu0 0
    %4750 = vmatpush1.bf16.msra.mxu0 0
    %4751 = vmatprep.subr.bf16.mxu0 0
    %4752 = vmatpush1.bf16.msra.mxu0 0
    %4753 = vmatprep.subr.bf16.mxu0 0
    %4754 = vmatpush1.bf16.msra.mxu0 0
    %4755 = vmatprep.subr.bf16.mxu0 0
    %4756 = vmatpush1.bf16.msra.mxu0 0
    %4757 = vmatprep.subr.bf16.mxu0 0
    %4758 = vmatpush1.bf16.msra.mxu0 0
    %4759 = vmatprep.subr.bf16.mxu0 0
    %4760 = vmatpush1.bf16.msra.mxu0 0
    %4761 = vmatprep.subr.bf16.mxu0 0
    %4762 = vmatpush1.bf16.msra.mxu0 0
    %4763 = vmatprep.subr.bf16.mxu0 0
    %4764 = vmatpush1.bf16.msra.mxu0 0
    %4765 = vmatprep.mubr.bf16.mxu0 0
    %4766 = vmatmul.mubr.bf16.gmra.mrb[0].mxu0 %v4728
    %v4767 = vpop.f32.mrb[0].mxu0
    %v4768 = vadd.f32 0.0, %v4767
    %v4769 = vpop.f32.mrb[0].mxu0
    %v4770 = vpop.f32.mrb[0].mxu0
    %v4771 = vpop.f32.mrb[0].mxu0
    %4772 = vdwg.mxu0
    %v4773 = vadd.f32 %v4723, %v4768
    %v4774 = vld [vmem:[%s11] sm:$0xf]
    %v4775 = vld [vmem:[%s11 + $0x4] sm:$0xf]
    %v4776 = vld [vmem:[%s11 + $0x8] sm:$0xf]
    %v4777 = vld [vmem:[%s11 + $0xc] sm:$0xf]
    %v4778 = vld [vmem:[%s11 + $0x10] sm:$0xf]
    %v4779 = vld [vmem:[%s11 + $0x14] sm:$0xf]
    %v4780 = vld [vmem:[%s11 + $0x18] sm:$0xf]
    %v4781 = vld [vmem:[%s11 + $0x1c] sm:$0xf]
    %v4782 = vld [vmem:[%s11 + $0x20] sm:$0xf]
    %v4783 = vld [vmem:[%s11 + $0x24] sm:$0xf]
    %v4784 = vld [vmem:[%s12] sm:$0x1]
    %v4787 = vunpack.c.l.b16 %v4774
    %v4788 = vunpack.c.l.b16 %v4775
    %v4789 = vpack.c.b16 %v4788, %v4787
    %v4791 = vsel %vm106, %v3951, 0
    %v4794 = vsel %vm106, %v3947, 0
    %v4796 = vsel %vm106, %v3953, 0
    %4798 = vmatprep.subr.bf16.mxu0 0
    %4799 = vmatpush1.bf16.msra.mxu0 %v4789
    %4800 = vmatprep.subr.bf16.mxu0 0
    %4801 = vmatpush1.bf16.msra.mxu0 0
    %4802 = vmatprep.subr.bf16.mxu0 0
    %4803 = vmatpush1.bf16.msra.mxu0 0
    %4804 = vmatprep.subr.bf16.mxu0 0
    %4805 = vmatpush1.bf16.msra.mxu0 0
    %4806 = vmatprep.subr.bf16.mxu0 0
    %4807 = vmatpush1.bf16.msra.mxu0 0
    %4808 = vmatprep.subr.bf16.mxu0 0
    %4809 = vmatpush1.bf16.msra.mxu0 0
    %4810 = vmatprep.subr.bf16.mxu0 0
    %4811 = vmatpush1.bf16.msra.mxu0 0
    %4812 = vmatprep.subr.bf16.mxu0 0
    %4813 = vmatpush1.bf16.msra.mxu0 0
    %4814 = vmatprep.subr.bf16.mxu0 0
    %4815 = vmatpush1.bf16.msra.mxu0 0
    %4816 = vmatprep.subr.bf16.mxu0 0
    %4817 = vmatpush1.bf16.msra.mxu0 0
    %4818 = vmatprep.subr.bf16.mxu0 0
    %4819 = vmatpush1.bf16.msra.mxu0 0
    %4820 = vmatprep.subr.bf16.mxu0 0
    %4821 = vmatpush1.bf16.msra.mxu0 0
    %4822 = vmatprep.subr.bf16.mxu0 0
    %4823 = vmatpush1.bf16.msra.mxu0 0
    %4824 = vmatprep.subr.bf16.mxu0 0
    %4825 = vmatpush1.bf16.msra.mxu0 0
    %4826 = vmatprep.subr.bf16.mxu0 0
    %4827 = vmatpush1.bf16.msra.mxu0 0
    %4828 = vmatprep.subr.bf16.mxu0 0
    %4829 = vmatpush1.bf16.msra.mxu0 0
    %4830 = vmatprep.mubr.bf16.mxu0 0
    %4831 = vmatmul.mubr.bf16.gmra.mrb[0].mxu0 %v4791
    %v4832 = vpop.f32.mrb[0].mxu0
    %v4833 = vadd.f32 0.0, %v4832
    %v4834 = vpop.f32.mrb[0].mxu0
    %v4835 = vpop.f32.mrb[0].mxu0
    %v4836 = vadd.f32 0.0, %v4835
    %v4837 = vpop.f32.mrb[0].mxu0
    %4838 = vmatprep.mubr.bf16.mxu0 0
    %4839 = vmatmul.mubr.bf16.gmra.mrb[0].mxu0 %v4794
    %v4840 = vpop.f32.mrb[0].mxu0
    %v4841 = vadd.f32 0.0, %v4840
    %v4842 = vpop.f32.mrb[0].mxu0
    %v4843 = vpop.f32.mrb[0].mxu0
    %v4844 = vadd.f32 0.0, %v4843
    %v4845 = vpop.f32.mrb[0].mxu0
    %4846 = vmatprep.mubr.bf16.mxu0 0
    %4847 = vmatmul.mubr.bf16.gmra.mrb[0].mxu0 %v4796
    %v4848 = vpop.f32.mrb[0].mxu0
    %v4849 = vadd.f32 0.0, %v4848
    %v4850 = vpop.f32.mrb[0].mxu0
    %v4851 = vpop.f32.mrb[0].mxu0
    %v4852 = vpop.f32.mrb[0].mxu0
    %4853 = vdwg.mxu0
    %v4855 = vlaneseq
    %v4856 = vshrl.u32 %v4855, 7
    %v4857 = vsub.s32 0, %v4856
    %v4858 = vrot.slane %v4784, %v4857
    %v4860 = vadd.f32 %v4858, %v4833
    %v4861 = vadd.f32 %v4858, %v4836
    %v4862 = vadd.f32 %v4858, %v4841
    %v4863 = vadd.f32 %v4858, %v4844
    %v4864 = vadd.f32 %v4858, %v4849
    %v4867 = vunpack.c.l.b16 %v4776
    %v4868 = vunpack.c.l.b16 %v4777
    %v4869 = vpack.c.b16 %v4868, %v4867
    %4871 = vmatprep.subr.bf16.mxu0 0
    %4872 = vmatpush1.bf16.msra.mxu0 %v4869
    %4873 = vmatprep.subr.bf16.mxu0 0
    %4874 = vmatpush1.bf16.msra.mxu0 0
    %4875 = vmatprep.subr.bf16.mxu0 0
    %4876 = vmatpush1.bf16.msra.mxu0 0
    %4877 = vmatprep.subr.bf16.mxu0 0
    %4878 = vmatpush1.bf16.msra.mxu0 0
    %4879 = vmatprep.subr.bf16.mxu0 0
    %4880 = vmatpush1.bf16.msra.mxu0 0
    %4881 = vmatprep.subr.bf16.mxu0 0
    %4882 = vmatpush1.bf16.msra.mxu0 0
    %4883 = vmatprep.subr.bf16.mxu0 0
    %4884 = vmatpush1.bf16.msra.mxu0 0
    %4885 = vmatprep.subr.bf16.mxu0 0
    %4886 = vmatpush1.bf16.msra.mxu0 0
    %4887 = vmatprep.subr.bf16.mxu0 0
    %4888 = vmatpush1.bf16.msra.mxu0 0
    %4889 = vmatprep.subr.bf16.mxu0 0
    %4890 = vmatpush1.bf16.msra.mxu0 0
    %4891 = vmatprep.subr.bf16.mxu0 0
    %4892 = vmatpush1.bf16.msra.mxu0 0
    %4893 = vmatprep.subr.bf16.mxu0 0
    %4894 = vmatpush1.bf16.msra.mxu0 0
    %4895 = vmatprep.subr.bf16.mxu0 0
    %4896 = vmatpush1.bf16.msra.mxu0 0
    %4897 = vmatprep.subr.bf16.mxu0 0
    %4898 = vmatpush1.bf16.msra.mxu0 0
    %4899 = vmatprep.subr.bf16.mxu0 0
    %4900 = vmatpush1.bf16.msra.mxu0 0
    %4901 = vmatprep.subr.bf16.mxu0 0
    %4902 = vmatpush1.bf16.msra.mxu0 0
    %4903 = vmatprep.mubr.bf16.mxu0 0
    %4904 = vmatmul.mubr.bf16.gmra.mrb[0].mxu0 %v3984
    %v4905 = vpop.f32.mrb[0].mxu0
    %v4906 = vadd.f32 0.0, %v4905
    %v4907 = vpop.f32.mrb[0].mxu0
    %v4908 = vpop.f32.mrb[0].mxu0
    %v4909 = vadd.f32 0.0, %v4908
    %v4910 = vpop.f32.mrb[0].mxu0
    %4911 = vmatprep.mubr.bf16.mxu0 0
    %4912 = vmatmul.mubr.bf16.gmra.mrb[0].mxu0 %v3987
    %v4913 = vpop.f32.mrb[0].mxu0
    %v4914 = vadd.f32 0.0, %v4913
    %v4915 = vpop.f32.mrb[0].mxu0
    %v4916 = vpop.f32.mrb[0].mxu0
    %v4917 = vadd.f32 0.0, %v4916
    %v4918 = vpop.f32.mrb[0].mxu0
    %4919 = vmatprep.mubr.bf16.mxu0 0
    %4920 = vmatmul.mubr.bf16.gmra.mrb[0].mxu0 %v3990
    %v4921 = vpop.f32.mrb[0].mxu0
    %v4922 = vadd.f32 0.0, %v4921
    %v4923 = vpop.f32.mrb[0].mxu0
    %v4924 = vpop.f32.mrb[0].mxu0
    %v4925 = vpop.f32.mrb[0].mxu0
    %4926 = vdwg.mxu0
    %v4927 = vadd.f32 %v4860, %v4906
    %v4928 = vadd.f32 %v4861, %v4909
    %v4929 = vadd.f32 %v4862, %v4914
    %v4930 = vadd.f32 %v4863, %v4917
    %v4931 = vadd.f32 %v4864, %v4922
    %v4934 = vunpack.c.l.b16 %v4778
    %v4935 = vunpack.c.l.b16 %v4779
    %v4936 = vpack.c.b16 %v4935, %v4934
    %4938 = vmatprep.subr.bf16.mxu0 0
    %4939 = vmatpush1.bf16.msra.mxu0 %v4936
    %4940 = vmatprep.subr.bf16.mxu0 0
    %4941 = vmatpush1.bf16.msra.mxu0 0
    %4942 = vmatprep.subr.bf16.mxu0 0
    %4943 = vmatpush1.bf16.msra.mxu0 0
    %4944 = vmatprep.subr.bf16.mxu0 0
    %4945 = vmatpush1.bf16.msra.mxu0 0
    %4946 = vmatprep.subr.bf16.mxu0 0
    %4947 = vmatpush1.bf16.msra.mxu0 0
    %4948 = vmatprep.subr.bf16.mxu0 0
    %4949 = vmatpush1.bf16.msra.mxu0 0
    %4950 = vmatprep.subr.bf16.mxu0 0
    %4951 = vmatpush1.bf16.msra.mxu0 0
    %4952 = vmatprep.subr.bf16.mxu0 0
    %4953 = vmatpush1.bf16.msra.mxu0 0
    %4954 = vmatprep.subr.bf16.mxu0 0
    %4955 = vmatpush1.bf16.msra.mxu0 0
    %4956 = vmatprep.subr.bf16.mxu0 0
    %4957 = vmatpush1.bf16.msra.mxu0 0
    %4958 = vmatprep.subr.bf16.mxu0 0
    %4959 = vmatpush1.bf16.msra.mxu0 0
    %4960 = vmatprep.subr.bf16.mxu0 0
    %4961 = vmatpush1.bf16.msra.mxu0 0
    %4962 = vmatprep.subr.bf16.mxu0 0
    %4963 = vmatpush1.bf16.msra.mxu0 0
    %4964 = vmatprep.subr.bf16.mxu0 0
    %4965 = vmatpush1.bf16.msra.mxu0 0
    %4966 = vmatprep.subr.bf16.mxu0 0
    %4967 = vmatpush1.bf16.msra.mxu0 0
    %4968 = vmatprep.subr.bf16.mxu0 0
    %4969 = vmatpush1.bf16.msra.mxu0 0
    %4970 = vmatprep.mubr.bf16.mxu0 0
    %4971 = vmatmul.mubr.bf16.gmra.mrb[0].mxu0 %v4072
    %v4972 = vpop.f32.mrb[0].mxu0
    %v4973 = vadd.f32 0.0, %v4972
    %v4974 = vpop.f32.mrb[0].mxu0
    %v4975 = vpop.f32.mrb[0].mxu0
    %v4976 = vadd.f32 0.0, %v4975
    %v4977 = vpop.f32.mrb[0].mxu0
    %4978 = vmatprep.mubr.bf16.mxu0 0
    %4979 = vmatmul.mubr.bf16.gmra.mrb[0].mxu0 %v4075
    %v4980 = vpop.f32.mrb[0].mxu0
    %v4981 = vadd.f32 0.0, %v4980
    %v4982 = vpop.f32.mrb[0].mxu0
    %v4983 = vpop.f32.mrb[0].mxu0
    %v4984 = vadd.f32 0.0, %v4983
    %v4985 = vpop.f32.mrb[0].mxu0
    %4986 = vmatprep.mubr.bf16.mxu0 0
    %4987 = vmatmul.mubr.bf16.gmra.mrb[0].mxu0 %v4078
    %v4988 = vpop.f32.mrb[0].mxu0
    %v4989 = vadd.f32 0.0, %v4988
    %v4990 = vpop.f32.mrb[0].mxu0
    %v4991 = vpop.f32.mrb[0].mxu0
    %v4992 = vpop.f32.mrb[0].mxu0
    %4993 = vdwg.mxu0
    %v4994 = vadd.f32 %v4927, %v4973
    %v4995 = vadd.f32 %v4928, %v4976
    %v4996 = vadd.f32 %v4929, %v4981
    %v4997 = vadd.f32 %v4930, %v4984
    %v4998 = vadd.f32 %v4931, %v4989
    %v5001 = vunpack.c.l.b16 %v4780
    %v5002 = vunpack.c.l.b16 %v4781
    %v5003 = vpack.c.b16 %v5002, %v5001
    %5005 = vmatprep.subr.bf16.mxu0 0
    %5006 = vmatpush1.bf16.msra.mxu0 %v5003
    %5007 = vmatprep.subr.bf16.mxu0 0
    %5008 = vmatpush1.bf16.msra.mxu0 0
    %5009 = vmatprep.subr.bf16.mxu0 0
    %5010 = vmatpush1.bf16.msra.mxu0 0
    %5011 = vmatprep.subr.bf16.mxu0 0
    %5012 = vmatpush1.bf16.msra.mxu0 0
    %5013 = vmatprep.subr.bf16.mxu0 0
    %5014 = vmatpush1.bf16.msra.mxu0 0
    %5015 = vmatprep.subr.bf16.mxu0 0
    %5016 = vmatpush1.bf16.msra.mxu0 0
    %5017 = vmatprep.subr.bf16.mxu0 0
    %5018 = vmatpush1.bf16.msra.mxu0 0
    %5019 = vmatprep.subr.bf16.mxu0 0
    %5020 = vmatpush1.bf16.msra.mxu0 0
    %5021 = vmatprep.subr.bf16.mxu0 0
    %5022 = vmatpush1.bf16.msra.mxu0 0
    %5023 = vmatprep.subr.bf16.mxu0 0
    %5024 = vmatpush1.bf16.msra.mxu0 0
    %5025 = vmatprep.subr.bf16.mxu0 0
    %5026 = vmatpush1.bf16.msra.mxu0 0
    %5027 = vmatprep.subr.bf16.mxu0 0
    %5028 = vmatpush1.bf16.msra.mxu0 0
    %5029 = vmatprep.subr.bf16.mxu0 0
    %5030 = vmatpush1.bf16.msra.mxu0 0
    %5031 = vmatprep.subr.bf16.mxu0 0
    %5032 = vmatpush1.bf16.msra.mxu0 0
    %5033 = vmatprep.subr.bf16.mxu0 0
    %5034 = vmatpush1.bf16.msra.mxu0 0
    %5035 = vmatprep.subr.bf16.mxu0 0
    %5036 = vmatpush1.bf16.msra.mxu0 0
    %5037 = vmatprep.mubr.bf16.mxu0 0
    %5038 = vmatmul.mubr.bf16.gmra.mrb[0].mxu0 %v4154
    %v5039 = vpop.f32.mrb[0].mxu0
    %v5040 = vadd.f32 0.0, %v5039
    %v5041 = vpop.f32.mrb[0].mxu0
    %v5042 = vpop.f32.mrb[0].mxu0
    %v5043 = vadd.f32 0.0, %v5042
    %v5044 = vpop.f32.mrb[0].mxu0
    %5045 = vmatprep.mubr.bf16.mxu0 0
    %5046 = vmatmul.mubr.bf16.gmra.mrb[0].mxu0 %v4157
    %v5047 = vpop.f32.mrb[0].mxu0
    %v5048 = vadd.f32 0.0, %v5047
    %v5049 = vpop.f32.mrb[0].mxu0
    %v5050 = vpop.f32.mrb[0].mxu0
    %v5051 = vadd.f32 0.0, %v5050
    %v5052 = vpop.f32.mrb[0].mxu0
    %5053 = vmatprep.mubr.bf16.mxu0 0
    %5054 = vmatmul.mubr.bf16.gmra.mrb[0].mxu0 %v4160
    %v5055 = vpop.f32.mrb[0].mxu0
    %v5056 = vadd.f32 0.0, %v5055
    %v5057 = vpop.f32.mrb[0].mxu0
    %v5058 = vpop.f32.mrb[0].mxu0
    %v5059 = vpop.f32.mrb[0].mxu0
    %5060 = vdwg.mxu0
    %v5061 = vadd.f32 %v4994, %v5040
    %v5062 = vadd.f32 %v4995, %v5043
    %v5063 = vadd.f32 %v4996, %v5048
    %v5064 = vadd.f32 %v4997, %v5051
    %v5065 = vadd.f32 %v4998, %v5056
    %vm5066 = vcmask 1043456
    %v5067 = vrot.slane %v3951, 4
    %v5068 = vrot.slane %v3947, 4
    %v5069 = vsel %vm5066, %v5067, %v5068
    %v5070 = vrot.slane %v3953, 4
    %v5071 = vsel %vm5066, %v5068, %v5070
    %v5074 = vunpack.c.l.b16 %v4782
    %v5075 = vunpack.c.l.b16 %v4783
    %v5076 = vpack.c.b16 %v5075, %v5074
    %v5079 = vsel %vm106, %v5069, 0
    %v5082 = vsel %vm106, %v5071, 0
    %v5085 = vsel %vm106, %v5070, 0
    %5087 = vmatprep.subr.bf16.mxu0 0
    %5088 = vmatpush1.bf16.msra.mxu0 %v5076
    %5089 = vmatprep.subr.bf16.mxu0 0
    %5090 = vmatpush1.bf16.msra.mxu0 0
    %5091 = vmatprep.subr.bf16.mxu0 0
    %5092 = vmatpush1.bf16.msra.mxu0 0
    %5093 = vmatprep.subr.bf16.mxu0 0
    %5094 = vmatpush1.bf16.msra.mxu0 0
    %5095 = vmatprep.subr.bf16.mxu0 0
    %5096 = vmatpush1.bf16.msra.mxu0 0
    %5097 = vmatprep.subr.bf16.mxu0 0
    %5098 = vmatpush1.bf16.msra.mxu0 0
    %5099 = vmatprep.subr.bf16.mxu0 0
    %5100 = vmatpush1.bf16.msra.mxu0 0
    %5101 = vmatprep.subr.bf16.mxu0 0
    %5102 = vmatpush1.bf16.msra.mxu0 0
    %5103 = vmatprep.subr.bf16.mxu0 0
    %5104 = vmatpush1.bf16.msra.mxu0 0
    %5105 = vmatprep.subr.bf16.mxu0 0
    %5106 = vmatpush1.bf16.msra.mxu0 0
    %5107 = vmatprep.subr.bf16.mxu0 0
    %5108 = vmatpush1.bf16.msra.mxu0 0
    %5109 = vmatprep.subr.bf16.mxu0 0
    %5110 = vmatpush1.bf16.msra.mxu0 0
    %5111 = vmatprep.subr.bf16.mxu0 0
    %5112 = vmatpush1.bf16.msra.mxu0 0
    %5113 = vmatprep.subr.bf16.mxu0 0
    %5114 = vmatpush1.bf16.msra.mxu0 0
    %5115 = vmatprep.subr.bf16.mxu0 0
    %5116 = vmatpush1.bf16.msra.mxu0 0
    %5117 = vmatprep.subr.bf16.mxu0 0
    %5118 = vmatpush1.bf16.msra.mxu0 0
    %5119 = vmatprep.mubr.bf16.mxu0 0
    %5120 = vmatmul.mubr.bf16.gmra.mrb[0].mxu0 %v5079
    %v5121 = vpop.f32.mrb[0].mxu0
    %v5122 = vadd.f32 0.0, %v5121
    %v5123 = vpop.f32.mrb[0].mxu0
    %v5124 = vpop.f32.mrb[0].mxu0
    %v5125 = vadd.f32 0.0, %v5124
    %v5126 = vpop.f32.mrb[0].mxu0
    %5127 = vmatprep.mubr.bf16.mxu0 0
    %5128 = vmatmul.mubr.bf16.gmra.mrb[0].mxu0 %v5082
    %v5129 = vpop.f32.mrb[0].mxu0
    %v5130 = vadd.f32 0.0, %v5129
    %v5131 = vpop.f32.mrb[0].mxu0
    %v5132 = vpop.f32.mrb[0].mxu0
    %v5133 = vadd.f32 0.0, %v5132
    %v5134 = vpop.f32.mrb[0].mxu0
    %5135 = vmatprep.mubr.bf16.mxu0 0
    %5136 = vmatmul.mubr.bf16.gmra.mrb[0].mxu0 %v5085
    %v5137 = vpop.f32.mrb[0].mxu0
    %v5138 = vadd.f32 0.0, %v5137
    %v5139 = vpop.f32.mrb[0].mxu0
    %v5140 = vpop.f32.mrb[0].mxu0
    %v5141 = vpop.f32.mrb[0].mxu0
    %5142 = vdwg.mxu0
    %v5143 = vadd.f32 %v5061, %v5122
    %v5144 = vadd.f32 %v5062, %v5125
    %v5145 = vadd.f32 %v5063, %v5130
    %v5146 = vadd.f32 %v5064, %v5133
    %v5147 = vadd.f32 %v5065, %v5138
    %v5148 = vmul.f32 %v5143, 1.442695
    %v5149 = vpow.pop %v5148
    %v5150 = vmul.f32 %v5144, 1.442695
    %v5151 = vpow.pop %v5150
    %v5152 = vmul.f32 %v5145, 1.442695
    %v5153 = vpow.pop %v5152
    %v5154 = vmul.f32 %v5146, 1.442695
    %v5155 = vpow.pop %v5154
    %v5156 = vmul.f32 %v5147, 1.442695
    %v5157 = vpow.pop %v5156
    %v5158 = vadd.f32 %v5149, 1.0
    %v5159 = vadd.f32 %v5151, 1.0
    %v5160 = vadd.f32 %v5153, 1.0
    %v5161 = vadd.f32 %v5155, 1.0
    %v5162 = vadd.f32 %v5157, 1.0
    %v5163 = vmul.f32 %v5158, %v5158
    %v5164 = vmul.f32 %v5159, %v5159
    %v5165 = vmul.f32 %v5160, %v5160
    %v5166 = vmul.f32 %v5161, %v5161
    %v5167 = vmul.f32 %v5162, %v5162
    %v5168 = vadd.f32 %v5163, 1.0
    %v5169 = vadd.f32 %v5164, 1.0
    %v5170 = vadd.f32 %v5165, 1.0
    %v5171 = vadd.f32 %v5166, 1.0
    %v5172 = vadd.f32 %v5167, 1.0
    %v5173 = vrcp.pop %v5168
    %v5174 = vrcp.pop %v5169
    %v5175 = vrcp.pop %v5170
    %v5176 = vrcp.pop %v5171
    %v5177 = vrcp.pop %v5172
    %v5178 = vmul.f32 %v5173, 2.0
    %v5179 = vmul.f32 %v5174, 2.0
    %v5180 = vmul.f32 %v5175, 2.0
    %v5181 = vmul.f32 %v5176, 2.0
    %v5182 = vmul.f32 %v5177, 2.0
    %v5183 = vsub.f32 1.0, %v5178
    %v5184 = vsub.f32 1.0, %v5179
    %v5185 = vsub.f32 1.0, %v5180
    %v5186 = vsub.f32 1.0, %v5181
    %v5187 = vsub.f32 1.0, %v5182
    %v5188 = vmul.f32 %v5143, %v5183
    %v5189 = vmul.f32 %v5144, %v5184
    %v5190 = vmul.f32 %v5145, %v5185
    %v5191 = vmul.f32 %v5146, %v5186
    %v5192 = vmul.f32 %v5147, %v5187
    %v5193 = vpack.c.bf16 %v5189, %v5188
    %v5194 = vpack.c.bf16 %v5191, %v5190
    %v5195 = vpack.c.bf16 %v5192, %v5192
    %v5197 = vrot.slane %v5193, 1
    %v5199 = vmax.bf16 %v5193, %v5197
    %v5200 = vld [vmem:[%s13 + $0x28] sm:$0xf]
    %v5202 = vsel %vm4276, %v5199, 0
    %v5205 = vsel %vm525, %v5200, 0
    %5207 = vmatprep.subr.bf16.mxu0 0
    %5208 = vmatpush1.bf16.msra.mxu0 %v5205
    %5209 = vmatprep.subr.bf16.mxu0 0
    %5210 = vmatpush1.bf16.msra.mxu0 0
    %5211 = vmatprep.subr.bf16.mxu0 0
    %5212 = vmatpush1.bf16.msra.mxu0 0
    %5213 = vmatprep.subr.bf16.mxu0 0
    %5214 = vmatpush1.bf16.msra.mxu0 0
    %5215 = vmatprep.subr.bf16.mxu0 0
    %5216 = vmatpush1.bf16.msra.mxu0 0
    %5217 = vmatprep.subr.bf16.mxu0 0
    %5218 = vmatpush1.bf16.msra.mxu0 0
    %5219 = vmatprep.subr.bf16.mxu0 0
    %5220 = vmatpush1.bf16.msra.mxu0 0
    %5221 = vmatprep.subr.bf16.mxu0 0
    %5222 = vmatpush1.bf16.msra.mxu0 0
    %5223 = vmatprep.subr.bf16.mxu0 0
    %5224 = vmatpush1.bf16.msra.mxu0 0
    %5225 = vmatprep.subr.bf16.mxu0 0
    %5226 = vmatpush1.bf16.msra.mxu0 0
    %5227 = vmatprep.subr.bf16.mxu0 0
    %5228 = vmatpush1.bf16.msra.mxu0 0
    %5229 = vmatprep.subr.bf16.mxu0 0
    %5230 = vmatpush1.bf16.msra.mxu0 0
    %5231 = vmatprep.subr.bf16.mxu0 0
    %5232 = vmatpush1.bf16.msra.mxu0 0
    %5233 = vmatprep.subr.bf16.mxu0 0
    %5234 = vmatpush1.bf16.msra.mxu0 0
    %5235 = vmatprep.subr.bf16.mxu0 0
    %5236 = vmatpush1.bf16.msra.mxu0 0
    %5237 = vmatprep.subr.bf16.mxu0 0
    %5238 = vmatpush1.bf16.msra.mxu0 0
    %5239 = vmatprep.mubr.bf16.mxu0 0
    %5240 = vmatmul.mubr.bf16.gmra.mrb[0].mxu0 %v5202
    %v5241 = vpop.f32.mrb[0].mxu0
    %v5242 = vadd.f32 0.0, %v5241
    %v5243 = vpop.f32.mrb[0].mxu0
    %v5244 = vpop.f32.mrb[0].mxu0
    %v5245 = vpop.f32.mrb[0].mxu0
    %5246 = vdwg.mxu0
    %v5247 = vadd.f32 %v4773, %v5242
    %v5248 = vld [vmem:[%s13 + $0x2c] sm:$0xf]
    %v5250 = vrot.slane %v5199, 2
    %v5252 = vsel %vm4276, %v5250, 0
    %v5255 = vsel %vm525, %v5248, 0
    %5257 = vmatprep.subr.bf16.mxu0 0
    %5258 = vmatpush1.bf16.msra.mxu0 %v5255
    %5259 = vmatprep.subr.bf16.mxu0 0
    %5260 = vmatpush1.bf16.msra.mxu0 0
    %5261 = vmatprep.subr.bf16.mxu0 0
    %5262 = vmatpush1.bf16.msra.mxu0 0
    %5263 = vmatprep.subr.bf16.mxu0 0
    %5264 = vmatpush1.bf16.msra.mxu0 0
    %5265 = vmatprep.subr.bf16.mxu0 0
    %5266 = vmatpush1.bf16.msra.mxu0 0
    %5267 = vmatprep.subr.bf16.mxu0 0
    %5268 = vmatpush1.bf16.msra.mxu0 0
    %5269 = vmatprep.subr.bf16.mxu0 0
    %5270 = vmatpush1.bf16.msra.mxu0 0
    %5271 = vmatprep.subr.bf16.mxu0 0
    %5272 = vmatpush1.bf16.msra.mxu0 0
    %5273 = vmatprep.subr.bf16.mxu0 0
    %5274 = vmatpush1.bf16.msra.mxu0 0
    %5275 = vmatprep.subr.bf16.mxu0 0
    %5276 = vmatpush1.bf16.msra.mxu0 0
    %5277 = vmatprep.subr.bf16.mxu0 0
    %5278 = vmatpush1.bf16.msra.mxu0 0
    %5279 = vmatprep.subr.bf16.mxu0 0
    %5280 = vmatpush1.bf16.msra.mxu0 0
    %5281 = vmatprep.subr.bf16.mxu0 0
    %5282 = vmatpush1.bf16.msra.mxu0 0
    %5283 = vmatprep.subr.bf16.mxu0 0
    %5284 = vmatpush1.bf16.msra.mxu0 0
    %5285 = vmatprep.subr.bf16.mxu0 0
    %5286 = vmatpush1.bf16.msra.mxu0 0
    %5287 = vmatprep.subr.bf16.mxu0 0
    %5288 = vmatpush1.bf16.msra.mxu0 0
    %5289 = vmatprep.mubr.bf16.mxu0 0
    %5290 = vmatmul.mubr.bf16.gmra.mrb[0].mxu0 %v5252
    %v5291 = vpop.f32.mrb[0].mxu0
    %v5292 = vadd.f32 0.0, %v5291
    %v5293 = vpop.f32.mrb[0].mxu0
    %v5294 = vpop.f32.mrb[0].mxu0
    %v5295 = vpop.f32.mrb[0].mxu0
    %5296 = vdwg.mxu0
    %v5297 = vadd.f32 %v5247, %v5292
    %v5298 = vld [vmem:[%s13 + $0x30] sm:$0xf]
    %v5299 = vrot.slane %v5199, 4
    %v5301 = vsel %vm4276, %v5299, 0
    %v5304 = vsel %vm525, %v5298, 0
    %5306 = vmatprep.subr.bf16.mxu0 0
    %5307 = vmatpush1.bf16.msra.mxu0 %v5304
    %5308 = vmatprep.subr.bf16.mxu0 0
    %5309 = vmatpush1.bf16.msra.mxu0 0
    %5310 = vmatprep.subr.bf16.mxu0 0
    %5311 = vmatpush1.bf16.msra.mxu0 0
    %5312 = vmatprep.subr.bf16.mxu0 0
    %5313 = vmatpush1.bf16.msra.mxu0 0
    %5314 = vmatprep.subr.bf16.mxu0 0
    %5315 = vmatpush1.bf16.msra.mxu0 0
    %5316 = vmatprep.subr.bf16.mxu0 0
    %5317 = vmatpush1.bf16.msra.mxu0 0
    %5318 = vmatprep.subr.bf16.mxu0 0
    %5319 = vmatpush1.bf16.msra.mxu0 0
    %5320 = vmatprep.subr.bf16.mxu0 0
    %5321 = vmatpush1.bf16.msra.mxu0 0
    %5322 = vmatprep.subr.bf16.mxu0 0
    %5323 = vmatpush1.bf16.msra.mxu0 0
    %5324 = vmatprep.subr.bf16.mxu0 0
    %5325 = vmatpush1.bf16.msra.mxu0 0
    %5326 = vmatprep.subr.bf16.mxu0 0
    %5327 = vmatpush1.bf16.msra.mxu0 0
    %5328 = vmatprep.subr.bf16.mxu0 0
    %5329 = vmatpush1.bf16.msra.mxu0 0
    %5330 = vmatprep.subr.bf16.mxu0 0
    %5331 = vmatpush1.bf16.msra.mxu0 0
    %5332 = vmatprep.subr.bf16.mxu0 0
    %5333 = vmatpush1.bf16.msra.mxu0 0
    %5334 = vmatprep.subr.bf16.mxu0 0
    %5335 = vmatpush1.bf16.msra.mxu0 0
    %5336 = vmatprep.subr.bf16.mxu0 0
    %5337 = vmatpush1.bf16.msra.mxu0 0
    %5338 = vmatprep.mubr.bf16.mxu0 0
    %5339 = vmatmul.mubr.bf16.gmra.mrb[0].mxu0 %v5301
    %v5340 = vpop.f32.mrb[0].mxu0
    %v5341 = vadd.f32 0.0, %v5340
    %v5342 = vpop.f32.mrb[0].mxu0
    %v5343 = vpop.f32.mrb[0].mxu0
    %v5344 = vpop.f32.mrb[0].mxu0
    %5345 = vdwg.mxu0
    %v5346 = vadd.f32 %v5297, %v5341
    %v5347 = vld [vmem:[%s13 + $0x34] sm:$0xf]
    %v5348 = vrot.slane %v5199, 6
    %v5350 = vsel %vm4276, %v5348, 0
    %v5353 = vsel %vm525, %v5347, 0
    %5355 = vmatprep.subr.bf16.mxu0 0
    %5356 = vmatpush1.bf16.msra.mxu0 %v5353
    %5357 = vmatprep.subr.bf16.mxu0 0
    %5358 = vmatpush1.bf16.msra.mxu0 0
    %5359 = vmatprep.subr.bf16.mxu0 0
    %5360 = vmatpush1.bf16.msra.mxu0 0
    %5361 = vmatprep.subr.bf16.mxu0 0
    %5362 = vmatpush1.bf16.msra.mxu0 0
    %5363 = vmatprep.subr.bf16.mxu0 0
    %5364 = vmatpush1.bf16.msra.mxu0 0
    %5365 = vmatprep.subr.bf16.mxu0 0
    %5366 = vmatpush1.bf16.msra.mxu0 0
    %5367 = vmatprep.subr.bf16.mxu0 0
    %5368 = vmatpush1.bf16.msra.mxu0 0
    %5369 = vmatprep.subr.bf16.mxu0 0
    %5370 = vmatpush1.bf16.msra.mxu0 0
    %5371 = vmatprep.subr.bf16.mxu0 0
    %5372 = vmatpush1.bf16.msra.mxu0 0
    %5373 = vmatprep.subr.bf16.mxu0 0
    %5374 = vmatpush1.bf16.msra.mxu0 0
    %5375 = vmatprep.subr.bf16.mxu0 0
    %5376 = vmatpush1.bf16.msra.mxu0 0
    %5377 = vmatprep.subr.bf16.mxu0 0
    %5378 = vmatpush1.bf16.msra.mxu0 0
    %5379 = vmatprep.subr.bf16.mxu0 0
    %5380 = vmatpush1.bf16.msra.mxu0 0
    %5381 = vmatprep.subr.bf16.mxu0 0
    %5382 = vmatpush1.bf16.msra.mxu0 0
    %5383 = vmatprep.subr.bf16.mxu0 0
    %5384 = vmatpush1.bf16.msra.mxu0 0
    %5385 = vmatprep.subr.bf16.mxu0 0
    %5386 = vmatpush1.bf16.msra.mxu0 0
    %5387 = vmatprep.mubr.bf16.mxu0 0
    %5388 = vmatmul.mubr.bf16.gmra.mrb[0].mxu0 %v5350
    %v5389 = vpop.f32.mrb[0].mxu0
    %v5390 = vadd.f32 0.0, %v5389
    %v5391 = vpop.f32.mrb[0].mxu0
    %v5392 = vpop.f32.mrb[0].mxu0
    %v5393 = vpop.f32.mrb[0].mxu0
    %5394 = vdwg.mxu0
    %v5395 = vadd.f32 %v5346, %v5390
    %v5397 = vrot.slane %v5194, 1
    %v5399 = vmax.bf16 %v5194, %v5397
    %v5400 = vld [vmem:[%s13 + $0x38] sm:$0xf]
    %v5402 = vsel %vm4276, %v5399, 0
    %v5405 = vsel %vm525, %v5400, 0
    %5407 = vmatprep.subr.bf16.mxu0 0
    %5408 = vmatpush1.bf16.msra.mxu0 %v5405
    %5409 = vmatprep.subr.bf16.mxu0 0
    %5410 = vmatpush1.bf16.msra.mxu0 0
    %5411 = vmatprep.subr.bf16.mxu0 0
    %5412 = vmatpush1.bf16.msra.mxu0 0
    %5413 = vmatprep.subr.bf16.mxu0 0
    %5414 = vmatpush1.bf16.msra.mxu0 0
    %5415 = vmatprep.subr.bf16.mxu0 0
    %5416 = vmatpush1.bf16.msra.mxu0 0
    %5417 = vmatprep.subr.bf16.mxu0 0
    %5418 = vmatpush1.bf16.msra.mxu0 0
    %5419 = vmatprep.subr.bf16.mxu0 0
    %5420 = vmatpush1.bf16.msra.mxu0 0
    %5421 = vmatprep.subr.bf16.mxu0 0
    %5422 = vmatpush1.bf16.msra.mxu0 0
    %5423 = vmatprep.subr.bf16.mxu0 0
    %5424 = vmatpush1.bf16.msra.mxu0 0
    %5425 = vmatprep.subr.bf16.mxu0 0
    %5426 = vmatpush1.bf16.msra.mxu0 0
    %5427 = vmatprep.subr.bf16.mxu0 0
    %5428 = vmatpush1.bf16.msra.mxu0 0
    %5429 = vmatprep.subr.bf16.mxu0 0
    %5430 = vmatpush1.bf16.msra.mxu0 0
    %5431 = vmatprep.subr.bf16.mxu0 0
    %5432 = vmatpush1.bf16.msra.mxu0 0
    %5433 = vmatprep.subr.bf16.mxu0 0
    %5434 = vmatpush1.bf16.msra.mxu0 0
    %5435 = vmatprep.subr.bf16.mxu0 0
    %5436 = vmatpush1.bf16.msra.mxu0 0
    %5437 = vmatprep.subr.bf16.mxu0 0
    %5438 = vmatpush1.bf16.msra.mxu0 0
    %5439 = vmatprep.mubr.bf16.mxu0 0
    %5440 = vmatmul.mubr.bf16.gmra.mrb[0].mxu0 %v5402
    %v5441 = vpop.f32.mrb[0].mxu0
    %v5442 = vadd.f32 0.0, %v5441
    %v5443 = vpop.f32.mrb[0].mxu0
    %v5444 = vpop.f32.mrb[0].mxu0
    %v5445 = vpop.f32.mrb[0].mxu0
    %5446 = vdwg.mxu0
    %v5447 = vadd.f32 %v5395, %v5442
    %v5448 = vld [vmem:[%s13 + $0x3c] sm:$0xf]
    %v5450 = vrot.slane %v5399, 2
    %v5452 = vsel %vm4276, %v5450, 0
    %v5455 = vsel %vm525, %v5448, 0
    %5457 = vmatprep.subr.bf16.mxu0 0
    %5458 = vmatpush1.bf16.msra.mxu0 %v5455
    %5459 = vmatprep.subr.bf16.mxu0 0
    %5460 = vmatpush1.bf16.msra.mxu0 0
    %5461 = vmatprep.subr.bf16.mxu0 0
    %5462 = vmatpush1.bf16.msra.mxu0 0
    %5463 = vmatprep.subr.bf16.mxu0 0
    %5464 = vmatpush1.bf16.msra.mxu0 0
    %5465 = vmatprep.subr.bf16.mxu0 0
    %5466 = vmatpush1.bf16.msra.mxu0 0
    %5467 = vmatprep.subr.bf16.mxu0 0
    %5468 = vmatpush1.bf16.msra.mxu0 0
    %5469 = vmatprep.subr.bf16.mxu0 0
    %5470 = vmatpush1.bf16.msra.mxu0 0
    %5471 = vmatprep.subr.bf16.mxu0 0
    %5472 = vmatpush1.bf16.msra.mxu0 0
    %5473 = vmatprep.subr.bf16.mxu0 0
    %5474 = vmatpush1.bf16.msra.mxu0 0
    %5475 = vmatprep.subr.bf16.mxu0 0
    %5476 = vmatpush1.bf16.msra.mxu0 0
    %5477 = vmatprep.subr.bf16.mxu0 0
    %5478 = vmatpush1.bf16.msra.mxu0 0
    %5479 = vmatprep.subr.bf16.mxu0 0
    %5480 = vmatpush1.bf16.msra.mxu0 0
    %5481 = vmatprep.subr.bf16.mxu0 0
    %5482 = vmatpush1.bf16.msra.mxu0 0
    %5483 = vmatprep.subr.bf16.mxu0 0
    %5484 = vmatpush1.bf16.msra.mxu0 0
    %5485 = vmatprep.subr.bf16.mxu0 0
    %5486 = vmatpush1.bf16.msra.mxu0 0
    %5487 = vmatprep.subr.bf16.mxu0 0
    %5488 = vmatpush1.bf16.msra.mxu0 0
    %5489 = vmatprep.mubr.bf16.mxu0 0
    %5490 = vmatmul.mubr.bf16.gmra.mrb[0].mxu0 %v5452
    %v5491 = vpop.f32.mrb[0].mxu0
    %v5492 = vadd.f32 0.0, %v5491
    %v5493 = vpop.f32.mrb[0].mxu0
    %v5494 = vpop.f32.mrb[0].mxu0
    %v5495 = vpop.f32.mrb[0].mxu0
    %5496 = vdwg.mxu0
    %v5497 = vadd.f32 %v5447, %v5492
    %v5498 = vld [vmem:[%s13 + $0x40] sm:$0xf]
    %v5499 = vrot.slane %v5399, 4
    %v5501 = vsel %vm4276, %v5499, 0
    %v5504 = vsel %vm525, %v5498, 0
    %5506 = vmatprep.subr.bf16.mxu0 0
    %5507 = vmatpush1.bf16.msra.mxu0 %v5504
    %5508 = vmatprep.subr.bf16.mxu0 0
    %5509 = vmatpush1.bf16.msra.mxu0 0
    %5510 = vmatprep.subr.bf16.mxu0 0
    %5511 = vmatpush1.bf16.msra.mxu0 0
    %5512 = vmatprep.subr.bf16.mxu0 0
    %5513 = vmatpush1.bf16.msra.mxu0 0
    %5514 = vmatprep.subr.bf16.mxu0 0
    %5515 = vmatpush1.bf16.msra.mxu0 0
    %5516 = vmatprep.subr.bf16.mxu0 0
    %5517 = vmatpush1.bf16.msra.mxu0 0
    %5518 = vmatprep.subr.bf16.mxu0 0
    %5519 = vmatpush1.bf16.msra.mxu0 0
    %5520 = vmatprep.subr.bf16.mxu0 0
    %5521 = vmatpush1.bf16.msra.mxu0 0
    %5522 = vmatprep.subr.bf16.mxu0 0
    %5523 = vmatpush1.bf16.msra.mxu0 0
    %5524 = vmatprep.subr.bf16.mxu0 0
    %5525 = vmatpush1.bf16.msra.mxu0 0
    %5526 = vmatprep.subr.bf16.mxu0 0
    %5527 = vmatpush1.bf16.msra.mxu0 0
    %5528 = vmatprep.subr.bf16.mxu0 0
    %5529 = vmatpush1.bf16.msra.mxu0 0
    %5530 = vmatprep.subr.bf16.mxu0 0
    %5531 = vmatpush1.bf16.msra.mxu0 0
    %5532 = vmatprep.subr.bf16.mxu0 0
    %5533 = vmatpush1.bf16.msra.mxu0 0
    %5534 = vmatprep.subr.bf16.mxu0 0
    %5535 = vmatpush1.bf16.msra.mxu0 0
    %5536 = vmatprep.subr.bf16.mxu0 0
    %5537 = vmatpush1.bf16.msra.mxu0 0
    %5538 = vmatprep.mubr.bf16.mxu0 0
    %5539 = vmatmul.mubr.bf16.gmra.mrb[0].mxu0 %v5501
    %v5540 = vpop.f32.mrb[0].mxu0
    %v5541 = vadd.f32 0.0, %v5540
    %v5542 = vpop.f32.mrb[0].mxu0
    %v5543 = vpop.f32.mrb[0].mxu0
    %v5544 = vpop.f32.mrb[0].mxu0
    %5545 = vdwg.mxu0
    %v5546 = vadd.f32 %v5497, %v5541
    %v5547 = vld [vmem:[%s13 + $0x44] sm:$0xf]
    %v5548 = vrot.slane %v5399, 6
    %v5550 = vsel %vm4276, %v5548, 0
    %v5553 = vsel %vm525, %v5547, 0
    %5555 = vmatprep.subr.bf16.mxu0 0
    %5556 = vmatpush1.bf16.msra.mxu0 %v5553
    %5557 = vmatprep.subr.bf16.mxu0 0
    %5558 = vmatpush1.bf16.msra.mxu0 0
    %5559 = vmatprep.subr.bf16.mxu0 0
    %5560 = vmatpush1.bf16.msra.mxu0 0
    %5561 = vmatprep.subr.bf16.mxu0 0
    %5562 = vmatpush1.bf16.msra.mxu0 0
    %5563 = vmatprep.subr.bf16.mxu0 0
    %5564 = vmatpush1.bf16.msra.mxu0 0
    %5565 = vmatprep.subr.bf16.mxu0 0
    %5566 = vmatpush1.bf16.msra.mxu0 0
    %5567 = vmatprep.subr.bf16.mxu0 0
    %5568 = vmatpush1.bf16.msra.mxu0 0
    %5569 = vmatprep.subr.bf16.mxu0 0
    %5570 = vmatpush1.bf16.msra.mxu0 0
    %5571 = vmatprep.subr.bf16.mxu0 0
    %5572 = vmatpush1.bf16.msra.mxu0 0
    %5573 = vmatprep.subr.bf16.mxu0 0
    %5574 = vmatpush1.bf16.msra.mxu0 0
    %5575 = vmatprep.subr.bf16.mxu0 0
    %5576 = vmatpush1.bf16.msra.mxu0 0
    %5577 = vmatprep.subr.bf16.mxu0 0
    %5578 = vmatpush1.bf16.msra.mxu0 0
    %5579 = vmatprep.subr.bf16.mxu0 0
    %5580 = vmatpush1.bf16.msra.mxu0 0
    %5581 = vmatprep.subr.bf16.mxu0 0
    %5582 = vmatpush1.bf16.msra.mxu0 0
    %5583 = vmatprep.subr.bf16.mxu0 0
    %5584 = vmatpush1.bf16.msra.mxu0 0
    %5585 = vmatprep.subr.bf16.mxu0 0
    %5586 = vmatpush1.bf16.msra.mxu0 0
    %5587 = vmatprep.mubr.bf16.mxu0 0
    %5588 = vmatmul.mubr.bf16.gmra.mrb[0].mxu0 %v5550
    %v5589 = vpop.f32.mrb[0].mxu0
    %v5590 = vadd.f32 0.0, %v5589
    %v5591 = vpop.f32.mrb[0].mxu0
    %v5592 = vpop.f32.mrb[0].mxu0
    %v5593 = vpop.f32.mrb[0].mxu0
    %5594 = vdwg.mxu0
    %v5595 = vadd.f32 %v5546, %v5590
    %v5597 = vrot.slane %v5195, 1
    %v5599 = vmax.bf16 %v5195, %v5597
    %v5600 = vld [vmem:[%s13 + $0x48] sm:$0xf]
    %v5602 = vsel %vm4276, %v5599, 0
    %v5605 = vsel %vm525, %v5600, 0
    %5607 = vmatprep.subr.bf16.mxu0 0
    %5608 = vmatpush1.bf16.msra.mxu0 %v5605
    %5609 = vmatprep.subr.bf16.mxu0 0
    %5610 = vmatpush1.bf16.msra.mxu0 0
    %5611 = vmatprep.subr.bf16.mxu0 0
    %5612 = vmatpush1.bf16.msra.mxu0 0
    %5613 = vmatprep.subr.bf16.mxu0 0
    %5614 = vmatpush1.bf16.msra.mxu0 0
    %5615 = vmatprep.subr.bf16.mxu0 0
    %5616 = vmatpush1.bf16.msra.mxu0 0
    %5617 = vmatprep.subr.bf16.mxu0 0
    %5618 = vmatpush1.bf16.msra.mxu0 0
    %5619 = vmatprep.subr.bf16.mxu0 0
    %5620 = vmatpush1.bf16.msra.mxu0 0
    %5621 = vmatprep.subr.bf16.mxu0 0
    %5622 = vmatpush1.bf16.msra.mxu0 0
    %5623 = vmatprep.subr.bf16.mxu0 0
    %5624 = vmatpush1.bf16.msra.mxu0 0
    %5625 = vmatprep.subr.bf16.mxu0 0
    %5626 = vmatpush1.bf16.msra.mxu0 0
    %5627 = vmatprep.subr.bf16.mxu0 0
    %5628 = vmatpush1.bf16.msra.mxu0 0
    %5629 = vmatprep.subr.bf16.mxu0 0
    %5630 = vmatpush1.bf16.msra.mxu0 0
    %5631 = vmatprep.subr.bf16.mxu0 0
    %5632 = vmatpush1.bf16.msra.mxu0 0
    %5633 = vmatprep.subr.bf16.mxu0 0
    %5634 = vmatpush1.bf16.msra.mxu0 0
    %5635 = vmatprep.subr.bf16.mxu0 0
    %5636 = vmatpush1.bf16.msra.mxu0 0
    %5637 = vmatprep.subr.bf16.mxu0 0
    %5638 = vmatpush1.bf16.msra.mxu0 0
    %5639 = vmatprep.mubr.bf16.mxu0 0
    %5640 = vmatmul.mubr.bf16.gmra.mrb[0].mxu0 %v5602
    %v5641 = vpop.f32.mrb[0].mxu0
    %v5642 = vadd.f32 0.0, %v5641
    %v5643 = vpop.f32.mrb[0].mxu0
    %v5644 = vpop.f32.mrb[0].mxu0
    %v5645 = vpop.f32.mrb[0].mxu0
    %5646 = vdwg.mxu0
    %v5647 = vadd.f32 %v5595, %v5642
    %v5648 = vld [vmem:[%s13 + $0x4c] sm:$0xf]
    %v5650 = vrot.slane %v5599, 2
    %v5652 = vsel %vm4276, %v5650, 0
    %v5655 = vsel %vm525, %v5648, 0
    %5657 = vmatprep.subr.bf16.mxu0 0
    %5658 = vmatpush1.bf16.msra.mxu0 %v5655
    %5659 = vmatprep.subr.bf16.mxu0 0
    %5660 = vmatpush1.bf16.msra.mxu0 0
    %5661 = vmatprep.subr.bf16.mxu0 0
    %5662 = vmatpush1.bf16.msra.mxu0 0
    %5663 = vmatprep.subr.bf16.mxu0 0
    %5664 = vmatpush1.bf16.msra.mxu0 0
    %5665 = vmatprep.subr.bf16.mxu0 0
    %5666 = vmatpush1.bf16.msra.mxu0 0
    %5667 = vmatprep.subr.bf16.mxu0 0
    %5668 = vmatpush1.bf16.msra.mxu0 0
    %5669 = vmatprep.subr.bf16.mxu0 0
    %5670 = vmatpush1.bf16.msra.mxu0 0
    %5671 = vmatprep.subr.bf16.mxu0 0
    %5672 = vmatpush1.bf16.msra.mxu0 0
    %5673 = vmatprep.subr.bf16.mxu0 0
    %5674 = vmatpush1.bf16.msra.mxu0 0
    %5675 = vmatprep.subr.bf16.mxu0 0
    %5676 = vmatpush1.bf16.msra.mxu0 0
    %5677 = vmatprep.subr.bf16.mxu0 0
    %5678 = vmatpush1.bf16.msra.mxu0 0
    %5679 = vmatprep.subr.bf16.mxu0 0
    %5680 = vmatpush1.bf16.msra.mxu0 0
    %5681 = vmatprep.subr.bf16.mxu0 0
    %5682 = vmatpush1.bf16.msra.mxu0 0
    %5683 = vmatprep.subr.bf16.mxu0 0
    %5684 = vmatpush1.bf16.msra.mxu0 0
    %5685 = vmatprep.subr.bf16.mxu0 0
    %5686 = vmatpush1.bf16.msra.mxu0 0
    %5687 = vmatprep.subr.bf16.mxu0 0
    %5688 = vmatpush1.bf16.msra.mxu0 0
    %5689 = vmatprep.mubr.bf16.mxu0 0
    %5690 = vmatmul.mubr.bf16.gmra.mrb[0].mxu0 %v5652
    %v5691 = vpop.f32.mrb[0].mxu0
    %v5692 = vadd.f32 0.0, %v5691
    %v5693 = vpop.f32.mrb[0].mxu0
    %v5694 = vpop.f32.mrb[0].mxu0
    %v5695 = vpop.f32.mrb[0].mxu0
    %5696 = vdwg.mxu0
    %v5697 = vadd.f32 %v5647, %v5692
    %v5698 = vmul.f32 %v5697, 1.442695
    %v5699 = vpow.pop %v5698
    %v5700 = vadd.f32 %v5699, 1.0
    %v5701 = vmul.f32 %v5700, %v5700
    %v5702 = vadd.f32 %v5701, 1.0
    %v5703 = vrcp.pop %v5702
    %v5704 = vmul.f32 %v5703, 2.0
    %v5705 = vsub.f32 1.0, %v5704
    %v5706 = vmul.f32 %v5697, %v5705
    %v5707 = vpack.c.bf16 %v5706, %v5706
    %v5708 = vld [vmem:[%s15] sm:$0xf]
    %v5709 = vld [vmem:[%s15 + $0x4] sm:$0xf]
    %v5710 = vld [vmem:[%s16] sm:$0x1]
    %v5712 = vlaneseq
    %v5713 = vshrl.u32 %v5712, 7
    %v5714 = vsub.s32 0, %v5713
    %v5715 = vrot.slane %v5710, %v5714
    %v5719 = vunpack.c.l.b16 %v5708
    %v5720 = vunpack.c.l.b16 %v5709
    %v5721 = vpack.c.b16 %v5720, %v5719
    %v5724 = vsel %vm106, %v5707, 0
    %5726 = vmatprep.subr.bf16.mxu0 0
    %5727 = vmatpush1.bf16.msra.mxu0 %v5721
    %5728 = vmatprep.subr.bf16.mxu0 0
    %5729 = vmatpush1.bf16.msra.mxu0 0
    %5730 = vmatprep.subr.bf16.mxu0 0
    %5731 = vmatpush1.bf16.msra.mxu0 0
    %5732 = vmatprep.subr.bf16.mxu0 0
    %5733 = vmatpush1.bf16.msra.mxu0 0
    %5734 = vmatprep.subr.bf16.mxu0 0
    %5735 = vmatpush1.bf16.msra.mxu0 0
    %5736 = vmatprep.subr.bf16.mxu0 0
    %5737 = vmatpush1.bf16.msra.mxu0 0
    %5738 = vmatprep.subr.bf16.mxu0 0
    %5739 = vmatpush1.bf16.msra.mxu0 0
    %5740 = vmatprep.subr.bf16.mxu0 0
    %5741 = vmatpush1.bf16.msra.mxu0 0
    %5742 = vmatprep.subr.bf16.mxu0 0
    %5743 = vmatpush1.bf16.msra.mxu0 0
    %5744 = vmatprep.subr.bf16.mxu0 0
    %5745 = vmatpush1.bf16.msra.mxu0 0
    %5746 = vmatprep.subr.bf16.mxu0 0
    %5747 = vmatpush1.bf16.msra.mxu0 0
    %5748 = vmatprep.subr.bf16.mxu0 0
    %5749 = vmatpush1.bf16.msra.mxu0 0
    %5750 = vmatprep.subr.bf16.mxu0 0
    %5751 = vmatpush1.bf16.msra.mxu0 0
    %5752 = vmatprep.subr.bf16.mxu0 0
    %5753 = vmatpush1.bf16.msra.mxu0 0
    %5754 = vmatprep.subr.bf16.mxu0 0
    %5755 = vmatpush1.bf16.msra.mxu0 0
    %5756 = vmatprep.subr.bf16.mxu0 0
    %5757 = vmatpush1.bf16.msra.mxu0 0
    %5758 = vmatprep.mubr.bf16.mxu0 0
    %5759 = vmatmul.mubr.bf16.gmra.mrb[0].mxu0 %v5724
    %v5760 = vpop.f32.mrb[0].mxu0
    %v5761 = vadd.f32 %v5715, %v5760
    %v5762 = vpop.f32.mrb[0].mxu0
    %v5763 = vpop.f32.mrb[0].mxu0
    %v5764 = vpop.f32.mrb[0].mxu0
    %5765 = vdwg.mxu0
    %v5766 = vmul.f32 %v5761, 1.442695
    %v5767 = vpow.pop %v5766
    %v5768 = vadd.f32 %v5767, 1.0
    %v5769 = vmul.f32 %v5768, %v5768
    %v5770 = vadd.f32 %v5769, 1.0
    %v5771 = vrcp.pop %v5770
    %v5772 = vmul.f32 %v5771, 2.0
    %v5773 = vsub.f32 1.0, %v5772
    %v5774 = vmul.f32 %v5761, %v5773
    %v5775 = vpack.c.bf16 %v5774, %v5774
    %v5776 = vld [vmem:[%s17] sm:$0xf]
    %v5777 = vld [vmem:[%s18] sm:$0x1]
    %v5779 = vlaneseq
    %v5780 = vshrl.u32 %v5779, 7
    %v5781 = vsub.s32 0, %v5780
    %v5782 = vrot.slane %v5777, %v5781
    %v5785 = vsel %vm4276, %v5775, 0
    %v5788 = vsel %vm525, %v5776, 0
    %5790 = vmatprep.subr.bf16.mxu0 0
    %5791 = vmatpush1.bf16.msra.mxu0 %v5788
    %5792 = vmatprep.subr.bf16.mxu0 0
    %5793 = vmatpush1.bf16.msra.mxu0 0
    %5794 = vmatprep.subr.bf16.mxu0 0
    %5795 = vmatpush1.bf16.msra.mxu0 0
    %5796 = vmatprep.subr.bf16.mxu0 0
    %5797 = vmatpush1.bf16.msra.mxu0 0
    %5798 = vmatprep.subr.bf16.mxu0 0
    %5799 = vmatpush1.bf16.msra.mxu0 0
    %5800 = vmatprep.subr.bf16.mxu0 0
    %5801 = vmatpush1.bf16.msra.mxu0 0
    %5802 = vmatprep.subr.bf16.mxu0 0
    %5803 = vmatpush1.bf16.msra.mxu0 0
    %5804 = vmatprep.subr.bf16.mxu0 0
    %5805 = vmatpush1.bf16.msra.mxu0 0
    %5806 = vmatprep.subr.bf16.mxu0 0
    %5807 = vmatpush1.bf16.msra.mxu0 0
    %5808 = vmatprep.subr.bf16.mxu0 0
    %5809 = vmatpush1.bf16.msra.mxu0 0
    %5810 = vmatprep.subr.bf16.mxu0 0
    %5811 = vmatpush1.bf16.msra.mxu0 0
    %5812 = vmatprep.subr.bf16.mxu0 0
    %5813 = vmatpush1.bf16.msra.mxu0 0
    %5814 = vmatprep.subr.bf16.mxu0 0
    %5815 = vmatpush1.bf16.msra.mxu0 0
    %5816 = vmatprep.subr.bf16.mxu0 0
    %5817 = vmatpush1.bf16.msra.mxu0 0
    %5818 = vmatprep.subr.bf16.mxu0 0
    %5819 = vmatpush1.bf16.msra.mxu0 0
    %5820 = vmatprep.subr.bf16.mxu0 0
    %5821 = vmatpush1.bf16.msra.mxu0 0
    %5822 = vmatprep.mubr.bf16.mxu0 0
    %5823 = vmatmul.mubr.bf16.gmra.mrb[0].mxu0 %v5785
    %v5824 = vpop.f32.mrb[0].mxu0
    %v5825 = vadd.f32 %v5782, %v5824
    %v5826 = vpop.f32.mrb[0].mxu0
    %v5827 = vpop.f32.mrb[0].mxu0
    %v5828 = vpop.f32.mrb[0].mxu0
    %5829 = vdwg.mxu0
    %vm5830 = vcmask 25600
    %5831 = vst.msk [vmem:[#allocation5] sm:$0x3] %vm5830, %v5825
    // Predicated region
    $region78: #{rcnn_forward.1} parent=1 // pred_check
      _
    $region79: #{rcnn_forward.1} parent=1 // pred_check_branch
      %5833 = sbr.rel (0) target = $region81
    $region80: #{rcnn_forward.1} parent=1 // pred_region
      %s5835 = ssub.s32 32, 32
      %5836 = vsyncadd [#allocation6], %s5835
      %s5838 = sshll.u32 [#allocation5], 4
      %s5839 = int_to_ptr.vmem [resolvable:$true] %s5838
      %5841 = dma.vmem_to_hbm [thread:$0]  %s5839, 32, %s19, [#allocation6]
    $region81: #{rcnn_forward.1} parent=1 // pred_fallthru
      _
    // Predicated region
    $region82: #{rcnn_forward.1} parent=1 // pred_check
      _
    $region83: #{rcnn_forward.1} parent=1 // pred_check_branch
      %5843 = sbr.rel (0) target = $region85
    $region84: #{rcnn_forward.1} parent=1 // pred_region
      %5844 = dma.done [#allocation6], 32
    $region85: #{rcnn_forward.1} parent=1 // pred_fallthru
      _
    %5845 = vsyncpa [#allocation6], 1

</llo_original>
